<compile_context>
chip_gen: v5e
topology: v5e:2x2
jax: 0.10.0
libtpu: 0.0.40
codegen_flags: <defaults>
</compile_context>

<pallas_src>
import math
import functools

import jax
import jax.numpy as jnp
from jax.experimental import pallas as pl
from jax.experimental.pallas import tpu as pltpu

PAD_ID, SOS_ID, EOS_ID, UNK_ID = 0, 1, 2, 3
NEG_INF = -1.0e9

WEIGHT_DTYPE = jnp.bfloat16   # MXU inputs
ACT_DTYPE = jnp.bfloat16      # activations between kernels


def _row_tile(m, target=512):
    # Full array if small (full-dim blocks always satisfy the (8,128) rule);
    # otherwise a row tile that is a multiple of 8 and 16 (f32 / bf16 sublanes).
    return m if m <= target else target


def _cp(semantics, block_bytes, extra_bytes=0):
    # Explicit scoped-VMEM limit: double-buffered blocks + intermediates + slack,
    # floored at 32 MiB (above v5e/v6e defaults), capped at 64 MiB (v7x physical).
    need = 2 * int(block_bytes) + int(extra_bytes) + (2 << 20)
    limit = int(min(max(need, 32 << 20), 64 << 20))
    return pltpu.CompilerParams(dimension_semantics=semantics,
                                vmem_limit_bytes=limit)


# ----------------------------- Pallas kernels -----------------------------

def _linear_kernel(x_ref, w_ref, b_ref, o_ref):
    acc = jnp.dot(x_ref[...], w_ref[...], preferred_element_type=jnp.float32)
    o_ref[...] = (acc + b_ref[...]).astype(o_ref.dtype)


def _qkv_kernel(x_ref, wq_ref, bq_ref, wkv_ref, bkv_ref, q_ref, kv_ref):
    # Dual-output projection: x is read from HBM once, produces Q (scale pre-folded
    # into wq/bq) and fused KV.
    x = x_ref[...]
    q = jnp.dot(x, wq_ref[...], preferred_element_type=jnp.float32) + bq_ref[...]
    q_ref[...] = q.astype(q_ref.dtype)
    kv = jnp.dot(x, wkv_ref[...], preferred_element_type=jnp.float32) + bkv_ref[...]
    kv_ref[...] = kv.astype(kv_ref.dtype)


def _ffn_ln_kernel(x_ref, w1_ref, b1_ref, w2_ref, b2_ref, g_ref, b_ref, o_ref):
    # Fused FFN + residual + LayerNorm: LN(x + relu(x@w1+b1)@w2 + b2).
    x = x_ref[...]
    h = jnp.dot(x, w1_ref[...], preferred_element_type=jnp.float32) + b1_ref[...]
    h = jnp.maximum(h, 0.0).astype(w2_ref.dtype)
    y = jnp.dot(h, w2_ref[...], preferred_element_type=jnp.float32) + b2_ref[...]
    z = x.astype(jnp.float32) + y
    mean = jnp.mean(z, axis=-1, keepdims=True)
    var = jnp.mean((z - mean) ** 2, axis=-1, keepdims=True)
    zn = (z - mean) * jax.lax.rsqrt(var + 1e-5)
    o_ref[...] = (zn * g_ref[...] + b_ref[...]).astype(o_ref.dtype)


def _attn_kernel(q_ref, kv_ref, kb_ref, xr_ref, wo_ref, bo_ref, g_ref, b_ref, o_ref,
                 *, num_heads, d_model, causal):
    # Fused multi-head attention + output projection + residual + LayerNorm for one
    # (batch, query-tile) grid cell.  Mask is built in-kernel from the (1, Tk)
    # additive key-padding bias (+ causal via iota); softmax scale is pre-folded
    # into the Q projection weights.
    D = d_model
    dh = D // num_heads
    q_all = q_ref[...]                              # (TQ, D)  bf16
    kv = kv_ref[...]                                # (Tk, 2D) bf16
    k_all = kv[:, :D]
    v_all = kv[:, D:]
    TQ = q_all.shape[0]
    Tk = k_all.shape[0]

    bias = jnp.broadcast_to(kb_ref[...], (TQ, Tk))  # (TQ, Tk) f32, 0 / -1e9
    if causal:
        row = pl.program_id(1) * TQ + jax.lax.broadcasted_iota(jnp.int32, (TQ, Tk), 0)
        col = jax.lax.broadcasted_iota(jnp.int32, (TQ, Tk), 1)
        bias = jnp.where(col <= row, bias, NEG_INF)

    wo = wo_ref[...]                                # (D, D) bf16, resident
    acc = None
    for h in range(num_heads):
        sl = slice(h * dh, (h + 1) * dh)
        q = q_all[:, sl]
        k = k_all[:, sl]
        v = v_all[:, sl]
        # q @ k^T with no explicit transpose (contract last dims).
        s = jax.lax.dot_general(q, k, (((1,), (1,)), ((), ())),
                                preferred_element_type=jnp.float32)
        s = s + bias
        s = s - jnp.max(s, axis=-1, keepdims=True)
        p = jnp.exp(s)
        p = p * pl.reciprocal(jnp.sum(p, axis=-1, keepdims=True), approx=True)
        hv = jnp.dot(p.astype(v.dtype), v, preferred_element_type=jnp.float32)
        # Fold this head directly into the output projection: no concat/relayout.
        contrib = jnp.dot(hv.astype(wo.dtype), wo[sl, :],
                          preferred_element_type=jnp.float32)
        acc = contrib if acc is None else acc + contrib

    y = acc + bo_ref[...]                           # (TQ, D) f32
    z = xr_ref[...].astype(jnp.float32) + y         # residual
    mean = jnp.mean(z, axis=-1, keepdims=True)
    var = jnp.mean((z - mean) ** 2, axis=-1, keepdims=True)
    zn = (z - mean) * jax.lax.rsqrt(var + 1e-5)
    o_ref[...] = (zn * g_ref[...] + b_ref[...]).astype(o_ref.dtype)


# ----------------------------- Pallas wrappers -----------------------------

def linear(x2d, w, b, out_dtype=None):
    M, D = x2d.shape
    N = w.shape[1]
    out_dtype = x2d.dtype if out_dtype is None else out_dtype
    TM = _row_tile(M)
    blk = (TM * D * x2d.dtype.itemsize + D * N * w.dtype.itemsize + N * 4
           + TM * N * jnp.dtype(out_dtype).itemsize)
    return pl.pallas_call(
        _linear_kernel,
        out_shape=jax.ShapeDtypeStruct((M, N), out_dtype),
        grid=(pl.cdiv(M, TM),),
        in_specs=[
            pl.BlockSpec((TM, D), lambda i: (i, 0)),
            pl.BlockSpec((D, N), lambda i: (0, 0)),
            pl.BlockSpec((1, N), lambda i: (0, 0)),
        ],
        out_specs=pl.BlockSpec((TM, N), lambda i: (i, 0)),
        compiler_params=_cp(("parallel",), blk),
    )(x2d, w, b.reshape(1, N))


def qkv_project(x2d, wq, bq, wkv, bkv):
    # One launch, one HBM read of x -> Q (M, D) and fused KV (M, 2D).
    M, D = x2d.shape
    TM = _row_tile(M)
    blk = (TM * D * 2 + D * D * 2 + D * 4 + D * 2 * D * 2 + 2 * D * 4
           + TM * D * 2 + TM * 2 * D * 2)
    q, kv = pl.pallas_call(
        _qkv_kernel,
        out_shape=(jax.ShapeDtypeStruct((M, D), x2d.dtype),
                   jax.ShapeDtypeStruct((M, 2 * D), x2d.dtype)),
        grid=(pl.cdiv(M, TM),),
        in_specs=[
            pl.BlockSpec((TM, D), lambda i: (i, 0)),
            pl.BlockSpec((D, D), lambda i: (0, 0)),
            pl.BlockSpec((1, D), lambda i: (0, 0)),
            pl.BlockSpec((D, 2 * D), lambda i: (0, 0)),
            pl.BlockSpec((1, 2 * D), lambda i: (0, 0)),
        ],
        out_specs=[
            pl.BlockSpec((TM, D), lambda i: (i, 0)),
            pl.BlockSpec((TM, 2 * D), lambda i: (i, 0)),
        ],
        compiler_params=_cp(("parallel",), blk),
    )(x2d, wq, bq.reshape(1, D), wkv, bkv.reshape(1, 2 * D))
    return q, kv


def feed_forward_ln(p, x, ln_g, ln_b):
    # LN(x + FFN(x)), row tiled.  TM capped at 256 (v7x VMEM headroom).
    B, T, D = x.shape
    Dff = p["w1"].shape[1]
    M = B * T
    TM = _row_tile(M, target=256)
    blk = (TM * D * 2 + D * Dff * 2 + Dff * 4 + Dff * D * 2 + D * 4
           + 2 * D * 4 + TM * D * 2)
    extra = TM * Dff * 4 + TM * D * 4
    y = pl.pallas_call(
        _ffn_ln_kernel,
        out_shape=jax.ShapeDtypeStruct((M, D), x.dtype),
        grid=(pl.cdiv(M, TM),),
        in_specs=[
            pl.BlockSpec((TM, D), lambda i: (i, 0)),
            pl.BlockSpec((D, Dff), lambda i: (0, 0)),
            pl.BlockSpec((1, Dff), lambda i: (0, 0)),
            pl.BlockSpec((Dff, D), lambda i: (0, 0)),
            pl.BlockSpec((1, D), lambda i: (0, 0)),
            pl.BlockSpec((1, D), lambda i: (0, 0)),
            pl.BlockSpec((1, D), lambda i: (0, 0)),
        ],
        out_specs=pl.BlockSpec((TM, D), lambda i: (i, 0)),
        compiler_params=_cp(("parallel",), blk, extra),
    )(x.reshape(M, D), p["w1"], p["b1"].reshape(1, Dff), p["w2"],
      p["b2"].reshape(1, D), ln_g.reshape(1, D), ln_b.reshape(1, D))
    return y.reshape(B, T, D)


def attention_block(q, kv, key_bias, x_res, wo, bo, ln_g, ln_b, *, num_heads, causal):
    # Fused MHA + wo + residual + LN.  grid=(B, query tiles); K/V resident per batch.
    B, Tq, D = q.shape
    Tk = kv.shape[1]
    TQ = Tq if Tq <= 256 else 256
    nq = pl.cdiv(Tq, TQ)
    kern = functools.partial(_attn_kernel, num_heads=num_heads, d_model=D,
                             causal=causal)
    blk = (TQ * D * 2 + Tk * 2 * D * 2 + Tk * 4 + TQ * D * 2 + D * D * 2
           + 3 * D * 4 + TQ * D * 2)
    extra = 3 * TQ * Tk * 4 + TQ * D * 4
    return pl.pallas_call(
        kern,
        out_shape=jax.ShapeDtypeStruct((B, Tq, D), q.dtype),
        grid=(B, nq),
        in_specs=[
            pl.BlockSpec((pl.Squeezed(), TQ, D), lambda b, i: (b, i, 0)),
            pl.BlockSpec((pl.Squeezed(), Tk, 2 * D), lambda b, i: (b, 0, 0)),
            pl.BlockSpec((pl.Squeezed(), 1, Tk), lambda b, i: (b, 0, 0)),
            pl.BlockSpec((pl.Squeezed(), TQ, D), lambda b, i: (b, i, 0)),
            pl.BlockSpec((D, D), lambda b, i: (0, 0)),
            pl.BlockSpec((1, D), lambda b, i: (0, 0)),
            pl.BlockSpec((1, D), lambda b, i: (0, 0)),
            pl.BlockSpec((1, D), lambda b, i: (0, 0)),
        ],
        out_specs=pl.BlockSpec((pl.Squeezed(), TQ, D), lambda b, i: (b, i, 0)),
        compiler_params=_cp(("parallel", "parallel"), blk, extra),
    )(q, kv, key_bias, x_res, wo, bo.reshape(1, D),
      ln_g.reshape(1, D), ln_b.reshape(1, D))


def final_layer(x, w, b):
    # Plain tiled vocab projection; PAD/UNK masking is baked into w/b at init.
    B, T, D = x.shape
    V = w.shape[1]
    M = B * T
    TM = _row_tile(M)
    TN = V if V <= 2048 else 1024     # vocab tiling (multiple of 128 for big vocabs)
    blk = TM * D * 2 + D * TN * 2 + TN * 4 + TM * TN * 4
    y = pl.pallas_call(
        _linear_kernel,
        out_shape=jax.ShapeDtypeStruct((M, V), jnp.float32),
        grid=(pl.cdiv(M, TM), pl.cdiv(V, TN)),
        in_specs=[
            pl.BlockSpec((TM, D), lambda i, j: (i, 0)),
            pl.BlockSpec((D, TN), lambda i, j: (0, j)),
            pl.BlockSpec((1, TN), lambda i, j: (0, j)),
        ],
        out_specs=pl.BlockSpec((TM, TN), lambda i, j: (i, j)),
        compiler_params=_cp(("parallel", "parallel"), blk),
    )(x.reshape(M, D), w, b.reshape(1, V))
    return y.reshape(B, T, V)


# ----------------------------- model pieces (glue) -----------------------------

def sinusoidal_pe(max_len, d_model):
    pos = jnp.arange(max_len, dtype=jnp.float32)[:, None]
    div = jnp.exp(jnp.arange(0, d_model, 2, dtype=jnp.float32)
                  * (-math.log(10000.0) / d_model))
    pe = jnp.zeros((max_len, d_model), dtype=jnp.float32)
    pe = pe.at[:, 0::2].set(jnp.sin(pos * div))
    pe = pe.at[:, 1::2].set(jnp.cos(pos * div))
    return pe


def key_pad_bias(tokens):
    # (B, 1, S) additive key-padding bias: 0 where attend, -1e9 where key is PAD.
    keep = (tokens != PAD_ID)[:, None, :]
    return jnp.where(keep, 0.0, NEG_INF).astype(jnp.float32)


def encoder_layer(p, x, src_key_bias, num_heads):
    B, T, D = x.shape
    m = p["mha"]
    q, kv = qkv_project(x.reshape(B * T, D), m["wq"], m["bq"], m["wkv"], m["bkv"])
    x = attention_block(q.reshape(B, T, D), kv.reshape(B, T, 2 * D), src_key_bias, x,
                        m["wo"], m["bo"], p["ln1_g"], p["ln1_b"],
                        num_heads=num_heads, causal=False)
    x = feed_forward_ln(p["ffn"], x, p["ln2_g"], p["ln2_b"])
    return x


def decoder_layer(p, x, enc_out, tgt_key_bias, src_key_bias, num_heads):
    B, T, D = x.shape
    S = enc_out.shape[1]
    m = p["self_mha"]
    q, kv = qkv_project(x.reshape(B * T, D), m["wq"], m["bq"], m["wkv"], m["bkv"])
    x = attention_block(q.reshape(B, T, D), kv.reshape(B, T, 2 * D), tgt_key_bias, x,
                        m["wo"], m["bo"], p["ln1_g"], p["ln1_b"],
                        num_heads=num_heads, causal=True)
    c = p["cross_mha"]
    q = linear(x.reshape(B * T, D), c["wq"], c["bq"]).reshape(B, T, D)
    kv = linear(enc_out.reshape(B * S, D), c["wkv"], c["bkv"]).reshape(B, S, 2 * D)
    x = attention_block(q, kv, src_key_bias, x, c["wo"], c["bo"],
                        p["ln2_g"], p["ln2_b"], num_heads=num_heads, causal=False)
    x = feed_forward_ln(p["ffn"], x, p["ln3_g"], p["ln3_b"])
    return x


def classic_transformer_forward(params, src, tgt, num_heads):
    B, S = src.shape
    T = tgt.shape[1]

    src_key_bias = key_pad_bias(src)          # (B,1,S): encoder self + decoder cross
    tgt_key_bias = key_pad_bias(tgt)          # (B,1,T): decoder self (causal in-kernel)

    emb, pe = params["embedding"], params["pe"]
    src_x = (emb[src] + pe[:S][None, :, :]).astype(ACT_DTYPE)
    tgt_x = (emb[tgt] + pe[:T][None, :, :]).astype(ACT_DTYPE)

    for p in params["encoders"]:
        src_x = encoder_layer(p, src_x, src_key_bias, num_heads)
    for p in params["decoders"]:
        tgt_x = decoder_layer(p, tgt_x, src_x, tgt_key_bias, src_key_bias, num_heads)

    return final_layer(tgt_x, params["final_w"], params["final_b"])


# ----------------------------- parameter init -----------------------------

def _init_linear(key, d_in, d_out, scale=0.05):
    kw, kb = jax.random.split(key)
    return (jax.random.normal(kw, (d_in, d_out), jnp.float32) * scale,
            jax.random.normal(kb, (d_out,), jnp.float32) * scale)


def _init_mha(key, d_model, num_heads):
    ks = jax.random.split(key, 4)
    wq, bq = _init_linear(ks[0], d_model, d_model)
    wk, bk = _init_linear(ks[1], d_model, d_model)
    wv, bv = _init_linear(ks[2], d_model, d_model)
    wo, bo = _init_linear(ks[3], d_model, d_model)
    # Fold the 1/sqrt(dh) softmax scale into the Q projection (in f32, before the
    # bf16 cast) — no in-kernel scaling, slightly better numerics.
    scale = 1.0 / math.sqrt(d_model // num_heads)
    return dict(
        wq=(wq * scale).astype(WEIGHT_DTYPE), bq=bq * scale,
        wkv=jnp.concatenate([wk, wv], axis=1).astype(WEIGHT_DTYPE),
        bkv=jnp.concatenate([bk, bv], axis=0),
        wo=wo.astype(WEIGHT_DTYPE), bo=bo)


def _init_ffn(key, d_model, d_ff):
    k1, k2 = jax.random.split(key)
    w1, b1 = _init_linear(k1, d_model, d_ff)
    w2, b2 = _init_linear(k2, d_ff, d_model)
    return dict(w1=w1.astype(WEIGHT_DTYPE), b1=b1,
                w2=w2.astype(WEIGHT_DTYPE), b2=b2)


def init_params(key, vocab_size, d_model, num_heads, num_encoders, num_decoders,
                d_ff, max_seq_len):
    keys = jax.random.split(key, 3 + num_encoders + num_decoders)
    emb = jax.random.normal(keys[0], (vocab_size, d_model), jnp.float32) * 0.1
    emb = emb.at[PAD_ID].set(0.0)                     # nn.Embedding padding_idx
    encoders = []
    for i in range(num_encoders):
        k1, k2 = jax.random.split(keys[1 + i])
        encoders.append(dict(
            mha=_init_mha(k1, d_model, num_heads), ffn=_init_ffn(k2, d_model, d_ff),
            ln1_g=jnp.ones((d_model,)), ln1_b=jnp.zeros((d_model,)),
            ln2_g=jnp.ones((d_model,)), ln2_b=jnp.zeros((d_model,))))
    decoders = []
    for i in range(num_decoders):
        k1, k2, k3 = jax.random.split(keys[1 + num_encoders + i], 3)
        decoders.append(dict(
            self_mha=_init_mha(k1, d_model, num_heads),
            cross_mha=_init_mha(k2, d_model, num_heads),
            ffn=_init_ffn(k3, d_model, d_ff),
            ln1_g=jnp.ones((d_model,)), ln1_b=jnp.zeros((d_model,)),
            ln2_g=jnp.ones((d_model,)), ln2_b=jnp.zeros((d_model,)),
            ln3_g=jnp.ones((d_model,)), ln3_b=jnp.zeros((d_model,))))
    fw, fb = _init_linear(keys[-1], d_model, vocab_size)
    # Bake the PAD/UNK logit masking into the final projection: zero columns + -1e9
    # bias gives exactly -1e9 in those columns with no per-tile iota/where epilogue.
    fw = fw.at[:, PAD_ID].set(0.0).at[:, UNK_ID].set(0.0)
    fb = fb.at[PAD_ID].set(NEG_INF).at[UNK_ID].set(NEG_INF)
    return dict(embedding=emb, pe=sinusoidal_pe(max_seq_len, d_model),
                encoders=encoders, decoders=decoders,
                final_w=fw.astype(WEIGHT_DTYPE), final_b=fb)


# ----------------------------- main -----------------------------

if __name__ == "__main__":
    vocab_size, d_model, num_heads = 32, 32, 4
    num_encoders, num_decoders, d_ff = 2, 2, 64
    max_seq_len = 64                    # module default is 50000; small here
    B, S_src, S_tgt = 2, 8, 8

    key = jax.random.PRNGKey(0)
    kp, ks, kt = jax.random.split(key, 3)
    params = init_params(kp, vocab_size, d_model, num_heads, num_encoders,
                         num_decoders, d_ff, max_seq_len)

    src = jax.random.randint(ks, (B, S_src), 0, vocab_size, dtype=jnp.int32)
    tgt = jax.random.randint(kt, (B, S_tgt), 0, vocab_size, dtype=jnp.int32)
    # put a couple of PAD tokens in so the padding masks matter
    src = src.at[:, -1].set(PAD_ID)
    tgt = tgt.at[:, -1].set(PAD_ID)

    fwd = jax.jit(functools.partial(classic_transformer_forward, num_heads=num_heads))
    out = fwd(params, src, tgt)
    out = jax.block_until_ready(out)

    assert out.shape == (B, S_tgt, vocab_size)
    assert out.dtype == jnp.float32
    assert bool(jnp.all(out[..., PAD_ID] == NEG_INF))
    assert bool(jnp.all(out[..., UNK_ID] == NEG_INF))
    assert bool(jnp.all(jnp.isfinite(out[..., 4:])))
    print("KERNEL_OK")
</pallas_src>

<mosaic_0001>
module attributes {stable_mosaic.version = 11 : i64} {
  func.func @_attn_kernel(%arg0: i32, %arg1: i32, %arg2: memref<1x8x32xbf16, #tpu.memory_space<vmem>>, %arg3: memref<1x8x64xbf16, #tpu.memory_space<vmem>>, %arg4: memref<1x1x8xf32, #tpu.memory_space<vmem>>, %arg5: memref<1x8x32xbf16, #tpu.memory_space<vmem>>, %arg6: memref<32x32xbf16, #tpu.memory_space<vmem>>, %arg7: memref<1x32xf32, #tpu.memory_space<vmem>>, %arg8: memref<1x32xf32, #tpu.memory_space<vmem>>, %arg9: memref<1x32xf32, #tpu.memory_space<vmem>>, %arg10: memref<1x8x32xbf16, #tpu.memory_space<vmem>>) attributes {dimension_semantics = [#tpu.dimension_semantics<parallel>, #tpu.dimension_semantics<parallel>], iteration_bounds = array<i64: 2, 1>, scalar_prefetch = 0 : i64, scratch_operands = 0 : i64, tpu.core_type = #tpu.core_type<tc>, window_params = [{transform_indices = @transform_0, window_bounds = array<i64: 1, 8, 32>}, {transform_indices = @transform_1, window_bounds = array<i64: 1, 8, 64>}, {transform_indices = @transform_2, window_bounds = array<i64: 1, 1, 8>}, {transform_indices = @transform_3, window_bounds = array<i64: 1, 8, 32>}, {pipeline_mode = #tpu.pipeline_mode<synchronous>, transform_indices = @transform_4, window_bounds = array<i64: 32, 32>}, {pipeline_mode = #tpu.pipeline_mode<synchronous>, transform_indices = @transform_5, window_bounds = array<i64: 1, 32>}, {pipeline_mode = #tpu.pipeline_mode<synchronous>, transform_indices = @transform_6, window_bounds = array<i64: 1, 32>}, {pipeline_mode = #tpu.pipeline_mode<synchronous>, transform_indices = @transform_7, window_bounds = array<i64: 1, 32>}, {transform_indices = @transform_8, window_bounds = array<i64: 1, 8, 32>}]} {
    %c0 = arith.constant 0 : index
    %c0_0 = arith.constant 0 : index
    %c0_1 = arith.constant 0 : index
    %0 = vector.load %arg2[%c0, %c0_0, %c0_1] : memref<1x8x32xbf16, #tpu.memory_space<vmem>>, vector<1x8x32xbf16>
    %1 = vector.shape_cast %0 : vector<1x8x32xbf16> to vector<8x32xbf16>
    %c0_2 = arith.constant 0 : index
    %c0_3 = arith.constant 0 : index
    %c0_4 = arith.constant 0 : index
    %2 = vector.load %arg3[%c0_2, %c0_3, %c0_4] : memref<1x8x64xbf16, #tpu.memory_space<vmem>>, vector<1x8x64xbf16>
    %3 = vector.shape_cast %2 : vector<1x8x64xbf16> to vector<8x64xbf16>
    %4 = vector.extract_strided_slice %3 {offsets = [0, 0], sizes = [8, 32], strides = [1, 1]} : vector<8x64xbf16> to vector<8x32xbf16>
    %5 = vector.extract_strided_slice %3 {offsets = [0, 32], sizes = [8, 32], strides = [1, 1]} : vector<8x64xbf16> to vector<8x32xbf16>
    %c0_5 = arith.constant 0 : index
    %c0_6 = arith.constant 0 : index
    %c0_7 = arith.constant 0 : index
    %6 = vector.load %arg4[%c0_5, %c0_6, %c0_7] : memref<1x1x8xf32, #tpu.memory_space<vmem>>, vector<1x1x8xf32>
    %7 = vector.shape_cast %6 : vector<1x1x8xf32> to vector<1x8xf32>
    %8 = vector.shape_cast %7 : vector<1x8xf32> to vector<1x8xf32>
    %9 = vector.broadcast %8 : vector<1x8xf32> to vector<8x8xf32>
    %c0_8 = arith.constant 0 : index
    %c0_9 = arith.constant 0 : index
    %10 = vector.load %arg6[%c0_8, %c0_9] : memref<32x32xbf16, #tpu.memory_space<vmem>>, vector<32x32xbf16>
    %11 = vector.extract_strided_slice %1 {offsets = [0, 0], sizes = [8, 8], strides = [1, 1]} : vector<8x32xbf16> to vector<8x8xbf16>
    %12 = vector.extract_strided_slice %4 {offsets = [0, 0], sizes = [8, 8], strides = [1, 1]} : vector<8x32xbf16> to vector<8x8xbf16>
    %13 = vector.extract_strided_slice %5 {offsets = [0, 0], sizes = [8, 8], strides = [1, 1]} : vector<8x32xbf16> to vector<8x8xbf16>
    %cst = arith.constant dense<0.000000e+00> : vector<8x8xf32>
    %14 = tpu.matmul %11, %12, %cst {dimension_numbers = #tpu.dot_dimension_numbers<[1], [1], [0], [0], [0, 0, 1, 0], [], []>} : vector<8x8xbf16>, vector<8x8xbf16>, vector<8x8xf32> -> vector<8x8xf32>
    %15 = arith.addf %14, %9 : vector<8x8xf32>
    %cst_10 = arith.constant dense<0xFF800000> : vector<8xf32>
    %16 = vector.multi_reduction <maximumf>, %15, %cst_10 [1] : vector<8x8xf32> to vector<8xf32>
    %17 = vector.shape_cast %16 : vector<8xf32> to vector<8x1xf32>
    %18 = vector.broadcast %17 : vector<8x1xf32> to vector<8x8xf32>
    %19 = arith.subf %15, %18 : vector<8x8xf32>
    %20 = math.exp %19 : vector<8x8xf32>
    %cst_11 = arith.constant dense<0.000000e+00> : vector<8xf32>
    %21 = vector.multi_reduction <add>, %20, %cst_11 [1] : vector<8x8xf32> to vector<8xf32>
    %22 = vector.shape_cast %21 : vector<8xf32> to vector<8x1xf32>
    %23 = tpu.reciprocal %22 {approx = true} : vector<8x1xf32> -> vector<8x1xf32>
    %24 = vector.broadcast %23 : vector<8x1xf32> to vector<8x8xf32>
    %25 = arith.mulf %20, %24 : vector<8x8xf32>
    %26 = arith.truncf %25 : vector<8x8xf32> to vector<8x8xbf16>
    %cst_12 = arith.constant dense<0.000000e+00> : vector<8x8xf32>
    %27 = tpu.matmul %26, %13, %cst_12 {dimension_numbers = #tpu.dot_dimension_numbers<[1], [0], [0], [1], [0, 0, 1, 1], [], []>} : vector<8x8xbf16>, vector<8x8xbf16>, vector<8x8xf32> -> vector<8x8xf32>
    %28 = arith.truncf %27 : vector<8x8xf32> to vector<8x8xbf16>
    %29 = vector.extract_strided_slice %10 {offsets = [0, 0], sizes = [8, 32], strides = [1, 1]} : vector<32x32xbf16> to vector<8x32xbf16>
    %cst_13 = arith.constant dense<0.000000e+00> : vector<8x32xf32>
    %30 = tpu.matmul %28, %29, %cst_13 {dimension_numbers = #tpu.dot_dimension_numbers<[1], [0], [0], [1], [0, 0, 1, 1], [], []>} : vector<8x8xbf16>, vector<8x32xbf16>, vector<8x32xf32> -> vector<8x32xf32>
    %31 = vector.extract_strided_slice %1 {offsets = [0, 8], sizes = [8, 8], strides = [1, 1]} : vector<8x32xbf16> to vector<8x8xbf16>
    %32 = vector.extract_strided_slice %4 {offsets = [0, 8], sizes = [8, 8], strides = [1, 1]} : vector<8x32xbf16> to vector<8x8xbf16>
    %33 = vector.extract_strided_slice %5 {offsets = [0, 8], sizes = [8, 8], strides = [1, 1]} : vector<8x32xbf16> to vector<8x8xbf16>
    %cst_14 = arith.constant dense<0.000000e+00> : vector<8x8xf32>
    %34 = tpu.matmul %31, %32, %cst_14 {dimension_numbers = #tpu.dot_dimension_numbers<[1], [1], [0], [0], [0, 0, 1, 0], [], []>} : vector<8x8xbf16>, vector<8x8xbf16>, vector<8x8xf32> -> vector<8x8xf32>
    %35 = arith.addf %34, %9 : vector<8x8xf32>
    %cst_15 = arith.constant dense<0xFF800000> : vector<8xf32>
    %36 = vector.multi_reduction <maximumf>, %35, %cst_15 [1] : vector<8x8xf32> to vector<8xf32>
    %37 = vector.shape_cast %36 : vector<8xf32> to vector<8x1xf32>
    %38 = vector.broadcast %37 : vector<8x1xf32> to vector<8x8xf32>
    %39 = arith.subf %35, %38 : vector<8x8xf32>
    %40 = math.exp %39 : vector<8x8xf32>
    %cst_16 = arith.constant dense<0.000000e+00> : vector<8xf32>
    %41 = vector.multi_reduction <add>, %40, %cst_16 [1] : vector<8x8xf32> to vector<8xf32>
    %42 = vector.shape_cast %41 : vector<8xf32> to vector<8x1xf32>
    %43 = tpu.reciprocal %42 {approx = true} : vector<8x1xf32> -> vector<8x1xf32>
    %44 = vector.broadcast %43 : vector<8x1xf32> to vector<8x8xf32>
    %45 = arith.mulf %40, %44 : vector<8x8xf32>
    %46 = arith.truncf %45 : vector<8x8xf32> to vector<8x8xbf16>
    %cst_17 = arith.constant dense<0.000000e+00> : vector<8x8xf32>
    %47 = tpu.matmul %46, %33, %cst_17 {dimension_numbers = #tpu.dot_dimension_numbers<[1], [0], [0], [1], [0, 0, 1, 1], [], []>} : vector<8x8xbf16>, vector<8x8xbf16>, vector<8x8xf32> -> vector<8x8xf32>
    %48 = arith.truncf %47 : vector<8x8xf32> to vector<8x8xbf16>
    %49 = vector.extract_strided_slice %10 {offsets = [8, 0], sizes = [8, 32], strides = [1, 1]} : vector<32x32xbf16> to vector<8x32xbf16>
    %cst_18 = arith.constant dense<0.000000e+00> : vector<8x32xf32>
    %50 = tpu.matmul %48, %49, %cst_18 {dimension_numbers = #tpu.dot_dimension_numbers<[1], [0], [0], [1], [0, 0, 1, 1], [], []>} : vector<8x8xbf16>, vector<8x32xbf16>, vector<8x32xf32> -> vector<8x32xf32>
    %51 = arith.addf %30, %50 : vector<8x32xf32>
    %52 = vector.extract_strided_slice %1 {offsets = [0, 16], sizes = [8, 8], strides = [1, 1]} : vector<8x32xbf16> to vector<8x8xbf16>
    %53 = vector.extract_strided_slice %4 {offsets = [0, 16], sizes = [8, 8], strides = [1, 1]} : vector<8x32xbf16> to vector<8x8xbf16>
    %54 = vector.extract_strided_slice %5 {offsets = [0, 16], sizes = [8, 8], strides = [1, 1]} : vector<8x32xbf16> to vector<8x8xbf16>
    %cst_19 = arith.constant dense<0.000000e+00> : vector<8x8xf32>
    %55 = tpu.matmul %52, %53, %cst_19 {dimension_numbers = #tpu.dot_dimension_numbers<[1], [1], [0], [0], [0, 0, 1, 0], [], []>} : vector<8x8xbf16>, vector<8x8xbf16>, vector<8x8xf32> -> vector<8x8xf32>
    %56 = arith.addf %55, %9 : vector<8x8xf32>
    %cst_20 = arith.constant dense<0xFF800000> : vector<8xf32>
    %57 = vector.multi_reduction <maximumf>, %56, %cst_20 [1] : vector<8x8xf32> to vector<8xf32>
    %58 = vector.shape_cast %57 : vector<8xf32> to vector<8x1xf32>
    %59 = vector.broadcast %58 : vector<8x1xf32> to vector<8x8xf32>
    %60 = arith.subf %56, %59 : vector<8x8xf32>
    %61 = math.exp %60 : vector<8x8xf32>
    %cst_21 = arith.constant dense<0.000000e+00> : vector<8xf32>
    %62 = vector.multi_reduction <add>, %61, %cst_21 [1] : vector<8x8xf32> to vector<8xf32>
    %63 = vector.shape_cast %62 : vector<8xf32> to vector<8x1xf32>
    %64 = tpu.reciprocal %63 {approx = true} : vector<8x1xf32> -> vector<8x1xf32>
    %65 = vector.broadcast %64 : vector<8x1xf32> to vector<8x8xf32>
    %66 = arith.mulf %61, %65 : vector<8x8xf32>
    %67 = arith.truncf %66 : vector<8x8xf32> to vector<8x8xbf16>
    %cst_22 = arith.constant dense<0.000000e+00> : vector<8x8xf32>
    %68 = tpu.matmul %67, %54, %cst_22 {dimension_numbers = #tpu.dot_dimension_numbers<[1], [0], [0], [1], [0, 0, 1, 1], [], []>} : vector<8x8xbf16>, vector<8x8xbf16>, vector<8x8xf32> -> vector<8x8xf32>
    %69 = arith.truncf %68 : vector<8x8xf32> to vector<8x8xbf16>
    %70 = vector.extract_strided_slice %10 {offsets = [16, 0], sizes = [8, 32], strides = [1, 1]} : vector<32x32xbf16> to vector<8x32xbf16>
    %cst_23 = arith.constant dense<0.000000e+00> : vector<8x32xf32>
    %71 = tpu.matmul %69, %70, %cst_23 {dimension_numbers = #tpu.dot_dimension_numbers<[1], [0], [0], [1], [0, 0, 1, 1], [], []>} : vector<8x8xbf16>, vector<8x32xbf16>, vector<8x32xf32> -> vector<8x32xf32>
    %72 = arith.addf %51, %71 : vector<8x32xf32>
    %73 = vector.extract_strided_slice %1 {offsets = [0, 24], sizes = [8, 8], strides = [1, 1]} : vector<8x32xbf16> to vector<8x8xbf16>
    %74 = vector.extract_strided_slice %4 {offsets = [0, 24], sizes = [8, 8], strides = [1, 1]} : vector<8x32xbf16> to vector<8x8xbf16>
    %75 = vector.extract_strided_slice %5 {offsets = [0, 24], sizes = [8, 8], strides = [1, 1]} : vector<8x32xbf16> to vector<8x8xbf16>
    %cst_24 = arith.constant dense<0.000000e+00> : vector<8x8xf32>
    %76 = tpu.matmul %73, %74, %cst_24 {dimension_numbers = #tpu.dot_dimension_numbers<[1], [1], [0], [0], [0, 0, 1, 0], [], []>} : vector<8x8xbf16>, vector<8x8xbf16>, vector<8x8xf32> -> vector<8x8xf32>
    %77 = arith.addf %76, %9 : vector<8x8xf32>
    %cst_25 = arith.constant dense<0xFF800000> : vector<8xf32>
    %78 = vector.multi_reduction <maximumf>, %77, %cst_25 [1] : vector<8x8xf32> to vector<8xf32>
    %79 = vector.shape_cast %78 : vector<8xf32> to vector<8x1xf32>
    %80 = vector.broadcast %79 : vector<8x1xf32> to vector<8x8xf32>
    %81 = arith.subf %77, %80 : vector<8x8xf32>
    %82 = math.exp %81 : vector<8x8xf32>
    %cst_26 = arith.constant dense<0.000000e+00> : vector<8xf32>
    %83 = vector.multi_reduction <add>, %82, %cst_26 [1] : vector<8x8xf32> to vector<8xf32>
    %84 = vector.shape_cast %83 : vector<8xf32> to vector<8x1xf32>
    %85 = tpu.reciprocal %84 {approx = true} : vector<8x1xf32> -> vector<8x1xf32>
    %86 = vector.broadcast %85 : vector<8x1xf32> to vector<8x8xf32>
    %87 = arith.mulf %82, %86 : vector<8x8xf32>
    %88 = arith.truncf %87 : vector<8x8xf32> to vector<8x8xbf16>
    %cst_27 = arith.constant dense<0.000000e+00> : vector<8x8xf32>
    %89 = tpu.matmul %88, %75, %cst_27 {dimension_numbers = #tpu.dot_dimension_numbers<[1], [0], [0], [1], [0, 0, 1, 1], [], []>} : vector<8x8xbf16>, vector<8x8xbf16>, vector<8x8xf32> -> vector<8x8xf32>
    %90 = arith.truncf %89 : vector<8x8xf32> to vector<8x8xbf16>
    %91 = vector.extract_strided_slice %10 {offsets = [24, 0], sizes = [8, 32], strides = [1, 1]} : vector<32x32xbf16> to vector<8x32xbf16>
    %cst_28 = arith.constant dense<0.000000e+00> : vector<8x32xf32>
    %92 = tpu.matmul %90, %91, %cst_28 {dimension_numbers = #tpu.dot_dimension_numbers<[1], [0], [0], [1], [0, 0, 1, 1], [], []>} : vector<8x8xbf16>, vector<8x32xbf16>, vector<8x32xf32> -> vector<8x32xf32>
    %93 = arith.addf %72, %92 : vector<8x32xf32>
    %c0_29 = arith.constant 0 : index
    %c0_30 = arith.constant 0 : index
    %94 = vector.load %arg7[%c0_29, %c0_30] : memref<1x32xf32, #tpu.memory_space<vmem>>, vector<1x32xf32>
    %95 = vector.broadcast %94 : vector<1x32xf32> to vector<8x32xf32>
    %96 = arith.addf %93, %95 : vector<8x32xf32>
    %c0_31 = arith.constant 0 : index
    %c0_32 = arith.constant 0 : index
    %c0_33 = arith.constant 0 : index
    %97 = vector.load %arg5[%c0_31, %c0_32, %c0_33] : memref<1x8x32xbf16, #tpu.memory_space<vmem>>, vector<1x8x32xbf16>
    %98 = vector.shape_cast %97 : vector<1x8x32xbf16> to vector<8x32xbf16>
    %99 = arith.extf %98 : vector<8x32xbf16> to vector<8x32xf32>
    %100 = arith.addf %99, %96 : vector<8x32xf32>
    %cst_34 = arith.constant dense<0.000000e+00> : vector<8xf32>
    %101 = vector.multi_reduction <add>, %100, %cst_34 [1] : vector<8x32xf32> to vector<8xf32>
    %102 = vector.shape_cast %101 : vector<8xf32> to vector<8x1xf32>
    %cst_35 = arith.constant 3.200000e+01 : f32
    %103 = vector.broadcast %cst_35 : f32 to vector<8x1xf32>
    %104 = arith.divf %102, %103 : vector<8x1xf32>
    %105 = vector.broadcast %104 : vector<8x1xf32> to vector<8x32xf32>
    %106 = arith.subf %100, %105 : vector<8x32xf32>
    %107 = arith.mulf %106, %106 : vector<8x32xf32>
    %cst_36 = arith.constant dense<0.000000e+00> : vector<8xf32>
    %108 = vector.multi_reduction <add>, %107, %cst_36 [1] : vector<8x32xf32> to vector<8xf32>
    %109 = vector.shape_cast %108 : vector<8xf32> to vector<8x1xf32>
    %cst_37 = arith.constant 3.200000e+01 : f32
    %110 = vector.broadcast %cst_37 : f32 to vector<8x1xf32>
    %111 = arith.divf %109, %110 : vector<8x1xf32>
    %112 = vector.broadcast %104 : vector<8x1xf32> to vector<8x32xf32>
    %113 = arith.subf %100, %112 : vector<8x32xf32>
    %cst_38 = arith.constant 9.99999974E-6 : f32
    %114 = vector.broadcast %cst_38 : f32 to vector<8x1xf32>
    %115 = arith.addf %111, %114 : vector<8x1xf32>
    %116 = math.rsqrt %115 : vector<8x1xf32>
    %117 = vector.broadcast %116 : vector<8x1xf32> to vector<8x32xf32>
    %118 = arith.mulf %113, %117 : vector<8x32xf32>
    %c0_39 = arith.constant 0 : index
    %c0_40 = arith.constant 0 : index
    %119 = vector.load %arg8[%c0_39, %c0_40] : memref<1x32xf32, #tpu.memory_space<vmem>>, vector<1x32xf32>
    %120 = vector.broadcast %119 : vector<1x32xf32> to vector<8x32xf32>
    %121 = arith.mulf %118, %120 : vector<8x32xf32>
    %c0_41 = arith.constant 0 : index
    %c0_42 = arith.constant 0 : index
    %122 = vector.load %arg9[%c0_41, %c0_42] : memref<1x32xf32, #tpu.memory_space<vmem>>, vector<1x32xf32>
    %123 = vector.broadcast %122 : vector<1x32xf32> to vector<8x32xf32>
    %124 = arith.addf %121, %123 : vector<8x32xf32>
    %125 = arith.truncf %124 : vector<8x32xf32> to vector<8x32xbf16>
    %c0_43 = arith.constant 0 : index
    %c0_44 = arith.constant 0 : index
    %c0_45 = arith.constant 0 : index
    %126 = vector.load %arg10[%c0_43, %c0_44, %c0_45] : memref<1x8x32xbf16, #tpu.memory_space<vmem>>, vector<1x8x32xbf16>
    %127 = vector.shape_cast %126 : vector<1x8x32xbf16> to vector<8x32xbf16>
    %128 = vector.shape_cast %125 : vector<8x32xbf16> to vector<1x8x32xbf16>
    tpu.vector_store %arg10[%c0_43, %c0_44, %c0_45], %128 {strides = array<i32>} : memref<1x8x32xbf16, #tpu.memory_space<vmem>>, vector<1x8x32xbf16>,
    return
  }
  func.func @transform_0(%arg0: i32, %arg1: i32) -> (i32, i32, i32) {
    %c0_i32 = arith.constant 0 : i32
    %c0_i32_0 = arith.constant 0 : i32
    return %arg0, %arg1, %c0_i32 : i32, i32, i32
  }
  func.func @transform_1(%arg0: i32, %arg1: i32) -> (i32, i32, i32) {
    %c0_i32 = arith.constant 0 : i32
    %c0_i32_0 = arith.constant 0 : i32
    %c0_i32_1 = arith.constant 0 : i32
    return %arg0, %c0_i32, %c0_i32_0 : i32, i32, i32
  }
  func.func @transform_2(%arg0: i32, %arg1: i32) -> (i32, i32, i32) {
    %c0_i32 = arith.constant 0 : i32
    %c0_i32_0 = arith.constant 0 : i32
    %c0_i32_1 = arith.constant 0 : i32
    return %arg0, %c0_i32, %c0_i32_0 : i32, i32, i32
  }
  func.func @transform_3(%arg0: i32, %arg1: i32) -> (i32, i32, i32) {
    %c0_i32 = arith.constant 0 : i32
    %c0_i32_0 = arith.constant 0 : i32
    return %arg0, %arg1, %c0_i32 : i32, i32, i32
  }
  func.func @transform_4(%arg0: i32, %arg1: i32) -> (i32, i32) {
    %c0_i32 = arith.constant 0 : i32
    %c0_i32_0 = arith.constant 0 : i32
    %c0_i32_1 = arith.constant 0 : i32
    return %c0_i32, %c0_i32_0 : i32, i32
  }
  func.func @transform_5(%arg0: i32, %arg1: i32) -> (i32, i32) {
    %c0_i32 = arith.constant 0 : i32
    %c0_i32_0 = arith.constant 0 : i32
    %c0_i32_1 = arith.constant 0 : i32
    return %c0_i32, %c0_i32_0 : i32, i32
  }
  func.func @transform_6(%arg0: i32, %arg1: i32) -> (i32, i32) {
    %c0_i32 = arith.constant 0 : i32
    %c0_i32_0 = arith.constant 0 : i32
    %c0_i32_1 = arith.constant 0 : i32
    return %c0_i32, %c0_i32_0 : i32, i32
  }
  func.func @transform_7(%arg0: i32, %arg1: i32) -> (i32, i32) {
    %c0_i32 = arith.constant 0 : i32
    %c0_i32_0 = arith.constant 0 : i32
    %c0_i32_1 = arith.constant 0 : i32
    return %c0_i32, %c0_i32_0 : i32, i32
  }
  func.func @transform_8(%arg0: i32, %arg1: i32) -> (i32, i32, i32) {
    %c0_i32 = arith.constant 0 : i32
    %c0_i32_0 = arith.constant 0 : i32
    return %arg0, %arg1, %c0_i32 : i32, i32, i32
  }
}

module attributes {stable_mosaic.version = 11 : i64} {
  func.func @_qkv_kernel(%arg0: i32, %arg1: memref<16x32xbf16, #tpu.memory_space<vmem>>, %arg2: memref<32x32xbf16, #tpu.memory_space<vmem>>, %arg3: memref<1x32xf32, #tpu.memory_space<vmem>>, %arg4: memref<32x64xbf16, #tpu.memory_space<vmem>>, %arg5: memref<1x64xf32, #tpu.memory_space<vmem>>, %arg6: memref<16x32xbf16, #tpu.memory_space<vmem>>, %arg7: memref<16x64xbf16, #tpu.memory_space<vmem>>) attributes {dimension_semantics = [#tpu.dimension_semantics<parallel>], iteration_bounds = array<i64: 1>, scalar_prefetch = 0 : i64, scratch_operands = 0 : i64, tpu.core_type = #tpu.core_type<tc>, window_params = [{transform_indices = @transform_0, window_bounds = array<i64: 16, 32>}, {pipeline_mode = #tpu.pipeline_mode<synchronous>, transform_indices = @transform_1, window_bounds = array<i64: 32, 32>}, {pipeline_mode = #tpu.pipeline_mode<synchronous>, transform_indices = @transform_2, window_bounds = array<i64: 1, 32>}, {pipeline_mode = #tpu.pipeline_mode<synchronous>, transform_indices = @transform_3, window_bounds = array<i64: 32, 64>}, {pipeline_mode = #tpu.pipeline_mode<synchronous>, transform_indices = @transform_4, window_bounds = array<i64: 1, 64>}, {transform_indices = @transform_5, window_bounds = array<i64: 16, 32>}, {transform_indices = @transform_6, window_bounds = array<i64: 16, 64>}]} {
    %c0 = arith.constant 0 : index
    %c0_0 = arith.constant 0 : index
    %0 = vector.load %arg1[%c0, %c0_0] : memref<16x32xbf16, #tpu.memory_space<vmem>>, vector<16x32xbf16>
    %c0_1 = arith.constant 0 : index
    %c0_2 = arith.constant 0 : index
    %1 = vector.load %arg2[%c0_1, %c0_2] : memref<32x32xbf16, #tpu.memory_space<vmem>>, vector<32x32xbf16>
    %cst = arith.constant dense<0.000000e+00> : vector<16x32xf32>
    %2 = tpu.matmul %0, %1, %cst {dimension_numbers = #tpu.dot_dimension_numbers<[1], [0], [0], [1], [0, 0, 1, 1], [], []>} : vector<16x32xbf16>, vector<32x32xbf16>, vector<16x32xf32> -> vector<16x32xf32>
    %c0_3 = arith.constant 0 : index
    %c0_4 = arith.constant 0 : index
    %3 = vector.load %arg3[%c0_3, %c0_4] : memref<1x32xf32, #tpu.memory_space<vmem>>, vector<1x32xf32>
    %4 = vector.broadcast %3 : vector<1x32xf32> to vector<16x32xf32>
    %5 = arith.addf %2, %4 : vector<16x32xf32>
    %6 = arith.truncf %5 : vector<16x32xf32> to vector<16x32xbf16>
    %c0_5 = arith.constant 0 : index
    %c0_6 = arith.constant 0 : index
    %7 = vector.load %arg6[%c0_5, %c0_6] : memref<16x32xbf16, #tpu.memory_space<vmem>>, vector<16x32xbf16>
    tpu.vector_store %arg6[%c0_5, %c0_6], %6 {strides = array<i32>} : memref<16x32xbf16, #tpu.memory_space<vmem>>, vector<16x32xbf16>,
    %c0_7 = arith.constant 0 : index
    %c0_8 = arith.constant 0 : index
    %8 = vector.load %arg4[%c0_7, %c0_8] : memref<32x64xbf16, #tpu.memory_space<vmem>>, vector<32x64xbf16>
    %cst_9 = arith.constant dense<0.000000e+00> : vector<16x64xf32>
    %9 = tpu.matmul %0, %8, %cst_9 {dimension_numbers = #tpu.dot_dimension_numbers<[1], [0], [0], [1], [0, 0, 1, 1], [], []>} : vector<16x32xbf16>, vector<32x64xbf16>, vector<16x64xf32> -> vector<16x64xf32>
    %c0_10 = arith.constant 0 : index
    %c0_11 = arith.constant 0 : index
    %10 = vector.load %arg5[%c0_10, %c0_11] : memref<1x64xf32, #tpu.memory_space<vmem>>, vector<1x64xf32>
    %11 = vector.broadcast %10 : vector<1x64xf32> to vector<16x64xf32>
    %12 = arith.addf %9, %11 : vector<16x64xf32>
    %13 = arith.truncf %12 : vector<16x64xf32> to vector<16x64xbf16>
    %c0_12 = arith.constant 0 : index
    %c0_13 = arith.constant 0 : index
    %14 = vector.load %arg7[%c0_12, %c0_13] : memref<16x64xbf16, #tpu.memory_space<vmem>>, vector<16x64xbf16>
    tpu.vector_store %arg7[%c0_12, %c0_13], %13 {strides = array<i32>} : memref<16x64xbf16, #tpu.memory_space<vmem>>, vector<16x64xbf16>,
    return
  }
  func.func @transform_0(%arg0: i32) -> (i32, i32) {
    %c0_i32 = arith.constant 0 : i32
    %c0_i32_0 = arith.constant 0 : i32
    return %arg0, %c0_i32 : i32, i32
  }
  func.func @transform_1(%arg0: i32) -> (i32, i32) {
    %c0_i32 = arith.constant 0 : i32
    %c0_i32_0 = arith.constant 0 : i32
    %c0_i32_1 = arith.constant 0 : i32
    return %c0_i32, %c0_i32_0 : i32, i32
  }
  func.func @transform_2(%arg0: i32) -> (i32, i32) {
    %c0_i32 = arith.constant 0 : i32
    %c0_i32_0 = arith.constant 0 : i32
    %c0_i32_1 = arith.constant 0 : i32
    return %c0_i32, %c0_i32_0 : i32, i32
  }
  func.func @transform_3(%arg0: i32) -> (i32, i32) {
    %c0_i32 = arith.constant 0 : i32
    %c0_i32_0 = arith.constant 0 : i32
    %c0_i32_1 = arith.constant 0 : i32
    return %c0_i32, %c0_i32_0 : i32, i32
  }
  func.func @transform_4(%arg0: i32) -> (i32, i32) {
    %c0_i32 = arith.constant 0 : i32
    %c0_i32_0 = arith.constant 0 : i32
    %c0_i32_1 = arith.constant 0 : i32
    return %c0_i32, %c0_i32_0 : i32, i32
  }
  func.func @transform_5(%arg0: i32) -> (i32, i32) {
    %c0_i32 = arith.constant 0 : i32
    %c0_i32_0 = arith.constant 0 : i32
    return %arg0, %c0_i32 : i32, i32
  }
  func.func @transform_6(%arg0: i32) -> (i32, i32) {
    %c0_i32 = arith.constant 0 : i32
    %c0_i32_0 = arith.constant 0 : i32
    return %arg0, %c0_i32 : i32, i32
  }
}

module attributes {stable_mosaic.version = 11 : i64} {
  func.func @_ffn_ln_kernel(%arg0: i32, %arg1: memref<16x32xbf16, #tpu.memory_space<vmem>>, %arg2: memref<32x64xbf16, #tpu.memory_space<vmem>>, %arg3: memref<1x64xf32, #tpu.memory_space<vmem>>, %arg4: memref<64x32xbf16, #tpu.memory_space<vmem>>, %arg5: memref<1x32xf32, #tpu.memory_space<vmem>>, %arg6: memref<1x32xf32, #tpu.memory_space<vmem>>, %arg7: memref<1x32xf32, #tpu.memory_space<vmem>>, %arg8: memref<16x32xbf16, #tpu.memory_space<vmem>>) attributes {dimension_semantics = [#tpu.dimension_semantics<parallel>], iteration_bounds = array<i64: 1>, scalar_prefetch = 0 : i64, scratch_operands = 0 : i64, tpu.core_type = #tpu.core_type<tc>, window_params = [{transform_indices = @transform_0, window_bounds = array<i64: 16, 32>}, {pipeline_mode = #tpu.pipeline_mode<synchronous>, transform_indices = @transform_1, window_bounds = array<i64: 32, 64>}, {pipeline_mode = #tpu.pipeline_mode<synchronous>, transform_indices = @transform_2, window_bounds = array<i64: 1, 64>}, {pipeline_mode = #tpu.pipeline_mode<synchronous>, transform_indices = @transform_3, window_bounds = array<i64: 64, 32>}, {pipeline_mode = #tpu.pipeline_mode<synchronous>, transform_indices = @transform_4, window_bounds = array<i64: 1, 32>}, {pipeline_mode = #tpu.pipeline_mode<synchronous>, transform_indices = @transform_5, window_bounds = array<i64: 1, 32>}, {pipeline_mode = #tpu.pipeline_mode<synchronous>, transform_indices = @transform_6, window_bounds = array<i64: 1, 32>}, {transform_indices = @transform_7, window_bounds = array<i64: 16, 32>}]} {
    %c0 = arith.constant 0 : index
    %c0_0 = arith.constant 0 : index
    %0 = vector.load %arg1[%c0, %c0_0] : memref<16x32xbf16, #tpu.memory_space<vmem>>, vector<16x32xbf16>
    %c0_1 = arith.constant 0 : index
    %c0_2 = arith.constant 0 : index
    %1 = vector.load %arg2[%c0_1, %c0_2] : memref<32x64xbf16, #tpu.memory_space<vmem>>, vector<32x64xbf16>
    %cst = arith.constant dense<0.000000e+00> : vector<16x64xf32>
    %2 = tpu.matmul %0, %1, %cst {dimension_numbers = #tpu.dot_dimension_numbers<[1], [0], [0], [1], [0, 0, 1, 1], [], []>} : vector<16x32xbf16>, vector<32x64xbf16>, vector<16x64xf32> -> vector<16x64xf32>
    %c0_3 = arith.constant 0 : index
    %c0_4 = arith.constant 0 : index
    %3 = vector.load %arg3[%c0_3, %c0_4] : memref<1x64xf32, #tpu.memory_space<vmem>>, vector<1x64xf32>
    %4 = vector.broadcast %3 : vector<1x64xf32> to vector<16x64xf32>
    %5 = arith.addf %2, %4 : vector<16x64xf32>
    %cst_5 = arith.constant 0.000000e+00 : f32
    %6 = vector.broadcast %cst_5 : f32 to vector<16x64xf32>
    %7 = arith.maximumf %5, %6 : vector<16x64xf32>
    %8 = arith.truncf %7 : vector<16x64xf32> to vector<16x64xbf16>
    %c0_6 = arith.constant 0 : index
    %c0_7 = arith.constant 0 : index
    %9 = vector.load %arg4[%c0_6, %c0_7] : memref<64x32xbf16, #tpu.memory_space<vmem>>, vector<64x32xbf16>
    %cst_8 = arith.constant dense<0.000000e+00> : vector<16x32xf32>
    %10 = tpu.matmul %8, %9, %cst_8 {dimension_numbers = #tpu.dot_dimension_numbers<[1], [0], [0], [1], [0, 0, 1, 1], [], []>} : vector<16x64xbf16>, vector<64x32xbf16>, vector<16x32xf32> -> vector<16x32xf32>
    %c0_9 = arith.constant 0 : index
    %c0_10 = arith.constant 0 : index
    %11 = vector.load %arg5[%c0_9, %c0_10] : memref<1x32xf32, #tpu.memory_space<vmem>>, vector<1x32xf32>
    %12 = vector.broadcast %11 : vector<1x32xf32> to vector<16x32xf32>
    %13 = arith.addf %10, %12 : vector<16x32xf32>
    %14 = arith.extf %0 : vector<16x32xbf16> to vector<16x32xf32>
    %15 = arith.addf %14, %13 : vector<16x32xf32>
    %cst_11 = arith.constant dense<0.000000e+00> : vector<16xf32>
    %16 = vector.multi_reduction <add>, %15, %cst_11 [1] : vector<16x32xf32> to vector<16xf32>
    %17 = vector.shape_cast %16 : vector<16xf32> to vector<16x1xf32>
    %cst_12 = arith.constant 3.200000e+01 : f32
    %18 = vector.broadcast %cst_12 : f32 to vector<16x1xf32>
    %19 = arith.divf %17, %18 : vector<16x1xf32>
    %20 = vector.broadcast %19 : vector<16x1xf32> to vector<16x32xf32>
    %21 = arith.subf %15, %20 : vector<16x32xf32>
    %22 = arith.mulf %21, %21 : vector<16x32xf32>
    %cst_13 = arith.constant dense<0.000000e+00> : vector<16xf32>
    %23 = vector.multi_reduction <add>, %22, %cst_13 [1] : vector<16x32xf32> to vector<16xf32>
    %24 = vector.shape_cast %23 : vector<16xf32> to vector<16x1xf32>
    %cst_14 = arith.constant 3.200000e+01 : f32
    %25 = vector.broadcast %cst_14 : f32 to vector<16x1xf32>
    %26 = arith.divf %24, %25 : vector<16x1xf32>
    %27 = vector.broadcast %19 : vector<16x1xf32> to vector<16x32xf32>
    %28 = arith.subf %15, %27 : vector<16x32xf32>
    %cst_15 = arith.constant 9.99999974E-6 : f32
    %29 = vector.broadcast %cst_15 : f32 to vector<16x1xf32>
    %30 = arith.addf %26, %29 : vector<16x1xf32>
    %31 = math.rsqrt %30 : vector<16x1xf32>
    %32 = vector.broadcast %31 : vector<16x1xf32> to vector<16x32xf32>
    %33 = arith.mulf %28, %32 : vector<16x32xf32>
    %c0_16 = arith.constant 0 : index
    %c0_17 = arith.constant 0 : index
    %34 = vector.load %arg6[%c0_16, %c0_17] : memref<1x32xf32, #tpu.memory_space<vmem>>, vector<1x32xf32>
    %35 = vector.broadcast %34 : vector<1x32xf32> to vector<16x32xf32>
    %36 = arith.mulf %33, %35 : vector<16x32xf32>
    %c0_18 = arith.constant 0 : index
    %c0_19 = arith.constant 0 : index
    %37 = vector.load %arg7[%c0_18, %c0_19] : memref<1x32xf32, #tpu.memory_space<vmem>>, vector<1x32xf32>
    %38 = vector.broadcast %37 : vector<1x32xf32> to vector<16x32xf32>
    %39 = arith.addf %36, %38 : vector<16x32xf32>
    %40 = arith.truncf %39 : vector<16x32xf32> to vector<16x32xbf16>
    %c0_20 = arith.constant 0 : index
    %c0_21 = arith.constant 0 : index
    %41 = vector.load %arg8[%c0_20, %c0_21] : memref<16x32xbf16, #tpu.memory_space<vmem>>, vector<16x32xbf16>
    tpu.vector_store %arg8[%c0_20, %c0_21], %40 {strides = array<i32>} : memref<16x32xbf16, #tpu.memory_space<vmem>>, vector<16x32xbf16>,
    return
  }
  func.func @transform_0(%arg0: i32) -> (i32, i32) {
    %c0_i32 = arith.constant 0 : i32
    %c0_i32_0 = arith.constant 0 : i32
    return %arg0, %c0_i32 : i32, i32
  }
  func.func @transform_1(%arg0: i32) -> (i32, i32) {
    %c0_i32 = arith.constant 0 : i32
    %c0_i32_0 = arith.constant 0 : i32
    %c0_i32_1 = arith.constant 0 : i32
    return %c0_i32, %c0_i32_0 : i32, i32
  }
  func.func @transform_2(%arg0: i32) -> (i32, i32) {
    %c0_i32 = arith.constant 0 : i32
    %c0_i32_0 = arith.constant 0 : i32
    %c0_i32_1 = arith.constant 0 : i32
    return %c0_i32, %c0_i32_0 : i32, i32
  }
  func.func @transform_3(%arg0: i32) -> (i32, i32) {
    %c0_i32 = arith.constant 0 : i32
    %c0_i32_0 = arith.constant 0 : i32
    %c0_i32_1 = arith.constant 0 : i32
    return %c0_i32, %c0_i32_0 : i32, i32
  }
  func.func @transform_4(%arg0: i32) -> (i32, i32) {
    %c0_i32 = arith.constant 0 : i32
    %c0_i32_0 = arith.constant 0 : i32
    %c0_i32_1 = arith.constant 0 : i32
    return %c0_i32, %c0_i32_0 : i32, i32
  }
  func.func @transform_5(%arg0: i32) -> (i32, i32) {
    %c0_i32 = arith.constant 0 : i32
    %c0_i32_0 = arith.constant 0 : i32
    %c0_i32_1 = arith.constant 0 : i32
    return %c0_i32, %c0_i32_0 : i32, i32
  }
  func.func @transform_6(%arg0: i32) -> (i32, i32) {
    %c0_i32 = arith.constant 0 : i32
    %c0_i32_0 = arith.constant 0 : i32
    %c0_i32_1 = arith.constant 0 : i32
    return %c0_i32, %c0_i32_0 : i32, i32
  }
  func.func @transform_7(%arg0: i32) -> (i32, i32) {
    %c0_i32 = arith.constant 0 : i32
    %c0_i32_0 = arith.constant 0 : i32
    return %arg0, %c0_i32 : i32, i32
  }
}

module attributes {stable_mosaic.version = 11 : i64} {
  func.func @_linear_kernel(%arg0: i32, %arg1: memref<16x32xbf16, #tpu.memory_space<vmem>>, %arg2: memref<32x64xbf16, #tpu.memory_space<vmem>>, %arg3: memref<1x64xf32, #tpu.memory_space<vmem>>, %arg4: memref<16x64xbf16, #tpu.memory_space<vmem>>) attributes {dimension_semantics = [#tpu.dimension_semantics<parallel>], iteration_bounds = array<i64: 1>, scalar_prefetch = 0 : i64, scratch_operands = 0 : i64, tpu.core_type = #tpu.core_type<tc>, window_params = [{transform_indices = @transform_0, window_bounds = array<i64: 16, 32>}, {pipeline_mode = #tpu.pipeline_mode<synchronous>, transform_indices = @transform_1, window_bounds = array<i64: 32, 64>}, {pipeline_mode = #tpu.pipeline_mode<synchronous>, transform_indices = @transform_2, window_bounds = array<i64: 1, 64>}, {transform_indices = @transform_3, window_bounds = array<i64: 16, 64>}]} {
    %c0 = arith.constant 0 : index
    %c0_0 = arith.constant 0 : index
    %0 = vector.load %arg1[%c0, %c0_0] : memref<16x32xbf16, #tpu.memory_space<vmem>>, vector<16x32xbf16>
    %c0_1 = arith.constant 0 : index
    %c0_2 = arith.constant 0 : index
    %1 = vector.load %arg2[%c0_1, %c0_2] : memref<32x64xbf16, #tpu.memory_space<vmem>>, vector<32x64xbf16>
    %cst = arith.constant dense<0.000000e+00> : vector<16x64xf32>
    %2 = tpu.matmul %0, %1, %cst {dimension_numbers = #tpu.dot_dimension_numbers<[1], [0], [0], [1], [0, 0, 1, 1], [], []>} : vector<16x32xbf16>, vector<32x64xbf16>, vector<16x64xf32> -> vector<16x64xf32>
    %c0_3 = arith.constant 0 : index
    %c0_4 = arith.constant 0 : index
    %3 = vector.load %arg3[%c0_3, %c0_4] : memref<1x64xf32, #tpu.memory_space<vmem>>, vector<1x64xf32>
    %4 = vector.broadcast %3 : vector<1x64xf32> to vector<16x64xf32>
    %5 = arith.addf %2, %4 : vector<16x64xf32>
    %6 = arith.truncf %5 : vector<16x64xf32> to vector<16x64xbf16>
    %c0_5 = arith.constant 0 : index
    %c0_6 = arith.constant 0 : index
    %7 = vector.load %arg4[%c0_5, %c0_6] : memref<16x64xbf16, #tpu.memory_space<vmem>>, vector<16x64xbf16>
    tpu.vector_store %arg4[%c0_5, %c0_6], %6 {strides = array<i32>} : memref<16x64xbf16, #tpu.memory_space<vmem>>, vector<16x64xbf16>,
    return
  }
  func.func @transform_0(%arg0: i32) -> (i32, i32) {
    %c0_i32 = arith.constant 0 : i32
    %c0_i32_0 = arith.constant 0 : i32
    return %arg0, %c0_i32 : i32, i32
  }
  func.func @transform_1(%arg0: i32) -> (i32, i32) {
    %c0_i32 = arith.constant 0 : i32
    %c0_i32_0 = arith.constant 0 : i32
    %c0_i32_1 = arith.constant 0 : i32
    return %c0_i32, %c0_i32_0 : i32, i32
  }
  func.func @transform_2(%arg0: i32) -> (i32, i32) {
    %c0_i32 = arith.constant 0 : i32
    %c0_i32_0 = arith.constant 0 : i32
    %c0_i32_1 = arith.constant 0 : i32
    return %c0_i32, %c0_i32_0 : i32, i32
  }
  func.func @transform_3(%arg0: i32) -> (i32, i32) {
    %c0_i32 = arith.constant 0 : i32
    %c0_i32_0 = arith.constant 0 : i32
    return %arg0, %c0_i32 : i32, i32
  }
}

module attributes {stable_mosaic.version = 11 : i64} {
  func.func @_qkv_kernel(%arg0: i32, %arg1: memref<16x32xbf16, #tpu.memory_space<vmem>>, %arg2: memref<32x32xbf16, #tpu.memory_space<vmem>>, %arg3: memref<1x32xf32, #tpu.memory_space<vmem>>, %arg4: memref<32x64xbf16, #tpu.memory_space<vmem>>, %arg5: memref<1x64xf32, #tpu.memory_space<vmem>>, %arg6: memref<16x32xbf16, #tpu.memory_space<vmem>>, %arg7: memref<16x64xbf16, #tpu.memory_space<vmem>>) attributes {dimension_semantics = [#tpu.dimension_semantics<parallel>], iteration_bounds = array<i64: 1>, scalar_prefetch = 0 : i64, scratch_operands = 0 : i64, tpu.core_type = #tpu.core_type<tc>, window_params = [{transform_indices = @transform_0, window_bounds = array<i64: 16, 32>}, {pipeline_mode = #tpu.pipeline_mode<synchronous>, transform_indices = @transform_1, window_bounds = array<i64: 32, 32>}, {pipeline_mode = #tpu.pipeline_mode<synchronous>, transform_indices = @transform_2, window_bounds = array<i64: 1, 32>}, {pipeline_mode = #tpu.pipeline_mode<synchronous>, transform_indices = @transform_3, window_bounds = array<i64: 32, 64>}, {pipeline_mode = #tpu.pipeline_mode<synchronous>, transform_indices = @transform_4, window_bounds = array<i64: 1, 64>}, {transform_indices = @transform_5, window_bounds = array<i64: 16, 32>}, {transform_indices = @transform_6, window_bounds = array<i64: 16, 64>}]} {
    %c0 = arith.constant 0 : index
    %c0_0 = arith.constant 0 : index
    %0 = vector.load %arg1[%c0, %c0_0] : memref<16x32xbf16, #tpu.memory_space<vmem>>, vector<16x32xbf16>
    %c0_1 = arith.constant 0 : index
    %c0_2 = arith.constant 0 : index
    %1 = vector.load %arg2[%c0_1, %c0_2] : memref<32x32xbf16, #tpu.memory_space<vmem>>, vector<32x32xbf16>
    %cst = arith.constant dense<0.000000e+00> : vector<16x32xf32>
    %2 = tpu.matmul %0, %1, %cst {dimension_numbers = #tpu.dot_dimension_numbers<[1], [0], [0], [1], [0, 0, 1, 1], [], []>} : vector<16x32xbf16>, vector<32x32xbf16>, vector<16x32xf32> -> vector<16x32xf32>
    %c0_3 = arith.constant 0 : index
    %c0_4 = arith.constant 0 : index
    %3 = vector.load %arg3[%c0_3, %c0_4] : memref<1x32xf32, #tpu.memory_space<vmem>>, vector<1x32xf32>
    %4 = vector.broadcast %3 : vector<1x32xf32> to vector<16x32xf32>
    %5 = arith.addf %2, %4 : vector<16x32xf32>
    %6 = arith.truncf %5 : vector<16x32xf32> to vector<16x32xbf16>
    %c0_5 = arith.constant 0 : index
    %c0_6 = arith.constant 0 : index
    %7 = vector.load %arg6[%c0_5, %c0_6] : memref<16x32xbf16, #tpu.memory_space<vmem>>, vector<16x32xbf16>
    tpu.vector_store %arg6[%c0_5, %c0_6], %6 {strides = array<i32>} : memref<16x32xbf16, #tpu.memory_space<vmem>>, vector<16x32xbf16>,
    %c0_7 = arith.constant 0 : index
    %c0_8 = arith.constant 0 : index
    %8 = vector.load %arg4[%c0_7, %c0_8] : memref<32x64xbf16, #tpu.memory_space<vmem>>, vector<32x64xbf16>
    %cst_9 = arith.constant dense<0.000000e+00> : vector<16x64xf32>
    %9 = tpu.matmul %0, %8, %cst_9 {dimension_numbers = #tpu.dot_dimension_numbers<[1], [0], [0], [1], [0, 0, 1, 1], [], []>} : vector<16x32xbf16>, vector<32x64xbf16>, vector<16x64xf32> -> vector<16x64xf32>
    %c0_10 = arith.constant 0 : index
    %c0_11 = arith.constant 0 : index
    %10 = vector.load %arg5[%c0_10, %c0_11] : memref<1x64xf32, #tpu.memory_space<vmem>>, vector<1x64xf32>
    %11 = vector.broadcast %10 : vector<1x64xf32> to vector<16x64xf32>
    %12 = arith.addf %9, %11 : vector<16x64xf32>
    %13 = arith.truncf %12 : vector<16x64xf32> to vector<16x64xbf16>
    %c0_12 = arith.constant 0 : index
    %c0_13 = arith.constant 0 : index
    %14 = vector.load %arg7[%c0_12, %c0_13] : memref<16x64xbf16, #tpu.memory_space<vmem>>, vector<16x64xbf16>
    tpu.vector_store %arg7[%c0_12, %c0_13], %13 {strides = array<i32>} : memref<16x64xbf16, #tpu.memory_space<vmem>>, vector<16x64xbf16>,
    return
  }
  func.func @transform_0(%arg0: i32) -> (i32, i32) {
    %c0_i32 = arith.constant 0 : i32
    %c0_i32_0 = arith.constant 0 : i32
    return %arg0, %c0_i32 : i32, i32
  }
  func.func @transform_1(%arg0: i32) -> (i32, i32) {
    %c0_i32 = arith.constant 0 : i32
    %c0_i32_0 = arith.constant 0 : i32
    %c0_i32_1 = arith.constant 0 : i32
    return %c0_i32, %c0_i32_0 : i32, i32
  }
  func.func @transform_2(%arg0: i32) -> (i32, i32) {
    %c0_i32 = arith.constant 0 : i32
    %c0_i32_0 = arith.constant 0 : i32
    %c0_i32_1 = arith.constant 0 : i32
    return %c0_i32, %c0_i32_0 : i32, i32
  }
  func.func @transform_3(%arg0: i32) -> (i32, i32) {
    %c0_i32 = arith.constant 0 : i32
    %c0_i32_0 = arith.constant 0 : i32
    %c0_i32_1 = arith.constant 0 : i32
    return %c0_i32, %c0_i32_0 : i32, i32
  }
  func.func @transform_4(%arg0: i32) -> (i32, i32) {
    %c0_i32 = arith.constant 0 : i32
    %c0_i32_0 = arith.constant 0 : i32
    %c0_i32_1 = arith.constant 0 : i32
    return %c0_i32, %c0_i32_0 : i32, i32
  }
  func.func @transform_5(%arg0: i32) -> (i32, i32) {
    %c0_i32 = arith.constant 0 : i32
    %c0_i32_0 = arith.constant 0 : i32
    return %arg0, %c0_i32 : i32, i32
  }
  func.func @transform_6(%arg0: i32) -> (i32, i32) {
    %c0_i32 = arith.constant 0 : i32
    %c0_i32_0 = arith.constant 0 : i32
    return %arg0, %c0_i32 : i32, i32
  }
}

module attributes {stable_mosaic.version = 11 : i64} {
  func.func @_linear_kernel(%arg0: i32, %arg1: memref<16x32xbf16, #tpu.memory_space<vmem>>, %arg2: memref<32x32xbf16, #tpu.memory_space<vmem>>, %arg3: memref<1x32xf32, #tpu.memory_space<vmem>>, %arg4: memref<16x32xbf16, #tpu.memory_space<vmem>>) attributes {dimension_semantics = [#tpu.dimension_semantics<parallel>], iteration_bounds = array<i64: 1>, scalar_prefetch = 0 : i64, scratch_operands = 0 : i64, tpu.core_type = #tpu.core_type<tc>, window_params = [{transform_indices = @transform_0, window_bounds = array<i64: 16, 32>}, {pipeline_mode = #tpu.pipeline_mode<synchronous>, transform_indices = @transform_1, window_bounds = array<i64: 32, 32>}, {pipeline_mode = #tpu.pipeline_mode<synchronous>, transform_indices = @transform_2, window_bounds = array<i64: 1, 32>}, {transform_indices = @transform_3, window_bounds = array<i64: 16, 32>}]} {
    %c0 = arith.constant 0 : index
    %c0_0 = arith.constant 0 : index
    %0 = vector.load %arg1[%c0, %c0_0] : memref<16x32xbf16, #tpu.memory_space<vmem>>, vector<16x32xbf16>
    %c0_1 = arith.constant 0 : index
    %c0_2 = arith.constant 0 : index
    %1 = vector.load %arg2[%c0_1, %c0_2] : memref<32x32xbf16, #tpu.memory_space<vmem>>, vector<32x32xbf16>
    %cst = arith.constant dense<0.000000e+00> : vector<16x32xf32>
    %2 = tpu.matmul %0, %1, %cst {dimension_numbers = #tpu.dot_dimension_numbers<[1], [0], [0], [1], [0, 0, 1, 1], [], []>} : vector<16x32xbf16>, vector<32x32xbf16>, vector<16x32xf32> -> vector<16x32xf32>
    %c0_3 = arith.constant 0 : index
    %c0_4 = arith.constant 0 : index
    %3 = vector.load %arg3[%c0_3, %c0_4] : memref<1x32xf32, #tpu.memory_space<vmem>>, vector<1x32xf32>
    %4 = vector.broadcast %3 : vector<1x32xf32> to vector<16x32xf32>
    %5 = arith.addf %2, %4 : vector<16x32xf32>
    %6 = arith.truncf %5 : vector<16x32xf32> to vector<16x32xbf16>
    %c0_5 = arith.constant 0 : index
    %c0_6 = arith.constant 0 : index
    %7 = vector.load %arg4[%c0_5, %c0_6] : memref<16x32xbf16, #tpu.memory_space<vmem>>, vector<16x32xbf16>
    tpu.vector_store %arg4[%c0_5, %c0_6], %6 {strides = array<i32>} : memref<16x32xbf16, #tpu.memory_space<vmem>>, vector<16x32xbf16>,
    return
  }
  func.func @transform_0(%arg0: i32) -> (i32, i32) {
    %c0_i32 = arith.constant 0 : i32
    %c0_i32_0 = arith.constant 0 : i32
    return %arg0, %c0_i32 : i32, i32
  }
  func.func @transform_1(%arg0: i32) -> (i32, i32) {
    %c0_i32 = arith.constant 0 : i32
    %c0_i32_0 = arith.constant 0 : i32
    %c0_i32_1 = arith.constant 0 : i32
    return %c0_i32, %c0_i32_0 : i32, i32
  }
  func.func @transform_2(%arg0: i32) -> (i32, i32) {
    %c0_i32 = arith.constant 0 : i32
    %c0_i32_0 = arith.constant 0 : i32
    %c0_i32_1 = arith.constant 0 : i32
    return %c0_i32, %c0_i32_0 : i32, i32
  }
  func.func @transform_3(%arg0: i32) -> (i32, i32) {
    %c0_i32 = arith.constant 0 : i32
    %c0_i32_0 = arith.constant 0 : i32
    return %arg0, %c0_i32 : i32, i32
  }
}

module attributes {stable_mosaic.version = 11 : i64} {
  func.func @_attn_kernel(%arg0: i32, %arg1: i32, %arg2: memref<1x8x32xbf16, #tpu.memory_space<vmem>>, %arg3: memref<1x8x64xbf16, #tpu.memory_space<vmem>>, %arg4: memref<1x1x8xf32, #tpu.memory_space<vmem>>, %arg5: memref<1x8x32xbf16, #tpu.memory_space<vmem>>, %arg6: memref<32x32xbf16, #tpu.memory_space<vmem>>, %arg7: memref<1x32xf32, #tpu.memory_space<vmem>>, %arg8: memref<1x32xf32, #tpu.memory_space<vmem>>, %arg9: memref<1x32xf32, #tpu.memory_space<vmem>>, %arg10: memref<1x8x32xbf16, #tpu.memory_space<vmem>>) attributes {dimension_semantics = [#tpu.dimension_semantics<parallel>, #tpu.dimension_semantics<parallel>], iteration_bounds = array<i64: 2, 1>, scalar_prefetch = 0 : i64, scratch_operands = 0 : i64, tpu.core_type = #tpu.core_type<tc>, window_params = [{transform_indices = @transform_0, window_bounds = array<i64: 1, 8, 32>}, {transform_indices = @transform_1, window_bounds = array<i64: 1, 8, 64>}, {transform_indices = @transform_2, window_bounds = array<i64: 1, 1, 8>}, {transform_indices = @transform_3, window_bounds = array<i64: 1, 8, 32>}, {pipeline_mode = #tpu.pipeline_mode<synchronous>, transform_indices = @transform_4, window_bounds = array<i64: 32, 32>}, {pipeline_mode = #tpu.pipeline_mode<synchronous>, transform_indices = @transform_5, window_bounds = array<i64: 1, 32>}, {pipeline_mode = #tpu.pipeline_mode<synchronous>, transform_indices = @transform_6, window_bounds = array<i64: 1, 32>}, {pipeline_mode = #tpu.pipeline_mode<synchronous>, transform_indices = @transform_7, window_bounds = array<i64: 1, 32>}, {transform_indices = @transform_8, window_bounds = array<i64: 1, 8, 32>}]} {
    %c0 = arith.constant 0 : index
    %c0_0 = arith.constant 0 : index
    %c0_1 = arith.constant 0 : index
    %0 = vector.load %arg2[%c0, %c0_0, %c0_1] : memref<1x8x32xbf16, #tpu.memory_space<vmem>>, vector<1x8x32xbf16>
    %1 = vector.shape_cast %0 : vector<1x8x32xbf16> to vector<8x32xbf16>
    %c0_2 = arith.constant 0 : index
    %c0_3 = arith.constant 0 : index
    %c0_4 = arith.constant 0 : index
    %2 = vector.load %arg3[%c0_2, %c0_3, %c0_4] : memref<1x8x64xbf16, #tpu.memory_space<vmem>>, vector<1x8x64xbf16>
    %3 = vector.shape_cast %2 : vector<1x8x64xbf16> to vector<8x64xbf16>
    %4 = vector.extract_strided_slice %3 {offsets = [0, 0], sizes = [8, 32], strides = [1, 1]} : vector<8x64xbf16> to vector<8x32xbf16>
    %5 = vector.extract_strided_slice %3 {offsets = [0, 32], sizes = [8, 32], strides = [1, 1]} : vector<8x64xbf16> to vector<8x32xbf16>
    %c0_5 = arith.constant 0 : index
    %c0_6 = arith.constant 0 : index
    %c0_7 = arith.constant 0 : index
    %6 = vector.load %arg4[%c0_5, %c0_6, %c0_7] : memref<1x1x8xf32, #tpu.memory_space<vmem>>, vector<1x1x8xf32>
    %7 = vector.shape_cast %6 : vector<1x1x8xf32> to vector<1x8xf32>
    %8 = vector.shape_cast %7 : vector<1x8xf32> to vector<1x8xf32>
    %9 = vector.broadcast %8 : vector<1x8xf32> to vector<8x8xf32>
    %c8_i32 = arith.constant 8 : i32
    %10 = arith.muli %arg1, %c8_i32 : i32
    %11 = tpu.iota {dimensions = array<i32: 0>} : vector<8x8xi32>
    %12 = vector.broadcast %10 : i32 to vector<8x8xi32>
    %13 = arith.addi %12, %11 : vector<8x8xi32>
    %14 = tpu.iota {dimensions = array<i32: 1>} : vector<8x8xi32>
    %15 = arith.cmpi sle, %14, %13 : vector<8x8xi32>
    %cst = arith.constant -1.000000e+09 : f32
    %16 = vector.broadcast %cst : f32 to vector<8x8xf32>
    %17 = arith.select %15, %9, %16 : vector<8x8xi1>, vector<8x8xf32>
    %c0_8 = arith.constant 0 : index
    %c0_9 = arith.constant 0 : index
    %18 = vector.load %arg6[%c0_8, %c0_9] : memref<32x32xbf16, #tpu.memory_space<vmem>>, vector<32x32xbf16>
    %19 = vector.extract_strided_slice %1 {offsets = [0, 0], sizes = [8, 8], strides = [1, 1]} : vector<8x32xbf16> to vector<8x8xbf16>
    %20 = vector.extract_strided_slice %4 {offsets = [0, 0], sizes = [8, 8], strides = [1, 1]} : vector<8x32xbf16> to vector<8x8xbf16>
    %21 = vector.extract_strided_slice %5 {offsets = [0, 0], sizes = [8, 8], strides = [1, 1]} : vector<8x32xbf16> to vector<8x8xbf16>
    %cst_10 = arith.constant dense<0.000000e+00> : vector<8x8xf32>
    %22 = tpu.matmul %19, %20, %cst_10 {dimension_numbers = #tpu.dot_dimension_numbers<[1], [1], [0], [0], [0, 0, 1, 0], [], []>} : vector<8x8xbf16>, vector<8x8xbf16>, vector<8x8xf32> -> vector<8x8xf32>
    %23 = arith.addf %22, %17 : vector<8x8xf32>
    %cst_11 = arith.constant dense<0xFF800000> : vector<8xf32>
    %24 = vector.multi_reduction <maximumf>, %23, %cst_11 [1] : vector<8x8xf32> to vector<8xf32>
    %25 = vector.shape_cast %24 : vector<8xf32> to vector<8x1xf32>
    %26 = vector.broadcast %25 : vector<8x1xf32> to vector<8x8xf32>
    %27 = arith.subf %23, %26 : vector<8x8xf32>
    %28 = math.exp %27 : vector<8x8xf32>
    %cst_12 = arith.constant dense<0.000000e+00> : vector<8xf32>
    %29 = vector.multi_reduction <add>, %28, %cst_12 [1] : vector<8x8xf32> to vector<8xf32>
    %30 = vector.shape_cast %29 : vector<8xf32> to vector<8x1xf32>
    %31 = tpu.reciprocal %30 {approx = true} : vector<8x1xf32> -> vector<8x1xf32>
    %32 = vector.broadcast %31 : vector<8x1xf32> to vector<8x8xf32>
    %33 = arith.mulf %28, %32 : vector<8x8xf32>
    %34 = arith.truncf %33 : vector<8x8xf32> to vector<8x8xbf16>
    %cst_13 = arith.constant dense<0.000000e+00> : vector<8x8xf32>
    %35 = tpu.matmul %34, %21, %cst_13 {dimension_numbers = #tpu.dot_dimension_numbers<[1], [0], [0], [1], [0, 0, 1, 1], [], []>} : vector<8x8xbf16>, vector<8x8xbf16>, vector<8x8xf32> -> vector<8x8xf32>
    %36 = arith.truncf %35 : vector<8x8xf32> to vector<8x8xbf16>
    %37 = vector.extract_strided_slice %18 {offsets = [0, 0], sizes = [8, 32], strides = [1, 1]} : vector<32x32xbf16> to vector<8x32xbf16>
    %cst_14 = arith.constant dense<0.000000e+00> : vector<8x32xf32>
    %38 = tpu.matmul %36, %37, %cst_14 {dimension_numbers = #tpu.dot_dimension_numbers<[1], [0], [0], [1], [0, 0, 1, 1], [], []>} : vector<8x8xbf16>, vector<8x32xbf16>, vector<8x32xf32> -> vector<8x32xf32>
    %39 = vector.extract_strided_slice %1 {offsets = [0, 8], sizes = [8, 8], strides = [1, 1]} : vector<8x32xbf16> to vector<8x8xbf16>
    %40 = vector.extract_strided_slice %4 {offsets = [0, 8], sizes = [8, 8], strides = [1, 1]} : vector<8x32xbf16> to vector<8x8xbf16>
    %41 = vector.extract_strided_slice %5 {offsets = [0, 8], sizes = [8, 8], strides = [1, 1]} : vector<8x32xbf16> to vector<8x8xbf16>
    %cst_15 = arith.constant dense<0.000000e+00> : vector<8x8xf32>
    %42 = tpu.matmul %39, %40, %cst_15 {dimension_numbers = #tpu.dot_dimension_numbers<[1], [1], [0], [0], [0, 0, 1, 0], [], []>} : vector<8x8xbf16>, vector<8x8xbf16>, vector<8x8xf32> -> vector<8x8xf32>
    %43 = arith.addf %42, %17 : vector<8x8xf32>
    %cst_16 = arith.constant dense<0xFF800000> : vector<8xf32>
    %44 = vector.multi_reduction <maximumf>, %43, %cst_16 [1] : vector<8x8xf32> to vector<8xf32>
    %45 = vector.shape_cast %44 : vector<8xf32> to vector<8x1xf32>
    %46 = vector.broadcast %45 : vector<8x1xf32> to vector<8x8xf32>
    %47 = arith.subf %43, %46 : vector<8x8xf32>
    %48 = math.exp %47 : vector<8x8xf32>
    %cst_17 = arith.constant dense<0.000000e+00> : vector<8xf32>
    %49 = vector.multi_reduction <add>, %48, %cst_17 [1] : vector<8x8xf32> to vector<8xf32>
    %50 = vector.shape_cast %49 : vector<8xf32> to vector<8x1xf32>
    %51 = tpu.reciprocal %50 {approx = true} : vector<8x1xf32> -> vector<8x1xf32>
    %52 = vector.broadcast %51 : vector<8x1xf32> to vector<8x8xf32>
    %53 = arith.mulf %48, %52 : vector<8x8xf32>
    %54 = arith.truncf %53 : vector<8x8xf32> to vector<8x8xbf16>
    %cst_18 = arith.constant dense<0.000000e+00> : vector<8x8xf32>
    %55 = tpu.matmul %54, %41, %cst_18 {dimension_numbers = #tpu.dot_dimension_numbers<[1], [0], [0], [1], [0, 0, 1, 1], [], []>} : vector<8x8xbf16>, vector<8x8xbf16>, vector<8x8xf32> -> vector<8x8xf32>
    %56 = arith.truncf %55 : vector<8x8xf32> to vector<8x8xbf16>
    %57 = vector.extract_strided_slice %18 {offsets = [8, 0], sizes = [8, 32], strides = [1, 1]} : vector<32x32xbf16> to vector<8x32xbf16>
    %cst_19 = arith.constant dense<0.000000e+00> : vector<8x32xf32>
    %58 = tpu.matmul %56, %57, %cst_19 {dimension_numbers = #tpu.dot_dimension_numbers<[1], [0], [0], [1], [0, 0, 1, 1], [], []>} : vector<8x8xbf16>, vector<8x32xbf16>, vector<8x32xf32> -> vector<8x32xf32>
    %59 = arith.addf %38, %58 : vector<8x32xf32>
    %60 = vector.extract_strided_slice %1 {offsets = [0, 16], sizes = [8, 8], strides = [1, 1]} : vector<8x32xbf16> to vector<8x8xbf16>
    %61 = vector.extract_strided_slice %4 {offsets = [0, 16], sizes = [8, 8], strides = [1, 1]} : vector<8x32xbf16> to vector<8x8xbf16>
    %62 = vector.extract_strided_slice %5 {offsets = [0, 16], sizes = [8, 8], strides = [1, 1]} : vector<8x32xbf16> to vector<8x8xbf16>
    %cst_20 = arith.constant dense<0.000000e+00> : vector<8x8xf32>
    %63 = tpu.matmul %60, %61, %cst_20 {dimension_numbers = #tpu.dot_dimension_numbers<[1], [1], [0], [0], [0, 0, 1, 0], [], []>} : vector<8x8xbf16>, vector<8x8xbf16>, vector<8x8xf32> -> vector<8x8xf32>
    %64 = arith.addf %63, %17 : vector<8x8xf32>
    %cst_21 = arith.constant dense<0xFF800000> : vector<8xf32>
    %65 = vector.multi_reduction <maximumf>, %64, %cst_21 [1] : vector<8x8xf32> to vector<8xf32>
    %66 = vector.shape_cast %65 : vector<8xf32> to vector<8x1xf32>
    %67 = vector.broadcast %66 : vector<8x1xf32> to vector<8x8xf32>
    %68 = arith.subf %64, %67 : vector<8x8xf32>
    %69 = math.exp %68 : vector<8x8xf32>
    %cst_22 = arith.constant dense<0.000000e+00> : vector<8xf32>
    %70 = vector.multi_reduction <add>, %69, %cst_22 [1] : vector<8x8xf32> to vector<8xf32>
    %71 = vector.shape_cast %70 : vector<8xf32> to vector<8x1xf32>
    %72 = tpu.reciprocal %71 {approx = true} : vector<8x1xf32> -> vector<8x1xf32>
    %73 = vector.broadcast %72 : vector<8x1xf32> to vector<8x8xf32>
    %74 = arith.mulf %69, %73 : vector<8x8xf32>
    %75 = arith.truncf %74 : vector<8x8xf32> to vector<8x8xbf16>
    %cst_23 = arith.constant dense<0.000000e+00> : vector<8x8xf32>
    %76 = tpu.matmul %75, %62, %cst_23 {dimension_numbers = #tpu.dot_dimension_numbers<[1], [0], [0], [1], [0, 0, 1, 1], [], []>} : vector<8x8xbf16>, vector<8x8xbf16>, vector<8x8xf32> -> vector<8x8xf32>
    %77 = arith.truncf %76 : vector<8x8xf32> to vector<8x8xbf16>
    %78 = vector.extract_strided_slice %18 {offsets = [16, 0], sizes = [8, 32], strides = [1, 1]} : vector<32x32xbf16> to vector<8x32xbf16>
    %cst_24 = arith.constant dense<0.000000e+00> : vector<8x32xf32>
    %79 = tpu.matmul %77, %78, %cst_24 {dimension_numbers = #tpu.dot_dimension_numbers<[1], [0], [0], [1], [0, 0, 1, 1], [], []>} : vector<8x8xbf16>, vector<8x32xbf16>, vector<8x32xf32> -> vector<8x32xf32>
    %80 = arith.addf %59, %79 : vector<8x32xf32>
    %81 = vector.extract_strided_slice %1 {offsets = [0, 24], sizes = [8, 8], strides = [1, 1]} : vector<8x32xbf16> to vector<8x8xbf16>
    %82 = vector.extract_strided_slice %4 {offsets = [0, 24], sizes = [8, 8], strides = [1, 1]} : vector<8x32xbf16> to vector<8x8xbf16>
    %83 = vector.extract_strided_slice %5 {offsets = [0, 24], sizes = [8, 8], strides = [1, 1]} : vector<8x32xbf16> to vector<8x8xbf16>
    %cst_25 = arith.constant dense<0.000000e+00> : vector<8x8xf32>
    %84 = tpu.matmul %81, %82, %cst_25 {dimension_numbers = #tpu.dot_dimension_numbers<[1], [1], [0], [0], [0, 0, 1, 0], [], []>} : vector<8x8xbf16>, vector<8x8xbf16>, vector<8x8xf32> -> vector<8x8xf32>
    %85 = arith.addf %84, %17 : vector<8x8xf32>
    %cst_26 = arith.constant dense<0xFF800000> : vector<8xf32>
    %86 = vector.multi_reduction <maximumf>, %85, %cst_26 [1] : vector<8x8xf32> to vector<8xf32>
    %87 = vector.shape_cast %86 : vector<8xf32> to vector<8x1xf32>
    %88 = vector.broadcast %87 : vector<8x1xf32> to vector<8x8xf32>
    %89 = arith.subf %85, %88 : vector<8x8xf32>
    %90 = math.exp %89 : vector<8x8xf32>
    %cst_27 = arith.constant dense<0.000000e+00> : vector<8xf32>
    %91 = vector.multi_reduction <add>, %90, %cst_27 [1] : vector<8x8xf32> to vector<8xf32>
    %92 = vector.shape_cast %91 : vector<8xf32> to vector<8x1xf32>
    %93 = tpu.reciprocal %92 {approx = true} : vector<8x1xf32> -> vector<8x1xf32>
    %94 = vector.broadcast %93 : vector<8x1xf32> to vector<8x8xf32>
    %95 = arith.mulf %90, %94 : vector<8x8xf32>
    %96 = arith.truncf %95 : vector<8x8xf32> to vector<8x8xbf16>
    %cst_28 = arith.constant dense<0.000000e+00> : vector<8x8xf32>
    %97 = tpu.matmul %96, %83, %cst_28 {dimension_numbers = #tpu.dot_dimension_numbers<[1], [0], [0], [1], [0, 0, 1, 1], [], []>} : vector<8x8xbf16>, vector<8x8xbf16>, vector<8x8xf32> -> vector<8x8xf32>
    %98 = arith.truncf %97 : vector<8x8xf32> to vector<8x8xbf16>
    %99 = vector.extract_strided_slice %18 {offsets = [24, 0], sizes = [8, 32], strides = [1, 1]} : vector<32x32xbf16> to vector<8x32xbf16>
    %cst_29 = arith.constant dense<0.000000e+00> : vector<8x32xf32>
    %100 = tpu.matmul %98, %99, %cst_29 {dimension_numbers = #tpu.dot_dimension_numbers<[1], [0], [0], [1], [0, 0, 1, 1], [], []>} : vector<8x8xbf16>, vector<8x32xbf16>, vector<8x32xf32> -> vector<8x32xf32>
    %101 = arith.addf %80, %100 : vector<8x32xf32>
    %c0_30 = arith.constant 0 : index
    %c0_31 = arith.constant 0 : index
    %102 = vector.load %arg7[%c0_30, %c0_31] : memref<1x32xf32, #tpu.memory_space<vmem>>, vector<1x32xf32>
    %103 = vector.broadcast %102 : vector<1x32xf32> to vector<8x32xf32>
    %104 = arith.addf %101, %103 : vector<8x32xf32>
    %c0_32 = arith.constant 0 : index
    %c0_33 = arith.constant 0 : index
    %c0_34 = arith.constant 0 : index
    %105 = vector.load %arg5[%c0_32, %c0_33, %c0_34] : memref<1x8x32xbf16, #tpu.memory_space<vmem>>, vector<1x8x32xbf16>
    %106 = vector.shape_cast %105 : vector<1x8x32xbf16> to vector<8x32xbf16>
    %107 = arith.extf %106 : vector<8x32xbf16> to vector<8x32xf32>
    %108 = arith.addf %107, %104 : vector<8x32xf32>
    %cst_35 = arith.constant dense<0.000000e+00> : vector<8xf32>
    %109 = vector.multi_reduction <add>, %108, %cst_35 [1] : vector<8x32xf32> to vector<8xf32>
    %110 = vector.shape_cast %109 : vector<8xf32> to vector<8x1xf32>
    %cst_36 = arith.constant 3.200000e+01 : f32
    %111 = vector.broadcast %cst_36 : f32 to vector<8x1xf32>
    %112 = arith.divf %110, %111 : vector<8x1xf32>
    %113 = vector.broadcast %112 : vector<8x1xf32> to vector<8x32xf32>
    %114 = arith.subf %108, %113 : vector<8x32xf32>
    %115 = arith.mulf %114, %114 : vector<8x32xf32>
    %cst_37 = arith.constant dense<0.000000e+00> : vector<8xf32>
    %116 = vector.multi_reduction <add>, %115, %cst_37 [1] : vector<8x32xf32> to vector<8xf32>
    %117 = vector.shape_cast %116 : vector<8xf32> to vector<8x1xf32>
    %cst_38 = arith.constant 3.200000e+01 : f32
    %118 = vector.broadcast %cst_38 : f32 to vector<8x1xf32>
    %119 = arith.divf %117, %118 : vector<8x1xf32>
    %120 = vector.broadcast %112 : vector<8x1xf32> to vector<8x32xf32>
    %121 = arith.subf %108, %120 : vector<8x32xf32>
    %cst_39 = arith.constant 9.99999974E-6 : f32
    %122 = vector.broadcast %cst_39 : f32 to vector<8x1xf32>
    %123 = arith.addf %119, %122 : vector<8x1xf32>
    %124 = math.rsqrt %123 : vector<8x1xf32>
    %125 = vector.broadcast %124 : vector<8x1xf32> to vector<8x32xf32>
    %126 = arith.mulf %121, %125 : vector<8x32xf32>
    %c0_40 = arith.constant 0 : index
    %c0_41 = arith.constant 0 : index
    %127 = vector.load %arg8[%c0_40, %c0_41] : memref<1x32xf32, #tpu.memory_space<vmem>>, vector<1x32xf32>
    %128 = vector.broadcast %127 : vector<1x32xf32> to vector<8x32xf32>
    %129 = arith.mulf %126, %128 : vector<8x32xf32>
    %c0_42 = arith.constant 0 : index
    %c0_43 = arith.constant 0 : index
    %130 = vector.load %arg9[%c0_42, %c0_43] : memref<1x32xf32, #tpu.memory_space<vmem>>, vector<1x32xf32>
    %131 = vector.broadcast %130 : vector<1x32xf32> to vector<8x32xf32>
    %132 = arith.addf %129, %131 : vector<8x32xf32>
    %133 = arith.truncf %132 : vector<8x32xf32> to vector<8x32xbf16>
    %c0_44 = arith.constant 0 : index
    %c0_45 = arith.constant 0 : index
    %c0_46 = arith.constant 0 : index
    %134 = vector.load %arg10[%c0_44, %c0_45, %c0_46] : memref<1x8x32xbf16, #tpu.memory_space<vmem>>, vector<1x8x32xbf16>
    %135 = vector.shape_cast %134 : vector<1x8x32xbf16> to vector<8x32xbf16>
    %136 = vector.shape_cast %133 : vector<8x32xbf16> to vector<1x8x32xbf16>
    tpu.vector_store %arg10[%c0_44, %c0_45, %c0_46], %136 {strides = array<i32>} : memref<1x8x32xbf16, #tpu.memory_space<vmem>>, vector<1x8x32xbf16>,
    return
  }
  func.func @transform_0(%arg0: i32, %arg1: i32) -> (i32, i32, i32) {
    %c0_i32 = arith.constant 0 : i32
    %c0_i32_0 = arith.constant 0 : i32
    return %arg0, %arg1, %c0_i32 : i32, i32, i32
  }
  func.func @transform_1(%arg0: i32, %arg1: i32) -> (i32, i32, i32) {
    %c0_i32 = arith.constant 0 : i32
    %c0_i32_0 = arith.constant 0 : i32
    %c0_i32_1 = arith.constant 0 : i32
    return %arg0, %c0_i32, %c0_i32_0 : i32, i32, i32
  }
  func.func @transform_2(%arg0: i32, %arg1: i32) -> (i32, i32, i32) {
    %c0_i32 = arith.constant 0 : i32
    %c0_i32_0 = arith.constant 0 : i32
    %c0_i32_1 = arith.constant 0 : i32
    return %arg0, %c0_i32, %c0_i32_0 : i32, i32, i32
  }
  func.func @transform_3(%arg0: i32, %arg1: i32) -> (i32, i32, i32) {
    %c0_i32 = arith.constant 0 : i32
    %c0_i32_0 = arith.constant 0 : i32
    return %arg0, %arg1, %c0_i32 : i32, i32, i32
  }
  func.func @transform_4(%arg0: i32, %arg1: i32) -> (i32, i32) {
    %c0_i32 = arith.constant 0 : i32
    %c0_i32_0 = arith.constant 0 : i32
    %c0_i32_1 = arith.constant 0 : i32
    return %c0_i32, %c0_i32_0 : i32, i32
  }
  func.func @transform_5(%arg0: i32, %arg1: i32) -> (i32, i32) {
    %c0_i32 = arith.constant 0 : i32
    %c0_i32_0 = arith.constant 0 : i32
    %c0_i32_1 = arith.constant 0 : i32
    return %c0_i32, %c0_i32_0 : i32, i32
  }
  func.func @transform_6(%arg0: i32, %arg1: i32) -> (i32, i32) {
    %c0_i32 = arith.constant 0 : i32
    %c0_i32_0 = arith.constant 0 : i32
    %c0_i32_1 = arith.constant 0 : i32
    return %c0_i32, %c0_i32_0 : i32, i32
  }
  func.func @transform_7(%arg0: i32, %arg1: i32) -> (i32, i32) {
    %c0_i32 = arith.constant 0 : i32
    %c0_i32_0 = arith.constant 0 : i32
    %c0_i32_1 = arith.constant 0 : i32
    return %c0_i32, %c0_i32_0 : i32, i32
  }
  func.func @transform_8(%arg0: i32, %arg1: i32) -> (i32, i32, i32) {
    %c0_i32 = arith.constant 0 : i32
    %c0_i32_0 = arith.constant 0 : i32
    return %arg0, %arg1, %c0_i32 : i32, i32, i32
  }
}

module attributes {stable_mosaic.version = 11 : i64} {
  func.func @_attn_kernel(%arg0: i32, %arg1: i32, %arg2: memref<1x8x32xbf16, #tpu.memory_space<vmem>>, %arg3: memref<1x8x64xbf16, #tpu.memory_space<vmem>>, %arg4: memref<1x1x8xf32, #tpu.memory_space<vmem>>, %arg5: memref<1x8x32xbf16, #tpu.memory_space<vmem>>, %arg6: memref<32x32xbf16, #tpu.memory_space<vmem>>, %arg7: memref<1x32xf32, #tpu.memory_space<vmem>>, %arg8: memref<1x32xf32, #tpu.memory_space<vmem>>, %arg9: memref<1x32xf32, #tpu.memory_space<vmem>>, %arg10: memref<1x8x32xbf16, #tpu.memory_space<vmem>>) attributes {dimension_semantics = [#tpu.dimension_semantics<parallel>, #tpu.dimension_semantics<parallel>], iteration_bounds = array<i64: 2, 1>, scalar_prefetch = 0 : i64, scratch_operands = 0 : i64, tpu.core_type = #tpu.core_type<tc>, window_params = [{transform_indices = @transform_0, window_bounds = array<i64: 1, 8, 32>}, {transform_indices = @transform_1, window_bounds = array<i64: 1, 8, 64>}, {transform_indices = @transform_2, window_bounds = array<i64: 1, 1, 8>}, {transform_indices = @transform_3, window_bounds = array<i64: 1, 8, 32>}, {pipeline_mode = #tpu.pipeline_mode<synchronous>, transform_indices = @transform_4, window_bounds = array<i64: 32, 32>}, {pipeline_mode = #tpu.pipeline_mode<synchronous>, transform_indices = @transform_5, window_bounds = array<i64: 1, 32>}, {pipeline_mode = #tpu.pipeline_mode<synchronous>, transform_indices = @transform_6, window_bounds = array<i64: 1, 32>}, {pipeline_mode = #tpu.pipeline_mode<synchronous>, transform_indices = @transform_7, window_bounds = array<i64: 1, 32>}, {transform_indices = @transform_8, window_bounds = array<i64: 1, 8, 32>}]} {
    %c0 = arith.constant 0 : index
    %c0_0 = arith.constant 0 : index
    %c0_1 = arith.constant 0 : index
    %0 = vector.load %arg2[%c0, %c0_0, %c0_1] : memref<1x8x32xbf16, #tpu.memory_space<vmem>>, vector<1x8x32xbf16>
    %1 = vector.shape_cast %0 : vector<1x8x32xbf16> to vector<8x32xbf16>
    %c0_2 = arith.constant 0 : index
    %c0_3 = arith.constant 0 : index
    %c0_4 = arith.constant 0 : index
    %2 = vector.load %arg3[%c0_2, %c0_3, %c0_4] : memref<1x8x64xbf16, #tpu.memory_space<vmem>>, vector<1x8x64xbf16>
    %3 = vector.shape_cast %2 : vector<1x8x64xbf16> to vector<8x64xbf16>
    %4 = vector.extract_strided_slice %3 {offsets = [0, 0], sizes = [8, 32], strides = [1, 1]} : vector<8x64xbf16> to vector<8x32xbf16>
    %5 = vector.extract_strided_slice %3 {offsets = [0, 32], sizes = [8, 32], strides = [1, 1]} : vector<8x64xbf16> to vector<8x32xbf16>
    %c0_5 = arith.constant 0 : index
    %c0_6 = arith.constant 0 : index
    %c0_7 = arith.constant 0 : index
    %6 = vector.load %arg4[%c0_5, %c0_6, %c0_7] : memref<1x1x8xf32, #tpu.memory_space<vmem>>, vector<1x1x8xf32>
    %7 = vector.shape_cast %6 : vector<1x1x8xf32> to vector<1x8xf32>
    %8 = vector.shape_cast %7 : vector<1x8xf32> to vector<1x8xf32>
    %9 = vector.broadcast %8 : vector<1x8xf32> to vector<8x8xf32>
    %c0_8 = arith.constant 0 : index
    %c0_9 = arith.constant 0 : index
    %10 = vector.load %arg6[%c0_8, %c0_9] : memref<32x32xbf16, #tpu.memory_space<vmem>>, vector<32x32xbf16>
    %11 = vector.extract_strided_slice %1 {offsets = [0, 0], sizes = [8, 8], strides = [1, 1]} : vector<8x32xbf16> to vector<8x8xbf16>
    %12 = vector.extract_strided_slice %4 {offsets = [0, 0], sizes = [8, 8], strides = [1, 1]} : vector<8x32xbf16> to vector<8x8xbf16>
    %13 = vector.extract_strided_slice %5 {offsets = [0, 0], sizes = [8, 8], strides = [1, 1]} : vector<8x32xbf16> to vector<8x8xbf16>
    %cst = arith.constant dense<0.000000e+00> : vector<8x8xf32>
    %14 = tpu.matmul %11, %12, %cst {dimension_numbers = #tpu.dot_dimension_numbers<[1], [1], [0], [0], [0, 0, 1, 0], [], []>} : vector<8x8xbf16>, vector<8x8xbf16>, vector<8x8xf32> -> vector<8x8xf32>
    %15 = arith.addf %14, %9 : vector<8x8xf32>
    %cst_10 = arith.constant dense<0xFF800000> : vector<8xf32>
    %16 = vector.multi_reduction <maximumf>, %15, %cst_10 [1] : vector<8x8xf32> to vector<8xf32>
    %17 = vector.shape_cast %16 : vector<8xf32> to vector<8x1xf32>
    %18 = vector.broadcast %17 : vector<8x1xf32> to vector<8x8xf32>
    %19 = arith.subf %15, %18 : vector<8x8xf32>
    %20 = math.exp %19 : vector<8x8xf32>
    %cst_11 = arith.constant dense<0.000000e+00> : vector<8xf32>
    %21 = vector.multi_reduction <add>, %20, %cst_11 [1] : vector<8x8xf32> to vector<8xf32>
    %22 = vector.shape_cast %21 : vector<8xf32> to vector<8x1xf32>
    %23 = tpu.reciprocal %22 {approx = true} : vector<8x1xf32> -> vector<8x1xf32>
    %24 = vector.broadcast %23 : vector<8x1xf32> to vector<8x8xf32>
    %25 = arith.mulf %20, %24 : vector<8x8xf32>
    %26 = arith.truncf %25 : vector<8x8xf32> to vector<8x8xbf16>
    %cst_12 = arith.constant dense<0.000000e+00> : vector<8x8xf32>
    %27 = tpu.matmul %26, %13, %cst_12 {dimension_numbers = #tpu.dot_dimension_numbers<[1], [0], [0], [1], [0, 0, 1, 1], [], []>} : vector<8x8xbf16>, vector<8x8xbf16>, vector<8x8xf32> -> vector<8x8xf32>
    %28 = arith.truncf %27 : vector<8x8xf32> to vector<8x8xbf16>
    %29 = vector.extract_strided_slice %10 {offsets = [0, 0], sizes = [8, 32], strides = [1, 1]} : vector<32x32xbf16> to vector<8x32xbf16>
    %cst_13 = arith.constant dense<0.000000e+00> : vector<8x32xf32>
    %30 = tpu.matmul %28, %29, %cst_13 {dimension_numbers = #tpu.dot_dimension_numbers<[1], [0], [0], [1], [0, 0, 1, 1], [], []>} : vector<8x8xbf16>, vector<8x32xbf16>, vector<8x32xf32> -> vector<8x32xf32>
    %31 = vector.extract_strided_slice %1 {offsets = [0, 8], sizes = [8, 8], strides = [1, 1]} : vector<8x32xbf16> to vector<8x8xbf16>
    %32 = vector.extract_strided_slice %4 {offsets = [0, 8], sizes = [8, 8], strides = [1, 1]} : vector<8x32xbf16> to vector<8x8xbf16>
    %33 = vector.extract_strided_slice %5 {offsets = [0, 8], sizes = [8, 8], strides = [1, 1]} : vector<8x32xbf16> to vector<8x8xbf16>
    %cst_14 = arith.constant dense<0.000000e+00> : vector<8x8xf32>
    %34 = tpu.matmul %31, %32, %cst_14 {dimension_numbers = #tpu.dot_dimension_numbers<[1], [1], [0], [0], [0, 0, 1, 0], [], []>} : vector<8x8xbf16>, vector<8x8xbf16>, vector<8x8xf32> -> vector<8x8xf32>
    %35 = arith.addf %34, %9 : vector<8x8xf32>
    %cst_15 = arith.constant dense<0xFF800000> : vector<8xf32>
    %36 = vector.multi_reduction <maximumf>, %35, %cst_15 [1] : vector<8x8xf32> to vector<8xf32>
    %37 = vector.shape_cast %36 : vector<8xf32> to vector<8x1xf32>
    %38 = vector.broadcast %37 : vector<8x1xf32> to vector<8x8xf32>
    %39 = arith.subf %35, %38 : vector<8x8xf32>
    %40 = math.exp %39 : vector<8x8xf32>
    %cst_16 = arith.constant dense<0.000000e+00> : vector<8xf32>
    %41 = vector.multi_reduction <add>, %40, %cst_16 [1] : vector<8x8xf32> to vector<8xf32>
    %42 = vector.shape_cast %41 : vector<8xf32> to vector<8x1xf32>
    %43 = tpu.reciprocal %42 {approx = true} : vector<8x1xf32> -> vector<8x1xf32>
    %44 = vector.broadcast %43 : vector<8x1xf32> to vector<8x8xf32>
    %45 = arith.mulf %40, %44 : vector<8x8xf32>
    %46 = arith.truncf %45 : vector<8x8xf32> to vector<8x8xbf16>
    %cst_17 = arith.constant dense<0.000000e+00> : vector<8x8xf32>
    %47 = tpu.matmul %46, %33, %cst_17 {dimension_numbers = #tpu.dot_dimension_numbers<[1], [0], [0], [1], [0, 0, 1, 1], [], []>} : vector<8x8xbf16>, vector<8x8xbf16>, vector<8x8xf32> -> vector<8x8xf32>
    %48 = arith.truncf %47 : vector<8x8xf32> to vector<8x8xbf16>
    %49 = vector.extract_strided_slice %10 {offsets = [8, 0], sizes = [8, 32], strides = [1, 1]} : vector<32x32xbf16> to vector<8x32xbf16>
    %cst_18 = arith.constant dense<0.000000e+00> : vector<8x32xf32>
    %50 = tpu.matmul %48, %49, %cst_18 {dimension_numbers = #tpu.dot_dimension_numbers<[1], [0], [0], [1], [0, 0, 1, 1], [], []>} : vector<8x8xbf16>, vector<8x32xbf16>, vector<8x32xf32> -> vector<8x32xf32>
    %51 = arith.addf %30, %50 : vector<8x32xf32>
    %52 = vector.extract_strided_slice %1 {offsets = [0, 16], sizes = [8, 8], strides = [1, 1]} : vector<8x32xbf16> to vector<8x8xbf16>
    %53 = vector.extract_strided_slice %4 {offsets = [0, 16], sizes = [8, 8], strides = [1, 1]} : vector<8x32xbf16> to vector<8x8xbf16>
    %54 = vector.extract_strided_slice %5 {offsets = [0, 16], sizes = [8, 8], strides = [1, 1]} : vector<8x32xbf16> to vector<8x8xbf16>
    %cst_19 = arith.constant dense<0.000000e+00> : vector<8x8xf32>
    %55 = tpu.matmul %52, %53, %cst_19 {dimension_numbers = #tpu.dot_dimension_numbers<[1], [1], [0], [0], [0, 0, 1, 0], [], []>} : vector<8x8xbf16>, vector<8x8xbf16>, vector<8x8xf32> -> vector<8x8xf32>
    %56 = arith.addf %55, %9 : vector<8x8xf32>
    %cst_20 = arith.constant dense<0xFF800000> : vector<8xf32>
    %57 = vector.multi_reduction <maximumf>, %56, %cst_20 [1] : vector<8x8xf32> to vector<8xf32>
    %58 = vector.shape_cast %57 : vector<8xf32> to vector<8x1xf32>
    %59 = vector.broadcast %58 : vector<8x1xf32> to vector<8x8xf32>
    %60 = arith.subf %56, %59 : vector<8x8xf32>
    %61 = math.exp %60 : vector<8x8xf32>
    %cst_21 = arith.constant dense<0.000000e+00> : vector<8xf32>
    %62 = vector.multi_reduction <add>, %61, %cst_21 [1] : vector<8x8xf32> to vector<8xf32>
    %63 = vector.shape_cast %62 : vector<8xf32> to vector<8x1xf32>
    %64 = tpu.reciprocal %63 {approx = true} : vector<8x1xf32> -> vector<8x1xf32>
    %65 = vector.broadcast %64 : vector<8x1xf32> to vector<8x8xf32>
    %66 = arith.mulf %61, %65 : vector<8x8xf32>
    %67 = arith.truncf %66 : vector<8x8xf32> to vector<8x8xbf16>
    %cst_22 = arith.constant dense<0.000000e+00> : vector<8x8xf32>
    %68 = tpu.matmul %67, %54, %cst_22 {dimension_numbers = #tpu.dot_dimension_numbers<[1], [0], [0], [1], [0, 0, 1, 1], [], []>} : vector<8x8xbf16>, vector<8x8xbf16>, vector<8x8xf32> -> vector<8x8xf32>
    %69 = arith.truncf %68 : vector<8x8xf32> to vector<8x8xbf16>
    %70 = vector.extract_strided_slice %10 {offsets = [16, 0], sizes = [8, 32], strides = [1, 1]} : vector<32x32xbf16> to vector<8x32xbf16>
    %cst_23 = arith.constant dense<0.000000e+00> : vector<8x32xf32>
    %71 = tpu.matmul %69, %70, %cst_23 {dimension_numbers = #tpu.dot_dimension_numbers<[1], [0], [0], [1], [0, 0, 1, 1], [], []>} : vector<8x8xbf16>, vector<8x32xbf16>, vector<8x32xf32> -> vector<8x32xf32>
    %72 = arith.addf %51, %71 : vector<8x32xf32>
    %73 = vector.extract_strided_slice %1 {offsets = [0, 24], sizes = [8, 8], strides = [1, 1]} : vector<8x32xbf16> to vector<8x8xbf16>
    %74 = vector.extract_strided_slice %4 {offsets = [0, 24], sizes = [8, 8], strides = [1, 1]} : vector<8x32xbf16> to vector<8x8xbf16>
    %75 = vector.extract_strided_slice %5 {offsets = [0, 24], sizes = [8, 8], strides = [1, 1]} : vector<8x32xbf16> to vector<8x8xbf16>
    %cst_24 = arith.constant dense<0.000000e+00> : vector<8x8xf32>
    %76 = tpu.matmul %73, %74, %cst_24 {dimension_numbers = #tpu.dot_dimension_numbers<[1], [1], [0], [0], [0, 0, 1, 0], [], []>} : vector<8x8xbf16>, vector<8x8xbf16>, vector<8x8xf32> -> vector<8x8xf32>
    %77 = arith.addf %76, %9 : vector<8x8xf32>
    %cst_25 = arith.constant dense<0xFF800000> : vector<8xf32>
    %78 = vector.multi_reduction <maximumf>, %77, %cst_25 [1] : vector<8x8xf32> to vector<8xf32>
    %79 = vector.shape_cast %78 : vector<8xf32> to vector<8x1xf32>
    %80 = vector.broadcast %79 : vector<8x1xf32> to vector<8x8xf32>
    %81 = arith.subf %77, %80 : vector<8x8xf32>
    %82 = math.exp %81 : vector<8x8xf32>
    %cst_26 = arith.constant dense<0.000000e+00> : vector<8xf32>
    %83 = vector.multi_reduction <add>, %82, %cst_26 [1] : vector<8x8xf32> to vector<8xf32>
    %84 = vector.shape_cast %83 : vector<8xf32> to vector<8x1xf32>
    %85 = tpu.reciprocal %84 {approx = true} : vector<8x1xf32> -> vector<8x1xf32>
    %86 = vector.broadcast %85 : vector<8x1xf32> to vector<8x8xf32>
    %87 = arith.mulf %82, %86 : vector<8x8xf32>
    %88 = arith.truncf %87 : vector<8x8xf32> to vector<8x8xbf16>
    %cst_27 = arith.constant dense<0.000000e+00> : vector<8x8xf32>
    %89 = tpu.matmul %88, %75, %cst_27 {dimension_numbers = #tpu.dot_dimension_numbers<[1], [0], [0], [1], [0, 0, 1, 1], [], []>} : vector<8x8xbf16>, vector<8x8xbf16>, vector<8x8xf32> -> vector<8x8xf32>
    %90 = arith.truncf %89 : vector<8x8xf32> to vector<8x8xbf16>
    %91 = vector.extract_strided_slice %10 {offsets = [24, 0], sizes = [8, 32], strides = [1, 1]} : vector<32x32xbf16> to vector<8x32xbf16>
    %cst_28 = arith.constant dense<0.000000e+00> : vector<8x32xf32>
    %92 = tpu.matmul %90, %91, %cst_28 {dimension_numbers = #tpu.dot_dimension_numbers<[1], [0], [0], [1], [0, 0, 1, 1], [], []>} : vector<8x8xbf16>, vector<8x32xbf16>, vector<8x32xf32> -> vector<8x32xf32>
    %93 = arith.addf %72, %92 : vector<8x32xf32>
    %c0_29 = arith.constant 0 : index
    %c0_30 = arith.constant 0 : index
    %94 = vector.load %arg7[%c0_29, %c0_30] : memref<1x32xf32, #tpu.memory_space<vmem>>, vector<1x32xf32>
    %95 = vector.broadcast %94 : vector<1x32xf32> to vector<8x32xf32>
    %96 = arith.addf %93, %95 : vector<8x32xf32>
    %c0_31 = arith.constant 0 : index
    %c0_32 = arith.constant 0 : index
    %c0_33 = arith.constant 0 : index
    %97 = vector.load %arg5[%c0_31, %c0_32, %c0_33] : memref<1x8x32xbf16, #tpu.memory_space<vmem>>, vector<1x8x32xbf16>
    %98 = vector.shape_cast %97 : vector<1x8x32xbf16> to vector<8x32xbf16>
    %99 = arith.extf %98 : vector<8x32xbf16> to vector<8x32xf32>
    %100 = arith.addf %99, %96 : vector<8x32xf32>
    %cst_34 = arith.constant dense<0.000000e+00> : vector<8xf32>
    %101 = vector.multi_reduction <add>, %100, %cst_34 [1] : vector<8x32xf32> to vector<8xf32>
    %102 = vector.shape_cast %101 : vector<8xf32> to vector<8x1xf32>
    %cst_35 = arith.constant 3.200000e+01 : f32
    %103 = vector.broadcast %cst_35 : f32 to vector<8x1xf32>
    %104 = arith.divf %102, %103 : vector<8x1xf32>
    %105 = vector.broadcast %104 : vector<8x1xf32> to vector<8x32xf32>
    %106 = arith.subf %100, %105 : vector<8x32xf32>
    %107 = arith.mulf %106, %106 : vector<8x32xf32>
    %cst_36 = arith.constant dense<0.000000e+00> : vector<8xf32>
    %108 = vector.multi_reduction <add>, %107, %cst_36 [1] : vector<8x32xf32> to vector<8xf32>
    %109 = vector.shape_cast %108 : vector<8xf32> to vector<8x1xf32>
    %cst_37 = arith.constant 3.200000e+01 : f32
    %110 = vector.broadcast %cst_37 : f32 to vector<8x1xf32>
    %111 = arith.divf %109, %110 : vector<8x1xf32>
    %112 = vector.broadcast %104 : vector<8x1xf32> to vector<8x32xf32>
    %113 = arith.subf %100, %112 : vector<8x32xf32>
    %cst_38 = arith.constant 9.99999974E-6 : f32
    %114 = vector.broadcast %cst_38 : f32 to vector<8x1xf32>
    %115 = arith.addf %111, %114 : vector<8x1xf32>
    %116 = math.rsqrt %115 : vector<8x1xf32>
    %117 = vector.broadcast %116 : vector<8x1xf32> to vector<8x32xf32>
    %118 = arith.mulf %113, %117 : vector<8x32xf32>
    %c0_39 = arith.constant 0 : index
    %c0_40 = arith.constant 0 : index
    %119 = vector.load %arg8[%c0_39, %c0_40] : memref<1x32xf32, #tpu.memory_space<vmem>>, vector<1x32xf32>
    %120 = vector.broadcast %119 : vector<1x32xf32> to vector<8x32xf32>
    %121 = arith.mulf %118, %120 : vector<8x32xf32>
    %c0_41 = arith.constant 0 : index
    %c0_42 = arith.constant 0 : index
    %122 = vector.load %arg9[%c0_41, %c0_42] : memref<1x32xf32, #tpu.memory_space<vmem>>, vector<1x32xf32>
    %123 = vector.broadcast %122 : vector<1x32xf32> to vector<8x32xf32>
    %124 = arith.addf %121, %123 : vector<8x32xf32>
    %125 = arith.truncf %124 : vector<8x32xf32> to vector<8x32xbf16>
    %c0_43 = arith.constant 0 : index
    %c0_44 = arith.constant 0 : index
    %c0_45 = arith.constant 0 : index
    %126 = vector.load %arg10[%c0_43, %c0_44, %c0_45] : memref<1x8x32xbf16, #tpu.memory_space<vmem>>, vector<1x8x32xbf16>
    %127 = vector.shape_cast %126 : vector<1x8x32xbf16> to vector<8x32xbf16>
    %128 = vector.shape_cast %125 : vector<8x32xbf16> to vector<1x8x32xbf16>
    tpu.vector_store %arg10[%c0_43, %c0_44, %c0_45], %128 {strides = array<i32>} : memref<1x8x32xbf16, #tpu.memory_space<vmem>>, vector<1x8x32xbf16>,
    return
  }
  func.func @transform_0(%arg0: i32, %arg1: i32) -> (i32, i32, i32) {
    %c0_i32 = arith.constant 0 : i32
    %c0_i32_0 = arith.constant 0 : i32
    return %arg0, %arg1, %c0_i32 : i32, i32, i32
  }
  func.func @transform_1(%arg0: i32, %arg1: i32) -> (i32, i32, i32) {
    %c0_i32 = arith.constant 0 : i32
    %c0_i32_0 = arith.constant 0 : i32
    %c0_i32_1 = arith.constant 0 : i32
    return %arg0, %c0_i32, %c0_i32_0 : i32, i32, i32
  }
  func.func @transform_2(%arg0: i32, %arg1: i32) -> (i32, i32, i32) {
    %c0_i32 = arith.constant 0 : i32
    %c0_i32_0 = arith.constant 0 : i32
    %c0_i32_1 = arith.constant 0 : i32
    return %arg0, %c0_i32, %c0_i32_0 : i32, i32, i32
  }
  func.func @transform_3(%arg0: i32, %arg1: i32) -> (i32, i32, i32) {
    %c0_i32 = arith.constant 0 : i32
    %c0_i32_0 = arith.constant 0 : i32
    return %arg0, %arg1, %c0_i32 : i32, i32, i32
  }
  func.func @transform_4(%arg0: i32, %arg1: i32) -> (i32, i32) {
    %c0_i32 = arith.constant 0 : i32
    %c0_i32_0 = arith.constant 0 : i32
    %c0_i32_1 = arith.constant 0 : i32
    return %c0_i32, %c0_i32_0 : i32, i32
  }
  func.func @transform_5(%arg0: i32, %arg1: i32) -> (i32, i32) {
    %c0_i32 = arith.constant 0 : i32
    %c0_i32_0 = arith.constant 0 : i32
    %c0_i32_1 = arith.constant 0 : i32
    return %c0_i32, %c0_i32_0 : i32, i32
  }
  func.func @transform_6(%arg0: i32, %arg1: i32) -> (i32, i32) {
    %c0_i32 = arith.constant 0 : i32
    %c0_i32_0 = arith.constant 0 : i32
    %c0_i32_1 = arith.constant 0 : i32
    return %c0_i32, %c0_i32_0 : i32, i32
  }
  func.func @transform_7(%arg0: i32, %arg1: i32) -> (i32, i32) {
    %c0_i32 = arith.constant 0 : i32
    %c0_i32_0 = arith.constant 0 : i32
    %c0_i32_1 = arith.constant 0 : i32
    return %c0_i32, %c0_i32_0 : i32, i32
  }
  func.func @transform_8(%arg0: i32, %arg1: i32) -> (i32, i32, i32) {
    %c0_i32 = arith.constant 0 : i32
    %c0_i32_0 = arith.constant 0 : i32
    return %arg0, %arg1, %c0_i32 : i32, i32, i32
  }
}

module attributes {stable_mosaic.version = 11 : i64} {
  func.func @_ffn_ln_kernel(%arg0: i32, %arg1: memref<16x32xbf16, #tpu.memory_space<vmem>>, %arg2: memref<32x64xbf16, #tpu.memory_space<vmem>>, %arg3: memref<1x64xf32, #tpu.memory_space<vmem>>, %arg4: memref<64x32xbf16, #tpu.memory_space<vmem>>, %arg5: memref<1x32xf32, #tpu.memory_space<vmem>>, %arg6: memref<1x32xf32, #tpu.memory_space<vmem>>, %arg7: memref<1x32xf32, #tpu.memory_space<vmem>>, %arg8: memref<16x32xbf16, #tpu.memory_space<vmem>>) attributes {dimension_semantics = [#tpu.dimension_semantics<parallel>], iteration_bounds = array<i64: 1>, scalar_prefetch = 0 : i64, scratch_operands = 0 : i64, tpu.core_type = #tpu.core_type<tc>, window_params = [{transform_indices = @transform_0, window_bounds = array<i64: 16, 32>}, {pipeline_mode = #tpu.pipeline_mode<synchronous>, transform_indices = @transform_1, window_bounds = array<i64: 32, 64>}, {pipeline_mode = #tpu.pipeline_mode<synchronous>, transform_indices = @transform_2, window_bounds = array<i64: 1, 64>}, {pipeline_mode = #tpu.pipeline_mode<synchronous>, transform_indices = @transform_3, window_bounds = array<i64: 64, 32>}, {pipeline_mode = #tpu.pipeline_mode<synchronous>, transform_indices = @transform_4, window_bounds = array<i64: 1, 32>}, {pipeline_mode = #tpu.pipeline_mode<synchronous>, transform_indices = @transform_5, window_bounds = array<i64: 1, 32>}, {pipeline_mode = #tpu.pipeline_mode<synchronous>, transform_indices = @transform_6, window_bounds = array<i64: 1, 32>}, {transform_indices = @transform_7, window_bounds = array<i64: 16, 32>}]} {
    %c0 = arith.constant 0 : index
    %c0_0 = arith.constant 0 : index
    %0 = vector.load %arg1[%c0, %c0_0] : memref<16x32xbf16, #tpu.memory_space<vmem>>, vector<16x32xbf16>
    %c0_1 = arith.constant 0 : index
    %c0_2 = arith.constant 0 : index
    %1 = vector.load %arg2[%c0_1, %c0_2] : memref<32x64xbf16, #tpu.memory_space<vmem>>, vector<32x64xbf16>
    %cst = arith.constant dense<0.000000e+00> : vector<16x64xf32>
    %2 = tpu.matmul %0, %1, %cst {dimension_numbers = #tpu.dot_dimension_numbers<[1], [0], [0], [1], [0, 0, 1, 1], [], []>} : vector<16x32xbf16>, vector<32x64xbf16>, vector<16x64xf32> -> vector<16x64xf32>
    %c0_3 = arith.constant 0 : index
    %c0_4 = arith.constant 0 : index
    %3 = vector.load %arg3[%c0_3, %c0_4] : memref<1x64xf32, #tpu.memory_space<vmem>>, vector<1x64xf32>
    %4 = vector.broadcast %3 : vector<1x64xf32> to vector<16x64xf32>
    %5 = arith.addf %2, %4 : vector<16x64xf32>
    %cst_5 = arith.constant 0.000000e+00 : f32
    %6 = vector.broadcast %cst_5 : f32 to vector<16x64xf32>
    %7 = arith.maximumf %5, %6 : vector<16x64xf32>
    %8 = arith.truncf %7 : vector<16x64xf32> to vector<16x64xbf16>
    %c0_6 = arith.constant 0 : index
    %c0_7 = arith.constant 0 : index
    %9 = vector.load %arg4[%c0_6, %c0_7] : memref<64x32xbf16, #tpu.memory_space<vmem>>, vector<64x32xbf16>
    %cst_8 = arith.constant dense<0.000000e+00> : vector<16x32xf32>
    %10 = tpu.matmul %8, %9, %cst_8 {dimension_numbers = #tpu.dot_dimension_numbers<[1], [0], [0], [1], [0, 0, 1, 1], [], []>} : vector<16x64xbf16>, vector<64x32xbf16>, vector<16x32xf32> -> vector<16x32xf32>
    %c0_9 = arith.constant 0 : index
    %c0_10 = arith.constant 0 : index
    %11 = vector.load %arg5[%c0_9, %c0_10] : memref<1x32xf32, #tpu.memory_space<vmem>>, vector<1x32xf32>
    %12 = vector.broadcast %11 : vector<1x32xf32> to vector<16x32xf32>
    %13 = arith.addf %10, %12 : vector<16x32xf32>
    %14 = arith.extf %0 : vector<16x32xbf16> to vector<16x32xf32>
    %15 = arith.addf %14, %13 : vector<16x32xf32>
    %cst_11 = arith.constant dense<0.000000e+00> : vector<16xf32>
    %16 = vector.multi_reduction <add>, %15, %cst_11 [1] : vector<16x32xf32> to vector<16xf32>
    %17 = vector.shape_cast %16 : vector<16xf32> to vector<16x1xf32>
    %cst_12 = arith.constant 3.200000e+01 : f32
    %18 = vector.broadcast %cst_12 : f32 to vector<16x1xf32>
    %19 = arith.divf %17, %18 : vector<16x1xf32>
    %20 = vector.broadcast %19 : vector<16x1xf32> to vector<16x32xf32>
    %21 = arith.subf %15, %20 : vector<16x32xf32>
    %22 = arith.mulf %21, %21 : vector<16x32xf32>
    %cst_13 = arith.constant dense<0.000000e+00> : vector<16xf32>
    %23 = vector.multi_reduction <add>, %22, %cst_13 [1] : vector<16x32xf32> to vector<16xf32>
    %24 = vector.shape_cast %23 : vector<16xf32> to vector<16x1xf32>
    %cst_14 = arith.constant 3.200000e+01 : f32
    %25 = vector.broadcast %cst_14 : f32 to vector<16x1xf32>
    %26 = arith.divf %24, %25 : vector<16x1xf32>
    %27 = vector.broadcast %19 : vector<16x1xf32> to vector<16x32xf32>
    %28 = arith.subf %15, %27 : vector<16x32xf32>
    %cst_15 = arith.constant 9.99999974E-6 : f32
    %29 = vector.broadcast %cst_15 : f32 to vector<16x1xf32>
    %30 = arith.addf %26, %29 : vector<16x1xf32>
    %31 = math.rsqrt %30 : vector<16x1xf32>
    %32 = vector.broadcast %31 : vector<16x1xf32> to vector<16x32xf32>
    %33 = arith.mulf %28, %32 : vector<16x32xf32>
    %c0_16 = arith.constant 0 : index
    %c0_17 = arith.constant 0 : index
    %34 = vector.load %arg6[%c0_16, %c0_17] : memref<1x32xf32, #tpu.memory_space<vmem>>, vector<1x32xf32>
    %35 = vector.broadcast %34 : vector<1x32xf32> to vector<16x32xf32>
    %36 = arith.mulf %33, %35 : vector<16x32xf32>
    %c0_18 = arith.constant 0 : index
    %c0_19 = arith.constant 0 : index
    %37 = vector.load %arg7[%c0_18, %c0_19] : memref<1x32xf32, #tpu.memory_space<vmem>>, vector<1x32xf32>
    %38 = vector.broadcast %37 : vector<1x32xf32> to vector<16x32xf32>
    %39 = arith.addf %36, %38 : vector<16x32xf32>
    %40 = arith.truncf %39 : vector<16x32xf32> to vector<16x32xbf16>
    %c0_20 = arith.constant 0 : index
    %c0_21 = arith.constant 0 : index
    %41 = vector.load %arg8[%c0_20, %c0_21] : memref<16x32xbf16, #tpu.memory_space<vmem>>, vector<16x32xbf16>
    tpu.vector_store %arg8[%c0_20, %c0_21], %40 {strides = array<i32>} : memref<16x32xbf16, #tpu.memory_space<vmem>>, vector<16x32xbf16>,
    return
  }
  func.func @transform_0(%arg0: i32) -> (i32, i32) {
    %c0_i32 = arith.constant 0 : i32
    %c0_i32_0 = arith.constant 0 : i32
    return %arg0, %c0_i32 : i32, i32
  }
  func.func @transform_1(%arg0: i32) -> (i32, i32) {
    %c0_i32 = arith.constant 0 : i32
    %c0_i32_0 = arith.constant 0 : i32
    %c0_i32_1 = arith.constant 0 : i32
    return %c0_i32, %c0_i32_0 : i32, i32
  }
  func.func @transform_2(%arg0: i32) -> (i32, i32) {
    %c0_i32 = arith.constant 0 : i32
    %c0_i32_0 = arith.constant 0 : i32
    %c0_i32_1 = arith.constant 0 : i32
    return %c0_i32, %c0_i32_0 : i32, i32
  }
  func.func @transform_3(%arg0: i32) -> (i32, i32) {
    %c0_i32 = arith.constant 0 : i32
    %c0_i32_0 = arith.constant 0 : i32
    %c0_i32_1 = arith.constant 0 : i32
    return %c0_i32, %c0_i32_0 : i32, i32
  }
  func.func @transform_4(%arg0: i32) -> (i32, i32) {
    %c0_i32 = arith.constant 0 : i32
    %c0_i32_0 = arith.constant 0 : i32
    %c0_i32_1 = arith.constant 0 : i32
    return %c0_i32, %c0_i32_0 : i32, i32
  }
  func.func @transform_5(%arg0: i32) -> (i32, i32) {
    %c0_i32 = arith.constant 0 : i32
    %c0_i32_0 = arith.constant 0 : i32
    %c0_i32_1 = arith.constant 0 : i32
    return %c0_i32, %c0_i32_0 : i32, i32
  }
  func.func @transform_6(%arg0: i32) -> (i32, i32) {
    %c0_i32 = arith.constant 0 : i32
    %c0_i32_0 = arith.constant 0 : i32
    %c0_i32_1 = arith.constant 0 : i32
    return %c0_i32, %c0_i32_0 : i32, i32
  }
  func.func @transform_7(%arg0: i32) -> (i32, i32) {
    %c0_i32 = arith.constant 0 : i32
    %c0_i32_0 = arith.constant 0 : i32
    return %arg0, %c0_i32 : i32, i32
  }
}

module attributes {stable_mosaic.version = 11 : i64} {
  func.func @_attn_kernel(%arg0: i32, %arg1: i32, %arg2: memref<1x8x32xbf16, #tpu.memory_space<vmem>>, %arg3: memref<1x8x64xbf16, #tpu.memory_space<vmem>>, %arg4: memref<1x1x8xf32, #tpu.memory_space<vmem>>, %arg5: memref<1x8x32xbf16, #tpu.memory_space<vmem>>, %arg6: memref<32x32xbf16, #tpu.memory_space<vmem>>, %arg7: memref<1x32xf32, #tpu.memory_space<vmem>>, %arg8: memref<1x32xf32, #tpu.memory_space<vmem>>, %arg9: memref<1x32xf32, #tpu.memory_space<vmem>>, %arg10: memref<1x8x32xbf16, #tpu.memory_space<vmem>>) attributes {dimension_semantics = [#tpu.dimension_semantics<parallel>, #tpu.dimension_semantics<parallel>], iteration_bounds = array<i64: 2, 1>, scalar_prefetch = 0 : i64, scratch_operands = 0 : i64, tpu.core_type = #tpu.core_type<tc>, window_params = [{transform_indices = @transform_0, window_bounds = array<i64: 1, 8, 32>}, {transform_indices = @transform_1, window_bounds = array<i64: 1, 8, 64>}, {transform_indices = @transform_2, window_bounds = array<i64: 1, 1, 8>}, {transform_indices = @transform_3, window_bounds = array<i64: 1, 8, 32>}, {pipeline_mode = #tpu.pipeline_mode<synchronous>, transform_indices = @transform_4, window_bounds = array<i64: 32, 32>}, {pipeline_mode = #tpu.pipeline_mode<synchronous>, transform_indices = @transform_5, window_bounds = array<i64: 1, 32>}, {pipeline_mode = #tpu.pipeline_mode<synchronous>, transform_indices = @transform_6, window_bounds = array<i64: 1, 32>}, {pipeline_mode = #tpu.pipeline_mode<synchronous>, transform_indices = @transform_7, window_bounds = array<i64: 1, 32>}, {transform_indices = @transform_8, window_bounds = array<i64: 1, 8, 32>}]} {
    %c0 = arith.constant 0 : index
    %c0_0 = arith.constant 0 : index
    %c0_1 = arith.constant 0 : index
    %0 = vector.load %arg2[%c0, %c0_0, %c0_1] : memref<1x8x32xbf16, #tpu.memory_space<vmem>>, vector<1x8x32xbf16>
    %1 = vector.shape_cast %0 : vector<1x8x32xbf16> to vector<8x32xbf16>
    %c0_2 = arith.constant 0 : index
    %c0_3 = arith.constant 0 : index
    %c0_4 = arith.constant 0 : index
    %2 = vector.load %arg3[%c0_2, %c0_3, %c0_4] : memref<1x8x64xbf16, #tpu.memory_space<vmem>>, vector<1x8x64xbf16>
    %3 = vector.shape_cast %2 : vector<1x8x64xbf16> to vector<8x64xbf16>
    %4 = vector.extract_strided_slice %3 {offsets = [0, 0], sizes = [8, 32], strides = [1, 1]} : vector<8x64xbf16> to vector<8x32xbf16>
    %5 = vector.extract_strided_slice %3 {offsets = [0, 32], sizes = [8, 32], strides = [1, 1]} : vector<8x64xbf16> to vector<8x32xbf16>
    %c0_5 = arith.constant 0 : index
    %c0_6 = arith.constant 0 : index
    %c0_7 = arith.constant 0 : index
    %6 = vector.load %arg4[%c0_5, %c0_6, %c0_7] : memref<1x1x8xf32, #tpu.memory_space<vmem>>, vector<1x1x8xf32>
    %7 = vector.shape_cast %6 : vector<1x1x8xf32> to vector<1x8xf32>
    %8 = vector.shape_cast %7 : vector<1x8xf32> to vector<1x8xf32>
    %9 = vector.broadcast %8 : vector<1x8xf32> to vector<8x8xf32>
    %c8_i32 = arith.constant 8 : i32
    %10 = arith.muli %arg1, %c8_i32 : i32
    %11 = tpu.iota {dimensions = array<i32: 0>} : vector<8x8xi32>
    %12 = vector.broadcast %10 : i32 to vector<8x8xi32>
    %13 = arith.addi %12, %11 : vector<8x8xi32>
    %14 = tpu.iota {dimensions = array<i32: 1>} : vector<8x8xi32>
    %15 = arith.cmpi sle, %14, %13 : vector<8x8xi32>
    %cst = arith.constant -1.000000e+09 : f32
    %16 = vector.broadcast %cst : f32 to vector<8x8xf32>
    %17 = arith.select %15, %9, %16 : vector<8x8xi1>, vector<8x8xf32>
    %c0_8 = arith.constant 0 : index
    %c0_9 = arith.constant 0 : index
    %18 = vector.load %arg6[%c0_8, %c0_9] : memref<32x32xbf16, #tpu.memory_space<vmem>>, vector<32x32xbf16>
    %19 = vector.extract_strided_slice %1 {offsets = [0, 0], sizes = [8, 8], strides = [1, 1]} : vector<8x32xbf16> to vector<8x8xbf16>
    %20 = vector.extract_strided_slice %4 {offsets = [0, 0], sizes = [8, 8], strides = [1, 1]} : vector<8x32xbf16> to vector<8x8xbf16>
    %21 = vector.extract_strided_slice %5 {offsets = [0, 0], sizes = [8, 8], strides = [1, 1]} : vector<8x32xbf16> to vector<8x8xbf16>
    %cst_10 = arith.constant dense<0.000000e+00> : vector<8x8xf32>
    %22 = tpu.matmul %19, %20, %cst_10 {dimension_numbers = #tpu.dot_dimension_numbers<[1], [1], [0], [0], [0, 0, 1, 0], [], []>} : vector<8x8xbf16>, vector<8x8xbf16>, vector<8x8xf32> -> vector<8x8xf32>
    %23 = arith.addf %22, %17 : vector<8x8xf32>
    %cst_11 = arith.constant dense<0xFF800000> : vector<8xf32>
    %24 = vector.multi_reduction <maximumf>, %23, %cst_11 [1] : vector<8x8xf32> to vector<8xf32>
    %25 = vector.shape_cast %24 : vector<8xf32> to vector<8x1xf32>
    %26 = vector.broadcast %25 : vector<8x1xf32> to vector<8x8xf32>
    %27 = arith.subf %23, %26 : vector<8x8xf32>
    %28 = math.exp %27 : vector<8x8xf32>
    %cst_12 = arith.constant dense<0.000000e+00> : vector<8xf32>
    %29 = vector.multi_reduction <add>, %28, %cst_12 [1] : vector<8x8xf32> to vector<8xf32>
    %30 = vector.shape_cast %29 : vector<8xf32> to vector<8x1xf32>
    %31 = tpu.reciprocal %30 {approx = true} : vector<8x1xf32> -> vector<8x1xf32>
    %32 = vector.broadcast %31 : vector<8x1xf32> to vector<8x8xf32>
    %33 = arith.mulf %28, %32 : vector<8x8xf32>
    %34 = arith.truncf %33 : vector<8x8xf32> to vector<8x8xbf16>
    %cst_13 = arith.constant dense<0.000000e+00> : vector<8x8xf32>
    %35 = tpu.matmul %34, %21, %cst_13 {dimension_numbers = #tpu.dot_dimension_numbers<[1], [0], [0], [1], [0, 0, 1, 1], [], []>} : vector<8x8xbf16>, vector<8x8xbf16>, vector<8x8xf32> -> vector<8x8xf32>
    %36 = arith.truncf %35 : vector<8x8xf32> to vector<8x8xbf16>
    %37 = vector.extract_strided_slice %18 {offsets = [0, 0], sizes = [8, 32], strides = [1, 1]} : vector<32x32xbf16> to vector<8x32xbf16>
    %cst_14 = arith.constant dense<0.000000e+00> : vector<8x32xf32>
    %38 = tpu.matmul %36, %37, %cst_14 {dimension_numbers = #tpu.dot_dimension_numbers<[1], [0], [0], [1], [0, 0, 1, 1], [], []>} : vector<8x8xbf16>, vector<8x32xbf16>, vector<8x32xf32> -> vector<8x32xf32>
    %39 = vector.extract_strided_slice %1 {offsets = [0, 8], sizes = [8, 8], strides = [1, 1]} : vector<8x32xbf16> to vector<8x8xbf16>
    %40 = vector.extract_strided_slice %4 {offsets = [0, 8], sizes = [8, 8], strides = [1, 1]} : vector<8x32xbf16> to vector<8x8xbf16>
    %41 = vector.extract_strided_slice %5 {offsets = [0, 8], sizes = [8, 8], strides = [1, 1]} : vector<8x32xbf16> to vector<8x8xbf16>
    %cst_15 = arith.constant dense<0.000000e+00> : vector<8x8xf32>
    %42 = tpu.matmul %39, %40, %cst_15 {dimension_numbers = #tpu.dot_dimension_numbers<[1], [1], [0], [0], [0, 0, 1, 0], [], []>} : vector<8x8xbf16>, vector<8x8xbf16>, vector<8x8xf32> -> vector<8x8xf32>
    %43 = arith.addf %42, %17 : vector<8x8xf32>
    %cst_16 = arith.constant dense<0xFF800000> : vector<8xf32>
    %44 = vector.multi_reduction <maximumf>, %43, %cst_16 [1] : vector<8x8xf32> to vector<8xf32>
    %45 = vector.shape_cast %44 : vector<8xf32> to vector<8x1xf32>
    %46 = vector.broadcast %45 : vector<8x1xf32> to vector<8x8xf32>
    %47 = arith.subf %43, %46 : vector<8x8xf32>
    %48 = math.exp %47 : vector<8x8xf32>
    %cst_17 = arith.constant dense<0.000000e+00> : vector<8xf32>
    %49 = vector.multi_reduction <add>, %48, %cst_17 [1] : vector<8x8xf32> to vector<8xf32>
    %50 = vector.shape_cast %49 : vector<8xf32> to vector<8x1xf32>
    %51 = tpu.reciprocal %50 {approx = true} : vector<8x1xf32> -> vector<8x1xf32>
    %52 = vector.broadcast %51 : vector<8x1xf32> to vector<8x8xf32>
    %53 = arith.mulf %48, %52 : vector<8x8xf32>
    %54 = arith.truncf %53 : vector<8x8xf32> to vector<8x8xbf16>
    %cst_18 = arith.constant dense<0.000000e+00> : vector<8x8xf32>
    %55 = tpu.matmul %54, %41, %cst_18 {dimension_numbers = #tpu.dot_dimension_numbers<[1], [0], [0], [1], [0, 0, 1, 1], [], []>} : vector<8x8xbf16>, vector<8x8xbf16>, vector<8x8xf32> -> vector<8x8xf32>
    %56 = arith.truncf %55 : vector<8x8xf32> to vector<8x8xbf16>
    %57 = vector.extract_strided_slice %18 {offsets = [8, 0], sizes = [8, 32], strides = [1, 1]} : vector<32x32xbf16> to vector<8x32xbf16>
    %cst_19 = arith.constant dense<0.000000e+00> : vector<8x32xf32>
    %58 = tpu.matmul %56, %57, %cst_19 {dimension_numbers = #tpu.dot_dimension_numbers<[1], [0], [0], [1], [0, 0, 1, 1], [], []>} : vector<8x8xbf16>, vector<8x32xbf16>, vector<8x32xf32> -> vector<8x32xf32>
    %59 = arith.addf %38, %58 : vector<8x32xf32>
    %60 = vector.extract_strided_slice %1 {offsets = [0, 16], sizes = [8, 8], strides = [1, 1]} : vector<8x32xbf16> to vector<8x8xbf16>
    %61 = vector.extract_strided_slice %4 {offsets = [0, 16], sizes = [8, 8], strides = [1, 1]} : vector<8x32xbf16> to vector<8x8xbf16>
    %62 = vector.extract_strided_slice %5 {offsets = [0, 16], sizes = [8, 8], strides = [1, 1]} : vector<8x32xbf16> to vector<8x8xbf16>
    %cst_20 = arith.constant dense<0.000000e+00> : vector<8x8xf32>
    %63 = tpu.matmul %60, %61, %cst_20 {dimension_numbers = #tpu.dot_dimension_numbers<[1], [1], [0], [0], [0, 0, 1, 0], [], []>} : vector<8x8xbf16>, vector<8x8xbf16>, vector<8x8xf32> -> vector<8x8xf32>
    %64 = arith.addf %63, %17 : vector<8x8xf32>
    %cst_21 = arith.constant dense<0xFF800000> : vector<8xf32>
    %65 = vector.multi_reduction <maximumf>, %64, %cst_21 [1] : vector<8x8xf32> to vector<8xf32>
    %66 = vector.shape_cast %65 : vector<8xf32> to vector<8x1xf32>
    %67 = vector.broadcast %66 : vector<8x1xf32> to vector<8x8xf32>
    %68 = arith.subf %64, %67 : vector<8x8xf32>
    %69 = math.exp %68 : vector<8x8xf32>
    %cst_22 = arith.constant dense<0.000000e+00> : vector<8xf32>
    %70 = vector.multi_reduction <add>, %69, %cst_22 [1] : vector<8x8xf32> to vector<8xf32>
    %71 = vector.shape_cast %70 : vector<8xf32> to vector<8x1xf32>
    %72 = tpu.reciprocal %71 {approx = true} : vector<8x1xf32> -> vector<8x1xf32>
    %73 = vector.broadcast %72 : vector<8x1xf32> to vector<8x8xf32>
    %74 = arith.mulf %69, %73 : vector<8x8xf32>
    %75 = arith.truncf %74 : vector<8x8xf32> to vector<8x8xbf16>
    %cst_23 = arith.constant dense<0.000000e+00> : vector<8x8xf32>
    %76 = tpu.matmul %75, %62, %cst_23 {dimension_numbers = #tpu.dot_dimension_numbers<[1], [0], [0], [1], [0, 0, 1, 1], [], []>} : vector<8x8xbf16>, vector<8x8xbf16>, vector<8x8xf32> -> vector<8x8xf32>
    %77 = arith.truncf %76 : vector<8x8xf32> to vector<8x8xbf16>
    %78 = vector.extract_strided_slice %18 {offsets = [16, 0], sizes = [8, 32], strides = [1, 1]} : vector<32x32xbf16> to vector<8x32xbf16>
    %cst_24 = arith.constant dense<0.000000e+00> : vector<8x32xf32>
    %79 = tpu.matmul %77, %78, %cst_24 {dimension_numbers = #tpu.dot_dimension_numbers<[1], [0], [0], [1], [0, 0, 1, 1], [], []>} : vector<8x8xbf16>, vector<8x32xbf16>, vector<8x32xf32> -> vector<8x32xf32>
    %80 = arith.addf %59, %79 : vector<8x32xf32>
    %81 = vector.extract_strided_slice %1 {offsets = [0, 24], sizes = [8, 8], strides = [1, 1]} : vector<8x32xbf16> to vector<8x8xbf16>
    %82 = vector.extract_strided_slice %4 {offsets = [0, 24], sizes = [8, 8], strides = [1, 1]} : vector<8x32xbf16> to vector<8x8xbf16>
    %83 = vector.extract_strided_slice %5 {offsets = [0, 24], sizes = [8, 8], strides = [1, 1]} : vector<8x32xbf16> to vector<8x8xbf16>
    %cst_25 = arith.constant dense<0.000000e+00> : vector<8x8xf32>
    %84 = tpu.matmul %81, %82, %cst_25 {dimension_numbers = #tpu.dot_dimension_numbers<[1], [1], [0], [0], [0, 0, 1, 0], [], []>} : vector<8x8xbf16>, vector<8x8xbf16>, vector<8x8xf32> -> vector<8x8xf32>
    %85 = arith.addf %84, %17 : vector<8x8xf32>
    %cst_26 = arith.constant dense<0xFF800000> : vector<8xf32>
    %86 = vector.multi_reduction <maximumf>, %85, %cst_26 [1] : vector<8x8xf32> to vector<8xf32>
    %87 = vector.shape_cast %86 : vector<8xf32> to vector<8x1xf32>
    %88 = vector.broadcast %87 : vector<8x1xf32> to vector<8x8xf32>
    %89 = arith.subf %85, %88 : vector<8x8xf32>
    %90 = math.exp %89 : vector<8x8xf32>
    %cst_27 = arith.constant dense<0.000000e+00> : vector<8xf32>
    %91 = vector.multi_reduction <add>, %90, %cst_27 [1] : vector<8x8xf32> to vector<8xf32>
    %92 = vector.shape_cast %91 : vector<8xf32> to vector<8x1xf32>
    %93 = tpu.reciprocal %92 {approx = true} : vector<8x1xf32> -> vector<8x1xf32>
    %94 = vector.broadcast %93 : vector<8x1xf32> to vector<8x8xf32>
    %95 = arith.mulf %90, %94 : vector<8x8xf32>
    %96 = arith.truncf %95 : vector<8x8xf32> to vector<8x8xbf16>
    %cst_28 = arith.constant dense<0.000000e+00> : vector<8x8xf32>
    %97 = tpu.matmul %96, %83, %cst_28 {dimension_numbers = #tpu.dot_dimension_numbers<[1], [0], [0], [1], [0, 0, 1, 1], [], []>} : vector<8x8xbf16>, vector<8x8xbf16>, vector<8x8xf32> -> vector<8x8xf32>
    %98 = arith.truncf %97 : vector<8x8xf32> to vector<8x8xbf16>
    %99 = vector.extract_strided_slice %18 {offsets = [24, 0], sizes = [8, 32], strides = [1, 1]} : vector<32x32xbf16> to vector<8x32xbf16>
    %cst_29 = arith.constant dense<0.000000e+00> : vector<8x32xf32>
    %100 = tpu.matmul %98, %99, %cst_29 {dimension_numbers = #tpu.dot_dimension_numbers<[1], [0], [0], [1], [0, 0, 1, 1], [], []>} : vector<8x8xbf16>, vector<8x32xbf16>, vector<8x32xf32> -> vector<8x32xf32>
    %101 = arith.addf %80, %100 : vector<8x32xf32>
    %c0_30 = arith.constant 0 : index
    %c0_31 = arith.constant 0 : index
    %102 = vector.load %arg7[%c0_30, %c0_31] : memref<1x32xf32, #tpu.memory_space<vmem>>, vector<1x32xf32>
    %103 = vector.broadcast %102 : vector<1x32xf32> to vector<8x32xf32>
    %104 = arith.addf %101, %103 : vector<8x32xf32>
    %c0_32 = arith.constant 0 : index
    %c0_33 = arith.constant 0 : index
    %c0_34 = arith.constant 0 : index
    %105 = vector.load %arg5[%c0_32, %c0_33, %c0_34] : memref<1x8x32xbf16, #tpu.memory_space<vmem>>, vector<1x8x32xbf16>
    %106 = vector.shape_cast %105 : vector<1x8x32xbf16> to vector<8x32xbf16>
    %107 = arith.extf %106 : vector<8x32xbf16> to vector<8x32xf32>
    %108 = arith.addf %107, %104 : vector<8x32xf32>
    %cst_35 = arith.constant dense<0.000000e+00> : vector<8xf32>
    %109 = vector.multi_reduction <add>, %108, %cst_35 [1] : vector<8x32xf32> to vector<8xf32>
    %110 = vector.shape_cast %109 : vector<8xf32> to vector<8x1xf32>
    %cst_36 = arith.constant 3.200000e+01 : f32
    %111 = vector.broadcast %cst_36 : f32 to vector<8x1xf32>
    %112 = arith.divf %110, %111 : vector<8x1xf32>
    %113 = vector.broadcast %112 : vector<8x1xf32> to vector<8x32xf32>
    %114 = arith.subf %108, %113 : vector<8x32xf32>
    %115 = arith.mulf %114, %114 : vector<8x32xf32>
    %cst_37 = arith.constant dense<0.000000e+00> : vector<8xf32>
    %116 = vector.multi_reduction <add>, %115, %cst_37 [1] : vector<8x32xf32> to vector<8xf32>
    %117 = vector.shape_cast %116 : vector<8xf32> to vector<8x1xf32>
    %cst_38 = arith.constant 3.200000e+01 : f32
    %118 = vector.broadcast %cst_38 : f32 to vector<8x1xf32>
    %119 = arith.divf %117, %118 : vector<8x1xf32>
    %120 = vector.broadcast %112 : vector<8x1xf32> to vector<8x32xf32>
    %121 = arith.subf %108, %120 : vector<8x32xf32>
    %cst_39 = arith.constant 9.99999974E-6 : f32
    %122 = vector.broadcast %cst_39 : f32 to vector<8x1xf32>
    %123 = arith.addf %119, %122 : vector<8x1xf32>
    %124 = math.rsqrt %123 : vector<8x1xf32>
    %125 = vector.broadcast %124 : vector<8x1xf32> to vector<8x32xf32>
    %126 = arith.mulf %121, %125 : vector<8x32xf32>
    %c0_40 = arith.constant 0 : index
    %c0_41 = arith.constant 0 : index
    %127 = vector.load %arg8[%c0_40, %c0_41] : memref<1x32xf32, #tpu.memory_space<vmem>>, vector<1x32xf32>
    %128 = vector.broadcast %127 : vector<1x32xf32> to vector<8x32xf32>
    %129 = arith.mulf %126, %128 : vector<8x32xf32>
    %c0_42 = arith.constant 0 : index
    %c0_43 = arith.constant 0 : index
    %130 = vector.load %arg9[%c0_42, %c0_43] : memref<1x32xf32, #tpu.memory_space<vmem>>, vector<1x32xf32>
    %131 = vector.broadcast %130 : vector<1x32xf32> to vector<8x32xf32>
    %132 = arith.addf %129, %131 : vector<8x32xf32>
    %133 = arith.truncf %132 : vector<8x32xf32> to vector<8x32xbf16>
    %c0_44 = arith.constant 0 : index
    %c0_45 = arith.constant 0 : index
    %c0_46 = arith.constant 0 : index
    %134 = vector.load %arg10[%c0_44, %c0_45, %c0_46] : memref<1x8x32xbf16, #tpu.memory_space<vmem>>, vector<1x8x32xbf16>
    %135 = vector.shape_cast %134 : vector<1x8x32xbf16> to vector<8x32xbf16>
    %136 = vector.shape_cast %133 : vector<8x32xbf16> to vector<1x8x32xbf16>
    tpu.vector_store %arg10[%c0_44, %c0_45, %c0_46], %136 {strides = array<i32>} : memref<1x8x32xbf16, #tpu.memory_space<vmem>>, vector<1x8x32xbf16>,
    return
  }
  func.func @transform_0(%arg0: i32, %arg1: i32) -> (i32, i32, i32) {
    %c0_i32 = arith.constant 0 : i32
    %c0_i32_0 = arith.constant 0 : i32
    return %arg0, %arg1, %c0_i32 : i32, i32, i32
  }
  func.func @transform_1(%arg0: i32, %arg1: i32) -> (i32, i32, i32) {
    %c0_i32 = arith.constant 0 : i32
    %c0_i32_0 = arith.constant 0 : i32
    %c0_i32_1 = arith.constant 0 : i32
    return %arg0, %c0_i32, %c0_i32_0 : i32, i32, i32
  }
  func.func @transform_2(%arg0: i32, %arg1: i32) -> (i32, i32, i32) {
    %c0_i32 = arith.constant 0 : i32
    %c0_i32_0 = arith.constant 0 : i32
    %c0_i32_1 = arith.constant 0 : i32
    return %arg0, %c0_i32, %c0_i32_0 : i32, i32, i32
  }
  func.func @transform_3(%arg0: i32, %arg1: i32) -> (i32, i32, i32) {
    %c0_i32 = arith.constant 0 : i32
    %c0_i32_0 = arith.constant 0 : i32
    return %arg0, %arg1, %c0_i32 : i32, i32, i32
  }
  func.func @transform_4(%arg0: i32, %arg1: i32) -> (i32, i32) {
    %c0_i32 = arith.constant 0 : i32
    %c0_i32_0 = arith.constant 0 : i32
    %c0_i32_1 = arith.constant 0 : i32
    return %c0_i32, %c0_i32_0 : i32, i32
  }
  func.func @transform_5(%arg0: i32, %arg1: i32) -> (i32, i32) {
    %c0_i32 = arith.constant 0 : i32
    %c0_i32_0 = arith.constant 0 : i32
    %c0_i32_1 = arith.constant 0 : i32
    return %c0_i32, %c0_i32_0 : i32, i32
  }
  func.func @transform_6(%arg0: i32, %arg1: i32) -> (i32, i32) {
    %c0_i32 = arith.constant 0 : i32
    %c0_i32_0 = arith.constant 0 : i32
    %c0_i32_1 = arith.constant 0 : i32
    return %c0_i32, %c0_i32_0 : i32, i32
  }
  func.func @transform_7(%arg0: i32, %arg1: i32) -> (i32, i32) {
    %c0_i32 = arith.constant 0 : i32
    %c0_i32_0 = arith.constant 0 : i32
    %c0_i32_1 = arith.constant 0 : i32
    return %c0_i32, %c0_i32_0 : i32, i32
  }
  func.func @transform_8(%arg0: i32, %arg1: i32) -> (i32, i32, i32) {
    %c0_i32 = arith.constant 0 : i32
    %c0_i32_0 = arith.constant 0 : i32
    return %arg0, %arg1, %c0_i32 : i32, i32, i32
  }
}

module attributes {stable_mosaic.version = 11 : i64} {
  func.func @_linear_kernel(%arg0: i32, %arg1: memref<16x32xbf16, #tpu.memory_space<vmem>>, %arg2: memref<32x32xbf16, #tpu.memory_space<vmem>>, %arg3: memref<1x32xf32, #tpu.memory_space<vmem>>, %arg4: memref<16x32xbf16, #tpu.memory_space<vmem>>) attributes {dimension_semantics = [#tpu.dimension_semantics<parallel>], iteration_bounds = array<i64: 1>, scalar_prefetch = 0 : i64, scratch_operands = 0 : i64, tpu.core_type = #tpu.core_type<tc>, window_params = [{transform_indices = @transform_0, window_bounds = array<i64: 16, 32>}, {pipeline_mode = #tpu.pipeline_mode<synchronous>, transform_indices = @transform_1, window_bounds = array<i64: 32, 32>}, {pipeline_mode = #tpu.pipeline_mode<synchronous>, transform_indices = @transform_2, window_bounds = array<i64: 1, 32>}, {transform_indices = @transform_3, window_bounds = array<i64: 16, 32>}]} {
    %c0 = arith.constant 0 : index
    %c0_0 = arith.constant 0 : index
    %0 = vector.load %arg1[%c0, %c0_0] : memref<16x32xbf16, #tpu.memory_space<vmem>>, vector<16x32xbf16>
    %c0_1 = arith.constant 0 : index
    %c0_2 = arith.constant 0 : index
    %1 = vector.load %arg2[%c0_1, %c0_2] : memref<32x32xbf16, #tpu.memory_space<vmem>>, vector<32x32xbf16>
    %cst = arith.constant dense<0.000000e+00> : vector<16x32xf32>
    %2 = tpu.matmul %0, %1, %cst {dimension_numbers = #tpu.dot_dimension_numbers<[1], [0], [0], [1], [0, 0, 1, 1], [], []>} : vector<16x32xbf16>, vector<32x32xbf16>, vector<16x32xf32> -> vector<16x32xf32>
    %c0_3 = arith.constant 0 : index
    %c0_4 = arith.constant 0 : index
    %3 = vector.load %arg3[%c0_3, %c0_4] : memref<1x32xf32, #tpu.memory_space<vmem>>, vector<1x32xf32>
    %4 = vector.broadcast %3 : vector<1x32xf32> to vector<16x32xf32>
    %5 = arith.addf %2, %4 : vector<16x32xf32>
    %6 = arith.truncf %5 : vector<16x32xf32> to vector<16x32xbf16>
    %c0_5 = arith.constant 0 : index
    %c0_6 = arith.constant 0 : index
    %7 = vector.load %arg4[%c0_5, %c0_6] : memref<16x32xbf16, #tpu.memory_space<vmem>>, vector<16x32xbf16>
    tpu.vector_store %arg4[%c0_5, %c0_6], %6 {strides = array<i32>} : memref<16x32xbf16, #tpu.memory_space<vmem>>, vector<16x32xbf16>,
    return
  }
  func.func @transform_0(%arg0: i32) -> (i32, i32) {
    %c0_i32 = arith.constant 0 : i32
    %c0_i32_0 = arith.constant 0 : i32
    return %arg0, %c0_i32 : i32, i32
  }
  func.func @transform_1(%arg0: i32) -> (i32, i32) {
    %c0_i32 = arith.constant 0 : i32
    %c0_i32_0 = arith.constant 0 : i32
    %c0_i32_1 = arith.constant 0 : i32
    return %c0_i32, %c0_i32_0 : i32, i32
  }
  func.func @transform_2(%arg0: i32) -> (i32, i32) {
    %c0_i32 = arith.constant 0 : i32
    %c0_i32_0 = arith.constant 0 : i32
    %c0_i32_1 = arith.constant 0 : i32
    return %c0_i32, %c0_i32_0 : i32, i32
  }
  func.func @transform_3(%arg0: i32) -> (i32, i32) {
    %c0_i32 = arith.constant 0 : i32
    %c0_i32_0 = arith.constant 0 : i32
    return %arg0, %c0_i32 : i32, i32
  }
}

module attributes {stable_mosaic.version = 11 : i64} {
  func.func @_linear_kernel(%arg0: i32, %arg1: memref<16x32xbf16, #tpu.memory_space<vmem>>, %arg2: memref<32x64xbf16, #tpu.memory_space<vmem>>, %arg3: memref<1x64xf32, #tpu.memory_space<vmem>>, %arg4: memref<16x64xbf16, #tpu.memory_space<vmem>>) attributes {dimension_semantics = [#tpu.dimension_semantics<parallel>], iteration_bounds = array<i64: 1>, scalar_prefetch = 0 : i64, scratch_operands = 0 : i64, tpu.core_type = #tpu.core_type<tc>, window_params = [{transform_indices = @transform_0, window_bounds = array<i64: 16, 32>}, {pipeline_mode = #tpu.pipeline_mode<synchronous>, transform_indices = @transform_1, window_bounds = array<i64: 32, 64>}, {pipeline_mode = #tpu.pipeline_mode<synchronous>, transform_indices = @transform_2, window_bounds = array<i64: 1, 64>}, {transform_indices = @transform_3, window_bounds = array<i64: 16, 64>}]} {
    %c0 = arith.constant 0 : index
    %c0_0 = arith.constant 0 : index
    %0 = vector.load %arg1[%c0, %c0_0] : memref<16x32xbf16, #tpu.memory_space<vmem>>, vector<16x32xbf16>
    %c0_1 = arith.constant 0 : index
    %c0_2 = arith.constant 0 : index
    %1 = vector.load %arg2[%c0_1, %c0_2] : memref<32x64xbf16, #tpu.memory_space<vmem>>, vector<32x64xbf16>
    %cst = arith.constant dense<0.000000e+00> : vector<16x64xf32>
    %2 = tpu.matmul %0, %1, %cst {dimension_numbers = #tpu.dot_dimension_numbers<[1], [0], [0], [1], [0, 0, 1, 1], [], []>} : vector<16x32xbf16>, vector<32x64xbf16>, vector<16x64xf32> -> vector<16x64xf32>
    %c0_3 = arith.constant 0 : index
    %c0_4 = arith.constant 0 : index
    %3 = vector.load %arg3[%c0_3, %c0_4] : memref<1x64xf32, #tpu.memory_space<vmem>>, vector<1x64xf32>
    %4 = vector.broadcast %3 : vector<1x64xf32> to vector<16x64xf32>
    %5 = arith.addf %2, %4 : vector<16x64xf32>
    %6 = arith.truncf %5 : vector<16x64xf32> to vector<16x64xbf16>
    %c0_5 = arith.constant 0 : index
    %c0_6 = arith.constant 0 : index
    %7 = vector.load %arg4[%c0_5, %c0_6] : memref<16x64xbf16, #tpu.memory_space<vmem>>, vector<16x64xbf16>
    tpu.vector_store %arg4[%c0_5, %c0_6], %6 {strides = array<i32>} : memref<16x64xbf16, #tpu.memory_space<vmem>>, vector<16x64xbf16>,
    return
  }
  func.func @transform_0(%arg0: i32) -> (i32, i32) {
    %c0_i32 = arith.constant 0 : i32
    %c0_i32_0 = arith.constant 0 : i32
    return %arg0, %c0_i32 : i32, i32
  }
  func.func @transform_1(%arg0: i32) -> (i32, i32) {
    %c0_i32 = arith.constant 0 : i32
    %c0_i32_0 = arith.constant 0 : i32
    %c0_i32_1 = arith.constant 0 : i32
    return %c0_i32, %c0_i32_0 : i32, i32
  }
  func.func @transform_2(%arg0: i32) -> (i32, i32) {
    %c0_i32 = arith.constant 0 : i32
    %c0_i32_0 = arith.constant 0 : i32
    %c0_i32_1 = arith.constant 0 : i32
    return %c0_i32, %c0_i32_0 : i32, i32
  }
  func.func @transform_3(%arg0: i32) -> (i32, i32) {
    %c0_i32 = arith.constant 0 : i32
    %c0_i32_0 = arith.constant 0 : i32
    return %arg0, %c0_i32 : i32, i32
  }
}

module attributes {stable_mosaic.version = 11 : i64} {
  func.func @_attn_kernel(%arg0: i32, %arg1: i32, %arg2: memref<1x8x32xbf16, #tpu.memory_space<vmem>>, %arg3: memref<1x8x64xbf16, #tpu.memory_space<vmem>>, %arg4: memref<1x1x8xf32, #tpu.memory_space<vmem>>, %arg5: memref<1x8x32xbf16, #tpu.memory_space<vmem>>, %arg6: memref<32x32xbf16, #tpu.memory_space<vmem>>, %arg7: memref<1x32xf32, #tpu.memory_space<vmem>>, %arg8: memref<1x32xf32, #tpu.memory_space<vmem>>, %arg9: memref<1x32xf32, #tpu.memory_space<vmem>>, %arg10: memref<1x8x32xbf16, #tpu.memory_space<vmem>>) attributes {dimension_semantics = [#tpu.dimension_semantics<parallel>, #tpu.dimension_semantics<parallel>], iteration_bounds = array<i64: 2, 1>, scalar_prefetch = 0 : i64, scratch_operands = 0 : i64, tpu.core_type = #tpu.core_type<tc>, window_params = [{transform_indices = @transform_0, window_bounds = array<i64: 1, 8, 32>}, {transform_indices = @transform_1, window_bounds = array<i64: 1, 8, 64>}, {transform_indices = @transform_2, window_bounds = array<i64: 1, 1, 8>}, {transform_indices = @transform_3, window_bounds = array<i64: 1, 8, 32>}, {pipeline_mode = #tpu.pipeline_mode<synchronous>, transform_indices = @transform_4, window_bounds = array<i64: 32, 32>}, {pipeline_mode = #tpu.pipeline_mode<synchronous>, transform_indices = @transform_5, window_bounds = array<i64: 1, 32>}, {pipeline_mode = #tpu.pipeline_mode<synchronous>, transform_indices = @transform_6, window_bounds = array<i64: 1, 32>}, {pipeline_mode = #tpu.pipeline_mode<synchronous>, transform_indices = @transform_7, window_bounds = array<i64: 1, 32>}, {transform_indices = @transform_8, window_bounds = array<i64: 1, 8, 32>}]} {
    %c0 = arith.constant 0 : index
    %c0_0 = arith.constant 0 : index
    %c0_1 = arith.constant 0 : index
    %0 = vector.load %arg2[%c0, %c0_0, %c0_1] : memref<1x8x32xbf16, #tpu.memory_space<vmem>>, vector<1x8x32xbf16>
    %1 = vector.shape_cast %0 : vector<1x8x32xbf16> to vector<8x32xbf16>
    %c0_2 = arith.constant 0 : index
    %c0_3 = arith.constant 0 : index
    %c0_4 = arith.constant 0 : index
    %2 = vector.load %arg3[%c0_2, %c0_3, %c0_4] : memref<1x8x64xbf16, #tpu.memory_space<vmem>>, vector<1x8x64xbf16>
    %3 = vector.shape_cast %2 : vector<1x8x64xbf16> to vector<8x64xbf16>
    %4 = vector.extract_strided_slice %3 {offsets = [0, 0], sizes = [8, 32], strides = [1, 1]} : vector<8x64xbf16> to vector<8x32xbf16>
    %5 = vector.extract_strided_slice %3 {offsets = [0, 32], sizes = [8, 32], strides = [1, 1]} : vector<8x64xbf16> to vector<8x32xbf16>
    %c0_5 = arith.constant 0 : index
    %c0_6 = arith.constant 0 : index
    %c0_7 = arith.constant 0 : index
    %6 = vector.load %arg4[%c0_5, %c0_6, %c0_7] : memref<1x1x8xf32, #tpu.memory_space<vmem>>, vector<1x1x8xf32>
    %7 = vector.shape_cast %6 : vector<1x1x8xf32> to vector<1x8xf32>
    %8 = vector.shape_cast %7 : vector<1x8xf32> to vector<1x8xf32>
    %9 = vector.broadcast %8 : vector<1x8xf32> to vector<8x8xf32>
    %c0_8 = arith.constant 0 : index
    %c0_9 = arith.constant 0 : index
    %10 = vector.load %arg6[%c0_8, %c0_9] : memref<32x32xbf16, #tpu.memory_space<vmem>>, vector<32x32xbf16>
    %11 = vector.extract_strided_slice %1 {offsets = [0, 0], sizes = [8, 8], strides = [1, 1]} : vector<8x32xbf16> to vector<8x8xbf16>
    %12 = vector.extract_strided_slice %4 {offsets = [0, 0], sizes = [8, 8], strides = [1, 1]} : vector<8x32xbf16> to vector<8x8xbf16>
    %13 = vector.extract_strided_slice %5 {offsets = [0, 0], sizes = [8, 8], strides = [1, 1]} : vector<8x32xbf16> to vector<8x8xbf16>
    %cst = arith.constant dense<0.000000e+00> : vector<8x8xf32>
    %14 = tpu.matmul %11, %12, %cst {dimension_numbers = #tpu.dot_dimension_numbers<[1], [1], [0], [0], [0, 0, 1, 0], [], []>} : vector<8x8xbf16>, vector<8x8xbf16>, vector<8x8xf32> -> vector<8x8xf32>
    %15 = arith.addf %14, %9 : vector<8x8xf32>
    %cst_10 = arith.constant dense<0xFF800000> : vector<8xf32>
    %16 = vector.multi_reduction <maximumf>, %15, %cst_10 [1] : vector<8x8xf32> to vector<8xf32>
    %17 = vector.shape_cast %16 : vector<8xf32> to vector<8x1xf32>
    %18 = vector.broadcast %17 : vector<8x1xf32> to vector<8x8xf32>
    %19 = arith.subf %15, %18 : vector<8x8xf32>
    %20 = math.exp %19 : vector<8x8xf32>
    %cst_11 = arith.constant dense<0.000000e+00> : vector<8xf32>
    %21 = vector.multi_reduction <add>, %20, %cst_11 [1] : vector<8x8xf32> to vector<8xf32>
    %22 = vector.shape_cast %21 : vector<8xf32> to vector<8x1xf32>
    %23 = tpu.reciprocal %22 {approx = true} : vector<8x1xf32> -> vector<8x1xf32>
    %24 = vector.broadcast %23 : vector<8x1xf32> to vector<8x8xf32>
    %25 = arith.mulf %20, %24 : vector<8x8xf32>
    %26 = arith.truncf %25 : vector<8x8xf32> to vector<8x8xbf16>
    %cst_12 = arith.constant dense<0.000000e+00> : vector<8x8xf32>
    %27 = tpu.matmul %26, %13, %cst_12 {dimension_numbers = #tpu.dot_dimension_numbers<[1], [0], [0], [1], [0, 0, 1, 1], [], []>} : vector<8x8xbf16>, vector<8x8xbf16>, vector<8x8xf32> -> vector<8x8xf32>
    %28 = arith.truncf %27 : vector<8x8xf32> to vector<8x8xbf16>
    %29 = vector.extract_strided_slice %10 {offsets = [0, 0], sizes = [8, 32], strides = [1, 1]} : vector<32x32xbf16> to vector<8x32xbf16>
    %cst_13 = arith.constant dense<0.000000e+00> : vector<8x32xf32>
    %30 = tpu.matmul %28, %29, %cst_13 {dimension_numbers = #tpu.dot_dimension_numbers<[1], [0], [0], [1], [0, 0, 1, 1], [], []>} : vector<8x8xbf16>, vector<8x32xbf16>, vector<8x32xf32> -> vector<8x32xf32>
    %31 = vector.extract_strided_slice %1 {offsets = [0, 8], sizes = [8, 8], strides = [1, 1]} : vector<8x32xbf16> to vector<8x8xbf16>
    %32 = vector.extract_strided_slice %4 {offsets = [0, 8], sizes = [8, 8], strides = [1, 1]} : vector<8x32xbf16> to vector<8x8xbf16>
    %33 = vector.extract_strided_slice %5 {offsets = [0, 8], sizes = [8, 8], strides = [1, 1]} : vector<8x32xbf16> to vector<8x8xbf16>
    %cst_14 = arith.constant dense<0.000000e+00> : vector<8x8xf32>
    %34 = tpu.matmul %31, %32, %cst_14 {dimension_numbers = #tpu.dot_dimension_numbers<[1], [1], [0], [0], [0, 0, 1, 0], [], []>} : vector<8x8xbf16>, vector<8x8xbf16>, vector<8x8xf32> -> vector<8x8xf32>
    %35 = arith.addf %34, %9 : vector<8x8xf32>
    %cst_15 = arith.constant dense<0xFF800000> : vector<8xf32>
    %36 = vector.multi_reduction <maximumf>, %35, %cst_15 [1] : vector<8x8xf32> to vector<8xf32>
    %37 = vector.shape_cast %36 : vector<8xf32> to vector<8x1xf32>
    %38 = vector.broadcast %37 : vector<8x1xf32> to vector<8x8xf32>
    %39 = arith.subf %35, %38 : vector<8x8xf32>
    %40 = math.exp %39 : vector<8x8xf32>
    %cst_16 = arith.constant dense<0.000000e+00> : vector<8xf32>
    %41 = vector.multi_reduction <add>, %40, %cst_16 [1] : vector<8x8xf32> to vector<8xf32>
    %42 = vector.shape_cast %41 : vector<8xf32> to vector<8x1xf32>
    %43 = tpu.reciprocal %42 {approx = true} : vector<8x1xf32> -> vector<8x1xf32>
    %44 = vector.broadcast %43 : vector<8x1xf32> to vector<8x8xf32>
    %45 = arith.mulf %40, %44 : vector<8x8xf32>
    %46 = arith.truncf %45 : vector<8x8xf32> to vector<8x8xbf16>
    %cst_17 = arith.constant dense<0.000000e+00> : vector<8x8xf32>
    %47 = tpu.matmul %46, %33, %cst_17 {dimension_numbers = #tpu.dot_dimension_numbers<[1], [0], [0], [1], [0, 0, 1, 1], [], []>} : vector<8x8xbf16>, vector<8x8xbf16>, vector<8x8xf32> -> vector<8x8xf32>
    %48 = arith.truncf %47 : vector<8x8xf32> to vector<8x8xbf16>
    %49 = vector.extract_strided_slice %10 {offsets = [8, 0], sizes = [8, 32], strides = [1, 1]} : vector<32x32xbf16> to vector<8x32xbf16>
    %cst_18 = arith.constant dense<0.000000e+00> : vector<8x32xf32>
    %50 = tpu.matmul %48, %49, %cst_18 {dimension_numbers = #tpu.dot_dimension_numbers<[1], [0], [0], [1], [0, 0, 1, 1], [], []>} : vector<8x8xbf16>, vector<8x32xbf16>, vector<8x32xf32> -> vector<8x32xf32>
    %51 = arith.addf %30, %50 : vector<8x32xf32>
    %52 = vector.extract_strided_slice %1 {offsets = [0, 16], sizes = [8, 8], strides = [1, 1]} : vector<8x32xbf16> to vector<8x8xbf16>
    %53 = vector.extract_strided_slice %4 {offsets = [0, 16], sizes = [8, 8], strides = [1, 1]} : vector<8x32xbf16> to vector<8x8xbf16>
    %54 = vector.extract_strided_slice %5 {offsets = [0, 16], sizes = [8, 8], strides = [1, 1]} : vector<8x32xbf16> to vector<8x8xbf16>
    %cst_19 = arith.constant dense<0.000000e+00> : vector<8x8xf32>
    %55 = tpu.matmul %52, %53, %cst_19 {dimension_numbers = #tpu.dot_dimension_numbers<[1], [1], [0], [0], [0, 0, 1, 0], [], []>} : vector<8x8xbf16>, vector<8x8xbf16>, vector<8x8xf32> -> vector<8x8xf32>
    %56 = arith.addf %55, %9 : vector<8x8xf32>
    %cst_20 = arith.constant dense<0xFF800000> : vector<8xf32>
    %57 = vector.multi_reduction <maximumf>, %56, %cst_20 [1] : vector<8x8xf32> to vector<8xf32>
    %58 = vector.shape_cast %57 : vector<8xf32> to vector<8x1xf32>
    %59 = vector.broadcast %58 : vector<8x1xf32> to vector<8x8xf32>
    %60 = arith.subf %56, %59 : vector<8x8xf32>
    %61 = math.exp %60 : vector<8x8xf32>
    %cst_21 = arith.constant dense<0.000000e+00> : vector<8xf32>
    %62 = vector.multi_reduction <add>, %61, %cst_21 [1] : vector<8x8xf32> to vector<8xf32>
    %63 = vector.shape_cast %62 : vector<8xf32> to vector<8x1xf32>
    %64 = tpu.reciprocal %63 {approx = true} : vector<8x1xf32> -> vector<8x1xf32>
    %65 = vector.broadcast %64 : vector<8x1xf32> to vector<8x8xf32>
    %66 = arith.mulf %61, %65 : vector<8x8xf32>
    %67 = arith.truncf %66 : vector<8x8xf32> to vector<8x8xbf16>
    %cst_22 = arith.constant dense<0.000000e+00> : vector<8x8xf32>
    %68 = tpu.matmul %67, %54, %cst_22 {dimension_numbers = #tpu.dot_dimension_numbers<[1], [0], [0], [1], [0, 0, 1, 1], [], []>} : vector<8x8xbf16>, vector<8x8xbf16>, vector<8x8xf32> -> vector<8x8xf32>
    %69 = arith.truncf %68 : vector<8x8xf32> to vector<8x8xbf16>
    %70 = vector.extract_strided_slice %10 {offsets = [16, 0], sizes = [8, 32], strides = [1, 1]} : vector<32x32xbf16> to vector<8x32xbf16>
    %cst_23 = arith.constant dense<0.000000e+00> : vector<8x32xf32>
    %71 = tpu.matmul %69, %70, %cst_23 {dimension_numbers = #tpu.dot_dimension_numbers<[1], [0], [0], [1], [0, 0, 1, 1], [], []>} : vector<8x8xbf16>, vector<8x32xbf16>, vector<8x32xf32> -> vector<8x32xf32>
    %72 = arith.addf %51, %71 : vector<8x32xf32>
    %73 = vector.extract_strided_slice %1 {offsets = [0, 24], sizes = [8, 8], strides = [1, 1]} : vector<8x32xbf16> to vector<8x8xbf16>
    %74 = vector.extract_strided_slice %4 {offsets = [0, 24], sizes = [8, 8], strides = [1, 1]} : vector<8x32xbf16> to vector<8x8xbf16>
    %75 = vector.extract_strided_slice %5 {offsets = [0, 24], sizes = [8, 8], strides = [1, 1]} : vector<8x32xbf16> to vector<8x8xbf16>
    %cst_24 = arith.constant dense<0.000000e+00> : vector<8x8xf32>
    %76 = tpu.matmul %73, %74, %cst_24 {dimension_numbers = #tpu.dot_dimension_numbers<[1], [1], [0], [0], [0, 0, 1, 0], [], []>} : vector<8x8xbf16>, vector<8x8xbf16>, vector<8x8xf32> -> vector<8x8xf32>
    %77 = arith.addf %76, %9 : vector<8x8xf32>
    %cst_25 = arith.constant dense<0xFF800000> : vector<8xf32>
    %78 = vector.multi_reduction <maximumf>, %77, %cst_25 [1] : vector<8x8xf32> to vector<8xf32>
    %79 = vector.shape_cast %78 : vector<8xf32> to vector<8x1xf32>
    %80 = vector.broadcast %79 : vector<8x1xf32> to vector<8x8xf32>
    %81 = arith.subf %77, %80 : vector<8x8xf32>
    %82 = math.exp %81 : vector<8x8xf32>
    %cst_26 = arith.constant dense<0.000000e+00> : vector<8xf32>
    %83 = vector.multi_reduction <add>, %82, %cst_26 [1] : vector<8x8xf32> to vector<8xf32>
    %84 = vector.shape_cast %83 : vector<8xf32> to vector<8x1xf32>
    %85 = tpu.reciprocal %84 {approx = true} : vector<8x1xf32> -> vector<8x1xf32>
    %86 = vector.broadcast %85 : vector<8x1xf32> to vector<8x8xf32>
    %87 = arith.mulf %82, %86 : vector<8x8xf32>
    %88 = arith.truncf %87 : vector<8x8xf32> to vector<8x8xbf16>
    %cst_27 = arith.constant dense<0.000000e+00> : vector<8x8xf32>
    %89 = tpu.matmul %88, %75, %cst_27 {dimension_numbers = #tpu.dot_dimension_numbers<[1], [0], [0], [1], [0, 0, 1, 1], [], []>} : vector<8x8xbf16>, vector<8x8xbf16>, vector<8x8xf32> -> vector<8x8xf32>
    %90 = arith.truncf %89 : vector<8x8xf32> to vector<8x8xbf16>
    %91 = vector.extract_strided_slice %10 {offsets = [24, 0], sizes = [8, 32], strides = [1, 1]} : vector<32x32xbf16> to vector<8x32xbf16>
    %cst_28 = arith.constant dense<0.000000e+00> : vector<8x32xf32>
    %92 = tpu.matmul %90, %91, %cst_28 {dimension_numbers = #tpu.dot_dimension_numbers<[1], [0], [0], [1], [0, 0, 1, 1], [], []>} : vector<8x8xbf16>, vector<8x32xbf16>, vector<8x32xf32> -> vector<8x32xf32>
    %93 = arith.addf %72, %92 : vector<8x32xf32>
    %c0_29 = arith.constant 0 : index
    %c0_30 = arith.constant 0 : index
    %94 = vector.load %arg7[%c0_29, %c0_30] : memref<1x32xf32, #tpu.memory_space<vmem>>, vector<1x32xf32>
    %95 = vector.broadcast %94 : vector<1x32xf32> to vector<8x32xf32>
    %96 = arith.addf %93, %95 : vector<8x32xf32>
    %c0_31 = arith.constant 0 : index
    %c0_32 = arith.constant 0 : index
    %c0_33 = arith.constant 0 : index
    %97 = vector.load %arg5[%c0_31, %c0_32, %c0_33] : memref<1x8x32xbf16, #tpu.memory_space<vmem>>, vector<1x8x32xbf16>
    %98 = vector.shape_cast %97 : vector<1x8x32xbf16> to vector<8x32xbf16>
    %99 = arith.extf %98 : vector<8x32xbf16> to vector<8x32xf32>
    %100 = arith.addf %99, %96 : vector<8x32xf32>
    %cst_34 = arith.constant dense<0.000000e+00> : vector<8xf32>
    %101 = vector.multi_reduction <add>, %100, %cst_34 [1] : vector<8x32xf32> to vector<8xf32>
    %102 = vector.shape_cast %101 : vector<8xf32> to vector<8x1xf32>
    %cst_35 = arith.constant 3.200000e+01 : f32
    %103 = vector.broadcast %cst_35 : f32 to vector<8x1xf32>
    %104 = arith.divf %102, %103 : vector<8x1xf32>
    %105 = vector.broadcast %104 : vector<8x1xf32> to vector<8x32xf32>
    %106 = arith.subf %100, %105 : vector<8x32xf32>
    %107 = arith.mulf %106, %106 : vector<8x32xf32>
    %cst_36 = arith.constant dense<0.000000e+00> : vector<8xf32>
    %108 = vector.multi_reduction <add>, %107, %cst_36 [1] : vector<8x32xf32> to vector<8xf32>
    %109 = vector.shape_cast %108 : vector<8xf32> to vector<8x1xf32>
    %cst_37 = arith.constant 3.200000e+01 : f32
    %110 = vector.broadcast %cst_37 : f32 to vector<8x1xf32>
    %111 = arith.divf %109, %110 : vector<8x1xf32>
    %112 = vector.broadcast %104 : vector<8x1xf32> to vector<8x32xf32>
    %113 = arith.subf %100, %112 : vector<8x32xf32>
    %cst_38 = arith.constant 9.99999974E-6 : f32
    %114 = vector.broadcast %cst_38 : f32 to vector<8x1xf32>
    %115 = arith.addf %111, %114 : vector<8x1xf32>
    %116 = math.rsqrt %115 : vector<8x1xf32>
    %117 = vector.broadcast %116 : vector<8x1xf32> to vector<8x32xf32>
    %118 = arith.mulf %113, %117 : vector<8x32xf32>
    %c0_39 = arith.constant 0 : index
    %c0_40 = arith.constant 0 : index
    %119 = vector.load %arg8[%c0_39, %c0_40] : memref<1x32xf32, #tpu.memory_space<vmem>>, vector<1x32xf32>
    %120 = vector.broadcast %119 : vector<1x32xf32> to vector<8x32xf32>
    %121 = arith.mulf %118, %120 : vector<8x32xf32>
    %c0_41 = arith.constant 0 : index
    %c0_42 = arith.constant 0 : index
    %122 = vector.load %arg9[%c0_41, %c0_42] : memref<1x32xf32, #tpu.memory_space<vmem>>, vector<1x32xf32>
    %123 = vector.broadcast %122 : vector<1x32xf32> to vector<8x32xf32>
    %124 = arith.addf %121, %123 : vector<8x32xf32>
    %125 = arith.truncf %124 : vector<8x32xf32> to vector<8x32xbf16>
    %c0_43 = arith.constant 0 : index
    %c0_44 = arith.constant 0 : index
    %c0_45 = arith.constant 0 : index
    %126 = vector.load %arg10[%c0_43, %c0_44, %c0_45] : memref<1x8x32xbf16, #tpu.memory_space<vmem>>, vector<1x8x32xbf16>
    %127 = vector.shape_cast %126 : vector<1x8x32xbf16> to vector<8x32xbf16>
    %128 = vector.shape_cast %125 : vector<8x32xbf16> to vector<1x8x32xbf16>
    tpu.vector_store %arg10[%c0_43, %c0_44, %c0_45], %128 {strides = array<i32>} : memref<1x8x32xbf16, #tpu.memory_space<vmem>>, vector<1x8x32xbf16>,
    return
  }
  func.func @transform_0(%arg0: i32, %arg1: i32) -> (i32, i32, i32) {
    %c0_i32 = arith.constant 0 : i32
    %c0_i32_0 = arith.constant 0 : i32
    return %arg0, %arg1, %c0_i32 : i32, i32, i32
  }
  func.func @transform_1(%arg0: i32, %arg1: i32) -> (i32, i32, i32) {
    %c0_i32 = arith.constant 0 : i32
    %c0_i32_0 = arith.constant 0 : i32
    %c0_i32_1 = arith.constant 0 : i32
    return %arg0, %c0_i32, %c0_i32_0 : i32, i32, i32
  }
  func.func @transform_2(%arg0: i32, %arg1: i32) -> (i32, i32, i32) {
    %c0_i32 = arith.constant 0 : i32
    %c0_i32_0 = arith.constant 0 : i32
    %c0_i32_1 = arith.constant 0 : i32
    return %arg0, %c0_i32, %c0_i32_0 : i32, i32, i32
  }
  func.func @transform_3(%arg0: i32, %arg1: i32) -> (i32, i32, i32) {
    %c0_i32 = arith.constant 0 : i32
    %c0_i32_0 = arith.constant 0 : i32
    return %arg0, %arg1, %c0_i32 : i32, i32, i32
  }
  func.func @transform_4(%arg0: i32, %arg1: i32) -> (i32, i32) {
    %c0_i32 = arith.constant 0 : i32
    %c0_i32_0 = arith.constant 0 : i32
    %c0_i32_1 = arith.constant 0 : i32
    return %c0_i32, %c0_i32_0 : i32, i32
  }
  func.func @transform_5(%arg0: i32, %arg1: i32) -> (i32, i32) {
    %c0_i32 = arith.constant 0 : i32
    %c0_i32_0 = arith.constant 0 : i32
    %c0_i32_1 = arith.constant 0 : i32
    return %c0_i32, %c0_i32_0 : i32, i32
  }
  func.func @transform_6(%arg0: i32, %arg1: i32) -> (i32, i32) {
    %c0_i32 = arith.constant 0 : i32
    %c0_i32_0 = arith.constant 0 : i32
    %c0_i32_1 = arith.constant 0 : i32
    return %c0_i32, %c0_i32_0 : i32, i32
  }
  func.func @transform_7(%arg0: i32, %arg1: i32) -> (i32, i32) {
    %c0_i32 = arith.constant 0 : i32
    %c0_i32_0 = arith.constant 0 : i32
    %c0_i32_1 = arith.constant 0 : i32
    return %c0_i32, %c0_i32_0 : i32, i32
  }
  func.func @transform_8(%arg0: i32, %arg1: i32) -> (i32, i32, i32) {
    %c0_i32 = arith.constant 0 : i32
    %c0_i32_0 = arith.constant 0 : i32
    return %arg0, %arg1, %c0_i32 : i32, i32, i32
  }
}

module attributes {stable_mosaic.version = 11 : i64} {
  func.func @_linear_kernel(%arg0: i32, %arg1: i32, %arg2: memref<16x32xbf16, #tpu.memory_space<vmem>>, %arg3: memref<32x32xbf16, #tpu.memory_space<vmem>>, %arg4: memref<1x32xf32, #tpu.memory_space<vmem>>, %arg5: memref<16x32xf32, #tpu.memory_space<vmem>>) attributes {dimension_semantics = [#tpu.dimension_semantics<parallel>, #tpu.dimension_semantics<parallel>], iteration_bounds = array<i64: 1, 1>, scalar_prefetch = 0 : i64, scratch_operands = 0 : i64, tpu.core_type = #tpu.core_type<tc>, window_params = [{transform_indices = @transform_0, window_bounds = array<i64: 16, 32>}, {transform_indices = @transform_1, window_bounds = array<i64: 32, 32>}, {transform_indices = @transform_2, window_bounds = array<i64: 1, 32>}, {transform_indices = @transform_3, window_bounds = array<i64: 16, 32>}]} {
    %c0 = arith.constant 0 : index
    %c0_0 = arith.constant 0 : index
    %0 = vector.load %arg2[%c0, %c0_0] : memref<16x32xbf16, #tpu.memory_space<vmem>>, vector<16x32xbf16>
    %c0_1 = arith.constant 0 : index
    %c0_2 = arith.constant 0 : index
    %1 = vector.load %arg3[%c0_1, %c0_2] : memref<32x32xbf16, #tpu.memory_space<vmem>>, vector<32x32xbf16>
    %cst = arith.constant dense<0.000000e+00> : vector<16x32xf32>
    %2 = tpu.matmul %0, %1, %cst {dimension_numbers = #tpu.dot_dimension_numbers<[1], [0], [0], [1], [0, 0, 1, 1], [], []>} : vector<16x32xbf16>, vector<32x32xbf16>, vector<16x32xf32> -> vector<16x32xf32>
    %c0_3 = arith.constant 0 : index
    %c0_4 = arith.constant 0 : index
    %3 = vector.load %arg4[%c0_3, %c0_4] : memref<1x32xf32, #tpu.memory_space<vmem>>, vector<1x32xf32>
    %4 = vector.broadcast %3 : vector<1x32xf32> to vector<16x32xf32>
    %5 = arith.addf %2, %4 : vector<16x32xf32>
    %c0_5 = arith.constant 0 : index
    %c0_6 = arith.constant 0 : index
    %6 = vector.load %arg5[%c0_5, %c0_6] : memref<16x32xf32, #tpu.memory_space<vmem>>, vector<16x32xf32>
    tpu.vector_store %arg5[%c0_5, %c0_6], %5 {strides = array<i32>} : memref<16x32xf32, #tpu.memory_space<vmem>>, vector<16x32xf32>,
    return
  }
  func.func @transform_0(%arg0: i32, %arg1: i32) -> (i32, i32) {
    %c0_i32 = arith.constant 0 : i32
    %c0_i32_0 = arith.constant 0 : i32
    return %arg0, %c0_i32 : i32, i32
  }
  func.func @transform_1(%arg0: i32, %arg1: i32) -> (i32, i32) {
    %c0_i32 = arith.constant 0 : i32
    %c0_i32_0 = arith.constant 0 : i32
    return %c0_i32, %arg1 : i32, i32
  }
  func.func @transform_2(%arg0: i32, %arg1: i32) -> (i32, i32) {
    %c0_i32 = arith.constant 0 : i32
    %c0_i32_0 = arith.constant 0 : i32
    return %c0_i32, %arg1 : i32, i32
  }
  func.func @transform_3(%arg0: i32, %arg1: i32) -> (i32, i32) {
    %c0_i32 = arith.constant 0 : i32
    return %arg0, %arg1 : i32, i32
  }
}

</mosaic_0001>

<llo_original>
// kernel: classic_transformer_forward.19
$region0: #{classic_transformer_forward.19}
  #allocation0 [shape = 'u32[]', space=smem, size = 0x4, offset = 0x4, fixed_abs, tag = 'smem constant byte address 0x4 - core index']
  #allocation1 [shape = 'u32[72,128]{1,0:T(1,128)}', space=vmem, size = 0x9000, scoped, tag = 'internal scratch']
  %s0 = inlined_call_operand.vmem [shape: bf16[16,32], index: 0, kind: input, shape index: {}]
  %s1 = inlined_call_operand.vmem [shape: bf16[32,32], index: 1, kind: input, shape index: {}]
  %s2 = inlined_call_operand.vmem [shape: f32[1,32], index: 2, kind: input, shape index: {}]
  %s3 = inlined_call_operand.vmem [shape: bf16[32,64], index: 3, kind: input, shape index: {}]
  %s4 = inlined_call_operand.vmem [shape: f32[1,64], index: 4, kind: input, shape index: {}]
  %s5 = inlined_call_operand.vmem [shape: bf16[16,32], index: 5, kind: output, shape index: {0}]
  %s6 = inlined_call_operand.vmem [shape: bf16[16,64], index: 6, kind: output, shape index: {1}]
  %7 = xla_tuple %s5, %s6
  %s8 = sld [smem:[#allocation0]]
  $region38: #{classic_transformer_forward.19} parent=0
    _
  %s10 = ssub.s32 1, %s8
  %s11 = scalar_select 0, %s10, %s8
  // Predicated region
  $region2: #{classic_transformer_forward.19} parent=0 // pred_check
    _
  $region3: #{classic_transformer_forward.19} parent=0 // pred_check_branch
    %13 = sbr.rel (0) target = $region5
  $region4: #{classic_transformer_forward.19} parent=0 // pred_region
    _
  $region5: #{classic_transformer_forward.19} parent=0 // pred_fallthru
    _
  // Predicated region
  $region6: #{classic_transformer_forward.19} parent=0 // pred_check
    _
  $region7: #{classic_transformer_forward.19} parent=0 // pred_check_branch
    %15 = sbr.rel (0) target = $region9
  $region8: #{classic_transformer_forward.19} parent=0 // pred_region
    _
  $region9: #{classic_transformer_forward.19} parent=0 // pred_fallthru
    _
  // Predicated region
  $region10: #{classic_transformer_forward.19} parent=0 // pred_check
    _
  $region11: #{classic_transformer_forward.19} parent=0 // pred_check_branch
    %17 = sbr.rel (0) target = $region13
  $region12: #{classic_transformer_forward.19} parent=0 // pred_region
    _
  $region13: #{classic_transformer_forward.19} parent=0 // pred_fallthru
    _
  // Predicated region
  $region14: #{classic_transformer_forward.19} parent=0 // pred_check
    _
  $region15: #{classic_transformer_forward.19} parent=0 // pred_check_branch
    %19 = sbr.rel (0) target = $region17
  $region16: #{classic_transformer_forward.19} parent=0 // pred_region
    _
  $region17: #{classic_transformer_forward.19} parent=0 // pred_fallthru
    _
  // Predicated region
  $region18: #{classic_transformer_forward.19} parent=0 // pred_check
    _
  $region19: #{classic_transformer_forward.19} parent=0 // pred_check_branch
    %21 = sbr.rel (0) target = $region21
  $region20: #{classic_transformer_forward.19} parent=0 // pred_region
    _
  $region21: #{classic_transformer_forward.19} parent=0 // pred_fallthru
    _
  %v23 = vld [vmem:[%s0] sm:$0xf]
  %v24 = vld [vmem:[%s0 + $0x4] sm:$0xf]
  %v25 = vld [vmem:[%s1] sm:$0xf]
  %v26 = vld [vmem:[%s1 + $0x4] sm:$0xf]
  %v27 = vld [vmem:[%s1 + $0x8] sm:$0xf]
  %v28 = vld [vmem:[%s1 + $0xc] sm:$0xf]
  %v29 = vld [vmem:[%s2] sm:$0x1]
  %v31 = vperm.slane %v29, 0
  %v35 = vunpack.c.l.b16 %v23
  %v36 = vunpack.c.l.b16 %v24
  %v37 = vpack.c.b16 %v36, %v35
  %v42 = vunpack.c.l.b16 %v25
  %v43 = vunpack.c.l.b16 %v26
  %v44 = vunpack.c.l.b16 %v27
  %v45 = vunpack.c.l.b16 %v28
  %v46 = vpack.c.b16 %v43, %v42
  %v47 = vpack.c.b16 %v45, %v44
  %vm50 = vcmask 261120
  %v52 = vsel %vm50, %v37, 0
  %54 = vmatpush.bf16.msra.mxu0 0
  %55 = vmatpush.bf16.msra.mxu0 0
  %56 = vmatpush.bf16.msra.mxu0 0
  %57 = vmatpush.bf16.msra.mxu0 0
  %58 = vmatpush.bf16.msra.mxu0 0
  %59 = vmatpush.bf16.msra.mxu0 0
  %60 = vmatpush.bf16.msra.mxu0 %v47
  %61 = vmatpush.bf16.msra.mxu0 %v46
  %62 = vmatmul.bf16.gmra.mxu0 %v52
  %v63 = vpop.f32.mrf.mxu0
  %v64 = vadd.f32 %v31, %v63
  %v65 = vpop.f32.mrf.mxu0
  %v66 = vadd.f32 %v31, %v65
  %67 = vdwg.mxu0
  %v68 = vpack.c.bf16 %v64, %v64
  %v69 = vpack.c.bf16 %v66, %v66
  %vm70 = vcmask 257024
  %71 = vst.msk [vmem:[%s5] sm:$0xf] %vm70, %v68
  %72 = vst.msk [vmem:[%s5 + $0x4] sm:$0xf] %vm70, %v69
  %v73 = vld [vmem:[%s3] sm:$0xf]
  %v74 = vld [vmem:[%s3 + $0x4] sm:$0xf]
  %v75 = vld [vmem:[%s3 + $0x8] sm:$0xf]
  %v76 = vld [vmem:[%s3 + $0xc] sm:$0xf]
  %v77 = vld [vmem:[%s4] sm:$0x1]
  %v79 = vperm.slane %v77, 0
  %v85 = vunpack.c.l.b16 %v73
  %v86 = vunpack.c.l.b16 %v74
  %v87 = vunpack.c.l.b16 %v75
  %v88 = vunpack.c.l.b16 %v76
  %v89 = vpack.c.b16 %v86, %v85
  %v90 = vpack.c.b16 %v88, %v87
  %93 = vmatpush.bf16.msra.mxu0 0
  %94 = vmatpush.bf16.msra.mxu0 0
  %95 = vmatpush.bf16.msra.mxu0 0
  %96 = vmatpush.bf16.msra.mxu0 0
  %97 = vmatpush.bf16.msra.mxu0 0
  %98 = vmatpush.bf16.msra.mxu0 0
  %99 = vmatpush.bf16.msra.mxu0 %v90
  %100 = vmatpush.bf16.msra.mxu0 %v89
  %101 = vmatmul.bf16.gmra.mxu0 %v52
  %v102 = vpop.f32.mrf.mxu0
  %v103 = vadd.f32 %v79, %v102
  %v104 = vpop.f32.mrf.mxu0
  %v105 = vadd.f32 %v79, %v104
  %106 = vdwg.mxu0
  %v107 = vpack.c.bf16 %v103, %v103
  %v108 = vpack.c.bf16 %v105, %v105
  %vm109 = vcmask 519168
  %110 = vst.msk [vmem:[%s6] sm:$0xf] %vm109, %v107
  %111 = vst.msk [vmem:[%s6 + $0x4] sm:$0xf] %vm109, %v108
  // Predicated region
  $region22: #{classic_transformer_forward.19} parent=0 // pred_check
    _
  $region23: #{classic_transformer_forward.19} parent=0 // pred_check_branch
    %113 = sbr.rel (0) target = $region25
  $region24: #{classic_transformer_forward.19} parent=0 // pred_region
    _
  $region25: #{classic_transformer_forward.19} parent=0 // pred_fallthru
    _
  // Predicated region
  $region26: #{classic_transformer_forward.19} parent=0 // pred_check
    _
  $region27: #{classic_transformer_forward.19} parent=0 // pred_check_branch
    %115 = sbr.rel (0) target = $region29
  $region28: #{classic_transformer_forward.19} parent=0 // pred_region
    _
  $region29: #{classic_transformer_forward.19} parent=0 // pred_fallthru
    _
  // Predicated region
  $region30: #{classic_transformer_forward.19} parent=0 // pred_check
    _
  $region31: #{classic_transformer_forward.19} parent=0 // pred_check_branch
    %117 = sbr.rel (0) target = $region33
  $region32: #{classic_transformer_forward.19} parent=0 // pred_region
    _
  $region33: #{classic_transformer_forward.19} parent=0 // pred_fallthru
    _
  // Predicated region
  $region34: #{classic_transformer_forward.19} parent=0 // pred_check
    _
  $region35: #{classic_transformer_forward.19} parent=0 // pred_check_branch
    %119 = sbr.rel (0) target = $region37
  $region36: #{classic_transformer_forward.19} parent=0 // pred_region
    _
  $region37: #{classic_transformer_forward.19} parent=0 // pred_fallthru
    _

// kernel: classic_transformer_forward.21
$region0: #{classic_transformer_forward.21}
  #allocation0 [shape = 'u32[]', space=smem, size = 0x4, offset = 0x4, fixed_abs, tag = 'smem constant byte address 0x4 - core index']
  #allocation1 [shape = 'u32[72,128]{1,0:T(1,128)}', space=vmem, size = 0x9000, scoped, tag = 'internal scratch']
  %s0 = inlined_call_operand.vmem [shape: bf16[16,32], index: 0, kind: input, shape index: {}]
  %s1 = inlined_call_operand.vmem [shape: bf16[32,64], index: 1, kind: input, shape index: {}]
  %s2 = inlined_call_operand.vmem [shape: f32[1,64], index: 2, kind: input, shape index: {}]
  %s3 = inlined_call_operand.vmem [shape: bf16[64,32], index: 3, kind: input, shape index: {}]
  %s4 = inlined_call_operand.vmem [shape: f32[1,32], index: 4, kind: input, shape index: {}]
  %s5 = inlined_call_operand.vmem [shape: f32[1,32], index: 5, kind: input, shape index: {}]
  %s6 = inlined_call_operand.vmem [shape: f32[1,32], index: 6, kind: input, shape index: {}]
  %s7 = inlined_call_operand.vmem [shape: bf16[16,32], index: 7, kind: output, shape index: {}]
  %s8 = sld [smem:[#allocation0]]
  $region38: #{classic_transformer_forward.21} parent=0
    _
  %s10 = ssub.s32 1, %s8
  %s11 = scalar_select 0, %s10, %s8
  // Predicated region
  $region2: #{classic_transformer_forward.21} parent=0 // pred_check
    _
  $region3: #{classic_transformer_forward.21} parent=0 // pred_check_branch
    %13 = sbr.rel (0) target = $region5
  $region4: #{classic_transformer_forward.21} parent=0 // pred_region
    _
  $region5: #{classic_transformer_forward.21} parent=0 // pred_fallthru
    _
  // Predicated region
  $region6: #{classic_transformer_forward.21} parent=0 // pred_check
    _
  $region7: #{classic_transformer_forward.21} parent=0 // pred_check_branch
    %15 = sbr.rel (0) target = $region9
  $region8: #{classic_transformer_forward.21} parent=0 // pred_region
    _
  $region9: #{classic_transformer_forward.21} parent=0 // pred_fallthru
    _
  // Predicated region
  $region10: #{classic_transformer_forward.21} parent=0 // pred_check
    _
  $region11: #{classic_transformer_forward.21} parent=0 // pred_check_branch
    %17 = sbr.rel (0) target = $region13
  $region12: #{classic_transformer_forward.21} parent=0 // pred_region
    _
  $region13: #{classic_transformer_forward.21} parent=0 // pred_fallthru
    _
  // Predicated region
  $region14: #{classic_transformer_forward.21} parent=0 // pred_check
    _
  $region15: #{classic_transformer_forward.21} parent=0 // pred_check_branch
    %19 = sbr.rel (0) target = $region17
  $region16: #{classic_transformer_forward.21} parent=0 // pred_region
    _
  $region17: #{classic_transformer_forward.21} parent=0 // pred_fallthru
    _
  // Predicated region
  $region18: #{classic_transformer_forward.21} parent=0 // pred_check
    _
  $region19: #{classic_transformer_forward.21} parent=0 // pred_check_branch
    %21 = sbr.rel (0) target = $region21
  $region20: #{classic_transformer_forward.21} parent=0 // pred_region
    _
  $region21: #{classic_transformer_forward.21} parent=0 // pred_fallthru
    _
  // Predicated region
  $region22: #{classic_transformer_forward.21} parent=0 // pred_check
    _
  $region23: #{classic_transformer_forward.21} parent=0 // pred_check_branch
    %23 = sbr.rel (0) target = $region25
  $region24: #{classic_transformer_forward.21} parent=0 // pred_region
    _
  $region25: #{classic_transformer_forward.21} parent=0 // pred_fallthru
    _
  // Predicated region
  $region26: #{classic_transformer_forward.21} parent=0 // pred_check
    _
  $region27: #{classic_transformer_forward.21} parent=0 // pred_check_branch
    %25 = sbr.rel (0) target = $region29
  $region28: #{classic_transformer_forward.21} parent=0 // pred_region
    _
  $region29: #{classic_transformer_forward.21} parent=0 // pred_fallthru
    _
  %v27 = vld [vmem:[%s0] sm:$0xf]
  %v28 = vld [vmem:[%s0 + $0x4] sm:$0xf]
  %v29 = vld [vmem:[%s1] sm:$0xf]
  %v30 = vld [vmem:[%s1 + $0x4] sm:$0xf]
  %v31 = vld [vmem:[%s1 + $0x8] sm:$0xf]
  %v32 = vld [vmem:[%s1 + $0xc] sm:$0xf]
  %v33 = vld [vmem:[%s2] sm:$0x1]
  %v35 = vperm.slane %v33, 0
  %v39 = vunpack.c.l.b16 %v27
  %v40 = vunpack.c.l.b16 %v28
  %v41 = vpack.c.b16 %v40, %v39
  %v46 = vunpack.c.l.b16 %v29
  %v47 = vunpack.c.l.b16 %v30
  %v48 = vunpack.c.l.b16 %v31
  %v49 = vunpack.c.l.b16 %v32
  %v50 = vpack.c.b16 %v47, %v46
  %v51 = vpack.c.b16 %v49, %v48
  %vm54 = vcmask 261120
  %v56 = vsel %vm54, %v41, 0
  %58 = vmatpush.bf16.msra.mxu0 0
  %59 = vmatpush.bf16.msra.mxu0 0
  %60 = vmatpush.bf16.msra.mxu0 0
  %61 = vmatpush.bf16.msra.mxu0 0
  %62 = vmatpush.bf16.msra.mxu0 0
  %63 = vmatpush.bf16.msra.mxu0 0
  %64 = vmatpush.bf16.msra.mxu0 %v51
  %65 = vmatpush.bf16.msra.mxu0 %v50
  %66 = vmatmul.bf16.gmra.mxu0 %v56
  %v67 = vpop.f32.mrf.mxu0
  %v68 = vadd.f32 %v35, %v67
  %v69 = vpop.f32.mrf.mxu0
  %v70 = vadd.f32 %v35, %v69
  %71 = vdwg.mxu0
  %v72 = vmax.f32 %v68, 0.0
  %v73 = vmax.f32 %v70, 0.0
  %v74 = vpack.c.bf16 %v73, %v72
  %v75 = vld [vmem:[%s3] sm:$0xf]
  %v76 = vld [vmem:[%s3 + $0x4] sm:$0xf]
  %v77 = vld [vmem:[%s3 + $0x8] sm:$0xf]
  %v78 = vld [vmem:[%s3 + $0xc] sm:$0xf]
  %v79 = vld [vmem:[%s3 + $0x10] sm:$0xf]
  %v80 = vld [vmem:[%s3 + $0x14] sm:$0xf]
  %v81 = vld [vmem:[%s3 + $0x18] sm:$0xf]
  %v82 = vld [vmem:[%s3 + $0x1c] sm:$0xf]
  %v83 = vld [vmem:[%s4] sm:$0x1]
  %v85 = vperm.slane %v83, 0
  %v95 = vunpack.c.l.b16 %v75
  %v96 = vunpack.c.l.b16 %v76
  %v97 = vunpack.c.l.b16 %v77
  %v98 = vunpack.c.l.b16 %v78
  %v99 = vunpack.c.l.b16 %v79
  %v100 = vunpack.c.l.b16 %v80
  %v101 = vunpack.c.l.b16 %v81
  %v102 = vunpack.c.l.b16 %v82
  %v103 = vpack.c.b16 %v96, %v95
  %v104 = vpack.c.b16 %v98, %v97
  %v105 = vpack.c.b16 %v100, %v99
  %v106 = vpack.c.b16 %v102, %v101
  %vm111 = vcmask 523264
  %v113 = vsel %vm111, %v74, 0
  %115 = vmatpush.bf16.msra.mxu0 0
  %116 = vmatpush.bf16.msra.mxu0 0
  %117 = vmatpush.bf16.msra.mxu0 0
  %118 = vmatpush.bf16.msra.mxu0 0
  %119 = vmatpush.bf16.msra.mxu0 %v106
  %120 = vmatpush.bf16.msra.mxu0 %v105
  %121 = vmatpush.bf16.msra.mxu0 %v104
  %122 = vmatpush.bf16.msra.mxu0 %v103
  %123 = vmatmul.bf16.gmra.mxu0 %v113
  %v124 = vpop.f32.mrf.mxu0
  %v125 = vadd.f32 %v85, %v124
  %v126 = vpop.f32.mrf.mxu0
  %v127 = vadd.f32 %v85, %v126
  %128 = vdwg.mxu0
  %v129 = vunpack.c.l.bf16 %v27
  %v130 = vunpack.c.l.bf16 %v28
  %v131 = vadd.f32 %v129, %v125
  %v132 = vadd.f32 %v130, %v127
  %v133 = vsel %vm54, %v131, 0.0
  %134 = vadd.xlane.f32.xlu0 %v133
  %v135 = vpop.xlane.xlu0 %134
  %v136 = vsel %vm54, %v132, 0.0
  %137 = vadd.xlane.f32.xlu0 %v136
  %v138 = vpop.xlane.xlu0 %137
  %v139 = vrcp.pop 32.0
  %v140 = vmul.f32 32.0, %v139
  %v141 = vsub.f32 1.0, %v140
  %v142 = vmul.f32 %v139, %v141
  %v143 = vadd.f32 %v139, %v142
  %vm144 = vweird.f32 %v139
  %v145 = vsel %vm144, %v139, %v143
  %v146 = vmul.f32 %v135, %v145
  %v147 = vmul.f32 %v138, %v145
  %v148 = vsub.f32 %v131, %v146
  %v149 = vsub.f32 %v132, %v147
  %v150 = vmul.f32 %v148, %v148
  %v151 = vmul.f32 %v149, %v149
  %v152 = vsel %vm54, %v150, 0.0
  %153 = vadd.xlane.f32.xlu0 %v152
  %v154 = vpop.xlane.xlu0 %153
  %v155 = vsel %vm54, %v151, 0.0
  %156 = vadd.xlane.f32.xlu0 %v155
  %v157 = vpop.xlane.xlu0 %156
  %v158 = vmul.f32 %v154, %v145
  %v159 = vmul.f32 %v157, %v145
  %v160 = vadd.f32 %v158, 1e-05
  %v161 = vadd.f32 %v159, 1e-05
  %v162 = vrsqrt.pop %v160
  %v163 = vmul.f32 %v162, %v160
  %v164 = vmul.f32 %v163, %v162
  %v165 = vmul.f32 0.5, %v164
  %v166 = vsub.f32 1.5, %v165
  %v167 = vmul.f32 %v162, %v166
  %vm168 = vweird.f32 %v160
  %vm169 = vweird.f32 %v162
  %vm170 = vmor %vm168, %vm169
  %v171 = vsel %vm170, %v162, %v167
  %v172 = vrsqrt.pop %v161
  %v173 = vmul.f32 %v172, %v161
  %v174 = vmul.f32 %v173, %v172
  %v175 = vmul.f32 0.5, %v174
  %v176 = vsub.f32 1.5, %v175
  %v177 = vmul.f32 %v172, %v176
  %vm178 = vweird.f32 %v161
  %vm179 = vweird.f32 %v172
  %vm180 = vmor %vm178, %vm179
  %v181 = vsel %vm180, %v172, %v177
  %v182 = vmul.f32 %v148, %v171
  %v183 = vmul.f32 %v149, %v181
  %v184 = vld [vmem:[%s5] sm:$0x1]
  %v186 = vperm.slane %v184, 0
  %v188 = vmul.f32 %v182, %v186
  %v189 = vmul.f32 %v183, %v186
  %v190 = vld [vmem:[%s6] sm:$0x1]
  %v192 = vperm.slane %v190, 0
  %v194 = vadd.f32 %v188, %v192
  %v195 = vadd.f32 %v189, %v192
  %v196 = vpack.c.bf16 %v194, %v194
  %v197 = vpack.c.bf16 %v195, %v195
  %vm198 = vcmask 257024
  %199 = vst.msk [vmem:[%s7] sm:$0xf] %vm198, %v196
  %200 = vst.msk [vmem:[%s7 + $0x4] sm:$0xf] %vm198, %v197
  // Predicated region
  $region30: #{classic_transformer_forward.21} parent=0 // pred_check
    _
  $region31: #{classic_transformer_forward.21} parent=0 // pred_check_branch
    %202 = sbr.rel (0) target = $region33
  $region32: #{classic_transformer_forward.21} parent=0 // pred_region
    _
  $region33: #{classic_transformer_forward.21} parent=0 // pred_fallthru
    _
  // Predicated region
  $region34: #{classic_transformer_forward.21} parent=0 // pred_check
    _
  $region35: #{classic_transformer_forward.21} parent=0 // pred_check_branch
    %204 = sbr.rel (0) target = $region37
  $region36: #{classic_transformer_forward.21} parent=0 // pred_region
    _
  $region37: #{classic_transformer_forward.21} parent=0 // pred_fallthru
    _

// kernel: classic_transformer_forward.28
$region0: #{classic_transformer_forward.28}
  #allocation0 [shape = 'u32[]', space=smem, size = 0x4, offset = 0x4, fixed_abs, tag = 'smem constant byte address 0x4 - core index']
  #allocation1 [shape = 'u32[72,128]{1,0:T(1,128)}', space=vmem, size = 0x9000, scoped, tag = 'internal scratch']
  %s0 = inlined_call_operand.vmem [shape: bf16[16,32], index: 0, kind: input, shape index: {}]
  %s1 = inlined_call_operand.vmem [shape: bf16[32,64], index: 1, kind: input, shape index: {}]
  %s2 = inlined_call_operand.hbm [shape: f32[1,64], index: 2, kind: input, shape index: {}]
  %s3 = inlined_call_operand.vmem [shape: bf16[16,64], index: 3, kind: output, shape index: {}]
  %s4 = sld [smem:[#allocation0]]
  $region26: #{classic_transformer_forward.28} parent=0
    _
  %s6 = ssub.s32 1, %s4
  %s7 = scalar_select 0, %s6, %s4
  $region1: #{classic_transformer_forward.28} parent=0
    #allocation2 [shape = 'u8[512]{0}', space=vmem, size = 0x400, scoped, tag = 'input window, operand 2, single buffered']
    #allocation3 [shape = 's32[1]{0}', space=sflag, size = 0x4, scoped, tag = 'scoped memory for classic_transformer_forward.28']
    %8 = vsyncpa [#allocation3], 0
    // Predicated region
    $region2: #{classic_transformer_forward.28} parent=1 // pred_check
      _
    $region3: #{classic_transformer_forward.28} parent=1 // pred_check_branch
      %10 = sbr.rel (0) target = $region5
    $region4: #{classic_transformer_forward.28} parent=1 // pred_region
      _
    $region5: #{classic_transformer_forward.28} parent=1 // pred_fallthru
      _
    // Predicated region
    $region6: #{classic_transformer_forward.28} parent=1 // pred_check
      _
    $region7: #{classic_transformer_forward.28} parent=1 // pred_check_branch
      %12 = sbr.rel (0) target = $region9
    $region8: #{classic_transformer_forward.28} parent=1 // pred_region
      _
    $region9: #{classic_transformer_forward.28} parent=1 // pred_fallthru
      _
    // Predicated region
    $region10: #{classic_transformer_forward.28} parent=1 // pred_check
      _
    $region11: #{classic_transformer_forward.28} parent=1 // pred_check_branch
      %14 = sbr.rel (0) target = $region13
    $region12: #{classic_transformer_forward.28} parent=1 // pred_region
      %16 = vsyncadd [#allocation3], 0
      %s18 = sshll.u32 %s2, 4
      %s19 = int_to_ptr.hbm [resolvable:$true] %s18
      %s20 = sshll.u32 [#allocation2], 4
      %s21 = int_to_ptr.vmem [resolvable:$true] %s20
      %23 = dma.hbm_to_vmem [thread:$0]  %s19, 16, %s21, [#allocation3]
    $region13: #{classic_transformer_forward.28} parent=1 // pred_fallthru
      _
    // Predicated region
    $region14: #{classic_transformer_forward.28} parent=1 // pred_check
      _
    $region15: #{classic_transformer_forward.28} parent=1 // pred_check_branch
      %25 = sbr.rel (0) target = $region17
    $region16: #{classic_transformer_forward.28} parent=1 // pred_region
      %27 = dma.done [#allocation3], 16
    $region17: #{classic_transformer_forward.28} parent=1 // pred_fallthru
      _
    %v29 = vld [vmem:[%s0] sm:$0xf]
    %v30 = vld [vmem:[%s0 + $0x4] sm:$0xf]
    %v31 = vld [vmem:[%s1] sm:$0xf]
    %v32 = vld [vmem:[%s1 + $0x4] sm:$0xf]
    %v33 = vld [vmem:[%s1 + $0x8] sm:$0xf]
    %v34 = vld [vmem:[%s1 + $0xc] sm:$0xf]
    %v35 = vld [vmem:[#allocation2] sm:$0x1]
    %v37 = vperm.slane %v35, 0
    %v41 = vunpack.c.l.b16 %v29
    %v42 = vunpack.c.l.b16 %v30
    %v43 = vpack.c.b16 %v42, %v41
    %v48 = vunpack.c.l.b16 %v31
    %v49 = vunpack.c.l.b16 %v32
    %v50 = vunpack.c.l.b16 %v33
    %v51 = vunpack.c.l.b16 %v34
    %v52 = vpack.c.b16 %v49, %v48
    %v53 = vpack.c.b16 %v51, %v50
    %vm56 = vcmask 261120
    %v58 = vsel %vm56, %v43, 0
    %60 = vmatpush.bf16.msra.mxu0 0
    %61 = vmatpush.bf16.msra.mxu0 0
    %62 = vmatpush.bf16.msra.mxu0 0
    %63 = vmatpush.bf16.msra.mxu0 0
    %64 = vmatpush.bf16.msra.mxu0 0
    %65 = vmatpush.bf16.msra.mxu0 0
    %66 = vmatpush.bf16.msra.mxu0 %v53
    %67 = vmatpush.bf16.msra.mxu0 %v52
    %68 = vmatmul.bf16.gmra.mxu0 %v58
    %v69 = vpop.f32.mrf.mxu0
    %v70 = vadd.f32 %v37, %v69
    %v71 = vpop.f32.mrf.mxu0
    %v72 = vadd.f32 %v37, %v71
    %73 = vdwg.mxu0
    %v74 = vpack.c.bf16 %v70, %v70
    %v75 = vpack.c.bf16 %v72, %v72
    %vm76 = vcmask 519168
    %77 = vst.msk [vmem:[%s3] sm:$0xf] %vm76, %v74
    %78 = vst.msk [vmem:[%s3 + $0x4] sm:$0xf] %vm76, %v75
    // Predicated region
    $region18: #{classic_transformer_forward.28} parent=1 // pred_check
      _
    $region19: #{classic_transformer_forward.28} parent=1 // pred_check_branch
      %80 = sbr.rel (0) target = $region21
    $region20: #{classic_transformer_forward.28} parent=1 // pred_region
      _
    $region21: #{classic_transformer_forward.28} parent=1 // pred_fallthru
      _
    // Predicated region
    $region22: #{classic_transformer_forward.28} parent=1 // pred_check
      _
    $region23: #{classic_transformer_forward.28} parent=1 // pred_check_branch
      %82 = sbr.rel (0) target = $region25
    $region24: #{classic_transformer_forward.28} parent=1 // pred_region
      _
    $region25: #{classic_transformer_forward.28} parent=1 // pred_fallthru
      _
    %83 = vsyncpa [#allocation3], 1

// kernel: classic_transformer_forward.20
$region0: #{classic_transformer_forward.20}
  #allocation0 [shape = 'u32[]', space=smem, size = 0x4, offset = 0x4, fixed_abs, tag = 'smem constant byte address 0x4 - core index']
  #allocation1 [shape = 'u32[72,128]{1,0:T(1,128)}', space=vmem, size = 0x9000, scoped, tag = 'internal scratch']
  %s0 = inlined_call_operand.vmem [shape: bf16[2,8,32], index: 0, kind: input, shape index: {}]
  %s1 = inlined_call_operand.vmem [shape: bf16[2,8,64], index: 1, kind: input, shape index: {}]
  %s2 = inlined_call_operand.vmem [shape: f32[2,1,8], index: 2, kind: input, shape index: {}]
  %s3 = inlined_call_operand.vmem [shape: bf16[2,8,32], index: 3, kind: input, shape index: {}]
  %s4 = inlined_call_operand.vmem [shape: bf16[32,32], index: 4, kind: input, shape index: {}]
  %s5 = inlined_call_operand.vmem [shape: f32[1,32], index: 5, kind: input, shape index: {}]
  %s6 = inlined_call_operand.vmem [shape: f32[1,32], index: 6, kind: input, shape index: {}]
  %s7 = inlined_call_operand.vmem [shape: f32[1,32], index: 7, kind: input, shape index: {}]
  %s8 = inlined_call_operand.vmem [shape: bf16[2,8,32], index: 8, kind: output, shape index: {}]
  %s9 = sld [smem:[#allocation0]]
  $region65: #{classic_transformer_forward.20} parent=0
    _
  %s11 = ssub.s32 1, %s9
  %s12 = scalar_select 0, %s11, %s9
  loop: start=0, step=1, limit=4
  $region2: #{classic_transformer_forward.20} parent=0 // loop_pre_header
    _
  $region3: #{classic_transformer_forward.20} parent=0 // loop_header
    %s14 = sphi 0, %s18
    %p15 = scmp.ge.s32.totalorder %s14, 4
    %s21 = sphi 0, %s33
    %s22 = sphi 0, %s29
    %s23 = sphi 0, %s21
    %s24 = sphi 0, %s22
    %s25 = sphi 0, %s23
    %s26 = sphi 0, %s24
    %s38 = sphi 0, %s40
    %s41 = sphi 0, %s38
    %s42 = sphi 0, %s41
    %s58 = sphi 0, %s42
    %s64 = sphi 0, %s66
    %s67 = sphi 0, %s64
    %s68 = sphi 0, %s67
    %s84 = sphi 0, %s68
    %s90 = sphi 0, %s92
    %s93 = sphi 0, %s90
    %s94 = sphi 0, %s93
    %s110 = sphi 0, %s94
    %s118 = sphi 0, %s120
    %s121 = sphi 0, %s118
    %s122 = sphi 0, %s121
    %s138 = sphi 0, %s122
    %s142 = sphi 0, %s142
    %s144 = sphi 0, %s142
    %s145 = sphi 0, %s144
    %s159 = sphi 0, %s145
    %s163 = sphi 0, %s163
    %s165 = sphi 0, %s163
    %s166 = sphi 0, %s165
    %s180 = sphi 0, %s166
    %s184 = sphi 0, %s184
    %s186 = sphi 0, %s184
    %s187 = sphi 0, %s186
    %s201 = sphi 0, %s187
    %s205 = sphi 0, %s205
    %s207 = sphi 0, %s205
    %s208 = sphi 0, %s207
    %s222 = sphi 0, %s208
    %s230 = sphi 0, %s232
    %s233 = sphi 0, %s230
    %s234 = sphi 0, %s233
    %s250 = sphi 0, %s234
  $region4: #{classic_transformer_forward.20} parent=0 // loop_header_branch
    %17 = sbr.rel (%p15) target = $region8
  $region5: #{classic_transformer_forward.20} parent=0 // loop_body
    %s19 = ssub.s32 %s14, 1
    %s20 = ssub.s32 %s14, 2
    %s27 = sadd.s32 1, %s22
    %p28 = scmp.ge.s32.totalorder %s27, 1
    %s29 = scalar_select %p28, 0, %s27
    %s30 = sadd.s32 1, %s21
    %s31 = scalar_select %p28, %s30, %s21
    %p32 = scmp.ge.s32.totalorder %s31, 2
    %s33 = scalar_select %p32, 0, %s31
    %s34 = ssub.s32 %s21, %s33
    %s35 = ssub.s32 %s22, %s29
    %s36 = sor.u32 %s34, %s35
    %p37 = scmp.eq.s32.totalorder %s36, 0
    %s39 = sadd.s32 %s38, 1
    %s40 = scalar_select %p37, %s38, %s39
    %p43 = pneg %p37
    %p44 = scmp.eq.s32.totalorder %s14, 1
    %p45 = por %p43, %p44
    %p46 = scmp.ne.s32.totalorder %s38, %s41
    %p47 = scmp.eq.s32.totalorder %s14, 0
    %p48 = por %p46, %p47
    %p49 = scmp.ne.s32.totalorder %s38, %s41
    %p50 = scmp.eq.s32.totalorder %s19, 1
    %p51 = por %p49, %p50
    %p52 = scmp.ne.s32.totalorder %s41, %s42
    %p53 = scmp.eq.s32.totalorder %s19, 0
    %p54 = por %p52, %p53
    %p55 = scmp.ne.s32.totalorder %s41, %s42
    %p56 = scmp.eq.s32.totalorder %s20, 1
    %p57 = por %p55, %p56
    %p59 = scmp.ne.s32.totalorder %s42, %s58
    %p60 = scmp.eq.s32.totalorder %s20, 0
    %p61 = por %p59, %p60
    %s62 = ssub.s32 %s21, %s33
    %p63 = scmp.eq.s32.totalorder %s62, 0
    %s65 = sadd.s32 %s64, 1
    %s66 = scalar_select %p63, %s64, %s65
    %p69 = pneg %p63
    %p70 = scmp.eq.s32.totalorder %s14, 1
    %p71 = por %p69, %p70
    %p72 = scmp.ne.s32.totalorder %s64, %s67
    %p73 = scmp.eq.s32.totalorder %s14, 0
    %p74 = por %p72, %p73
    %p75 = scmp.ne.s32.totalorder %s64, %s67
    %p76 = scmp.eq.s32.totalorder %s19, 1
    %p77 = por %p75, %p76
    %p78 = scmp.ne.s32.totalorder %s67, %s68
    %p79 = scmp.eq.s32.totalorder %s19, 0
    %p80 = por %p78, %p79
    %p81 = scmp.ne.s32.totalorder %s67, %s68
    %p82 = scmp.eq.s32.totalorder %s20, 1
    %p83 = por %p81, %p82
    %p85 = scmp.ne.s32.totalorder %s68, %s84
    %p86 = scmp.eq.s32.totalorder %s20, 0
    %p87 = por %p85, %p86
    %s88 = ssub.s32 %s21, %s33
    %p89 = scmp.eq.s32.totalorder %s88, 0
    %s91 = sadd.s32 %s90, 1
    %s92 = scalar_select %p89, %s90, %s91
    %p95 = pneg %p89
    %p96 = scmp.eq.s32.totalorder %s14, 1
    %p97 = por %p95, %p96
    %p98 = scmp.ne.s32.totalorder %s90, %s93
    %p99 = scmp.eq.s32.totalorder %s14, 0
    %p100 = por %p98, %p99
    %p101 = scmp.ne.s32.totalorder %s90, %s93
    %p102 = scmp.eq.s32.totalorder %s19, 1
    %p103 = por %p101, %p102
    %p104 = scmp.ne.s32.totalorder %s93, %s94
    %p105 = scmp.eq.s32.totalorder %s19, 0
    %p106 = por %p104, %p105
    %p107 = scmp.ne.s32.totalorder %s93, %s94
    %p108 = scmp.eq.s32.totalorder %s20, 1
    %p109 = por %p107, %p108
    %p111 = scmp.ne.s32.totalorder %s94, %s110
    %p112 = scmp.eq.s32.totalorder %s20, 0
    %p113 = por %p111, %p112
    %s114 = ssub.s32 %s21, %s33
    %s115 = ssub.s32 %s22, %s29
    %s116 = sor.u32 %s114, %s115
    %p117 = scmp.eq.s32.totalorder %s116, 0
    %s119 = sadd.s32 %s118, 1
    %s120 = scalar_select %p117, %s118, %s119
    %p123 = pneg %p117
    %p124 = scmp.eq.s32.totalorder %s14, 1
    %p125 = por %p123, %p124
    %p126 = scmp.ne.s32.totalorder %s118, %s121
    %p127 = scmp.eq.s32.totalorder %s14, 0
    %p128 = por %p126, %p127
    %p129 = scmp.ne.s32.totalorder %s118, %s121
    %p130 = scmp.eq.s32.totalorder %s19, 1
    %p131 = por %p129, %p130
    %p132 = scmp.ne.s32.totalorder %s121, %s122
    %p133 = scmp.eq.s32.totalorder %s19, 0
    %p134 = por %p132, %p133
    %p135 = scmp.ne.s32.totalorder %s121, %s122
    %p136 = scmp.eq.s32.totalorder %s20, 1
    %p137 = por %p135, %p136
    %p139 = scmp.ne.s32.totalorder %s122, %s138
    %p140 = scmp.eq.s32.totalorder %s20, 0
    %p141 = por %p139, %p140
    %s143 = sadd.s32 %s142, 1
    %p146 = scmp.eq.s32.totalorder %s14, 1
    %p147 = scmp.ne.s32.totalorder %s142, %s144
    %p148 = scmp.eq.s32.totalorder %s14, 0
    %p149 = por %p147, %p148
    %p150 = scmp.ne.s32.totalorder %s142, %s144
    %p151 = scmp.eq.s32.totalorder %s19, 1
    %p152 = por %p150, %p151
    %p153 = scmp.ne.s32.totalorder %s144, %s145
    %p154 = scmp.eq.s32.totalorder %s19, 0
    %p155 = por %p153, %p154
    %p156 = scmp.ne.s32.totalorder %s144, %s145
    %p157 = scmp.eq.s32.totalorder %s20, 1
    %p158 = por %p156, %p157
    %p160 = scmp.ne.s32.totalorder %s145, %s159
    %p161 = scmp.eq.s32.totalorder %s20, 0
    %p162 = por %p160, %p161
    %s164 = sadd.s32 %s163, 1
    %p167 = scmp.eq.s32.totalorder %s14, 1
    %p168 = scmp.ne.s32.totalorder %s163, %s165
    %p169 = scmp.eq.s32.totalorder %s14, 0
    %p170 = por %p168, %p169
    %p171 = scmp.ne.s32.totalorder %s163, %s165
    %p172 = scmp.eq.s32.totalorder %s19, 1
    %p173 = por %p171, %p172
    %p174 = scmp.ne.s32.totalorder %s165, %s166
    %p175 = scmp.eq.s32.totalorder %s19, 0
    %p176 = por %p174, %p175
    %p177 = scmp.ne.s32.totalorder %s165, %s166
    %p178 = scmp.eq.s32.totalorder %s20, 1
    %p179 = por %p177, %p178
    %p181 = scmp.ne.s32.totalorder %s166, %s180
    %p182 = scmp.eq.s32.totalorder %s20, 0
    %p183 = por %p181, %p182
    %s185 = sadd.s32 %s184, 1
    %p188 = scmp.eq.s32.totalorder %s14, 1
    %p189 = scmp.ne.s32.totalorder %s184, %s186
    %p190 = scmp.eq.s32.totalorder %s14, 0
    %p191 = por %p189, %p190
    %p192 = scmp.ne.s32.totalorder %s184, %s186
    %p193 = scmp.eq.s32.totalorder %s19, 1
    %p194 = por %p192, %p193
    %p195 = scmp.ne.s32.totalorder %s186, %s187
    %p196 = scmp.eq.s32.totalorder %s19, 0
    %p197 = por %p195, %p196
    %p198 = scmp.ne.s32.totalorder %s186, %s187
    %p199 = scmp.eq.s32.totalorder %s20, 1
    %p200 = por %p198, %p199
    %p202 = scmp.ne.s32.totalorder %s187, %s201
    %p203 = scmp.eq.s32.totalorder %s20, 0
    %p204 = por %p202, %p203
    %s206 = sadd.s32 %s205, 1
    %p209 = scmp.eq.s32.totalorder %s14, 1
    %p210 = scmp.ne.s32.totalorder %s205, %s207
    %p211 = scmp.eq.s32.totalorder %s14, 0
    %p212 = por %p210, %p211
    %p213 = scmp.ne.s32.totalorder %s205, %s207
    %p214 = scmp.eq.s32.totalorder %s19, 1
    %p215 = por %p213, %p214
    %p216 = scmp.ne.s32.totalorder %s207, %s208
    %p217 = scmp.eq.s32.totalorder %s19, 0
    %p218 = por %p216, %p217
    %p219 = scmp.ne.s32.totalorder %s207, %s208
    %p220 = scmp.eq.s32.totalorder %s20, 1
    %p221 = por %p219, %p220
    %p223 = scmp.ne.s32.totalorder %s208, %s222
    %p224 = scmp.eq.s32.totalorder %s20, 0
    %p225 = por %p223, %p224
    %s226 = ssub.s32 %s21, %s33
    %s227 = ssub.s32 %s22, %s29
    %s228 = sor.u32 %s226, %s227
    %p229 = scmp.eq.s32.totalorder %s228, 0
    %s231 = sadd.s32 %s230, 1
    %s232 = scalar_select %p229, %s230, %s231
    %p235 = pneg %p229
    %p236 = scmp.eq.s32.totalorder %s14, 1
    %p237 = por %p235, %p236
    %p238 = scmp.ne.s32.totalorder %s230, %s233
    %p239 = scmp.eq.s32.totalorder %s14, 0
    %p240 = por %p238, %p239
    %p241 = scmp.ne.s32.totalorder %s230, %s233
    %p242 = scmp.eq.s32.totalorder %s19, 1
    %p243 = por %p241, %p242
    %p244 = scmp.ne.s32.totalorder %s233, %s234
    %p245 = scmp.eq.s32.totalorder %s19, 0
    %p246 = por %p244, %p245
    %p247 = scmp.ne.s32.totalorder %s233, %s234
    %p248 = scmp.eq.s32.totalorder %s20, 1
    %p249 = por %p247, %p248
    %p251 = scmp.ne.s32.totalorder %s234, %s250
    %p252 = scmp.eq.s32.totalorder %s20, 0
    %p253 = por %p251, %p252
    %p254 = scmp.le.s32.totalorder 1, %s14
    %p255 = scmp.lt.s32.totalorder %s14, 3
    %p256 = pnand %p254, %p255
    %p257 = pneg %p256
    // Predicated region
    $region9: #{classic_transformer_forward.20} parent=5 // pred_check
      _
    $region10: #{classic_transformer_forward.20} parent=5 // pred_check_branch
      %259 = sbr.rel (%p256) target = $region12
    $region11: #{classic_transformer_forward.20} parent=5 // pred_region
      %s260 = ssub.s32 %s14, 1
      // Predicated region
      $region13: #{classic_transformer_forward.20} parent=11 // pred_check
        %p261 = pneg %p155
      $region14: #{classic_transformer_forward.20} parent=11 // pred_check_branch
        %263 = sbr.rel (%p261) target = $region16
      $region15: #{classic_transformer_forward.20} parent=11 // pred_region
        _
      $region16: #{classic_transformer_forward.20} parent=11 // pred_fallthru
        _
      // Predicated region
      $region17: #{classic_transformer_forward.20} parent=11 // pred_check
        %p264 = pneg %p176
      $region18: #{classic_transformer_forward.20} parent=11 // pred_check_branch
        %266 = sbr.rel (%p264) target = $region20
      $region19: #{classic_transformer_forward.20} parent=11 // pred_region
        _
      $region20: #{classic_transformer_forward.20} parent=11 // pred_fallthru
        _
      // Predicated region
      $region21: #{classic_transformer_forward.20} parent=11 // pred_check
        %p267 = pneg %p197
      $region22: #{classic_transformer_forward.20} parent=11 // pred_check_branch
        %269 = sbr.rel (%p267) target = $region24
      $region23: #{classic_transformer_forward.20} parent=11 // pred_region
        _
      $region24: #{classic_transformer_forward.20} parent=11 // pred_fallthru
        _
      // Predicated region
      $region25: #{classic_transformer_forward.20} parent=11 // pred_check
        %p270 = pneg %p218
      $region26: #{classic_transformer_forward.20} parent=11 // pred_check_branch
        %272 = sbr.rel (%p270) target = $region28
      $region27: #{classic_transformer_forward.20} parent=11 // pred_region
        _
      $region28: #{classic_transformer_forward.20} parent=11 // pred_fallthru
        _
    $region12: #{classic_transformer_forward.20} parent=5 // pred_fallthru
      _
    %p273 = scmp.lt.s32.totalorder %s14, 2
    // Predicated region
    $region29: #{classic_transformer_forward.20} parent=5 // pred_check
      %p274 = pneg %p273
    $region30: #{classic_transformer_forward.20} parent=5 // pred_check_branch
      %276 = sbr.rel (%p274) target = $region32
    $region31: #{classic_transformer_forward.20} parent=5 // pred_region
      // Predicated region
      $region33: #{classic_transformer_forward.20} parent=31 // pred_check
        %p277 = pneg %p48
      $region34: #{classic_transformer_forward.20} parent=31 // pred_check_branch
        %279 = sbr.rel (%p277) target = $region36
      $region35: #{classic_transformer_forward.20} parent=31 // pred_region
        %p280 = scmp.lt.s32.totalorder %s21, 1
        %s281 = scalar_select %p280, %s21, 1
        %p282 = scmp.lt.s32.totalorder %s22, 0
        %s283 = scalar_select %p282, %s22, 0
        %s284 = sadd.s32 %s283, %s281
        %s285 = smul.addr %s284, 4
        %s286 = scalar_lea.vmem %s0, %s285
      $region36: #{classic_transformer_forward.20} parent=31 // pred_fallthru
        _
      // Predicated region
      $region37: #{classic_transformer_forward.20} parent=31 // pred_check
        %p287 = pneg %p74
      $region38: #{classic_transformer_forward.20} parent=31 // pred_check_branch
        %289 = sbr.rel (%p287) target = $region40
      $region39: #{classic_transformer_forward.20} parent=31 // pred_region
        %p290 = scmp.lt.s32.totalorder %s21, 1
        %s291 = scalar_select %p290, %s21, 1
        %s292 = smul.addr %s291, 4
        %s293 = scalar_lea.vmem %s1, %s292
      $region40: #{classic_transformer_forward.20} parent=31 // pred_fallthru
        _
      // Predicated region
      $region41: #{classic_transformer_forward.20} parent=31 // pred_check
        %p294 = pneg %p100
      $region42: #{classic_transformer_forward.20} parent=31 // pred_check_branch
        %296 = sbr.rel (%p294) target = $region44
      $region43: #{classic_transformer_forward.20} parent=31 // pred_region
        %p297 = scmp.lt.s32.totalorder %s21, 1
        %s298 = scalar_select %p297, %s21, 1
        %s299 = scalar_lea.vmem %s2, %s298
      $region44: #{classic_transformer_forward.20} parent=31 // pred_fallthru
        _
      // Predicated region
      $region45: #{classic_transformer_forward.20} parent=31 // pred_check
        %p300 = pneg %p128
      $region46: #{classic_transformer_forward.20} parent=31 // pred_check_branch
        %302 = sbr.rel (%p300) target = $region48
      $region47: #{classic_transformer_forward.20} parent=31 // pred_region
        %p303 = scmp.lt.s32.totalorder %s21, 1
        %s304 = scalar_select %p303, %s21, 1
        %p305 = scmp.lt.s32.totalorder %s22, 0
        %s306 = scalar_select %p305, %s22, 0
        %s307 = sadd.s32 %s306, %s304
        %s308 = smul.addr %s307, 4
        %s309 = scalar_lea.vmem %s3, %s308
      $region48: #{classic_transformer_forward.20} parent=31 // pred_fallthru
        _
    $region32: #{classic_transformer_forward.20} parent=5 // pred_fallthru
      _
    %p310 = scmp.le.s32.totalorder 1, %s14
    %p311 = scmp.lt.s32.totalorder %s14, 3
    %p312 = pnand %p310, %p311
    %p313 = pneg %p312
    // Predicated region
    $region49: #{classic_transformer_forward.20} parent=5 // pred_check
      _
    $region50: #{classic_transformer_forward.20} parent=5 // pred_check_branch
      %315 = sbr.rel (%p312) target = $region52
    $region51: #{classic_transformer_forward.20} parent=5 // pred_region
      %s316 = ssub.s32 %s14, 1
      %p317 = scmp.lt.s32.totalorder %s23, 1
      %s318 = scalar_select %p317, %s23, 1
      %p319 = scmp.lt.s32.totalorder %s24, 0
      %s320 = scalar_select %p319, %s24, 0
      %s321 = sadd.s32 %s320, %s318
      %s322 = smul.addr %s321, 4
      %s323 = scalar_lea.vmem %s0, %s322
      %p324 = pneg %p54
      %p325 = pneg %p51
      %p326 = scmp.lt.s32.totalorder %s23, 1
      %s327 = scalar_select %p326, %s23, 1
      %s328 = smul.addr %s327, 4
      %s329 = scalar_lea.vmem %s1, %s328
      %p330 = pneg %p80
      %p331 = pneg %p77
      %p332 = scmp.lt.s32.totalorder %s23, 1
      %s333 = scalar_select %p332, %s23, 1
      %s334 = scalar_lea.vmem %s2, %s333
      %p335 = pneg %p106
      %p336 = pneg %p103
      %p337 = scmp.lt.s32.totalorder %s23, 1
      %s338 = scalar_select %p337, %s23, 1
      %p339 = scmp.lt.s32.totalorder %s24, 0
      %s340 = scalar_select %p339, %s24, 0
      %s341 = sadd.s32 %s340, %s338
      %s342 = smul.addr %s341, 4
      %s343 = scalar_lea.vmem %s3, %s342
      %p344 = pneg %p134
      %p345 = pneg %p131
      %p346 = pneg %p155
      %p347 = pneg %p152
      %p348 = pneg %p176
      %p349 = pneg %p173
      %p350 = pneg %p197
      %p351 = pneg %p194
      %p352 = pneg %p218
      %p353 = pneg %p215
      %p354 = pneg %p246
      %p355 = pneg %p243
      %p356 = scmp.lt.s32.totalorder %s23, 1
      %s357 = scalar_select %p356, %s23, 1
      %p358 = scmp.lt.s32.totalorder %s24, 0
      %s359 = scalar_select %p358, %s24, 0
      %s360 = sadd.s32 %s359, %s357
      %s361 = smul.addr %s360, 4
      %s362 = scalar_lea.vmem %s8, %s361
      %p363 = scmp.lt.s32.totalorder %s23, 1
      %s364 = scalar_select %p363, %s23, 1
      %p365 = scmp.lt.s32.totalorder %s24, 0
      %s366 = scalar_select %p365, %s24, 0
      %s367 = sadd.s32 %s366, %s364
      %s368 = smul.addr %s367, 4
      %s369 = scalar_lea.vmem %s0, %s368
      %p370 = scmp.lt.s32.totalorder %s23, 1
      %s371 = scalar_select %p370, %s23, 1
      %s372 = smul.addr %s371, 4
      %s373 = scalar_lea.vmem %s1, %s372
      %p374 = scmp.lt.s32.totalorder %s23, 1
      %s375 = scalar_select %p374, %s23, 1
      %s376 = scalar_lea.vmem %s2, %s375
      %p377 = scmp.lt.s32.totalorder %s23, 1
      %s378 = scalar_select %p377, %s23, 1
      %p379 = scmp.lt.s32.totalorder %s24, 0
      %s380 = scalar_select %p379, %s24, 0
      %s381 = sadd.s32 %s380, %s378
      %s382 = smul.addr %s381, 4
      %s383 = scalar_lea.vmem %s3, %s382
      %p384 = scmp.lt.s32.totalorder %s23, 1
      %s385 = scalar_select %p384, %s23, 1
      %p386 = scmp.lt.s32.totalorder %s24, 0
      %s387 = scalar_select %p386, %s24, 0
      %s388 = sadd.s32 %s387, %s385
      %s389 = smul.addr %s388, 4
      %s390 = scalar_lea.vmem %s8, %s389
      %v392 = vld [vmem:[%s369] sm:$0xf]
      %v393 = vld [vmem:[%s373] sm:$0xf]
      %v394 = vld [vmem:[%s376] sm:$0x1]
      %v396 = vperm.slane %v394, 0
      %v398 = vld [vmem:[%s4] sm:$0xf]
      %v399 = vld [vmem:[%s4 + $0x4] sm:$0xf]
      %v400 = vld [vmem:[%s4 + $0x8] sm:$0xf]
      %v401 = vld [vmem:[%s4 + $0xc] sm:$0xf]
      %vm402 = vcmask 64512
      %v404 = vsel %vm402, %v392, 0
      %v407 = vsel %vm402, %v393, 0
      %409 = vmatpush.bf16.xpose.msra.mxu0 0
      %410 = vmatpush.bf16.xpose.msra.mxu0 0
      %411 = vmatpush.bf16.xpose.msra.mxu0 0
      %412 = vmatpush.bf16.xpose.msra.mxu0 0
      %413 = vmatpush.bf16.xpose.msra.mxu0 0
      %414 = vmatpush.bf16.xpose.msra.mxu0 0
      %415 = vmatpush.bf16.xpose.msra.mxu0 0
      %416 = vmatpush.bf16.xpose.msra.mxu0 %v407
      %417 = vmatmul.bf16.gmra.mxu0 %v404
      %v418 = vpop.f32.mrf.mxu0
      %v419 = vadd.f32 %v396, %v418
      %v420 = vpop.f32.mrf.mxu0
      %421 = vdwg.mxu0
      %v422 = vsel %vm402, %v419, -inf
      %423 = vmax.xlane.f32.xlu0 %v422
      %v424 = vpop.xlane.xlu0 %423
      %v425 = vsub.f32 %v419, %v424
      %v426 = vmul.f32 %v425, 1.442695
      %v427 = vpow.pop %v426
      %v428 = vsel %vm402, %v427, 0.0
      %429 = vadd.xlane.f32.xlu0 %v428
      %v430 = vpop.xlane.xlu0 %429
      %v431 = vrcp.pop %v430
      %v432 = vmul.f32 %v427, %v431
      %v433 = vpack.c.bf16 %v432, %v432
      %v435 = vunpack.c.l.b16 %v393
      %v436 = vpack.c.b16 %v435, %v435
      %437 = vrot.lane.b32.xlu0 %v436, 96
      %v438 = vpop.permute.xlu0 %437
      %v440 = vsel %vm402, %v433, 0
      %vm442 = vcmask 1043456
      %v444 = vsel %vm442, %v438, 0
      %446 = vmatpush.bf16.msra.mxu0 0
      %447 = vmatpush.bf16.msra.mxu0 0
      %448 = vmatpush.bf16.msra.mxu0 0
      %449 = vmatpush.bf16.msra.mxu0 0
      %450 = vmatpush.bf16.msra.mxu0 0
      %451 = vmatpush.bf16.msra.mxu0 0
      %452 = vmatpush.bf16.msra.mxu0 0
      %453 = vmatpush.bf16.msra.mxu0 %v444
      %454 = vmatmul.bf16.gmra.mxu0 %v440
      %v455 = vpop.f32.mrf.mxu0
      %v456 = vadd.f32 0.0, %v455
      %v457 = vpop.f32.mrf.mxu0
      %458 = vdwg.mxu0
      %v459 = vpack.c.bf16 %v456, %v456
      %v461 = vunpack.c.l.b16 %v392
      %v462 = vpack.c.b16 %v461, %v461
      %463 = vrot.lane.b32.xlu0 %v462, 120
      %v464 = vpop.permute.xlu0 %463
      %465 = vrot.lane.b32.xlu0 %v436, 120
      %v466 = vpop.permute.xlu0 %465
      %v468 = vsel %vm402, %v464, 0
      %v471 = vsel %vm402, %v466, 0
      %473 = vmatpush.bf16.xpose.msra.mxu0 0
      %474 = vmatpush.bf16.xpose.msra.mxu0 0
      %475 = vmatpush.bf16.xpose.msra.mxu0 0
      %476 = vmatpush.bf16.xpose.msra.mxu0 0
      %477 = vmatpush.bf16.xpose.msra.mxu0 0
      %478 = vmatpush.bf16.xpose.msra.mxu0 0
      %479 = vmatpush.bf16.xpose.msra.mxu0 0
      %480 = vmatpush.bf16.xpose.msra.mxu0 %v471
      %481 = vmatmul.bf16.gmra.mxu0 %v468
      %v482 = vpop.f32.mrf.mxu0
      %v483 = vadd.f32 %v396, %v482
      %v484 = vpop.f32.mrf.mxu0
      %485 = vdwg.mxu0
      %v486 = vsel %vm402, %v483, -inf
      %487 = vmax.xlane.f32.xlu0 %v486
      %v488 = vpop.xlane.xlu0 %487
      %v489 = vsub.f32 %v483, %v488
      %v490 = vmul.f32 %v489, 1.442695
      %v491 = vpow.pop %v490
      %v492 = vsel %vm402, %v491, 0.0
      %493 = vadd.xlane.f32.xlu0 %v492
      %v494 = vpop.xlane.xlu0 %493
      %v495 = vrcp.pop %v494
      %v496 = vmul.f32 %v491, %v495
      %v497 = vpack.c.bf16 %v496, %v496
      %498 = vrot.lane.b32.xlu0 %v436, 88
      %v499 = vpop.permute.xlu0 %498
      %v501 = vsel %vm402, %v497, 0
      %v504 = vsel %vm442, %v499, 0
      %506 = vmatpush.bf16.msra.mxu0 0
      %507 = vmatpush.bf16.msra.mxu0 0
      %508 = vmatpush.bf16.msra.mxu0 0
      %509 = vmatpush.bf16.msra.mxu0 0
      %510 = vmatpush.bf16.msra.mxu0 0
      %511 = vmatpush.bf16.msra.mxu0 0
      %512 = vmatpush.bf16.msra.mxu0 0
      %513 = vmatpush.bf16.msra.mxu0 %v504
      %514 = vmatmul.bf16.gmra.mxu0 %v501
      %v515 = vpop.f32.mrf.mxu0
      %v516 = vadd.f32 0.0, %v515
      %v517 = vpop.f32.mrf.mxu0
      %518 = vdwg.mxu0
      %v519 = vpack.c.bf16 %v516, %v516
      %v521 = vsel %vm402, %v519, 0
      %v524 = vsel %vm442, %v399, 0
      %526 = vmatpush.bf16.msra.mxu0 0
      %527 = vmatpush.bf16.msra.mxu0 0
      %528 = vmatpush.bf16.msra.mxu0 0
      %529 = vmatpush.bf16.msra.mxu0 0
      %530 = vmatpush.bf16.msra.mxu0 0
      %531 = vmatpush.bf16.msra.mxu0 0
      %532 = vmatpush.bf16.msra.mxu0 0
      %533 = vmatpush.bf16.msra.mxu0 %v524
      %534 = vmatmul.bf16.gmra.mxu0 %v521
      %v535 = vpop.f32.mrf.mxu0
      %v536 = vadd.f32 0.0, %v535
      %v537 = vpop.f32.mrf.mxu0
      %538 = vdwg.mxu0
      %v540 = vsel %vm402, %v459, 0
      %v543 = vsel %vm442, %v398, 0
      %545 = vmatpush.bf16.msra.mxu0 0
      %546 = vmatpush.bf16.msra.mxu0 0
      %547 = vmatpush.bf16.msra.mxu0 0
      %548 = vmatpush.bf16.msra.mxu0 0
      %549 = vmatpush.bf16.msra.mxu0 0
      %550 = vmatpush.bf16.msra.mxu0 0
      %551 = vmatpush.bf16.msra.mxu0 0
      %552 = vmatpush.bf16.msra.mxu0 %v543
      %553 = vmatmul.bf16.gmra.mxu0 %v540
      %v554 = vpop.f32.mrf.mxu0
      %v555 = vadd.f32 %v536, %v554
      %v556 = vpop.f32.mrf.mxu0
      %557 = vdwg.mxu0
      %558 = vrot.lane.b32.xlu0 %v462, 112
      %v559 = vpop.permute.xlu0 %558
      %560 = vrot.lane.b32.xlu0 %v436, 112
      %v561 = vpop.permute.xlu0 %560
      %v563 = vsel %vm402, %v559, 0
      %v566 = vsel %vm402, %v561, 0
      %568 = vmatpush.bf16.xpose.msra.mxu0 0
      %569 = vmatpush.bf16.xpose.msra.mxu0 0
      %570 = vmatpush.bf16.xpose.msra.mxu0 0
      %571 = vmatpush.bf16.xpose.msra.mxu0 0
      %572 = vmatpush.bf16.xpose.msra.mxu0 0
      %573 = vmatpush.bf16.xpose.msra.mxu0 0
      %574 = vmatpush.bf16.xpose.msra.mxu0 0
      %575 = vmatpush.bf16.xpose.msra.mxu0 %v566
      %576 = vmatmul.bf16.gmra.mxu0 %v563
      %v577 = vpop.f32.mrf.mxu0
      %v578 = vadd.f32 %v396, %v577
      %v579 = vpop.f32.mrf.mxu0
      %580 = vdwg.mxu0
      %v581 = vsel %vm402, %v578, -inf
      %582 = vmax.xlane.f32.xlu0 %v581
      %v583 = vpop.xlane.xlu0 %582
      %v584 = vsub.f32 %v578, %v583
      %v585 = vmul.f32 %v584, 1.442695
      %v586 = vpow.pop %v585
      %v587 = vsel %vm402, %v586, 0.0
      %588 = vadd.xlane.f32.xlu0 %v587
      %v589 = vpop.xlane.xlu0 %588
      %v590 = vrcp.pop %v589
      %v591 = vmul.f32 %v586, %v590
      %v592 = vpack.c.bf16 %v591, %v591
      %593 = vrot.lane.b32.xlu0 %v436, 80
      %v594 = vpop.permute.xlu0 %593
      %v596 = vsel %vm402, %v592, 0
      %v599 = vsel %vm442, %v594, 0
      %601 = vmatpush.bf16.msra.mxu0 0
      %602 = vmatpush.bf16.msra.mxu0 0
      %603 = vmatpush.bf16.msra.mxu0 0
      %604 = vmatpush.bf16.msra.mxu0 0
      %605 = vmatpush.bf16.msra.mxu0 0
      %606 = vmatpush.bf16.msra.mxu0 0
      %607 = vmatpush.bf16.msra.mxu0 0
      %608 = vmatpush.bf16.msra.mxu0 %v599
      %609 = vmatmul.bf16.gmra.mxu0 %v596
      %v610 = vpop.f32.mrf.mxu0
      %v611 = vadd.f32 0.0, %v610
      %v612 = vpop.f32.mrf.mxu0
      %613 = vdwg.mxu0
      %v614 = vpack.c.bf16 %v611, %v611
      %v616 = vsel %vm402, %v614, 0
      %v619 = vsel %vm442, %v400, 0
      %621 = vmatpush.bf16.msra.mxu0 0
      %622 = vmatpush.bf16.msra.mxu0 0
      %623 = vmatpush.bf16.msra.mxu0 0
      %624 = vmatpush.bf16.msra.mxu0 0
      %625 = vmatpush.bf16.msra.mxu0 0
      %626 = vmatpush.bf16.msra.mxu0 0
      %627 = vmatpush.bf16.msra.mxu0 0
      %628 = vmatpush.bf16.msra.mxu0 %v619
      %629 = vmatmul.bf16.gmra.mxu0 %v616
      %v630 = vpop.f32.mrf.mxu0
      %v631 = vadd.f32 0.0, %v630
      %v632 = vpop.f32.mrf.mxu0
      %633 = vdwg.mxu0
      %v634 = vadd.f32 %v555, %v631
      %635 = vrot.lane.b32.xlu0 %v462, 104
      %v636 = vpop.permute.xlu0 %635
      %637 = vrot.lane.b32.xlu0 %v436, 104
      %v638 = vpop.permute.xlu0 %637
      %v640 = vsel %vm402, %v636, 0
      %v643 = vsel %vm402, %v638, 0
      %645 = vmatpush.bf16.xpose.msra.mxu0 0
      %646 = vmatpush.bf16.xpose.msra.mxu0 0
      %647 = vmatpush.bf16.xpose.msra.mxu0 0
      %648 = vmatpush.bf16.xpose.msra.mxu0 0
      %649 = vmatpush.bf16.xpose.msra.mxu0 0
      %650 = vmatpush.bf16.xpose.msra.mxu0 0
      %651 = vmatpush.bf16.xpose.msra.mxu0 0
      %652 = vmatpush.bf16.xpose.msra.mxu0 %v643
      %653 = vmatmul.bf16.gmra.mxu0 %v640
      %v654 = vpop.f32.mrf.mxu0
      %v655 = vadd.f32 %v396, %v654
      %v656 = vpop.f32.mrf.mxu0
      %657 = vdwg.mxu0
      %v658 = vsel %vm402, %v655, -inf
      %659 = vmax.xlane.f32.xlu0 %v658
      %v660 = vpop.xlane.xlu0 %659
      %v661 = vsub.f32 %v655, %v660
      %v662 = vmul.f32 %v661, 1.442695
      %v663 = vpow.pop %v662
      %v664 = vsel %vm402, %v663, 0.0
      %665 = vadd.xlane.f32.xlu0 %v664
      %v666 = vpop.xlane.xlu0 %665
      %v667 = vrcp.pop %v666
      %v668 = vmul.f32 %v663, %v667
      %v669 = vpack.c.bf16 %v668, %v668
      %670 = vrot.lane.b32.xlu0 %v436, 72
      %v671 = vpop.permute.xlu0 %670
      %v673 = vsel %vm402, %v669, 0
      %v676 = vsel %vm442, %v671, 0
      %678 = vmatpush.bf16.msra.mxu0 0
      %679 = vmatpush.bf16.msra.mxu0 0
      %680 = vmatpush.bf16.msra.mxu0 0
      %681 = vmatpush.bf16.msra.mxu0 0
      %682 = vmatpush.bf16.msra.mxu0 0
      %683 = vmatpush.bf16.msra.mxu0 0
      %684 = vmatpush.bf16.msra.mxu0 0
      %685 = vmatpush.bf16.msra.mxu0 %v676
      %686 = vmatmul.bf16.gmra.mxu0 %v673
      %v687 = vpop.f32.mrf.mxu0
      %v688 = vadd.f32 0.0, %v687
      %v689 = vpop.f32.mrf.mxu0
      %690 = vdwg.mxu0
      %v691 = vpack.c.bf16 %v688, %v688
      %v693 = vsel %vm402, %v691, 0
      %v696 = vsel %vm442, %v401, 0
      %698 = vmatpush.bf16.msra.mxu0 0
      %699 = vmatpush.bf16.msra.mxu0 0
      %700 = vmatpush.bf16.msra.mxu0 0
      %701 = vmatpush.bf16.msra.mxu0 0
      %702 = vmatpush.bf16.msra.mxu0 0
      %703 = vmatpush.bf16.msra.mxu0 0
      %704 = vmatpush.bf16.msra.mxu0 0
      %705 = vmatpush.bf16.msra.mxu0 %v696
      %706 = vmatmul.bf16.gmra.mxu0 %v693
      %v707 = vpop.f32.mrf.mxu0
      %v708 = vadd.f32 0.0, %v707
      %v709 = vpop.f32.mrf.mxu0
      %710 = vdwg.mxu0
      %v711 = vadd.f32 %v634, %v708
      %v712 = vld [vmem:[%s5] sm:$0x1]
      %v714 = vperm.slane %v712, 0
      %v716 = vadd.f32 %v711, %v714
      %v717 = vld [vmem:[%s383] sm:$0xf]
      %v718 = vunpack.c.l.bf16 %v717
      %v719 = vadd.f32 %v718, %v716
      %vm720 = vcmask 261120
      %v721 = vsel %vm720, %v719, 0.0
      %722 = vadd.xlane.f32.xlu0 %v721
      %v723 = vpop.xlane.xlu0 %722
      %v724 = vrcp.pop 32.0
      %v725 = vmul.f32 32.0, %v724
      %v726 = vsub.f32 1.0, %v725
      %v727 = vmul.f32 %v724, %v726
      %v728 = vadd.f32 %v724, %v727
      %vm729 = vweird.f32 %v724
      %v730 = vsel %vm729, %v724, %v728
      %v731 = vmul.f32 %v723, %v730
      %v732 = vsub.f32 %v719, %v731
      %v733 = vmul.f32 %v732, %v732
      %v734 = vsel %vm720, %v733, 0.0
      %735 = vadd.xlane.f32.xlu0 %v734
      %v736 = vpop.xlane.xlu0 %735
      %v737 = vmul.f32 %v736, %v730
      %v738 = vadd.f32 %v737, 1e-05
      %v739 = vrsqrt.pop %v738
      %v740 = vmul.f32 %v739, %v738
      %v741 = vmul.f32 %v740, %v739
      %v742 = vmul.f32 0.5, %v741
      %v743 = vsub.f32 1.5, %v742
      %v744 = vmul.f32 %v739, %v743
      %vm745 = vweird.f32 %v738
      %vm746 = vweird.f32 %v739
      %vm747 = vmor %vm745, %vm746
      %v748 = vsel %vm747, %v739, %v744
      %v749 = vmul.f32 %v732, %v748
      %v750 = vld [vmem:[%s6] sm:$0x1]
      %v752 = vperm.slane %v750, 0
      %v754 = vmul.f32 %v749, %v752
      %v755 = vld [vmem:[%s7] sm:$0x1]
      %v757 = vperm.slane %v755, 0
      %v759 = vadd.f32 %v754, %v757
      %v760 = vpack.c.bf16 %v759, %v759
      %vm761 = vcmask 257024
      %762 = vst.msk [vmem:[%s390] sm:$0xf] %vm761, %v760
      %p763 = scmp.lt.s32.totalorder %s23, 1
      %s764 = scalar_select %p763, %s23, 1
      %p765 = scmp.lt.s32.totalorder %s24, 0
      %s766 = scalar_select %p765, %s24, 0
      %s767 = sadd.s32 %s766, %s764
      %s768 = smul.addr %s767, 4
      %s769 = scalar_lea.vmem %s8, %s768
      // Predicated region
      $region53: #{classic_transformer_forward.20} parent=51 // pred_check
        %p770 = pneg %p243
      $region54: #{classic_transformer_forward.20} parent=51 // pred_check_branch
        %772 = sbr.rel (%p770) target = $region56
      $region55: #{classic_transformer_forward.20} parent=51 // pred_region
        _
      $region56: #{classic_transformer_forward.20} parent=51 // pred_fallthru
        _
    $region52: #{classic_transformer_forward.20} parent=5 // pred_fallthru
      _
    %p773 = scmp.le.s32.totalorder 2, %s14
    // Predicated region
    $region57: #{classic_transformer_forward.20} parent=5 // pred_check
      %p774 = pneg %p773
    $region58: #{classic_transformer_forward.20} parent=5 // pred_check_branch
      %776 = sbr.rel (%p774) target = $region60
    $region59: #{classic_transformer_forward.20} parent=5 // pred_region
      %s777 = ssub.s32 %s14, 2
      // Predicated region
      $region61: #{classic_transformer_forward.20} parent=59 // pred_check
        %p778 = pneg %p249
      $region62: #{classic_transformer_forward.20} parent=59 // pred_check_branch
        %780 = sbr.rel (%p778) target = $region64
      $region63: #{classic_transformer_forward.20} parent=59 // pred_region
        %p781 = scmp.lt.s32.totalorder %s25, 1
        %s782 = scalar_select %p781, %s25, 1
        %p783 = scmp.lt.s32.totalorder %s26, 0
        %s784 = scalar_select %p783, %s26, 0
        %s785 = sadd.s32 %s784, %s782
        %s786 = smul.addr %s785, 4
        %s787 = scalar_lea.vmem %s8, %s786
      $region64: #{classic_transformer_forward.20} parent=59 // pred_fallthru
        _
    $region60: #{classic_transformer_forward.20} parent=5 // pred_fallthru
      _
  $region6: #{classic_transformer_forward.20} parent=0 // loop_footer
    %s18 = sadd.s32 1, %s14
  $region7: #{classic_transformer_forward.20} parent=0 // loop_footer_branch
    %13 = sbr.rel target = $region3
  $region8: #{classic_transformer_forward.20} parent=0 // loop_exit
    _

// kernel: classic_transformer_forward.27
$region0: #{classic_transformer_forward.27}
  #allocation0 [shape = 'u32[]', space=smem, size = 0x4, offset = 0x4, fixed_abs, tag = 'smem constant byte address 0x4 - core index']
  #allocation1 [shape = 'u32[72,128]{1,0:T(1,128)}', space=vmem, size = 0x9000, scoped, tag = 'internal scratch']
  %s0 = inlined_call_operand.vmem [shape: bf16[16,32], index: 0, kind: input, shape index: {}]
  %s1 = inlined_call_operand.vmem [shape: bf16[32,32], index: 1, kind: input, shape index: {}]
  %s2 = inlined_call_operand.hbm [shape: f32[1,32], index: 2, kind: input, shape index: {}]
  %s3 = inlined_call_operand.vmem [shape: bf16[16,32], index: 3, kind: output, shape index: {}]
  %s4 = sld [smem:[#allocation0]]
  $region26: #{classic_transformer_forward.27} parent=0
    _
  %s6 = ssub.s32 1, %s4
  %s7 = scalar_select 0, %s6, %s4
  $region1: #{classic_transformer_forward.27} parent=0
    #allocation2 [shape = 'u8[512]{0}', space=vmem, size = 0x400, scoped, tag = 'input window, operand 2, single buffered']
    #allocation3 [shape = 's32[1]{0}', space=sflag, size = 0x4, scoped, tag = 'scoped memory for classic_transformer_forward.27']
    %8 = vsyncpa [#allocation3], 0
    // Predicated region
    $region2: #{classic_transformer_forward.27} parent=1 // pred_check
      _
    $region3: #{classic_transformer_forward.27} parent=1 // pred_check_branch
      %10 = sbr.rel (0) target = $region5
    $region4: #{classic_transformer_forward.27} parent=1 // pred_region
      _
    $region5: #{classic_transformer_forward.27} parent=1 // pred_fallthru
      _
    // Predicated region
    $region6: #{classic_transformer_forward.27} parent=1 // pred_check
      _
    $region7: #{classic_transformer_forward.27} parent=1 // pred_check_branch
      %12 = sbr.rel (0) target = $region9
    $region8: #{classic_transformer_forward.27} parent=1 // pred_region
      _
    $region9: #{classic_transformer_forward.27} parent=1 // pred_fallthru
      _
    // Predicated region
    $region10: #{classic_transformer_forward.27} parent=1 // pred_check
      _
    $region11: #{classic_transformer_forward.27} parent=1 // pred_check_branch
      %14 = sbr.rel (0) target = $region13
    $region12: #{classic_transformer_forward.27} parent=1 // pred_region
      %16 = vsyncadd [#allocation3], 0
      %s18 = sshll.u32 %s2, 4
      %s19 = int_to_ptr.hbm [resolvable:$true] %s18
      %s20 = sshll.u32 [#allocation2], 4
      %s21 = int_to_ptr.vmem [resolvable:$true] %s20
      %23 = dma.hbm_to_vmem [thread:$0]  %s19, 16, %s21, [#allocation3]
    $region13: #{classic_transformer_forward.27} parent=1 // pred_fallthru
      _
    // Predicated region
    $region14: #{classic_transformer_forward.27} parent=1 // pred_check
      _
    $region15: #{classic_transformer_forward.27} parent=1 // pred_check_branch
      %25 = sbr.rel (0) target = $region17
    $region16: #{classic_transformer_forward.27} parent=1 // pred_region
      %27 = dma.done [#allocation3], 16
    $region17: #{classic_transformer_forward.27} parent=1 // pred_fallthru
      _
    %v29 = vld [vmem:[%s0] sm:$0xf]
    %v30 = vld [vmem:[%s0 + $0x4] sm:$0xf]
    %v31 = vld [vmem:[%s1] sm:$0xf]
    %v32 = vld [vmem:[%s1 + $0x4] sm:$0xf]
    %v33 = vld [vmem:[%s1 + $0x8] sm:$0xf]
    %v34 = vld [vmem:[%s1 + $0xc] sm:$0xf]
    %v35 = vld [vmem:[#allocation2] sm:$0x1]
    %v37 = vperm.slane %v35, 0
    %v41 = vunpack.c.l.b16 %v29
    %v42 = vunpack.c.l.b16 %v30
    %v43 = vpack.c.b16 %v42, %v41
    %v48 = vunpack.c.l.b16 %v31
    %v49 = vunpack.c.l.b16 %v32
    %v50 = vunpack.c.l.b16 %v33
    %v51 = vunpack.c.l.b16 %v34
    %v52 = vpack.c.b16 %v49, %v48
    %v53 = vpack.c.b16 %v51, %v50
    %vm56 = vcmask 261120
    %v58 = vsel %vm56, %v43, 0
    %60 = vmatpush.bf16.msra.mxu0 0
    %61 = vmatpush.bf16.msra.mxu0 0
    %62 = vmatpush.bf16.msra.mxu0 0
    %63 = vmatpush.bf16.msra.mxu0 0
    %64 = vmatpush.bf16.msra.mxu0 0
    %65 = vmatpush.bf16.msra.mxu0 0
    %66 = vmatpush.bf16.msra.mxu0 %v53
    %67 = vmatpush.bf16.msra.mxu0 %v52
    %68 = vmatmul.bf16.gmra.mxu0 %v58
    %v69 = vpop.f32.mrf.mxu0
    %v70 = vadd.f32 %v37, %v69
    %v71 = vpop.f32.mrf.mxu0
    %v72 = vadd.f32 %v37, %v71
    %73 = vdwg.mxu0
    %v74 = vpack.c.bf16 %v70, %v70
    %v75 = vpack.c.bf16 %v72, %v72
    %vm76 = vcmask 257024
    %77 = vst.msk [vmem:[%s3] sm:$0xf] %vm76, %v74
    %78 = vst.msk [vmem:[%s3 + $0x4] sm:$0xf] %vm76, %v75
    // Predicated region
    $region18: #{classic_transformer_forward.27} parent=1 // pred_check
      _
    $region19: #{classic_transformer_forward.27} parent=1 // pred_check_branch
      %80 = sbr.rel (0) target = $region21
    $region20: #{classic_transformer_forward.27} parent=1 // pred_region
      _
    $region21: #{classic_transformer_forward.27} parent=1 // pred_fallthru
      _
    // Predicated region
    $region22: #{classic_transformer_forward.27} parent=1 // pred_check
      _
    $region23: #{classic_transformer_forward.27} parent=1 // pred_check_branch
      %82 = sbr.rel (0) target = $region25
    $region24: #{classic_transformer_forward.27} parent=1 // pred_region
      _
    $region25: #{classic_transformer_forward.27} parent=1 // pred_fallthru
      _
    %83 = vsyncpa [#allocation3], 1

// kernel: classic_transformer_forward.25
$region0: #{classic_transformer_forward.25}
  #allocation0 [shape = 'u32[]', space=smem, size = 0x4, offset = 0x4, fixed_abs, tag = 'smem constant byte address 0x4 - core index']
  #allocation1 [shape = 'u32[72,128]{1,0:T(1,128)}', space=vmem, size = 0x9000, scoped, tag = 'internal scratch']
  %s0 = inlined_call_operand.vmem [shape: bf16[16,32], index: 0, kind: input, shape index: {}]
  %s1 = inlined_call_operand.vmem [shape: bf16[32,32], index: 1, kind: input, shape index: {}]
  %s2 = inlined_call_operand.hbm [shape: f32[1,32], index: 2, kind: input, shape index: {}]
  %s3 = inlined_call_operand.vmem [shape: bf16[32,64], index: 3, kind: input, shape index: {}]
  %s4 = inlined_call_operand.hbm [shape: f32[1,64], index: 4, kind: input, shape index: {}]
  %s5 = inlined_call_operand.vmem [shape: bf16[16,32], index: 5, kind: output, shape index: {0}]
  %s6 = inlined_call_operand.vmem [shape: bf16[16,64], index: 6, kind: output, shape index: {1}]
  %7 = xla_tuple %s5, %s6
  %s8 = sld [smem:[#allocation0]]
  $region46: #{classic_transformer_forward.25} parent=0
    _
  %s10 = ssub.s32 1, %s8
  %s11 = scalar_select 0, %s10, %s8
  $region1: #{classic_transformer_forward.25} parent=0
    #allocation2 [shape = 'u8[512]{0}', space=vmem, size = 0x400, scoped, tag = 'input window, operand 2, single buffered']
    #allocation3 [shape = 's32[1]{0}', space=sflag, size = 0x4, scoped, tag = 'scoped memory for classic_transformer_forward.25']
    #allocation4 [shape = 'u8[512]{0}', space=vmem, size = 0x400, scoped, tag = 'input window, operand 4, single buffered']
    #allocation5 [shape = 's32[1]{0}', space=sflag, size = 0x4, scoped, tag = 'scoped memory for classic_transformer_forward.25']
    %12 = vsyncpa [#allocation3], 0
    %13 = vsyncpa [#allocation5], 0
    // Predicated region
    $region2: #{classic_transformer_forward.25} parent=1 // pred_check
      _
    $region3: #{classic_transformer_forward.25} parent=1 // pred_check_branch
      %15 = sbr.rel (0) target = $region5
    $region4: #{classic_transformer_forward.25} parent=1 // pred_region
      _
    $region5: #{classic_transformer_forward.25} parent=1 // pred_fallthru
      _
    // Predicated region
    $region6: #{classic_transformer_forward.25} parent=1 // pred_check
      _
    $region7: #{classic_transformer_forward.25} parent=1 // pred_check_branch
      %17 = sbr.rel (0) target = $region9
    $region8: #{classic_transformer_forward.25} parent=1 // pred_region
      _
    $region9: #{classic_transformer_forward.25} parent=1 // pred_fallthru
      _
    // Predicated region
    $region10: #{classic_transformer_forward.25} parent=1 // pred_check
      _
    $region11: #{classic_transformer_forward.25} parent=1 // pred_check_branch
      %19 = sbr.rel (0) target = $region13
    $region12: #{classic_transformer_forward.25} parent=1 // pred_region
      %21 = vsyncadd [#allocation3], 0
      %s23 = sshll.u32 %s2, 4
      %s24 = int_to_ptr.hbm [resolvable:$true] %s23
      %s25 = sshll.u32 [#allocation2], 4
      %s26 = int_to_ptr.vmem [resolvable:$true] %s25
      %28 = dma.hbm_to_vmem [thread:$0]  %s24, 16, %s26, [#allocation3]
    $region13: #{classic_transformer_forward.25} parent=1 // pred_fallthru
      _
    // Predicated region
    $region14: #{classic_transformer_forward.25} parent=1 // pred_check
      _
    $region15: #{classic_transformer_forward.25} parent=1 // pred_check_branch
      %30 = sbr.rel (0) target = $region17
    $region16: #{classic_transformer_forward.25} parent=1 // pred_region
      _
    $region17: #{classic_transformer_forward.25} parent=1 // pred_fallthru
      _
    // Predicated region
    $region18: #{classic_transformer_forward.25} parent=1 // pred_check
      _
    $region19: #{classic_transformer_forward.25} parent=1 // pred_check_branch
      %32 = sbr.rel (0) target = $region21
    $region20: #{classic_transformer_forward.25} parent=1 // pred_region
      %34 = vsyncadd [#allocation5], 0
      %s36 = sshll.u32 %s4, 4
      %s37 = int_to_ptr.hbm [resolvable:$true] %s36
      %s38 = sshll.u32 [#allocation4], 4
      %s39 = int_to_ptr.vmem [resolvable:$true] %s38
      %41 = dma.hbm_to_vmem [thread:$0]  %s37, 16, %s39, [#allocation5]
    $region21: #{classic_transformer_forward.25} parent=1 // pred_fallthru
      _
    // Predicated region
    $region22: #{classic_transformer_forward.25} parent=1 // pred_check
      _
    $region23: #{classic_transformer_forward.25} parent=1 // pred_check_branch
      %43 = sbr.rel (0) target = $region25
    $region24: #{classic_transformer_forward.25} parent=1 // pred_region
      %45 = dma.done [#allocation3], 16
    $region25: #{classic_transformer_forward.25} parent=1 // pred_fallthru
      _
    // Predicated region
    $region26: #{classic_transformer_forward.25} parent=1 // pred_check
      _
    $region27: #{classic_transformer_forward.25} parent=1 // pred_check_branch
      %47 = sbr.rel (0) target = $region29
    $region28: #{classic_transformer_forward.25} parent=1 // pred_region
      %49 = dma.done [#allocation5], 16
    $region29: #{classic_transformer_forward.25} parent=1 // pred_fallthru
      _
    %v51 = vld [vmem:[%s0] sm:$0xf]
    %v52 = vld [vmem:[%s0 + $0x4] sm:$0xf]
    %v53 = vld [vmem:[%s1] sm:$0xf]
    %v54 = vld [vmem:[%s1 + $0x4] sm:$0xf]
    %v55 = vld [vmem:[%s1 + $0x8] sm:$0xf]
    %v56 = vld [vmem:[%s1 + $0xc] sm:$0xf]
    %v57 = vld [vmem:[#allocation2] sm:$0x1]
    %v59 = vperm.slane %v57, 0
    %v63 = vunpack.c.l.b16 %v51
    %v64 = vunpack.c.l.b16 %v52
    %v65 = vpack.c.b16 %v64, %v63
    %v70 = vunpack.c.l.b16 %v53
    %v71 = vunpack.c.l.b16 %v54
    %v72 = vunpack.c.l.b16 %v55
    %v73 = vunpack.c.l.b16 %v56
    %v74 = vpack.c.b16 %v71, %v70
    %v75 = vpack.c.b16 %v73, %v72
    %vm78 = vcmask 261120
    %v80 = vsel %vm78, %v65, 0
    %82 = vmatpush.bf16.msra.mxu0 0
    %83 = vmatpush.bf16.msra.mxu0 0
    %84 = vmatpush.bf16.msra.mxu0 0
    %85 = vmatpush.bf16.msra.mxu0 0
    %86 = vmatpush.bf16.msra.mxu0 0
    %87 = vmatpush.bf16.msra.mxu0 0
    %88 = vmatpush.bf16.msra.mxu0 %v75
    %89 = vmatpush.bf16.msra.mxu0 %v74
    %90 = vmatmul.bf16.gmra.mxu0 %v80
    %v91 = vpop.f32.mrf.mxu0
    %v92 = vadd.f32 %v59, %v91
    %v93 = vpop.f32.mrf.mxu0
    %v94 = vadd.f32 %v59, %v93
    %95 = vdwg.mxu0
    %v96 = vpack.c.bf16 %v92, %v92
    %v97 = vpack.c.bf16 %v94, %v94
    %vm98 = vcmask 257024
    %99 = vst.msk [vmem:[%s5] sm:$0xf] %vm98, %v96
    %100 = vst.msk [vmem:[%s5 + $0x4] sm:$0xf] %vm98, %v97
    %v101 = vld [vmem:[%s3] sm:$0xf]
    %v102 = vld [vmem:[%s3 + $0x4] sm:$0xf]
    %v103 = vld [vmem:[%s3 + $0x8] sm:$0xf]
    %v104 = vld [vmem:[%s3 + $0xc] sm:$0xf]
    %v105 = vld [vmem:[#allocation4] sm:$0x1]
    %v107 = vperm.slane %v105, 0
    %v113 = vunpack.c.l.b16 %v101
    %v114 = vunpack.c.l.b16 %v102
    %v115 = vunpack.c.l.b16 %v103
    %v116 = vunpack.c.l.b16 %v104
    %v117 = vpack.c.b16 %v114, %v113
    %v118 = vpack.c.b16 %v116, %v115
    %121 = vmatpush.bf16.msra.mxu0 0
    %122 = vmatpush.bf16.msra.mxu0 0
    %123 = vmatpush.bf16.msra.mxu0 0
    %124 = vmatpush.bf16.msra.mxu0 0
    %125 = vmatpush.bf16.msra.mxu0 0
    %126 = vmatpush.bf16.msra.mxu0 0
    %127 = vmatpush.bf16.msra.mxu0 %v118
    %128 = vmatpush.bf16.msra.mxu0 %v117
    %129 = vmatmul.bf16.gmra.mxu0 %v80
    %v130 = vpop.f32.mrf.mxu0
    %v131 = vadd.f32 %v107, %v130
    %v132 = vpop.f32.mrf.mxu0
    %v133 = vadd.f32 %v107, %v132
    %134 = vdwg.mxu0
    %v135 = vpack.c.bf16 %v131, %v131
    %v136 = vpack.c.bf16 %v133, %v133
    %vm137 = vcmask 519168
    %138 = vst.msk [vmem:[%s6] sm:$0xf] %vm137, %v135
    %139 = vst.msk [vmem:[%s6 + $0x4] sm:$0xf] %vm137, %v136
    // Predicated region
    $region30: #{classic_transformer_forward.25} parent=1 // pred_check
      _
    $region31: #{classic_transformer_forward.25} parent=1 // pred_check_branch
      %141 = sbr.rel (0) target = $region33
    $region32: #{classic_transformer_forward.25} parent=1 // pred_region
      _
    $region33: #{classic_transformer_forward.25} parent=1 // pred_fallthru
      _
    // Predicated region
    $region34: #{classic_transformer_forward.25} parent=1 // pred_check
      _
    $region35: #{classic_transformer_forward.25} parent=1 // pred_check_branch
      %143 = sbr.rel (0) target = $region37
    $region36: #{classic_transformer_forward.25} parent=1 // pred_region
      _
    $region37: #{classic_transformer_forward.25} parent=1 // pred_fallthru
      _
    // Predicated region
    $region38: #{classic_transformer_forward.25} parent=1 // pred_check
      _
    $region39: #{classic_transformer_forward.25} parent=1 // pred_check_branch
      %145 = sbr.rel (0) target = $region41
    $region40: #{classic_transformer_forward.25} parent=1 // pred_region
      _
    $region41: #{classic_transformer_forward.25} parent=1 // pred_fallthru
      _
    // Predicated region
    $region42: #{classic_transformer_forward.25} parent=1 // pred_check
      _
    $region43: #{classic_transformer_forward.25} parent=1 // pred_check_branch
      %147 = sbr.rel (0) target = $region45
    $region44: #{classic_transformer_forward.25} parent=1 // pred_region
      _
    $region45: #{classic_transformer_forward.25} parent=1 // pred_fallthru
      _
    %148 = vsyncpa [#allocation3], 1
    %149 = vsyncpa [#allocation5], 1

// kernel: classic_transformer_forward.26
$region0: #{classic_transformer_forward.26}
  #allocation0 [shape = 'u32[]', space=smem, size = 0x4, offset = 0x4, fixed_abs, tag = 'smem constant byte address 0x4 - core index']
  #allocation1 [shape = 'u32[72,128]{1,0:T(1,128)}', space=vmem, size = 0x9000, scoped, tag = 'internal scratch']
  %s0 = inlined_call_operand.vmem [shape: bf16[2,8,32], index: 0, kind: input, shape index: {}]
  %s1 = inlined_call_operand.vmem [shape: bf16[2,8,64], index: 1, kind: input, shape index: {}]
  %s2 = inlined_call_operand.vmem [shape: f32[2,1,8], index: 2, kind: input, shape index: {}]
  %s3 = inlined_call_operand.vmem [shape: bf16[2,8,32], index: 3, kind: input, shape index: {}]
  %s4 = inlined_call_operand.vmem [shape: bf16[32,32], index: 4, kind: input, shape index: {}]
  %s5 = inlined_call_operand.hbm [shape: f32[1,32], index: 5, kind: input, shape index: {}]
  %s6 = inlined_call_operand.hbm [shape: f32[1,32], index: 6, kind: input, shape index: {}]
  %s7 = inlined_call_operand.hbm [shape: f32[1,32], index: 7, kind: input, shape index: {}]
  %s8 = inlined_call_operand.vmem [shape: bf16[2,8,32], index: 8, kind: output, shape index: {}]
  %s9 = sld [smem:[#allocation0]]
  $region77: #{classic_transformer_forward.26} parent=0
    _
  %s11 = ssub.s32 1, %s9
  %s12 = scalar_select 0, %s11, %s9
  $region1: #{classic_transformer_forward.26} parent=0
    #allocation2 [shape = 'u8[512]{0}', space=vmem, size = 0x400, scoped, tag = 'input window, operand 5, single buffered']
    #allocation3 [shape = 's32[2]{0}', space=sflag, size = 0x8, scoped, tag = 'scoped memory for classic_transformer_forward.26']
    #allocation4 [shape = 'u8[512]{0}', space=vmem, size = 0x400, scoped, tag = 'input window, operand 6, single buffered']
    #allocation5 [shape = 's32[1]{0}', space=sflag, size = 0x4, scoped, tag = 'scoped memory for classic_transformer_forward.26']
    #allocation6 [shape = 'u8[512]{0}', space=vmem, size = 0x400, scoped, tag = 'input window, operand 7, single buffered']
    %13 = vsyncpa [#allocation3], 0
    %14 = vsyncpa [#allocation5], 0
    loop: start=0, step=1, limit=4
    $region2: #{classic_transformer_forward.26} parent=1 // loop_pre_header
      _
    $region3: #{classic_transformer_forward.26} parent=1 // loop_header
      %s16 = sphi 0, %s20
      %p17 = scmp.ge.s32.totalorder %s16, 4
      %s23 = sphi 0, %s35
      %s24 = sphi 0, %s31
      %s25 = sphi 0, %s23
      %s26 = sphi 0, %s24
      %s27 = sphi 0, %s25
      %s28 = sphi 0, %s26
      %s40 = sphi 0, %s42
      %s43 = sphi 0, %s40
      %s44 = sphi 0, %s43
      %s60 = sphi 0, %s44
      %s66 = sphi 0, %s68
      %s69 = sphi 0, %s66
      %s70 = sphi 0, %s69
      %s86 = sphi 0, %s70
      %s92 = sphi 0, %s94
      %s95 = sphi 0, %s92
      %s96 = sphi 0, %s95
      %s112 = sphi 0, %s96
      %s120 = sphi 0, %s122
      %s123 = sphi 0, %s120
      %s124 = sphi 0, %s123
      %s140 = sphi 0, %s124
      %s144 = sphi 0, %s144
      %s146 = sphi 0, %s144
      %s147 = sphi 0, %s146
      %s161 = sphi 0, %s147
      %s165 = sphi 0, %s165
      %s167 = sphi 0, %s165
      %s168 = sphi 0, %s167
      %s182 = sphi 0, %s168
      %s186 = sphi 0, %s186
      %s188 = sphi 0, %s186
      %s189 = sphi 0, %s188
      %s203 = sphi 0, %s189
      %s207 = sphi 0, %s207
      %s209 = sphi 0, %s207
      %s210 = sphi 0, %s209
      %s224 = sphi 0, %s210
      %s232 = sphi 0, %s234
      %s235 = sphi 0, %s232
      %s236 = sphi 0, %s235
      %s252 = sphi 0, %s236
    $region4: #{classic_transformer_forward.26} parent=1 // loop_header_branch
      %19 = sbr.rel (%p17) target = $region8
    $region5: #{classic_transformer_forward.26} parent=1 // loop_body
      %s21 = ssub.s32 %s16, 1
      %s22 = ssub.s32 %s16, 2
      %s29 = sadd.s32 1, %s24
      %p30 = scmp.ge.s32.totalorder %s29, 1
      %s31 = scalar_select %p30, 0, %s29
      %s32 = sadd.s32 1, %s23
      %s33 = scalar_select %p30, %s32, %s23
      %p34 = scmp.ge.s32.totalorder %s33, 2
      %s35 = scalar_select %p34, 0, %s33
      %s36 = ssub.s32 %s23, %s35
      %s37 = ssub.s32 %s24, %s31
      %s38 = sor.u32 %s36, %s37
      %p39 = scmp.eq.s32.totalorder %s38, 0
      %s41 = sadd.s32 %s40, 1
      %s42 = scalar_select %p39, %s40, %s41
      %p45 = pneg %p39
      %p46 = scmp.eq.s32.totalorder %s16, 1
      %p47 = por %p45, %p46
      %p48 = scmp.ne.s32.totalorder %s40, %s43
      %p49 = scmp.eq.s32.totalorder %s16, 0
      %p50 = por %p48, %p49
      %p51 = scmp.ne.s32.totalorder %s40, %s43
      %p52 = scmp.eq.s32.totalorder %s21, 1
      %p53 = por %p51, %p52
      %p54 = scmp.ne.s32.totalorder %s43, %s44
      %p55 = scmp.eq.s32.totalorder %s21, 0
      %p56 = por %p54, %p55
      %p57 = scmp.ne.s32.totalorder %s43, %s44
      %p58 = scmp.eq.s32.totalorder %s22, 1
      %p59 = por %p57, %p58
      %p61 = scmp.ne.s32.totalorder %s44, %s60
      %p62 = scmp.eq.s32.totalorder %s22, 0
      %p63 = por %p61, %p62
      %s64 = ssub.s32 %s23, %s35
      %p65 = scmp.eq.s32.totalorder %s64, 0
      %s67 = sadd.s32 %s66, 1
      %s68 = scalar_select %p65, %s66, %s67
      %p71 = pneg %p65
      %p72 = scmp.eq.s32.totalorder %s16, 1
      %p73 = por %p71, %p72
      %p74 = scmp.ne.s32.totalorder %s66, %s69
      %p75 = scmp.eq.s32.totalorder %s16, 0
      %p76 = por %p74, %p75
      %p77 = scmp.ne.s32.totalorder %s66, %s69
      %p78 = scmp.eq.s32.totalorder %s21, 1
      %p79 = por %p77, %p78
      %p80 = scmp.ne.s32.totalorder %s69, %s70
      %p81 = scmp.eq.s32.totalorder %s21, 0
      %p82 = por %p80, %p81
      %p83 = scmp.ne.s32.totalorder %s69, %s70
      %p84 = scmp.eq.s32.totalorder %s22, 1
      %p85 = por %p83, %p84
      %p87 = scmp.ne.s32.totalorder %s70, %s86
      %p88 = scmp.eq.s32.totalorder %s22, 0
      %p89 = por %p87, %p88
      %s90 = ssub.s32 %s23, %s35
      %p91 = scmp.eq.s32.totalorder %s90, 0
      %s93 = sadd.s32 %s92, 1
      %s94 = scalar_select %p91, %s92, %s93
      %p97 = pneg %p91
      %p98 = scmp.eq.s32.totalorder %s16, 1
      %p99 = por %p97, %p98
      %p100 = scmp.ne.s32.totalorder %s92, %s95
      %p101 = scmp.eq.s32.totalorder %s16, 0
      %p102 = por %p100, %p101
      %p103 = scmp.ne.s32.totalorder %s92, %s95
      %p104 = scmp.eq.s32.totalorder %s21, 1
      %p105 = por %p103, %p104
      %p106 = scmp.ne.s32.totalorder %s95, %s96
      %p107 = scmp.eq.s32.totalorder %s21, 0
      %p108 = por %p106, %p107
      %p109 = scmp.ne.s32.totalorder %s95, %s96
      %p110 = scmp.eq.s32.totalorder %s22, 1
      %p111 = por %p109, %p110
      %p113 = scmp.ne.s32.totalorder %s96, %s112
      %p114 = scmp.eq.s32.totalorder %s22, 0
      %p115 = por %p113, %p114
      %s116 = ssub.s32 %s23, %s35
      %s117 = ssub.s32 %s24, %s31
      %s118 = sor.u32 %s116, %s117
      %p119 = scmp.eq.s32.totalorder %s118, 0
      %s121 = sadd.s32 %s120, 1
      %s122 = scalar_select %p119, %s120, %s121
      %p125 = pneg %p119
      %p126 = scmp.eq.s32.totalorder %s16, 1
      %p127 = por %p125, %p126
      %p128 = scmp.ne.s32.totalorder %s120, %s123
      %p129 = scmp.eq.s32.totalorder %s16, 0
      %p130 = por %p128, %p129
      %p131 = scmp.ne.s32.totalorder %s120, %s123
      %p132 = scmp.eq.s32.totalorder %s21, 1
      %p133 = por %p131, %p132
      %p134 = scmp.ne.s32.totalorder %s123, %s124
      %p135 = scmp.eq.s32.totalorder %s21, 0
      %p136 = por %p134, %p135
      %p137 = scmp.ne.s32.totalorder %s123, %s124
      %p138 = scmp.eq.s32.totalorder %s22, 1
      %p139 = por %p137, %p138
      %p141 = scmp.ne.s32.totalorder %s124, %s140
      %p142 = scmp.eq.s32.totalorder %s22, 0
      %p143 = por %p141, %p142
      %s145 = sadd.s32 %s144, 1
      %p148 = scmp.eq.s32.totalorder %s16, 1
      %p149 = scmp.ne.s32.totalorder %s144, %s146
      %p150 = scmp.eq.s32.totalorder %s16, 0
      %p151 = por %p149, %p150
      %p152 = scmp.ne.s32.totalorder %s144, %s146
      %p153 = scmp.eq.s32.totalorder %s21, 1
      %p154 = por %p152, %p153
      %p155 = scmp.ne.s32.totalorder %s146, %s147
      %p156 = scmp.eq.s32.totalorder %s21, 0
      %p157 = por %p155, %p156
      %p158 = scmp.ne.s32.totalorder %s146, %s147
      %p159 = scmp.eq.s32.totalorder %s22, 1
      %p160 = por %p158, %p159
      %p162 = scmp.ne.s32.totalorder %s147, %s161
      %p163 = scmp.eq.s32.totalorder %s22, 0
      %p164 = por %p162, %p163
      %s166 = sadd.s32 %s165, 1
      %p169 = scmp.eq.s32.totalorder %s16, 1
      %p170 = scmp.ne.s32.totalorder %s165, %s167
      %p171 = scmp.eq.s32.totalorder %s16, 0
      %p172 = por %p170, %p171
      %p173 = scmp.ne.s32.totalorder %s165, %s167
      %p174 = scmp.eq.s32.totalorder %s21, 1
      %p175 = por %p173, %p174
      %p176 = scmp.ne.s32.totalorder %s167, %s168
      %p177 = scmp.eq.s32.totalorder %s21, 0
      %p178 = por %p176, %p177
      %p179 = scmp.ne.s32.totalorder %s167, %s168
      %p180 = scmp.eq.s32.totalorder %s22, 1
      %p181 = por %p179, %p180
      %p183 = scmp.ne.s32.totalorder %s168, %s182
      %p184 = scmp.eq.s32.totalorder %s22, 0
      %p185 = por %p183, %p184
      %s187 = sadd.s32 %s186, 1
      %p190 = scmp.eq.s32.totalorder %s16, 1
      %p191 = scmp.ne.s32.totalorder %s186, %s188
      %p192 = scmp.eq.s32.totalorder %s16, 0
      %p193 = por %p191, %p192
      %p194 = scmp.ne.s32.totalorder %s186, %s188
      %p195 = scmp.eq.s32.totalorder %s21, 1
      %p196 = por %p194, %p195
      %p197 = scmp.ne.s32.totalorder %s188, %s189
      %p198 = scmp.eq.s32.totalorder %s21, 0
      %p199 = por %p197, %p198
      %p200 = scmp.ne.s32.totalorder %s188, %s189
      %p201 = scmp.eq.s32.totalorder %s22, 1
      %p202 = por %p200, %p201
      %p204 = scmp.ne.s32.totalorder %s189, %s203
      %p205 = scmp.eq.s32.totalorder %s22, 0
      %p206 = por %p204, %p205
      %s208 = sadd.s32 %s207, 1
      %p211 = scmp.eq.s32.totalorder %s16, 1
      %p212 = scmp.ne.s32.totalorder %s207, %s209
      %p213 = scmp.eq.s32.totalorder %s16, 0
      %p214 = por %p212, %p213
      %p215 = scmp.ne.s32.totalorder %s207, %s209
      %p216 = scmp.eq.s32.totalorder %s21, 1
      %p217 = por %p215, %p216
      %p218 = scmp.ne.s32.totalorder %s209, %s210
      %p219 = scmp.eq.s32.totalorder %s21, 0
      %p220 = por %p218, %p219
      %p221 = scmp.ne.s32.totalorder %s209, %s210
      %p222 = scmp.eq.s32.totalorder %s22, 1
      %p223 = por %p221, %p222
      %p225 = scmp.ne.s32.totalorder %s210, %s224
      %p226 = scmp.eq.s32.totalorder %s22, 0
      %p227 = por %p225, %p226
      %s228 = ssub.s32 %s23, %s35
      %s229 = ssub.s32 %s24, %s31
      %s230 = sor.u32 %s228, %s229
      %p231 = scmp.eq.s32.totalorder %s230, 0
      %s233 = sadd.s32 %s232, 1
      %s234 = scalar_select %p231, %s232, %s233
      %p237 = pneg %p231
      %p238 = scmp.eq.s32.totalorder %s16, 1
      %p239 = por %p237, %p238
      %p240 = scmp.ne.s32.totalorder %s232, %s235
      %p241 = scmp.eq.s32.totalorder %s16, 0
      %p242 = por %p240, %p241
      %p243 = scmp.ne.s32.totalorder %s232, %s235
      %p244 = scmp.eq.s32.totalorder %s21, 1
      %p245 = por %p243, %p244
      %p246 = scmp.ne.s32.totalorder %s235, %s236
      %p247 = scmp.eq.s32.totalorder %s21, 0
      %p248 = por %p246, %p247
      %p249 = scmp.ne.s32.totalorder %s235, %s236
      %p250 = scmp.eq.s32.totalorder %s22, 1
      %p251 = por %p249, %p250
      %p253 = scmp.ne.s32.totalorder %s236, %s252
      %p254 = scmp.eq.s32.totalorder %s22, 0
      %p255 = por %p253, %p254
      %p256 = scmp.le.s32.totalorder 1, %s16
      %p257 = scmp.lt.s32.totalorder %s16, 3
      %p258 = pnand %p256, %p257
      %p259 = pneg %p258
      // Predicated region
      $region9: #{classic_transformer_forward.26} parent=5 // pred_check
        _
      $region10: #{classic_transformer_forward.26} parent=5 // pred_check_branch
        %261 = sbr.rel (%p258) target = $region12
      $region11: #{classic_transformer_forward.26} parent=5 // pred_region
        %s262 = ssub.s32 %s16, 1
        // Predicated region
        $region13: #{classic_transformer_forward.26} parent=11 // pred_check
          %p263 = pneg %p157
        $region14: #{classic_transformer_forward.26} parent=11 // pred_check_branch
          %265 = sbr.rel (%p263) target = $region16
        $region15: #{classic_transformer_forward.26} parent=11 // pred_region
          _
        $region16: #{classic_transformer_forward.26} parent=11 // pred_fallthru
          _
        // Predicated region
        $region17: #{classic_transformer_forward.26} parent=11 // pred_check
          %p266 = pneg %p178
        $region18: #{classic_transformer_forward.26} parent=11 // pred_check_branch
          %268 = sbr.rel (%p266) target = $region20
        $region19: #{classic_transformer_forward.26} parent=11 // pred_region
          %270 = vsyncadd [#allocation3], 0
          %s272 = sshll.u32 %s5, 4
          %s273 = int_to_ptr.hbm [resolvable:$true] %s272
          %s274 = sshll.u32 [#allocation2], 4
          %s275 = int_to_ptr.vmem [resolvable:$true] %s274
          %277 = dma.hbm_to_vmem [thread:$0]  %s273, 16, %s275, [#allocation3]
        $region20: #{classic_transformer_forward.26} parent=11 // pred_fallthru
          _
        // Predicated region
        $region21: #{classic_transformer_forward.26} parent=11 // pred_check
          %p278 = pneg %p199
        $region22: #{classic_transformer_forward.26} parent=11 // pred_check_branch
          %280 = sbr.rel (%p278) target = $region24
        $region23: #{classic_transformer_forward.26} parent=11 // pred_region
          %282 = vsyncadd [#allocation5], 0
          %s284 = sshll.u32 %s6, 4
          %s285 = int_to_ptr.hbm [resolvable:$true] %s284
          %s286 = sshll.u32 [#allocation4], 4
          %s287 = int_to_ptr.vmem [resolvable:$true] %s286
          %289 = dma.hbm_to_vmem [thread:$0]  %s285, 16, %s287, [#allocation5]
        $region24: #{classic_transformer_forward.26} parent=11 // pred_fallthru
          _
        // Predicated region
        $region25: #{classic_transformer_forward.26} parent=11 // pred_check
          %p290 = pneg %p220
        $region26: #{classic_transformer_forward.26} parent=11 // pred_check_branch
          %292 = sbr.rel (%p290) target = $region28
        $region27: #{classic_transformer_forward.26} parent=11 // pred_region
          %294 = vsyncadd [#allocation5], 0
          %s296 = sshll.u32 %s7, 4
          %s297 = int_to_ptr.hbm [resolvable:$true] %s296
          %s298 = sshll.u32 [#allocation6], 4
          %s299 = int_to_ptr.vmem [resolvable:$true] %s298
          %301 = dma.hbm_to_vmem [thread:$0]  %s297, 16, %s299, [#allocation5]
        $region28: #{classic_transformer_forward.26} parent=11 // pred_fallthru
          _
      $region12: #{classic_transformer_forward.26} parent=5 // pred_fallthru
        _
      %p302 = scmp.lt.s32.totalorder %s16, 2
      // Predicated region
      $region29: #{classic_transformer_forward.26} parent=5 // pred_check
        %p303 = pneg %p302
      $region30: #{classic_transformer_forward.26} parent=5 // pred_check_branch
        %305 = sbr.rel (%p303) target = $region32
      $region31: #{classic_transformer_forward.26} parent=5 // pred_region
        // Predicated region
        $region33: #{classic_transformer_forward.26} parent=31 // pred_check
          %p306 = pneg %p50
        $region34: #{classic_transformer_forward.26} parent=31 // pred_check_branch
          %308 = sbr.rel (%p306) target = $region36
        $region35: #{classic_transformer_forward.26} parent=31 // pred_region
          %p309 = scmp.lt.s32.totalorder %s23, 1
          %s310 = scalar_select %p309, %s23, 1
          %p311 = scmp.lt.s32.totalorder %s24, 0
          %s312 = scalar_select %p311, %s24, 0
          %s313 = sadd.s32 %s312, %s310
          %s314 = smul.addr %s313, 4
          %s315 = scalar_lea.vmem %s0, %s314
        $region36: #{classic_transformer_forward.26} parent=31 // pred_fallthru
          _
        // Predicated region
        $region37: #{classic_transformer_forward.26} parent=31 // pred_check
          %p316 = pneg %p76
        $region38: #{classic_transformer_forward.26} parent=31 // pred_check_branch
          %318 = sbr.rel (%p316) target = $region40
        $region39: #{classic_transformer_forward.26} parent=31 // pred_region
          %p319 = scmp.lt.s32.totalorder %s23, 1
          %s320 = scalar_select %p319, %s23, 1
          %s321 = smul.addr %s320, 4
          %s322 = scalar_lea.vmem %s1, %s321
        $region40: #{classic_transformer_forward.26} parent=31 // pred_fallthru
          _
        // Predicated region
        $region41: #{classic_transformer_forward.26} parent=31 // pred_check
          %p323 = pneg %p102
        $region42: #{classic_transformer_forward.26} parent=31 // pred_check_branch
          %325 = sbr.rel (%p323) target = $region44
        $region43: #{classic_transformer_forward.26} parent=31 // pred_region
          %p326 = scmp.lt.s32.totalorder %s23, 1
          %s327 = scalar_select %p326, %s23, 1
          %s328 = scalar_lea.vmem %s2, %s327
        $region44: #{classic_transformer_forward.26} parent=31 // pred_fallthru
          _
        // Predicated region
        $region45: #{classic_transformer_forward.26} parent=31 // pred_check
          %p329 = pneg %p130
        $region46: #{classic_transformer_forward.26} parent=31 // pred_check_branch
          %331 = sbr.rel (%p329) target = $region48
        $region47: #{classic_transformer_forward.26} parent=31 // pred_region
          %p332 = scmp.lt.s32.totalorder %s23, 1
          %s333 = scalar_select %p332, %s23, 1
          %p334 = scmp.lt.s32.totalorder %s24, 0
          %s335 = scalar_select %p334, %s24, 0
          %s336 = sadd.s32 %s335, %s333
          %s337 = smul.addr %s336, 4
          %s338 = scalar_lea.vmem %s3, %s337
        $region48: #{classic_transformer_forward.26} parent=31 // pred_fallthru
          _
      $region32: #{classic_transformer_forward.26} parent=5 // pred_fallthru
        _
      %p339 = scmp.le.s32.totalorder 1, %s16
      %p340 = scmp.lt.s32.totalorder %s16, 3
      %p341 = pnand %p339, %p340
      %p342 = pneg %p341
      // Predicated region
      $region49: #{classic_transformer_forward.26} parent=5 // pred_check
        _
      $region50: #{classic_transformer_forward.26} parent=5 // pred_check_branch
        %344 = sbr.rel (%p341) target = $region52
      $region51: #{classic_transformer_forward.26} parent=5 // pred_region
        %s345 = ssub.s32 %s16, 1
        // Predicated region
        $region53: #{classic_transformer_forward.26} parent=51 // pred_check
          %p346 = pneg %p178
        $region54: #{classic_transformer_forward.26} parent=51 // pred_check_branch
          %348 = sbr.rel (%p346) target = $region56
        $region55: #{classic_transformer_forward.26} parent=51 // pred_region
          %350 = dma.done [#allocation3], 16
        $region56: #{classic_transformer_forward.26} parent=51 // pred_fallthru
          _
        // Predicated region
        $region57: #{classic_transformer_forward.26} parent=51 // pred_check
          %p351 = pneg %p199
        $region58: #{classic_transformer_forward.26} parent=51 // pred_check_branch
          %353 = sbr.rel (%p351) target = $region60
        $region59: #{classic_transformer_forward.26} parent=51 // pred_region
          %355 = dma.done [#allocation5], 16
        $region60: #{classic_transformer_forward.26} parent=51 // pred_fallthru
          _
        // Predicated region
        $region61: #{classic_transformer_forward.26} parent=51 // pred_check
          %p356 = pneg %p220
        $region62: #{classic_transformer_forward.26} parent=51 // pred_check_branch
          %358 = sbr.rel (%p356) target = $region64
        $region63: #{classic_transformer_forward.26} parent=51 // pred_region
          %360 = dma.done [#allocation5], 16
        $region64: #{classic_transformer_forward.26} parent=51 // pred_fallthru
          _
        %p361 = scmp.lt.s32.totalorder %s25, 1
        %s362 = scalar_select %p361, %s25, 1
        %p363 = scmp.lt.s32.totalorder %s26, 0
        %s364 = scalar_select %p363, %s26, 0
        %s365 = sadd.s32 %s364, %s362
        %s366 = smul.addr %s365, 4
        %s367 = scalar_lea.vmem %s0, %s366
        %p368 = pneg %p56
        %p369 = pneg %p53
        %p370 = scmp.lt.s32.totalorder %s25, 1
        %s371 = scalar_select %p370, %s25, 1
        %s372 = smul.addr %s371, 4
        %s373 = scalar_lea.vmem %s1, %s372
        %p374 = pneg %p82
        %p375 = pneg %p79
        %p376 = scmp.lt.s32.totalorder %s25, 1
        %s377 = scalar_select %p376, %s25, 1
        %s378 = scalar_lea.vmem %s2, %s377
        %p379 = pneg %p108
        %p380 = pneg %p105
        %p381 = scmp.lt.s32.totalorder %s25, 1
        %s382 = scalar_select %p381, %s25, 1
        %p383 = scmp.lt.s32.totalorder %s26, 0
        %s384 = scalar_select %p383, %s26, 0
        %s385 = sadd.s32 %s384, %s382
        %s386 = smul.addr %s385, 4
        %s387 = scalar_lea.vmem %s3, %s386
        %p388 = pneg %p136
        %p389 = pneg %p133
        %p390 = pneg %p157
        %p391 = pneg %p154
        %p392 = pneg %p178
        %p393 = pneg %p175
        %p394 = pneg %p199
        %p395 = pneg %p196
        %p396 = pneg %p220
        %p397 = pneg %p217
        %p398 = pneg %p248
        %p399 = pneg %p245
        %p400 = scmp.lt.s32.totalorder %s25, 1
        %s401 = scalar_select %p400, %s25, 1
        %p402 = scmp.lt.s32.totalorder %s26, 0
        %s403 = scalar_select %p402, %s26, 0
        %s404 = sadd.s32 %s403, %s401
        %s405 = smul.addr %s404, 4
        %s406 = scalar_lea.vmem %s8, %s405
        %p407 = scmp.lt.s32.totalorder %s25, 1
        %s408 = scalar_select %p407, %s25, 1
        %p409 = scmp.lt.s32.totalorder %s26, 0
        %s410 = scalar_select %p409, %s26, 0
        %s411 = sadd.s32 %s410, %s408
        %s412 = smul.addr %s411, 4
        %s413 = scalar_lea.vmem %s0, %s412
        %p414 = scmp.lt.s32.totalorder %s25, 1
        %s415 = scalar_select %p414, %s25, 1
        %s416 = smul.addr %s415, 4
        %s417 = scalar_lea.vmem %s1, %s416
        %p418 = scmp.lt.s32.totalorder %s25, 1
        %s419 = scalar_select %p418, %s25, 1
        %s420 = scalar_lea.vmem %s2, %s419
        %p421 = scmp.lt.s32.totalorder %s25, 1
        %s422 = scalar_select %p421, %s25, 1
        %p423 = scmp.lt.s32.totalorder %s26, 0
        %s424 = scalar_select %p423, %s26, 0
        %s425 = sadd.s32 %s424, %s422
        %s426 = smul.addr %s425, 4
        %s427 = scalar_lea.vmem %s3, %s426
        %p428 = scmp.lt.s32.totalorder %s25, 1
        %s429 = scalar_select %p428, %s25, 1
        %p430 = scmp.lt.s32.totalorder %s26, 0
        %s431 = scalar_select %p430, %s26, 0
        %s432 = sadd.s32 %s431, %s429
        %s433 = smul.addr %s432, 4
        %s434 = scalar_lea.vmem %s8, %s433
        %v436 = vld [vmem:[%s413] sm:$0xf]
        %v437 = vld [vmem:[%s417] sm:$0xf]
        %v438 = vld [vmem:[%s420] sm:$0x1]
        %v440 = vperm.slane %v438, 0
        %s442 = smul.u32 %s26, 8
        %v443 = vlaneseq
        %v444 = vshrl.u32 %v443, 7
        %v445 = vstv %s442
        %v446 = vadd.s32 %v445, %v444
        %v447 = vlaneseq
        %v448 = vand.u32 %v447, 127
        %vm449 = vcmp.le.s32.totalorder %v448, %v446
        %v450 = vsel %vm449, %v440, -1e+09
        %v451 = vld [vmem:[%s4] sm:$0xf]
        %v452 = vld [vmem:[%s4 + $0x4] sm:$0xf]
        %v453 = vld [vmem:[%s4 + $0x8] sm:$0xf]
        %v454 = vld [vmem:[%s4 + $0xc] sm:$0xf]
        %vm455 = vcmask 64512
        %v457 = vsel %vm455, %v436, 0
        %v460 = vsel %vm455, %v437, 0
        %462 = vmatpush.bf16.xpose.msra.mxu0 0
        %463 = vmatpush.bf16.xpose.msra.mxu0 0
        %464 = vmatpush.bf16.xpose.msra.mxu0 0
        %465 = vmatpush.bf16.xpose.msra.mxu0 0
        %466 = vmatpush.bf16.xpose.msra.mxu0 0
        %467 = vmatpush.bf16.xpose.msra.mxu0 0
        %468 = vmatpush.bf16.xpose.msra.mxu0 0
        %469 = vmatpush.bf16.xpose.msra.mxu0 %v460
        %470 = vmatmul.bf16.gmra.mxu0 %v457
        %v471 = vpop.f32.mrf.mxu0
        %v472 = vadd.f32 %v450, %v471
        %v473 = vpop.f32.mrf.mxu0
        %474 = vdwg.mxu0
        %v475 = vsel %vm455, %v472, -inf
        %476 = vmax.xlane.f32.xlu0 %v475
        %v477 = vpop.xlane.xlu0 %476
        %v478 = vsub.f32 %v472, %v477
        %v479 = vmul.f32 %v478, 1.442695
        %v480 = vpow.pop %v479
        %v481 = vsel %vm455, %v480, 0.0
        %482 = vadd.xlane.f32.xlu0 %v481
        %v483 = vpop.xlane.xlu0 %482
        %v484 = vrcp.pop %v483
        %v485 = vmul.f32 %v480, %v484
        %v486 = vpack.c.bf16 %v485, %v485
        %v488 = vunpack.c.l.b16 %v437
        %v489 = vpack.c.b16 %v488, %v488
        %490 = vrot.lane.b32.xlu0 %v489, 96
        %v491 = vpop.permute.xlu0 %490
        %v493 = vsel %vm455, %v486, 0
        %vm495 = vcmask 1043456
        %v497 = vsel %vm495, %v491, 0
        %499 = vmatpush.bf16.msra.mxu0 0
        %500 = vmatpush.bf16.msra.mxu0 0
        %501 = vmatpush.bf16.msra.mxu0 0
        %502 = vmatpush.bf16.msra.mxu0 0
        %503 = vmatpush.bf16.msra.mxu0 0
        %504 = vmatpush.bf16.msra.mxu0 0
        %505 = vmatpush.bf16.msra.mxu0 0
        %506 = vmatpush.bf16.msra.mxu0 %v497
        %507 = vmatmul.bf16.gmra.mxu0 %v493
        %v508 = vpop.f32.mrf.mxu0
        %v509 = vadd.f32 0.0, %v508
        %v510 = vpop.f32.mrf.mxu0
        %511 = vdwg.mxu0
        %v512 = vpack.c.bf16 %v509, %v509
        %v514 = vunpack.c.l.b16 %v436
        %v515 = vpack.c.b16 %v514, %v514
        %516 = vrot.lane.b32.xlu0 %v515, 120
        %v517 = vpop.permute.xlu0 %516
        %518 = vrot.lane.b32.xlu0 %v489, 120
        %v519 = vpop.permute.xlu0 %518
        %v521 = vsel %vm455, %v517, 0
        %v524 = vsel %vm455, %v519, 0
        %526 = vmatpush.bf16.xpose.msra.mxu0 0
        %527 = vmatpush.bf16.xpose.msra.mxu0 0
        %528 = vmatpush.bf16.xpose.msra.mxu0 0
        %529 = vmatpush.bf16.xpose.msra.mxu0 0
        %530 = vmatpush.bf16.xpose.msra.mxu0 0
        %531 = vmatpush.bf16.xpose.msra.mxu0 0
        %532 = vmatpush.bf16.xpose.msra.mxu0 0
        %533 = vmatpush.bf16.xpose.msra.mxu0 %v524
        %534 = vmatmul.bf16.gmra.mxu0 %v521
        %v535 = vpop.f32.mrf.mxu0
        %v536 = vadd.f32 %v450, %v535
        %v537 = vpop.f32.mrf.mxu0
        %538 = vdwg.mxu0
        %v539 = vsel %vm455, %v536, -inf
        %540 = vmax.xlane.f32.xlu0 %v539
        %v541 = vpop.xlane.xlu0 %540
        %v542 = vsub.f32 %v536, %v541
        %v543 = vmul.f32 %v542, 1.442695
        %v544 = vpow.pop %v543
        %v545 = vsel %vm455, %v544, 0.0
        %546 = vadd.xlane.f32.xlu0 %v545
        %v547 = vpop.xlane.xlu0 %546
        %v548 = vrcp.pop %v547
        %v549 = vmul.f32 %v544, %v548
        %v550 = vpack.c.bf16 %v549, %v549
        %551 = vrot.lane.b32.xlu0 %v489, 88
        %v552 = vpop.permute.xlu0 %551
        %v554 = vsel %vm455, %v550, 0
        %v557 = vsel %vm495, %v552, 0
        %559 = vmatpush.bf16.msra.mxu0 0
        %560 = vmatpush.bf16.msra.mxu0 0
        %561 = vmatpush.bf16.msra.mxu0 0
        %562 = vmatpush.bf16.msra.mxu0 0
        %563 = vmatpush.bf16.msra.mxu0 0
        %564 = vmatpush.bf16.msra.mxu0 0
        %565 = vmatpush.bf16.msra.mxu0 0
        %566 = vmatpush.bf16.msra.mxu0 %v557
        %567 = vmatmul.bf16.gmra.mxu0 %v554
        %v568 = vpop.f32.mrf.mxu0
        %v569 = vadd.f32 0.0, %v568
        %v570 = vpop.f32.mrf.mxu0
        %571 = vdwg.mxu0
        %v572 = vpack.c.bf16 %v569, %v569
        %v574 = vsel %vm455, %v572, 0
        %v577 = vsel %vm495, %v452, 0
        %579 = vmatpush.bf16.msra.mxu0 0
        %580 = vmatpush.bf16.msra.mxu0 0
        %581 = vmatpush.bf16.msra.mxu0 0
        %582 = vmatpush.bf16.msra.mxu0 0
        %583 = vmatpush.bf16.msra.mxu0 0
        %584 = vmatpush.bf16.msra.mxu0 0
        %585 = vmatpush.bf16.msra.mxu0 0
        %586 = vmatpush.bf16.msra.mxu0 %v577
        %587 = vmatmul.bf16.gmra.mxu0 %v574
        %v588 = vpop.f32.mrf.mxu0
        %v589 = vadd.f32 0.0, %v588
        %v590 = vpop.f32.mrf.mxu0
        %591 = vdwg.mxu0
        %v593 = vsel %vm455, %v512, 0
        %v596 = vsel %vm495, %v451, 0
        %598 = vmatpush.bf16.msra.mxu0 0
        %599 = vmatpush.bf16.msra.mxu0 0
        %600 = vmatpush.bf16.msra.mxu0 0
        %601 = vmatpush.bf16.msra.mxu0 0
        %602 = vmatpush.bf16.msra.mxu0 0
        %603 = vmatpush.bf16.msra.mxu0 0
        %604 = vmatpush.bf16.msra.mxu0 0
        %605 = vmatpush.bf16.msra.mxu0 %v596
        %606 = vmatmul.bf16.gmra.mxu0 %v593
        %v607 = vpop.f32.mrf.mxu0
        %v608 = vadd.f32 %v589, %v607
        %v609 = vpop.f32.mrf.mxu0
        %610 = vdwg.mxu0
        %611 = vrot.lane.b32.xlu0 %v515, 112
        %v612 = vpop.permute.xlu0 %611
        %613 = vrot.lane.b32.xlu0 %v489, 112
        %v614 = vpop.permute.xlu0 %613
        %v616 = vsel %vm455, %v612, 0
        %v619 = vsel %vm455, %v614, 0
        %621 = vmatpush.bf16.xpose.msra.mxu0 0
        %622 = vmatpush.bf16.xpose.msra.mxu0 0
        %623 = vmatpush.bf16.xpose.msra.mxu0 0
        %624 = vmatpush.bf16.xpose.msra.mxu0 0
        %625 = vmatpush.bf16.xpose.msra.mxu0 0
        %626 = vmatpush.bf16.xpose.msra.mxu0 0
        %627 = vmatpush.bf16.xpose.msra.mxu0 0
        %628 = vmatpush.bf16.xpose.msra.mxu0 %v619
        %629 = vmatmul.bf16.gmra.mxu0 %v616
        %v630 = vpop.f32.mrf.mxu0
        %v631 = vadd.f32 %v450, %v630
        %v632 = vpop.f32.mrf.mxu0
        %633 = vdwg.mxu0
        %v634 = vsel %vm455, %v631, -inf
        %635 = vmax.xlane.f32.xlu0 %v634
        %v636 = vpop.xlane.xlu0 %635
        %v637 = vsub.f32 %v631, %v636
        %v638 = vmul.f32 %v637, 1.442695
        %v639 = vpow.pop %v638
        %v640 = vsel %vm455, %v639, 0.0
        %641 = vadd.xlane.f32.xlu0 %v640
        %v642 = vpop.xlane.xlu0 %641
        %v643 = vrcp.pop %v642
        %v644 = vmul.f32 %v639, %v643
        %v645 = vpack.c.bf16 %v644, %v644
        %646 = vrot.lane.b32.xlu0 %v489, 80
        %v647 = vpop.permute.xlu0 %646
        %v649 = vsel %vm455, %v645, 0
        %v652 = vsel %vm495, %v647, 0
        %654 = vmatpush.bf16.msra.mxu0 0
        %655 = vmatpush.bf16.msra.mxu0 0
        %656 = vmatpush.bf16.msra.mxu0 0
        %657 = vmatpush.bf16.msra.mxu0 0
        %658 = vmatpush.bf16.msra.mxu0 0
        %659 = vmatpush.bf16.msra.mxu0 0
        %660 = vmatpush.bf16.msra.mxu0 0
        %661 = vmatpush.bf16.msra.mxu0 %v652
        %662 = vmatmul.bf16.gmra.mxu0 %v649
        %v663 = vpop.f32.mrf.mxu0
        %v664 = vadd.f32 0.0, %v663
        %v665 = vpop.f32.mrf.mxu0
        %666 = vdwg.mxu0
        %v667 = vpack.c.bf16 %v664, %v664
        %v669 = vsel %vm455, %v667, 0
        %v672 = vsel %vm495, %v453, 0
        %674 = vmatpush.bf16.msra.mxu0 0
        %675 = vmatpush.bf16.msra.mxu0 0
        %676 = vmatpush.bf16.msra.mxu0 0
        %677 = vmatpush.bf16.msra.mxu0 0
        %678 = vmatpush.bf16.msra.mxu0 0
        %679 = vmatpush.bf16.msra.mxu0 0
        %680 = vmatpush.bf16.msra.mxu0 0
        %681 = vmatpush.bf16.msra.mxu0 %v672
        %682 = vmatmul.bf16.gmra.mxu0 %v669
        %v683 = vpop.f32.mrf.mxu0
        %v684 = vadd.f32 0.0, %v683
        %v685 = vpop.f32.mrf.mxu0
        %686 = vdwg.mxu0
        %v687 = vadd.f32 %v608, %v684
        %688 = vrot.lane.b32.xlu0 %v515, 104
        %v689 = vpop.permute.xlu0 %688
        %690 = vrot.lane.b32.xlu0 %v489, 104
        %v691 = vpop.permute.xlu0 %690
        %v693 = vsel %vm455, %v689, 0
        %v696 = vsel %vm455, %v691, 0
        %698 = vmatpush.bf16.xpose.msra.mxu0 0
        %699 = vmatpush.bf16.xpose.msra.mxu0 0
        %700 = vmatpush.bf16.xpose.msra.mxu0 0
        %701 = vmatpush.bf16.xpose.msra.mxu0 0
        %702 = vmatpush.bf16.xpose.msra.mxu0 0
        %703 = vmatpush.bf16.xpose.msra.mxu0 0
        %704 = vmatpush.bf16.xpose.msra.mxu0 0
        %705 = vmatpush.bf16.xpose.msra.mxu0 %v696
        %706 = vmatmul.bf16.gmra.mxu0 %v693
        %v707 = vpop.f32.mrf.mxu0
        %v708 = vadd.f32 %v450, %v707
        %v709 = vpop.f32.mrf.mxu0
        %710 = vdwg.mxu0
        %v711 = vsel %vm455, %v708, -inf
        %712 = vmax.xlane.f32.xlu0 %v711
        %v713 = vpop.xlane.xlu0 %712
        %v714 = vsub.f32 %v708, %v713
        %v715 = vmul.f32 %v714, 1.442695
        %v716 = vpow.pop %v715
        %v717 = vsel %vm455, %v716, 0.0
        %718 = vadd.xlane.f32.xlu0 %v717
        %v719 = vpop.xlane.xlu0 %718
        %v720 = vrcp.pop %v719
        %v721 = vmul.f32 %v716, %v720
        %v722 = vpack.c.bf16 %v721, %v721
        %723 = vrot.lane.b32.xlu0 %v489, 72
        %v724 = vpop.permute.xlu0 %723
        %v726 = vsel %vm455, %v722, 0
        %v729 = vsel %vm495, %v724, 0
        %731 = vmatpush.bf16.msra.mxu0 0
        %732 = vmatpush.bf16.msra.mxu0 0
        %733 = vmatpush.bf16.msra.mxu0 0
        %734 = vmatpush.bf16.msra.mxu0 0
        %735 = vmatpush.bf16.msra.mxu0 0
        %736 = vmatpush.bf16.msra.mxu0 0
        %737 = vmatpush.bf16.msra.mxu0 0
        %738 = vmatpush.bf16.msra.mxu0 %v729
        %739 = vmatmul.bf16.gmra.mxu0 %v726
        %v740 = vpop.f32.mrf.mxu0
        %v741 = vadd.f32 0.0, %v740
        %v742 = vpop.f32.mrf.mxu0
        %743 = vdwg.mxu0
        %v744 = vpack.c.bf16 %v741, %v741
        %v746 = vsel %vm455, %v744, 0
        %v749 = vsel %vm495, %v454, 0
        %751 = vmatpush.bf16.msra.mxu0 0
        %752 = vmatpush.bf16.msra.mxu0 0
        %753 = vmatpush.bf16.msra.mxu0 0
        %754 = vmatpush.bf16.msra.mxu0 0
        %755 = vmatpush.bf16.msra.mxu0 0
        %756 = vmatpush.bf16.msra.mxu0 0
        %757 = vmatpush.bf16.msra.mxu0 0
        %758 = vmatpush.bf16.msra.mxu0 %v749
        %759 = vmatmul.bf16.gmra.mxu0 %v746
        %v760 = vpop.f32.mrf.mxu0
        %v761 = vadd.f32 0.0, %v760
        %v762 = vpop.f32.mrf.mxu0
        %763 = vdwg.mxu0
        %v764 = vadd.f32 %v687, %v761
        %v765 = vld [vmem:[#allocation2] sm:$0x1]
        %v767 = vperm.slane %v765, 0
        %v769 = vadd.f32 %v764, %v767
        %v770 = vld [vmem:[%s427] sm:$0xf]
        %v771 = vunpack.c.l.bf16 %v770
        %v772 = vadd.f32 %v771, %v769
        %vm773 = vcmask 261120
        %v774 = vsel %vm773, %v772, 0.0
        %775 = vadd.xlane.f32.xlu0 %v774
        %v776 = vpop.xlane.xlu0 %775
        %v777 = vrcp.pop 32.0
        %v778 = vmul.f32 32.0, %v777
        %v779 = vsub.f32 1.0, %v778
        %v780 = vmul.f32 %v777, %v779
        %v781 = vadd.f32 %v777, %v780
        %vm782 = vweird.f32 %v777
        %v783 = vsel %vm782, %v777, %v781
        %v784 = vmul.f32 %v776, %v783
        %v785 = vsub.f32 %v772, %v784
        %v786 = vmul.f32 %v785, %v785
        %v787 = vsel %vm773, %v786, 0.0
        %788 = vadd.xlane.f32.xlu0 %v787
        %v789 = vpop.xlane.xlu0 %788
        %v790 = vmul.f32 %v789, %v783
        %v791 = vadd.f32 %v790, 1e-05
        %v792 = vrsqrt.pop %v791
        %v793 = vmul.f32 %v792, %v791
        %v794 = vmul.f32 %v793, %v792
        %v795 = vmul.f32 0.5, %v794
        %v796 = vsub.f32 1.5, %v795
        %v797 = vmul.f32 %v792, %v796
        %vm798 = vweird.f32 %v791
        %vm799 = vweird.f32 %v792
        %vm800 = vmor %vm798, %vm799
        %v801 = vsel %vm800, %v792, %v797
        %v802 = vmul.f32 %v785, %v801
        %v803 = vld [vmem:[#allocation4] sm:$0x1]
        %v805 = vperm.slane %v803, 0
        %v807 = vmul.f32 %v802, %v805
        %v808 = vld [vmem:[#allocation6] sm:$0x1]
        %v810 = vperm.slane %v808, 0
        %v812 = vadd.f32 %v807, %v810
        %v813 = vpack.c.bf16 %v812, %v812
        %vm814 = vcmask 257024
        %815 = vst.msk [vmem:[%s434] sm:$0xf] %vm814, %v813
        %p816 = scmp.lt.s32.totalorder %s25, 1
        %s817 = scalar_select %p816, %s25, 1
        %p818 = scmp.lt.s32.totalorder %s26, 0
        %s819 = scalar_select %p818, %s26, 0
        %s820 = sadd.s32 %s819, %s817
        %s821 = smul.addr %s820, 4
        %s822 = scalar_lea.vmem %s8, %s821
        // Predicated region
        $region65: #{classic_transformer_forward.26} parent=51 // pred_check
          %p823 = pneg %p245
        $region66: #{classic_transformer_forward.26} parent=51 // pred_check_branch
          %825 = sbr.rel (%p823) target = $region68
        $region67: #{classic_transformer_forward.26} parent=51 // pred_region
          _
        $region68: #{classic_transformer_forward.26} parent=51 // pred_fallthru
          _
      $region52: #{classic_transformer_forward.26} parent=5 // pred_fallthru
        _
      %p826 = scmp.le.s32.totalorder 2, %s16
      // Predicated region
      $region69: #{classic_transformer_forward.26} parent=5 // pred_check
        %p827 = pneg %p826
      $region70: #{classic_transformer_forward.26} parent=5 // pred_check_branch
        %829 = sbr.rel (%p827) target = $region72
      $region71: #{classic_transformer_forward.26} parent=5 // pred_region
        %s830 = ssub.s32 %s16, 2
        // Predicated region
        $region73: #{classic_transformer_forward.26} parent=71 // pred_check
          %p831 = pneg %p251
        $region74: #{classic_transformer_forward.26} parent=71 // pred_check_branch
          %833 = sbr.rel (%p831) target = $region76
        $region75: #{classic_transformer_forward.26} parent=71 // pred_region
          %p834 = scmp.lt.s32.totalorder %s27, 1
          %s835 = scalar_select %p834, %s27, 1
          %p836 = scmp.lt.s32.totalorder %s28, 0
          %s837 = scalar_select %p836, %s28, 0
          %s838 = sadd.s32 %s837, %s835
          %s839 = smul.addr %s838, 4
          %s840 = scalar_lea.vmem %s8, %s839
        $region76: #{classic_transformer_forward.26} parent=71 // pred_fallthru
          _
      $region72: #{classic_transformer_forward.26} parent=5 // pred_fallthru
        _
    $region6: #{classic_transformer_forward.26} parent=1 // loop_footer
      %s20 = sadd.s32 1, %s16
    $region7: #{classic_transformer_forward.26} parent=1 // loop_footer_branch
      %15 = sbr.rel target = $region3
    $region8: #{classic_transformer_forward.26} parent=1 // loop_exit
      _
    %841 = vsyncpa [#allocation3], 1
    %s842 = scalar_lea.sflag [#allocation3], 1
    %843 = vsyncpa %s842, 1
    %844 = vsyncpa [#allocation5], 1

// kernel: classic_transformer_forward.29
$region0: #{classic_transformer_forward.29}
  #allocation0 [shape = 'u32[]', space=smem, size = 0x4, offset = 0x4, fixed_abs, tag = 'smem constant byte address 0x4 - core index']
  #allocation1 [shape = 'u32[72,128]{1,0:T(1,128)}', space=vmem, size = 0x9000, scoped, tag = 'internal scratch']
  %s0 = inlined_call_operand.vmem [shape: bf16[2,8,32], index: 0, kind: input, shape index: {}]
  %s1 = inlined_call_operand.vmem [shape: bf16[2,8,64], index: 1, kind: input, shape index: {}]
  %s2 = inlined_call_operand.vmem [shape: f32[2,1,8], index: 2, kind: input, shape index: {}]
  %s3 = inlined_call_operand.vmem [shape: bf16[2,8,32], index: 3, kind: input, shape index: {}]
  %s4 = inlined_call_operand.vmem [shape: bf16[32,32], index: 4, kind: input, shape index: {}]
  %s5 = inlined_call_operand.hbm [shape: f32[1,32], index: 5, kind: input, shape index: {}]
  %s6 = inlined_call_operand.hbm [shape: f32[1,32], index: 6, kind: input, shape index: {}]
  %s7 = inlined_call_operand.hbm [shape: f32[1,32], index: 7, kind: input, shape index: {}]
  %s8 = inlined_call_operand.vmem [shape: bf16[2,8,32], index: 8, kind: output, shape index: {}]
  %s9 = sld [smem:[#allocation0]]
  $region77: #{classic_transformer_forward.29} parent=0
    _
  %s11 = ssub.s32 1, %s9
  %s12 = scalar_select 0, %s11, %s9
  $region1: #{classic_transformer_forward.29} parent=0
    #allocation2 [shape = 'u8[512]{0}', space=vmem, size = 0x400, scoped, tag = 'input window, operand 5, single buffered']
    #allocation3 [shape = 's32[2]{0}', space=sflag, size = 0x8, scoped, tag = 'scoped memory for classic_transformer_forward.29']
    #allocation4 [shape = 'u8[512]{0}', space=vmem, size = 0x400, scoped, tag = 'input window, operand 6, single buffered']
    #allocation5 [shape = 's32[1]{0}', space=sflag, size = 0x4, scoped, tag = 'scoped memory for classic_transformer_forward.29']
    #allocation6 [shape = 'u8[512]{0}', space=vmem, size = 0x400, scoped, tag = 'input window, operand 7, single buffered']
    %13 = vsyncpa [#allocation3], 0
    %14 = vsyncpa [#allocation5], 0
    loop: start=0, step=1, limit=4
    $region2: #{classic_transformer_forward.29} parent=1 // loop_pre_header
      _
    $region3: #{classic_transformer_forward.29} parent=1 // loop_header
      %s16 = sphi 0, %s20
      %p17 = scmp.ge.s32.totalorder %s16, 4
      %s23 = sphi 0, %s35
      %s24 = sphi 0, %s31
      %s25 = sphi 0, %s23
      %s26 = sphi 0, %s24
      %s27 = sphi 0, %s25
      %s28 = sphi 0, %s26
      %s40 = sphi 0, %s42
      %s43 = sphi 0, %s40
      %s44 = sphi 0, %s43
      %s60 = sphi 0, %s44
      %s66 = sphi 0, %s68
      %s69 = sphi 0, %s66
      %s70 = sphi 0, %s69
      %s86 = sphi 0, %s70
      %s92 = sphi 0, %s94
      %s95 = sphi 0, %s92
      %s96 = sphi 0, %s95
      %s112 = sphi 0, %s96
      %s120 = sphi 0, %s122
      %s123 = sphi 0, %s120
      %s124 = sphi 0, %s123
      %s140 = sphi 0, %s124
      %s144 = sphi 0, %s144
      %s146 = sphi 0, %s144
      %s147 = sphi 0, %s146
      %s161 = sphi 0, %s147
      %s165 = sphi 0, %s165
      %s167 = sphi 0, %s165
      %s168 = sphi 0, %s167
      %s182 = sphi 0, %s168
      %s186 = sphi 0, %s186
      %s188 = sphi 0, %s186
      %s189 = sphi 0, %s188
      %s203 = sphi 0, %s189
      %s207 = sphi 0, %s207
      %s209 = sphi 0, %s207
      %s210 = sphi 0, %s209
      %s224 = sphi 0, %s210
      %s232 = sphi 0, %s234
      %s235 = sphi 0, %s232
      %s236 = sphi 0, %s235
      %s252 = sphi 0, %s236
    $region4: #{classic_transformer_forward.29} parent=1 // loop_header_branch
      %19 = sbr.rel (%p17) target = $region8
    $region5: #{classic_transformer_forward.29} parent=1 // loop_body
      %s21 = ssub.s32 %s16, 1
      %s22 = ssub.s32 %s16, 2
      %s29 = sadd.s32 1, %s24
      %p30 = scmp.ge.s32.totalorder %s29, 1
      %s31 = scalar_select %p30, 0, %s29
      %s32 = sadd.s32 1, %s23
      %s33 = scalar_select %p30, %s32, %s23
      %p34 = scmp.ge.s32.totalorder %s33, 2
      %s35 = scalar_select %p34, 0, %s33
      %s36 = ssub.s32 %s23, %s35
      %s37 = ssub.s32 %s24, %s31
      %s38 = sor.u32 %s36, %s37
      %p39 = scmp.eq.s32.totalorder %s38, 0
      %s41 = sadd.s32 %s40, 1
      %s42 = scalar_select %p39, %s40, %s41
      %p45 = pneg %p39
      %p46 = scmp.eq.s32.totalorder %s16, 1
      %p47 = por %p45, %p46
      %p48 = scmp.ne.s32.totalorder %s40, %s43
      %p49 = scmp.eq.s32.totalorder %s16, 0
      %p50 = por %p48, %p49
      %p51 = scmp.ne.s32.totalorder %s40, %s43
      %p52 = scmp.eq.s32.totalorder %s21, 1
      %p53 = por %p51, %p52
      %p54 = scmp.ne.s32.totalorder %s43, %s44
      %p55 = scmp.eq.s32.totalorder %s21, 0
      %p56 = por %p54, %p55
      %p57 = scmp.ne.s32.totalorder %s43, %s44
      %p58 = scmp.eq.s32.totalorder %s22, 1
      %p59 = por %p57, %p58
      %p61 = scmp.ne.s32.totalorder %s44, %s60
      %p62 = scmp.eq.s32.totalorder %s22, 0
      %p63 = por %p61, %p62
      %s64 = ssub.s32 %s23, %s35
      %p65 = scmp.eq.s32.totalorder %s64, 0
      %s67 = sadd.s32 %s66, 1
      %s68 = scalar_select %p65, %s66, %s67
      %p71 = pneg %p65
      %p72 = scmp.eq.s32.totalorder %s16, 1
      %p73 = por %p71, %p72
      %p74 = scmp.ne.s32.totalorder %s66, %s69
      %p75 = scmp.eq.s32.totalorder %s16, 0
      %p76 = por %p74, %p75
      %p77 = scmp.ne.s32.totalorder %s66, %s69
      %p78 = scmp.eq.s32.totalorder %s21, 1
      %p79 = por %p77, %p78
      %p80 = scmp.ne.s32.totalorder %s69, %s70
      %p81 = scmp.eq.s32.totalorder %s21, 0
      %p82 = por %p80, %p81
      %p83 = scmp.ne.s32.totalorder %s69, %s70
      %p84 = scmp.eq.s32.totalorder %s22, 1
      %p85 = por %p83, %p84
      %p87 = scmp.ne.s32.totalorder %s70, %s86
      %p88 = scmp.eq.s32.totalorder %s22, 0
      %p89 = por %p87, %p88
      %s90 = ssub.s32 %s23, %s35
      %p91 = scmp.eq.s32.totalorder %s90, 0
      %s93 = sadd.s32 %s92, 1
      %s94 = scalar_select %p91, %s92, %s93
      %p97 = pneg %p91
      %p98 = scmp.eq.s32.totalorder %s16, 1
      %p99 = por %p97, %p98
      %p100 = scmp.ne.s32.totalorder %s92, %s95
      %p101 = scmp.eq.s32.totalorder %s16, 0
      %p102 = por %p100, %p101
      %p103 = scmp.ne.s32.totalorder %s92, %s95
      %p104 = scmp.eq.s32.totalorder %s21, 1
      %p105 = por %p103, %p104
      %p106 = scmp.ne.s32.totalorder %s95, %s96
      %p107 = scmp.eq.s32.totalorder %s21, 0
      %p108 = por %p106, %p107
      %p109 = scmp.ne.s32.totalorder %s95, %s96
      %p110 = scmp.eq.s32.totalorder %s22, 1
      %p111 = por %p109, %p110
      %p113 = scmp.ne.s32.totalorder %s96, %s112
      %p114 = scmp.eq.s32.totalorder %s22, 0
      %p115 = por %p113, %p114
      %s116 = ssub.s32 %s23, %s35
      %s117 = ssub.s32 %s24, %s31
      %s118 = sor.u32 %s116, %s117
      %p119 = scmp.eq.s32.totalorder %s118, 0
      %s121 = sadd.s32 %s120, 1
      %s122 = scalar_select %p119, %s120, %s121
      %p125 = pneg %p119
      %p126 = scmp.eq.s32.totalorder %s16, 1
      %p127 = por %p125, %p126
      %p128 = scmp.ne.s32.totalorder %s120, %s123
      %p129 = scmp.eq.s32.totalorder %s16, 0
      %p130 = por %p128, %p129
      %p131 = scmp.ne.s32.totalorder %s120, %s123
      %p132 = scmp.eq.s32.totalorder %s21, 1
      %p133 = por %p131, %p132
      %p134 = scmp.ne.s32.totalorder %s123, %s124
      %p135 = scmp.eq.s32.totalorder %s21, 0
      %p136 = por %p134, %p135
      %p137 = scmp.ne.s32.totalorder %s123, %s124
      %p138 = scmp.eq.s32.totalorder %s22, 1
      %p139 = por %p137, %p138
      %p141 = scmp.ne.s32.totalorder %s124, %s140
      %p142 = scmp.eq.s32.totalorder %s22, 0
      %p143 = por %p141, %p142
      %s145 = sadd.s32 %s144, 1
      %p148 = scmp.eq.s32.totalorder %s16, 1
      %p149 = scmp.ne.s32.totalorder %s144, %s146
      %p150 = scmp.eq.s32.totalorder %s16, 0
      %p151 = por %p149, %p150
      %p152 = scmp.ne.s32.totalorder %s144, %s146
      %p153 = scmp.eq.s32.totalorder %s21, 1
      %p154 = por %p152, %p153
      %p155 = scmp.ne.s32.totalorder %s146, %s147
      %p156 = scmp.eq.s32.totalorder %s21, 0
      %p157 = por %p155, %p156
      %p158 = scmp.ne.s32.totalorder %s146, %s147
      %p159 = scmp.eq.s32.totalorder %s22, 1
      %p160 = por %p158, %p159
      %p162 = scmp.ne.s32.totalorder %s147, %s161
      %p163 = scmp.eq.s32.totalorder %s22, 0
      %p164 = por %p162, %p163
      %s166 = sadd.s32 %s165, 1
      %p169 = scmp.eq.s32.totalorder %s16, 1
      %p170 = scmp.ne.s32.totalorder %s165, %s167
      %p171 = scmp.eq.s32.totalorder %s16, 0
      %p172 = por %p170, %p171
      %p173 = scmp.ne.s32.totalorder %s165, %s167
      %p174 = scmp.eq.s32.totalorder %s21, 1
      %p175 = por %p173, %p174
      %p176 = scmp.ne.s32.totalorder %s167, %s168
      %p177 = scmp.eq.s32.totalorder %s21, 0
      %p178 = por %p176, %p177
      %p179 = scmp.ne.s32.totalorder %s167, %s168
      %p180 = scmp.eq.s32.totalorder %s22, 1
      %p181 = por %p179, %p180
      %p183 = scmp.ne.s32.totalorder %s168, %s182
      %p184 = scmp.eq.s32.totalorder %s22, 0
      %p185 = por %p183, %p184
      %s187 = sadd.s32 %s186, 1
      %p190 = scmp.eq.s32.totalorder %s16, 1
      %p191 = scmp.ne.s32.totalorder %s186, %s188
      %p192 = scmp.eq.s32.totalorder %s16, 0
      %p193 = por %p191, %p192
      %p194 = scmp.ne.s32.totalorder %s186, %s188
      %p195 = scmp.eq.s32.totalorder %s21, 1
      %p196 = por %p194, %p195
      %p197 = scmp.ne.s32.totalorder %s188, %s189
      %p198 = scmp.eq.s32.totalorder %s21, 0
      %p199 = por %p197, %p198
      %p200 = scmp.ne.s32.totalorder %s188, %s189
      %p201 = scmp.eq.s32.totalorder %s22, 1
      %p202 = por %p200, %p201
      %p204 = scmp.ne.s32.totalorder %s189, %s203
      %p205 = scmp.eq.s32.totalorder %s22, 0
      %p206 = por %p204, %p205
      %s208 = sadd.s32 %s207, 1
      %p211 = scmp.eq.s32.totalorder %s16, 1
      %p212 = scmp.ne.s32.totalorder %s207, %s209
      %p213 = scmp.eq.s32.totalorder %s16, 0
      %p214 = por %p212, %p213
      %p215 = scmp.ne.s32.totalorder %s207, %s209
      %p216 = scmp.eq.s32.totalorder %s21, 1
      %p217 = por %p215, %p216
      %p218 = scmp.ne.s32.totalorder %s209, %s210
      %p219 = scmp.eq.s32.totalorder %s21, 0
      %p220 = por %p218, %p219
      %p221 = scmp.ne.s32.totalorder %s209, %s210
      %p222 = scmp.eq.s32.totalorder %s22, 1
      %p223 = por %p221, %p222
      %p225 = scmp.ne.s32.totalorder %s210, %s224
      %p226 = scmp.eq.s32.totalorder %s22, 0
      %p227 = por %p225, %p226
      %s228 = ssub.s32 %s23, %s35
      %s229 = ssub.s32 %s24, %s31
      %s230 = sor.u32 %s228, %s229
      %p231 = scmp.eq.s32.totalorder %s230, 0
      %s233 = sadd.s32 %s232, 1
      %s234 = scalar_select %p231, %s232, %s233
      %p237 = pneg %p231
      %p238 = scmp.eq.s32.totalorder %s16, 1
      %p239 = por %p237, %p238
      %p240 = scmp.ne.s32.totalorder %s232, %s235
      %p241 = scmp.eq.s32.totalorder %s16, 0
      %p242 = por %p240, %p241
      %p243 = scmp.ne.s32.totalorder %s232, %s235
      %p244 = scmp.eq.s32.totalorder %s21, 1
      %p245 = por %p243, %p244
      %p246 = scmp.ne.s32.totalorder %s235, %s236
      %p247 = scmp.eq.s32.totalorder %s21, 0
      %p248 = por %p246, %p247
      %p249 = scmp.ne.s32.totalorder %s235, %s236
      %p250 = scmp.eq.s32.totalorder %s22, 1
      %p251 = por %p249, %p250
      %p253 = scmp.ne.s32.totalorder %s236, %s252
      %p254 = scmp.eq.s32.totalorder %s22, 0
      %p255 = por %p253, %p254
      %p256 = scmp.le.s32.totalorder 1, %s16
      %p257 = scmp.lt.s32.totalorder %s16, 3
      %p258 = pnand %p256, %p257
      %p259 = pneg %p258
      // Predicated region
      $region9: #{classic_transformer_forward.29} parent=5 // pred_check
        _
      $region10: #{classic_transformer_forward.29} parent=5 // pred_check_branch
        %261 = sbr.rel (%p258) target = $region12
      $region11: #{classic_transformer_forward.29} parent=5 // pred_region
        %s262 = ssub.s32 %s16, 1
        // Predicated region
        $region13: #{classic_transformer_forward.29} parent=11 // pred_check
          %p263 = pneg %p157
        $region14: #{classic_transformer_forward.29} parent=11 // pred_check_branch
          %265 = sbr.rel (%p263) target = $region16
        $region15: #{classic_transformer_forward.29} parent=11 // pred_region
          _
        $region16: #{classic_transformer_forward.29} parent=11 // pred_fallthru
          _
        // Predicated region
        $region17: #{classic_transformer_forward.29} parent=11 // pred_check
          %p266 = pneg %p178
        $region18: #{classic_transformer_forward.29} parent=11 // pred_check_branch
          %268 = sbr.rel (%p266) target = $region20
        $region19: #{classic_transformer_forward.29} parent=11 // pred_region
          %270 = vsyncadd [#allocation3], 0
          %s272 = sshll.u32 %s5, 4
          %s273 = int_to_ptr.hbm [resolvable:$true] %s272
          %s274 = sshll.u32 [#allocation2], 4
          %s275 = int_to_ptr.vmem [resolvable:$true] %s274
          %277 = dma.hbm_to_vmem [thread:$0]  %s273, 16, %s275, [#allocation3]
        $region20: #{classic_transformer_forward.29} parent=11 // pred_fallthru
          _
        // Predicated region
        $region21: #{classic_transformer_forward.29} parent=11 // pred_check
          %p278 = pneg %p199
        $region22: #{classic_transformer_forward.29} parent=11 // pred_check_branch
          %280 = sbr.rel (%p278) target = $region24
        $region23: #{classic_transformer_forward.29} parent=11 // pred_region
          %282 = vsyncadd [#allocation5], 0
          %s284 = sshll.u32 %s6, 4
          %s285 = int_to_ptr.hbm [resolvable:$true] %s284
          %s286 = sshll.u32 [#allocation4], 4
          %s287 = int_to_ptr.vmem [resolvable:$true] %s286
          %289 = dma.hbm_to_vmem [thread:$0]  %s285, 16, %s287, [#allocation5]
        $region24: #{classic_transformer_forward.29} parent=11 // pred_fallthru
          _
        // Predicated region
        $region25: #{classic_transformer_forward.29} parent=11 // pred_check
          %p290 = pneg %p220
        $region26: #{classic_transformer_forward.29} parent=11 // pred_check_branch
          %292 = sbr.rel (%p290) target = $region28
        $region27: #{classic_transformer_forward.29} parent=11 // pred_region
          %294 = vsyncadd [#allocation5], 0
          %s296 = sshll.u32 %s7, 4
          %s297 = int_to_ptr.hbm [resolvable:$true] %s296
          %s298 = sshll.u32 [#allocation6], 4
          %s299 = int_to_ptr.vmem [resolvable:$true] %s298
          %301 = dma.hbm_to_vmem [thread:$0]  %s297, 16, %s299, [#allocation5]
        $region28: #{classic_transformer_forward.29} parent=11 // pred_fallthru
          _
      $region12: #{classic_transformer_forward.29} parent=5 // pred_fallthru
        _
      %p302 = scmp.lt.s32.totalorder %s16, 2
      // Predicated region
      $region29: #{classic_transformer_forward.29} parent=5 // pred_check
        %p303 = pneg %p302
      $region30: #{classic_transformer_forward.29} parent=5 // pred_check_branch
        %305 = sbr.rel (%p303) target = $region32
      $region31: #{classic_transformer_forward.29} parent=5 // pred_region
        // Predicated region
        $region33: #{classic_transformer_forward.29} parent=31 // pred_check
          %p306 = pneg %p50
        $region34: #{classic_transformer_forward.29} parent=31 // pred_check_branch
          %308 = sbr.rel (%p306) target = $region36
        $region35: #{classic_transformer_forward.29} parent=31 // pred_region
          %p309 = scmp.lt.s32.totalorder %s23, 1
          %s310 = scalar_select %p309, %s23, 1
          %p311 = scmp.lt.s32.totalorder %s24, 0
          %s312 = scalar_select %p311, %s24, 0
          %s313 = sadd.s32 %s312, %s310
          %s314 = smul.addr %s313, 4
          %s315 = scalar_lea.vmem %s0, %s314
        $region36: #{classic_transformer_forward.29} parent=31 // pred_fallthru
          _
        // Predicated region
        $region37: #{classic_transformer_forward.29} parent=31 // pred_check
          %p316 = pneg %p76
        $region38: #{classic_transformer_forward.29} parent=31 // pred_check_branch
          %318 = sbr.rel (%p316) target = $region40
        $region39: #{classic_transformer_forward.29} parent=31 // pred_region
          %p319 = scmp.lt.s32.totalorder %s23, 1
          %s320 = scalar_select %p319, %s23, 1
          %s321 = smul.addr %s320, 4
          %s322 = scalar_lea.vmem %s1, %s321
        $region40: #{classic_transformer_forward.29} parent=31 // pred_fallthru
          _
        // Predicated region
        $region41: #{classic_transformer_forward.29} parent=31 // pred_check
          %p323 = pneg %p102
        $region42: #{classic_transformer_forward.29} parent=31 // pred_check_branch
          %325 = sbr.rel (%p323) target = $region44
        $region43: #{classic_transformer_forward.29} parent=31 // pred_region
          %p326 = scmp.lt.s32.totalorder %s23, 1
          %s327 = scalar_select %p326, %s23, 1
          %s328 = scalar_lea.vmem %s2, %s327
        $region44: #{classic_transformer_forward.29} parent=31 // pred_fallthru
          _
        // Predicated region
        $region45: #{classic_transformer_forward.29} parent=31 // pred_check
          %p329 = pneg %p130
        $region46: #{classic_transformer_forward.29} parent=31 // pred_check_branch
          %331 = sbr.rel (%p329) target = $region48
        $region47: #{classic_transformer_forward.29} parent=31 // pred_region
          %p332 = scmp.lt.s32.totalorder %s23, 1
          %s333 = scalar_select %p332, %s23, 1
          %p334 = scmp.lt.s32.totalorder %s24, 0
          %s335 = scalar_select %p334, %s24, 0
          %s336 = sadd.s32 %s335, %s333
          %s337 = smul.addr %s336, 4
          %s338 = scalar_lea.vmem %s3, %s337
        $region48: #{classic_transformer_forward.29} parent=31 // pred_fallthru
          _
      $region32: #{classic_transformer_forward.29} parent=5 // pred_fallthru
        _
      %p339 = scmp.le.s32.totalorder 1, %s16
      %p340 = scmp.lt.s32.totalorder %s16, 3
      %p341 = pnand %p339, %p340
      %p342 = pneg %p341
      // Predicated region
      $region49: #{classic_transformer_forward.29} parent=5 // pred_check
        _
      $region50: #{classic_transformer_forward.29} parent=5 // pred_check_branch
        %344 = sbr.rel (%p341) target = $region52
      $region51: #{classic_transformer_forward.29} parent=5 // pred_region
        %s345 = ssub.s32 %s16, 1
        // Predicated region
        $region53: #{classic_transformer_forward.29} parent=51 // pred_check
          %p346 = pneg %p178
        $region54: #{classic_transformer_forward.29} parent=51 // pred_check_branch
          %348 = sbr.rel (%p346) target = $region56
        $region55: #{classic_transformer_forward.29} parent=51 // pred_region
          %350 = dma.done [#allocation3], 16
        $region56: #{classic_transformer_forward.29} parent=51 // pred_fallthru
          _
        // Predicated region
        $region57: #{classic_transformer_forward.29} parent=51 // pred_check
          %p351 = pneg %p199
        $region58: #{classic_transformer_forward.29} parent=51 // pred_check_branch
          %353 = sbr.rel (%p351) target = $region60
        $region59: #{classic_transformer_forward.29} parent=51 // pred_region
          %355 = dma.done [#allocation5], 16
        $region60: #{classic_transformer_forward.29} parent=51 // pred_fallthru
          _
        // Predicated region
        $region61: #{classic_transformer_forward.29} parent=51 // pred_check
          %p356 = pneg %p220
        $region62: #{classic_transformer_forward.29} parent=51 // pred_check_branch
          %358 = sbr.rel (%p356) target = $region64
        $region63: #{classic_transformer_forward.29} parent=51 // pred_region
          %360 = dma.done [#allocation5], 16
        $region64: #{classic_transformer_forward.29} parent=51 // pred_fallthru
          _
        %p361 = scmp.lt.s32.totalorder %s25, 1
        %s362 = scalar_select %p361, %s25, 1
        %p363 = scmp.lt.s32.totalorder %s26, 0
        %s364 = scalar_select %p363, %s26, 0
        %s365 = sadd.s32 %s364, %s362
        %s366 = smul.addr %s365, 4
        %s367 = scalar_lea.vmem %s0, %s366
        %p368 = pneg %p56
        %p369 = pneg %p53
        %p370 = scmp.lt.s32.totalorder %s25, 1
        %s371 = scalar_select %p370, %s25, 1
        %s372 = smul.addr %s371, 4
        %s373 = scalar_lea.vmem %s1, %s372
        %p374 = pneg %p82
        %p375 = pneg %p79
        %p376 = scmp.lt.s32.totalorder %s25, 1
        %s377 = scalar_select %p376, %s25, 1
        %s378 = scalar_lea.vmem %s2, %s377
        %p379 = pneg %p108
        %p380 = pneg %p105
        %p381 = scmp.lt.s32.totalorder %s25, 1
        %s382 = scalar_select %p381, %s25, 1
        %p383 = scmp.lt.s32.totalorder %s26, 0
        %s384 = scalar_select %p383, %s26, 0
        %s385 = sadd.s32 %s384, %s382
        %s386 = smul.addr %s385, 4
        %s387 = scalar_lea.vmem %s3, %s386
        %p388 = pneg %p136
        %p389 = pneg %p133
        %p390 = pneg %p157
        %p391 = pneg %p154
        %p392 = pneg %p178
        %p393 = pneg %p175
        %p394 = pneg %p199
        %p395 = pneg %p196
        %p396 = pneg %p220
        %p397 = pneg %p217
        %p398 = pneg %p248
        %p399 = pneg %p245
        %p400 = scmp.lt.s32.totalorder %s25, 1
        %s401 = scalar_select %p400, %s25, 1
        %p402 = scmp.lt.s32.totalorder %s26, 0
        %s403 = scalar_select %p402, %s26, 0
        %s404 = sadd.s32 %s403, %s401
        %s405 = smul.addr %s404, 4
        %s406 = scalar_lea.vmem %s8, %s405
        %p407 = scmp.lt.s32.totalorder %s25, 1
        %s408 = scalar_select %p407, %s25, 1
        %p409 = scmp.lt.s32.totalorder %s26, 0
        %s410 = scalar_select %p409, %s26, 0
        %s411 = sadd.s32 %s410, %s408
        %s412 = smul.addr %s411, 4
        %s413 = scalar_lea.vmem %s0, %s412
        %p414 = scmp.lt.s32.totalorder %s25, 1
        %s415 = scalar_select %p414, %s25, 1
        %s416 = smul.addr %s415, 4
        %s417 = scalar_lea.vmem %s1, %s416
        %p418 = scmp.lt.s32.totalorder %s25, 1
        %s419 = scalar_select %p418, %s25, 1
        %s420 = scalar_lea.vmem %s2, %s419
        %p421 = scmp.lt.s32.totalorder %s25, 1
        %s422 = scalar_select %p421, %s25, 1
        %p423 = scmp.lt.s32.totalorder %s26, 0
        %s424 = scalar_select %p423, %s26, 0
        %s425 = sadd.s32 %s424, %s422
        %s426 = smul.addr %s425, 4
        %s427 = scalar_lea.vmem %s3, %s426
        %p428 = scmp.lt.s32.totalorder %s25, 1
        %s429 = scalar_select %p428, %s25, 1
        %p430 = scmp.lt.s32.totalorder %s26, 0
        %s431 = scalar_select %p430, %s26, 0
        %s432 = sadd.s32 %s431, %s429
        %s433 = smul.addr %s432, 4
        %s434 = scalar_lea.vmem %s8, %s433
        %v436 = vld [vmem:[%s413] sm:$0xf]
        %v437 = vld [vmem:[%s417] sm:$0xf]
        %v438 = vld [vmem:[%s420] sm:$0x1]
        %v440 = vperm.slane %v438, 0
        %v442 = vld [vmem:[%s4] sm:$0xf]
        %v443 = vld [vmem:[%s4 + $0x4] sm:$0xf]
        %v444 = vld [vmem:[%s4 + $0x8] sm:$0xf]
        %v445 = vld [vmem:[%s4 + $0xc] sm:$0xf]
        %vm446 = vcmask 64512
        %v448 = vsel %vm446, %v436, 0
        %v451 = vsel %vm446, %v437, 0
        %453 = vmatpush.bf16.xpose.msra.mxu0 0
        %454 = vmatpush.bf16.xpose.msra.mxu0 0
        %455 = vmatpush.bf16.xpose.msra.mxu0 0
        %456 = vmatpush.bf16.xpose.msra.mxu0 0
        %457 = vmatpush.bf16.xpose.msra.mxu0 0
        %458 = vmatpush.bf16.xpose.msra.mxu0 0
        %459 = vmatpush.bf16.xpose.msra.mxu0 0
        %460 = vmatpush.bf16.xpose.msra.mxu0 %v451
        %461 = vmatmul.bf16.gmra.mxu0 %v448
        %v462 = vpop.f32.mrf.mxu0
        %v463 = vadd.f32 %v440, %v462
        %v464 = vpop.f32.mrf.mxu0
        %465 = vdwg.mxu0
        %v466 = vsel %vm446, %v463, -inf
        %467 = vmax.xlane.f32.xlu0 %v466
        %v468 = vpop.xlane.xlu0 %467
        %v469 = vsub.f32 %v463, %v468
        %v470 = vmul.f32 %v469, 1.442695
        %v471 = vpow.pop %v470
        %v472 = vsel %vm446, %v471, 0.0
        %473 = vadd.xlane.f32.xlu0 %v472
        %v474 = vpop.xlane.xlu0 %473
        %v475 = vrcp.pop %v474
        %v476 = vmul.f32 %v471, %v475
        %v477 = vpack.c.bf16 %v476, %v476
        %v479 = vunpack.c.l.b16 %v437
        %v480 = vpack.c.b16 %v479, %v479
        %481 = vrot.lane.b32.xlu0 %v480, 96
        %v482 = vpop.permute.xlu0 %481
        %v484 = vsel %vm446, %v477, 0
        %vm486 = vcmask 1043456
        %v488 = vsel %vm486, %v482, 0
        %490 = vmatpush.bf16.msra.mxu0 0
        %491 = vmatpush.bf16.msra.mxu0 0
        %492 = vmatpush.bf16.msra.mxu0 0
        %493 = vmatpush.bf16.msra.mxu0 0
        %494 = vmatpush.bf16.msra.mxu0 0
        %495 = vmatpush.bf16.msra.mxu0 0
        %496 = vmatpush.bf16.msra.mxu0 0
        %497 = vmatpush.bf16.msra.mxu0 %v488
        %498 = vmatmul.bf16.gmra.mxu0 %v484
        %v499 = vpop.f32.mrf.mxu0
        %v500 = vadd.f32 0.0, %v499
        %v501 = vpop.f32.mrf.mxu0
        %502 = vdwg.mxu0
        %v503 = vpack.c.bf16 %v500, %v500
        %v505 = vunpack.c.l.b16 %v436
        %v506 = vpack.c.b16 %v505, %v505
        %507 = vrot.lane.b32.xlu0 %v506, 120
        %v508 = vpop.permute.xlu0 %507
        %509 = vrot.lane.b32.xlu0 %v480, 120
        %v510 = vpop.permute.xlu0 %509
        %v512 = vsel %vm446, %v508, 0
        %v515 = vsel %vm446, %v510, 0
        %517 = vmatpush.bf16.xpose.msra.mxu0 0
        %518 = vmatpush.bf16.xpose.msra.mxu0 0
        %519 = vmatpush.bf16.xpose.msra.mxu0 0
        %520 = vmatpush.bf16.xpose.msra.mxu0 0
        %521 = vmatpush.bf16.xpose.msra.mxu0 0
        %522 = vmatpush.bf16.xpose.msra.mxu0 0
        %523 = vmatpush.bf16.xpose.msra.mxu0 0
        %524 = vmatpush.bf16.xpose.msra.mxu0 %v515
        %525 = vmatmul.bf16.gmra.mxu0 %v512
        %v526 = vpop.f32.mrf.mxu0
        %v527 = vadd.f32 %v440, %v526
        %v528 = vpop.f32.mrf.mxu0
        %529 = vdwg.mxu0
        %v530 = vsel %vm446, %v527, -inf
        %531 = vmax.xlane.f32.xlu0 %v530
        %v532 = vpop.xlane.xlu0 %531
        %v533 = vsub.f32 %v527, %v532
        %v534 = vmul.f32 %v533, 1.442695
        %v535 = vpow.pop %v534
        %v536 = vsel %vm446, %v535, 0.0
        %537 = vadd.xlane.f32.xlu0 %v536
        %v538 = vpop.xlane.xlu0 %537
        %v539 = vrcp.pop %v538
        %v540 = vmul.f32 %v535, %v539
        %v541 = vpack.c.bf16 %v540, %v540
        %542 = vrot.lane.b32.xlu0 %v480, 88
        %v543 = vpop.permute.xlu0 %542
        %v545 = vsel %vm446, %v541, 0
        %v548 = vsel %vm486, %v543, 0
        %550 = vmatpush.bf16.msra.mxu0 0
        %551 = vmatpush.bf16.msra.mxu0 0
        %552 = vmatpush.bf16.msra.mxu0 0
        %553 = vmatpush.bf16.msra.mxu0 0
        %554 = vmatpush.bf16.msra.mxu0 0
        %555 = vmatpush.bf16.msra.mxu0 0
        %556 = vmatpush.bf16.msra.mxu0 0
        %557 = vmatpush.bf16.msra.mxu0 %v548
        %558 = vmatmul.bf16.gmra.mxu0 %v545
        %v559 = vpop.f32.mrf.mxu0
        %v560 = vadd.f32 0.0, %v559
        %v561 = vpop.f32.mrf.mxu0
        %562 = vdwg.mxu0
        %v563 = vpack.c.bf16 %v560, %v560
        %v565 = vsel %vm446, %v563, 0
        %v568 = vsel %vm486, %v443, 0
        %570 = vmatpush.bf16.msra.mxu0 0
        %571 = vmatpush.bf16.msra.mxu0 0
        %572 = vmatpush.bf16.msra.mxu0 0
        %573 = vmatpush.bf16.msra.mxu0 0
        %574 = vmatpush.bf16.msra.mxu0 0
        %575 = vmatpush.bf16.msra.mxu0 0
        %576 = vmatpush.bf16.msra.mxu0 0
        %577 = vmatpush.bf16.msra.mxu0 %v568
        %578 = vmatmul.bf16.gmra.mxu0 %v565
        %v579 = vpop.f32.mrf.mxu0
        %v580 = vadd.f32 0.0, %v579
        %v581 = vpop.f32.mrf.mxu0
        %582 = vdwg.mxu0
        %v584 = vsel %vm446, %v503, 0
        %v587 = vsel %vm486, %v442, 0
        %589 = vmatpush.bf16.msra.mxu0 0
        %590 = vmatpush.bf16.msra.mxu0 0
        %591 = vmatpush.bf16.msra.mxu0 0
        %592 = vmatpush.bf16.msra.mxu0 0
        %593 = vmatpush.bf16.msra.mxu0 0
        %594 = vmatpush.bf16.msra.mxu0 0
        %595 = vmatpush.bf16.msra.mxu0 0
        %596 = vmatpush.bf16.msra.mxu0 %v587
        %597 = vmatmul.bf16.gmra.mxu0 %v584
        %v598 = vpop.f32.mrf.mxu0
        %v599 = vadd.f32 %v580, %v598
        %v600 = vpop.f32.mrf.mxu0
        %601 = vdwg.mxu0
        %602 = vrot.lane.b32.xlu0 %v506, 112
        %v603 = vpop.permute.xlu0 %602
        %604 = vrot.lane.b32.xlu0 %v480, 112
        %v605 = vpop.permute.xlu0 %604
        %v607 = vsel %vm446, %v603, 0
        %v610 = vsel %vm446, %v605, 0
        %612 = vmatpush.bf16.xpose.msra.mxu0 0
        %613 = vmatpush.bf16.xpose.msra.mxu0 0
        %614 = vmatpush.bf16.xpose.msra.mxu0 0
        %615 = vmatpush.bf16.xpose.msra.mxu0 0
        %616 = vmatpush.bf16.xpose.msra.mxu0 0
        %617 = vmatpush.bf16.xpose.msra.mxu0 0
        %618 = vmatpush.bf16.xpose.msra.mxu0 0
        %619 = vmatpush.bf16.xpose.msra.mxu0 %v610
        %620 = vmatmul.bf16.gmra.mxu0 %v607
        %v621 = vpop.f32.mrf.mxu0
        %v622 = vadd.f32 %v440, %v621
        %v623 = vpop.f32.mrf.mxu0
        %624 = vdwg.mxu0
        %v625 = vsel %vm446, %v622, -inf
        %626 = vmax.xlane.f32.xlu0 %v625
        %v627 = vpop.xlane.xlu0 %626
        %v628 = vsub.f32 %v622, %v627
        %v629 = vmul.f32 %v628, 1.442695
        %v630 = vpow.pop %v629
        %v631 = vsel %vm446, %v630, 0.0
        %632 = vadd.xlane.f32.xlu0 %v631
        %v633 = vpop.xlane.xlu0 %632
        %v634 = vrcp.pop %v633
        %v635 = vmul.f32 %v630, %v634
        %v636 = vpack.c.bf16 %v635, %v635
        %637 = vrot.lane.b32.xlu0 %v480, 80
        %v638 = vpop.permute.xlu0 %637
        %v640 = vsel %vm446, %v636, 0
        %v643 = vsel %vm486, %v638, 0
        %645 = vmatpush.bf16.msra.mxu0 0
        %646 = vmatpush.bf16.msra.mxu0 0
        %647 = vmatpush.bf16.msra.mxu0 0
        %648 = vmatpush.bf16.msra.mxu0 0
        %649 = vmatpush.bf16.msra.mxu0 0
        %650 = vmatpush.bf16.msra.mxu0 0
        %651 = vmatpush.bf16.msra.mxu0 0
        %652 = vmatpush.bf16.msra.mxu0 %v643
        %653 = vmatmul.bf16.gmra.mxu0 %v640
        %v654 = vpop.f32.mrf.mxu0
        %v655 = vadd.f32 0.0, %v654
        %v656 = vpop.f32.mrf.mxu0
        %657 = vdwg.mxu0
        %v658 = vpack.c.bf16 %v655, %v655
        %v660 = vsel %vm446, %v658, 0
        %v663 = vsel %vm486, %v444, 0
        %665 = vmatpush.bf16.msra.mxu0 0
        %666 = vmatpush.bf16.msra.mxu0 0
        %667 = vmatpush.bf16.msra.mxu0 0
        %668 = vmatpush.bf16.msra.mxu0 0
        %669 = vmatpush.bf16.msra.mxu0 0
        %670 = vmatpush.bf16.msra.mxu0 0
        %671 = vmatpush.bf16.msra.mxu0 0
        %672 = vmatpush.bf16.msra.mxu0 %v663
        %673 = vmatmul.bf16.gmra.mxu0 %v660
        %v674 = vpop.f32.mrf.mxu0
        %v675 = vadd.f32 0.0, %v674
        %v676 = vpop.f32.mrf.mxu0
        %677 = vdwg.mxu0
        %v678 = vadd.f32 %v599, %v675
        %679 = vrot.lane.b32.xlu0 %v506, 104
        %v680 = vpop.permute.xlu0 %679
        %681 = vrot.lane.b32.xlu0 %v480, 104
        %v682 = vpop.permute.xlu0 %681
        %v684 = vsel %vm446, %v680, 0
        %v687 = vsel %vm446, %v682, 0
        %689 = vmatpush.bf16.xpose.msra.mxu0 0
        %690 = vmatpush.bf16.xpose.msra.mxu0 0
        %691 = vmatpush.bf16.xpose.msra.mxu0 0
        %692 = vmatpush.bf16.xpose.msra.mxu0 0
        %693 = vmatpush.bf16.xpose.msra.mxu0 0
        %694 = vmatpush.bf16.xpose.msra.mxu0 0
        %695 = vmatpush.bf16.xpose.msra.mxu0 0
        %696 = vmatpush.bf16.xpose.msra.mxu0 %v687
        %697 = vmatmul.bf16.gmra.mxu0 %v684
        %v698 = vpop.f32.mrf.mxu0
        %v699 = vadd.f32 %v440, %v698
        %v700 = vpop.f32.mrf.mxu0
        %701 = vdwg.mxu0
        %v702 = vsel %vm446, %v699, -inf
        %703 = vmax.xlane.f32.xlu0 %v702
        %v704 = vpop.xlane.xlu0 %703
        %v705 = vsub.f32 %v699, %v704
        %v706 = vmul.f32 %v705, 1.442695
        %v707 = vpow.pop %v706
        %v708 = vsel %vm446, %v707, 0.0
        %709 = vadd.xlane.f32.xlu0 %v708
        %v710 = vpop.xlane.xlu0 %709
        %v711 = vrcp.pop %v710
        %v712 = vmul.f32 %v707, %v711
        %v713 = vpack.c.bf16 %v712, %v712
        %714 = vrot.lane.b32.xlu0 %v480, 72
        %v715 = vpop.permute.xlu0 %714
        %v717 = vsel %vm446, %v713, 0
        %v720 = vsel %vm486, %v715, 0
        %722 = vmatpush.bf16.msra.mxu0 0
        %723 = vmatpush.bf16.msra.mxu0 0
        %724 = vmatpush.bf16.msra.mxu0 0
        %725 = vmatpush.bf16.msra.mxu0 0
        %726 = vmatpush.bf16.msra.mxu0 0
        %727 = vmatpush.bf16.msra.mxu0 0
        %728 = vmatpush.bf16.msra.mxu0 0
        %729 = vmatpush.bf16.msra.mxu0 %v720
        %730 = vmatmul.bf16.gmra.mxu0 %v717
        %v731 = vpop.f32.mrf.mxu0
        %v732 = vadd.f32 0.0, %v731
        %v733 = vpop.f32.mrf.mxu0
        %734 = vdwg.mxu0
        %v735 = vpack.c.bf16 %v732, %v732
        %v737 = vsel %vm446, %v735, 0
        %v740 = vsel %vm486, %v445, 0
        %742 = vmatpush.bf16.msra.mxu0 0
        %743 = vmatpush.bf16.msra.mxu0 0
        %744 = vmatpush.bf16.msra.mxu0 0
        %745 = vmatpush.bf16.msra.mxu0 0
        %746 = vmatpush.bf16.msra.mxu0 0
        %747 = vmatpush.bf16.msra.mxu0 0
        %748 = vmatpush.bf16.msra.mxu0 0
        %749 = vmatpush.bf16.msra.mxu0 %v740
        %750 = vmatmul.bf16.gmra.mxu0 %v737
        %v751 = vpop.f32.mrf.mxu0
        %v752 = vadd.f32 0.0, %v751
        %v753 = vpop.f32.mrf.mxu0
        %754 = vdwg.mxu0
        %v755 = vadd.f32 %v678, %v752
        %v756 = vld [vmem:[#allocation2] sm:$0x1]
        %v758 = vperm.slane %v756, 0
        %v760 = vadd.f32 %v755, %v758
        %v761 = vld [vmem:[%s427] sm:$0xf]
        %v762 = vunpack.c.l.bf16 %v761
        %v763 = vadd.f32 %v762, %v760
        %vm764 = vcmask 261120
        %v765 = vsel %vm764, %v763, 0.0
        %766 = vadd.xlane.f32.xlu0 %v765
        %v767 = vpop.xlane.xlu0 %766
        %v768 = vrcp.pop 32.0
        %v769 = vmul.f32 32.0, %v768
        %v770 = vsub.f32 1.0, %v769
        %v771 = vmul.f32 %v768, %v770
        %v772 = vadd.f32 %v768, %v771
        %vm773 = vweird.f32 %v768
        %v774 = vsel %vm773, %v768, %v772
        %v775 = vmul.f32 %v767, %v774
        %v776 = vsub.f32 %v763, %v775
        %v777 = vmul.f32 %v776, %v776
        %v778 = vsel %vm764, %v777, 0.0
        %779 = vadd.xlane.f32.xlu0 %v778
        %v780 = vpop.xlane.xlu0 %779
        %v781 = vmul.f32 %v780, %v774
        %v782 = vadd.f32 %v781, 1e-05
        %v783 = vrsqrt.pop %v782
        %v784 = vmul.f32 %v783, %v782
        %v785 = vmul.f32 %v784, %v783
        %v786 = vmul.f32 0.5, %v785
        %v787 = vsub.f32 1.5, %v786
        %v788 = vmul.f32 %v783, %v787
        %vm789 = vweird.f32 %v782
        %vm790 = vweird.f32 %v783
        %vm791 = vmor %vm789, %vm790
        %v792 = vsel %vm791, %v783, %v788
        %v793 = vmul.f32 %v776, %v792
        %v794 = vld [vmem:[#allocation4] sm:$0x1]
        %v796 = vperm.slane %v794, 0
        %v798 = vmul.f32 %v793, %v796
        %v799 = vld [vmem:[#allocation6] sm:$0x1]
        %v801 = vperm.slane %v799, 0
        %v803 = vadd.f32 %v798, %v801
        %v804 = vpack.c.bf16 %v803, %v803
        %vm805 = vcmask 257024
        %806 = vst.msk [vmem:[%s434] sm:$0xf] %vm805, %v804
        %p807 = scmp.lt.s32.totalorder %s25, 1
        %s808 = scalar_select %p807, %s25, 1
        %p809 = scmp.lt.s32.totalorder %s26, 0
        %s810 = scalar_select %p809, %s26, 0
        %s811 = sadd.s32 %s810, %s808
        %s812 = smul.addr %s811, 4
        %s813 = scalar_lea.vmem %s8, %s812
        // Predicated region
        $region65: #{classic_transformer_forward.29} parent=51 // pred_check
          %p814 = pneg %p245
        $region66: #{classic_transformer_forward.29} parent=51 // pred_check_branch
          %816 = sbr.rel (%p814) target = $region68
        $region67: #{classic_transformer_forward.29} parent=51 // pred_region
          _
        $region68: #{classic_transformer_forward.29} parent=51 // pred_fallthru
          _
      $region52: #{classic_transformer_forward.29} parent=5 // pred_fallthru
        _
      %p817 = scmp.le.s32.totalorder 2, %s16
      // Predicated region
      $region69: #{classic_transformer_forward.29} parent=5 // pred_check
        %p818 = pneg %p817
      $region70: #{classic_transformer_forward.29} parent=5 // pred_check_branch
        %820 = sbr.rel (%p818) target = $region72
      $region71: #{classic_transformer_forward.29} parent=5 // pred_region
        %s821 = ssub.s32 %s16, 2
        // Predicated region
        $region73: #{classic_transformer_forward.29} parent=71 // pred_check
          %p822 = pneg %p251
        $region74: #{classic_transformer_forward.29} parent=71 // pred_check_branch
          %824 = sbr.rel (%p822) target = $region76
        $region75: #{classic_transformer_forward.29} parent=71 // pred_region
          %p825 = scmp.lt.s32.totalorder %s27, 1
          %s826 = scalar_select %p825, %s27, 1
          %p827 = scmp.lt.s32.totalorder %s28, 0
          %s828 = scalar_select %p827, %s28, 0
          %s829 = sadd.s32 %s828, %s826
          %s830 = smul.addr %s829, 4
          %s831 = scalar_lea.vmem %s8, %s830
        $region76: #{classic_transformer_forward.29} parent=71 // pred_fallthru
          _
      $region72: #{classic_transformer_forward.29} parent=5 // pred_fallthru
        _
    $region6: #{classic_transformer_forward.29} parent=1 // loop_footer
      %s20 = sadd.s32 1, %s16
    $region7: #{classic_transformer_forward.29} parent=1 // loop_footer_branch
      %15 = sbr.rel target = $region3
    $region8: #{classic_transformer_forward.29} parent=1 // loop_exit
      _
    %832 = vsyncpa [#allocation3], 1
    %s833 = scalar_lea.sflag [#allocation3], 1
    %834 = vsyncpa %s833, 1
    %835 = vsyncpa [#allocation5], 1

// kernel: classic_transformer_forward.30
$region0: #{classic_transformer_forward.30}
  #allocation0 [shape = 'u32[]', space=smem, size = 0x4, offset = 0x4, fixed_abs, tag = 'smem constant byte address 0x4 - core index']
  #allocation1 [shape = 'u32[72,128]{1,0:T(1,128)}', space=vmem, size = 0x9000, scoped, tag = 'internal scratch']
  %s0 = inlined_call_operand.vmem [shape: bf16[16,32], index: 0, kind: input, shape index: {}]
  %s1 = inlined_call_operand.vmem [shape: bf16[32,64], index: 1, kind: input, shape index: {}]
  %s2 = inlined_call_operand.vmem [shape: f32[1,64], index: 2, kind: input, shape index: {}]
  %s3 = inlined_call_operand.vmem [shape: bf16[64,32], index: 3, kind: input, shape index: {}]
  %s4 = inlined_call_operand.vmem [shape: f32[1,32], index: 4, kind: input, shape index: {}]
  %s5 = inlined_call_operand.vmem [shape: f32[1,32], index: 5, kind: input, shape index: {}]
  %s6 = inlined_call_operand.hbm [shape: f32[1,32], index: 6, kind: input, shape index: {}]
  %s7 = inlined_call_operand.vmem [shape: bf16[16,32], index: 7, kind: output, shape index: {}]
  %s8 = sld [smem:[#allocation0]]
  $region42: #{classic_transformer_forward.30} parent=0
    _
  %s10 = ssub.s32 1, %s8
  %s11 = scalar_select 0, %s10, %s8
  $region1: #{classic_transformer_forward.30} parent=0
    #allocation2 [shape = 'u8[512]{0}', space=vmem, size = 0x400, scoped, tag = 'input window, operand 6, single buffered']
    #allocation3 [shape = 's32[1]{0}', space=sflag, size = 0x4, scoped, tag = 'scoped memory for classic_transformer_forward.30']
    %12 = vsyncpa [#allocation3], 0
    // Predicated region
    $region2: #{classic_transformer_forward.30} parent=1 // pred_check
      _
    $region3: #{classic_transformer_forward.30} parent=1 // pred_check_branch
      %14 = sbr.rel (0) target = $region5
    $region4: #{classic_transformer_forward.30} parent=1 // pred_region
      _
    $region5: #{classic_transformer_forward.30} parent=1 // pred_fallthru
      _
    // Predicated region
    $region6: #{classic_transformer_forward.30} parent=1 // pred_check
      _
    $region7: #{classic_transformer_forward.30} parent=1 // pred_check_branch
      %16 = sbr.rel (0) target = $region9
    $region8: #{classic_transformer_forward.30} parent=1 // pred_region
      _
    $region9: #{classic_transformer_forward.30} parent=1 // pred_fallthru
      _
    // Predicated region
    $region10: #{classic_transformer_forward.30} parent=1 // pred_check
      _
    $region11: #{classic_transformer_forward.30} parent=1 // pred_check_branch
      %18 = sbr.rel (0) target = $region13
    $region12: #{classic_transformer_forward.30} parent=1 // pred_region
      _
    $region13: #{classic_transformer_forward.30} parent=1 // pred_fallthru
      _
    // Predicated region
    $region14: #{classic_transformer_forward.30} parent=1 // pred_check
      _
    $region15: #{classic_transformer_forward.30} parent=1 // pred_check_branch
      %20 = sbr.rel (0) target = $region17
    $region16: #{classic_transformer_forward.30} parent=1 // pred_region
      _
    $region17: #{classic_transformer_forward.30} parent=1 // pred_fallthru
      _
    // Predicated region
    $region18: #{classic_transformer_forward.30} parent=1 // pred_check
      _
    $region19: #{classic_transformer_forward.30} parent=1 // pred_check_branch
      %22 = sbr.rel (0) target = $region21
    $region20: #{classic_transformer_forward.30} parent=1 // pred_region
      _
    $region21: #{classic_transformer_forward.30} parent=1 // pred_fallthru
      _
    // Predicated region
    $region22: #{classic_transformer_forward.30} parent=1 // pred_check
      _
    $region23: #{classic_transformer_forward.30} parent=1 // pred_check_branch
      %24 = sbr.rel (0) target = $region25
    $region24: #{classic_transformer_forward.30} parent=1 // pred_region
      _
    $region25: #{classic_transformer_forward.30} parent=1 // pred_fallthru
      _
    // Predicated region
    $region26: #{classic_transformer_forward.30} parent=1 // pred_check
      _
    $region27: #{classic_transformer_forward.30} parent=1 // pred_check_branch
      %26 = sbr.rel (0) target = $region29
    $region28: #{classic_transformer_forward.30} parent=1 // pred_region
      %28 = vsyncadd [#allocation3], 0
      %s30 = sshll.u32 %s6, 4
      %s31 = int_to_ptr.hbm [resolvable:$true] %s30
      %s32 = sshll.u32 [#allocation2], 4
      %s33 = int_to_ptr.vmem [resolvable:$true] %s32
      %35 = dma.hbm_to_vmem [thread:$0]  %s31, 16, %s33, [#allocation3]
    $region29: #{classic_transformer_forward.30} parent=1 // pred_fallthru
      _
    // Predicated region
    $region30: #{classic_transformer_forward.30} parent=1 // pred_check
      _
    $region31: #{classic_transformer_forward.30} parent=1 // pred_check_branch
      %37 = sbr.rel (0) target = $region33
    $region32: #{classic_transformer_forward.30} parent=1 // pred_region
      %39 = dma.done [#allocation3], 16
    $region33: #{classic_transformer_forward.30} parent=1 // pred_fallthru
      _
    %v41 = vld [vmem:[%s0] sm:$0xf]
    %v42 = vld [vmem:[%s0 + $0x4] sm:$0xf]
    %v43 = vld [vmem:[%s1] sm:$0xf]
    %v44 = vld [vmem:[%s1 + $0x4] sm:$0xf]
    %v45 = vld [vmem:[%s1 + $0x8] sm:$0xf]
    %v46 = vld [vmem:[%s1 + $0xc] sm:$0xf]
    %v47 = vld [vmem:[%s2] sm:$0x1]
    %v49 = vperm.slane %v47, 0
    %v53 = vunpack.c.l.b16 %v41
    %v54 = vunpack.c.l.b16 %v42
    %v55 = vpack.c.b16 %v54, %v53
    %v60 = vunpack.c.l.b16 %v43
    %v61 = vunpack.c.l.b16 %v44
    %v62 = vunpack.c.l.b16 %v45
    %v63 = vunpack.c.l.b16 %v46
    %v64 = vpack.c.b16 %v61, %v60
    %v65 = vpack.c.b16 %v63, %v62
    %vm68 = vcmask 261120
    %v70 = vsel %vm68, %v55, 0
    %72 = vmatpush.bf16.msra.mxu0 0
    %73 = vmatpush.bf16.msra.mxu0 0
    %74 = vmatpush.bf16.msra.mxu0 0
    %75 = vmatpush.bf16.msra.mxu0 0
    %76 = vmatpush.bf16.msra.mxu0 0
    %77 = vmatpush.bf16.msra.mxu0 0
    %78 = vmatpush.bf16.msra.mxu0 %v65
    %79 = vmatpush.bf16.msra.mxu0 %v64
    %80 = vmatmul.bf16.gmra.mxu0 %v70
    %v81 = vpop.f32.mrf.mxu0
    %v82 = vadd.f32 %v49, %v81
    %v83 = vpop.f32.mrf.mxu0
    %v84 = vadd.f32 %v49, %v83
    %85 = vdwg.mxu0
    %v86 = vmax.f32 %v82, 0.0
    %v87 = vmax.f32 %v84, 0.0
    %v88 = vpack.c.bf16 %v87, %v86
    %v89 = vld [vmem:[%s3] sm:$0xf]
    %v90 = vld [vmem:[%s3 + $0x4] sm:$0xf]
    %v91 = vld [vmem:[%s3 + $0x8] sm:$0xf]
    %v92 = vld [vmem:[%s3 + $0xc] sm:$0xf]
    %v93 = vld [vmem:[%s3 + $0x10] sm:$0xf]
    %v94 = vld [vmem:[%s3 + $0x14] sm:$0xf]
    %v95 = vld [vmem:[%s3 + $0x18] sm:$0xf]
    %v96 = vld [vmem:[%s3 + $0x1c] sm:$0xf]
    %v97 = vld [vmem:[%s4] sm:$0x1]
    %v99 = vperm.slane %v97, 0
    %v109 = vunpack.c.l.b16 %v89
    %v110 = vunpack.c.l.b16 %v90
    %v111 = vunpack.c.l.b16 %v91
    %v112 = vunpack.c.l.b16 %v92
    %v113 = vunpack.c.l.b16 %v93
    %v114 = vunpack.c.l.b16 %v94
    %v115 = vunpack.c.l.b16 %v95
    %v116 = vunpack.c.l.b16 %v96
    %v117 = vpack.c.b16 %v110, %v109
    %v118 = vpack.c.b16 %v112, %v111
    %v119 = vpack.c.b16 %v114, %v113
    %v120 = vpack.c.b16 %v116, %v115
    %vm125 = vcmask 523264
    %v127 = vsel %vm125, %v88, 0
    %129 = vmatpush.bf16.msra.mxu0 0
    %130 = vmatpush.bf16.msra.mxu0 0
    %131 = vmatpush.bf16.msra.mxu0 0
    %132 = vmatpush.bf16.msra.mxu0 0
    %133 = vmatpush.bf16.msra.mxu0 %v120
    %134 = vmatpush.bf16.msra.mxu0 %v119
    %135 = vmatpush.bf16.msra.mxu0 %v118
    %136 = vmatpush.bf16.msra.mxu0 %v117
    %137 = vmatmul.bf16.gmra.mxu0 %v127
    %v138 = vpop.f32.mrf.mxu0
    %v139 = vadd.f32 %v99, %v138
    %v140 = vpop.f32.mrf.mxu0
    %v141 = vadd.f32 %v99, %v140
    %142 = vdwg.mxu0
    %v143 = vunpack.c.l.bf16 %v41
    %v144 = vunpack.c.l.bf16 %v42
    %v145 = vadd.f32 %v143, %v139
    %v146 = vadd.f32 %v144, %v141
    %v147 = vsel %vm68, %v145, 0.0
    %148 = vadd.xlane.f32.xlu0 %v147
    %v149 = vpop.xlane.xlu0 %148
    %v150 = vsel %vm68, %v146, 0.0
    %151 = vadd.xlane.f32.xlu0 %v150
    %v152 = vpop.xlane.xlu0 %151
    %v153 = vrcp.pop 32.0
    %v154 = vmul.f32 32.0, %v153
    %v155 = vsub.f32 1.0, %v154
    %v156 = vmul.f32 %v153, %v155
    %v157 = vadd.f32 %v153, %v156
    %vm158 = vweird.f32 %v153
    %v159 = vsel %vm158, %v153, %v157
    %v160 = vmul.f32 %v149, %v159
    %v161 = vmul.f32 %v152, %v159
    %v162 = vsub.f32 %v145, %v160
    %v163 = vsub.f32 %v146, %v161
    %v164 = vmul.f32 %v162, %v162
    %v165 = vmul.f32 %v163, %v163
    %v166 = vsel %vm68, %v164, 0.0
    %167 = vadd.xlane.f32.xlu0 %v166
    %v168 = vpop.xlane.xlu0 %167
    %v169 = vsel %vm68, %v165, 0.0
    %170 = vadd.xlane.f32.xlu0 %v169
    %v171 = vpop.xlane.xlu0 %170
    %v172 = vmul.f32 %v168, %v159
    %v173 = vmul.f32 %v171, %v159
    %v174 = vadd.f32 %v172, 1e-05
    %v175 = vadd.f32 %v173, 1e-05
    %v176 = vrsqrt.pop %v174
    %v177 = vmul.f32 %v176, %v174
    %v178 = vmul.f32 %v177, %v176
    %v179 = vmul.f32 0.5, %v178
    %v180 = vsub.f32 1.5, %v179
    %v181 = vmul.f32 %v176, %v180
    %vm182 = vweird.f32 %v174
    %vm183 = vweird.f32 %v176
    %vm184 = vmor %vm182, %vm183
    %v185 = vsel %vm184, %v176, %v181
    %v186 = vrsqrt.pop %v175
    %v187 = vmul.f32 %v186, %v175
    %v188 = vmul.f32 %v187, %v186
    %v189 = vmul.f32 0.5, %v188
    %v190 = vsub.f32 1.5, %v189
    %v191 = vmul.f32 %v186, %v190
    %vm192 = vweird.f32 %v175
    %vm193 = vweird.f32 %v186
    %vm194 = vmor %vm192, %vm193
    %v195 = vsel %vm194, %v186, %v191
    %v196 = vmul.f32 %v162, %v185
    %v197 = vmul.f32 %v163, %v195
    %v198 = vld [vmem:[%s5] sm:$0x1]
    %v200 = vperm.slane %v198, 0
    %v202 = vmul.f32 %v196, %v200
    %v203 = vmul.f32 %v197, %v200
    %v204 = vld [vmem:[#allocation2] sm:$0x1]
    %v206 = vperm.slane %v204, 0
    %v208 = vadd.f32 %v202, %v206
    %v209 = vadd.f32 %v203, %v206
    %v210 = vpack.c.bf16 %v208, %v208
    %v211 = vpack.c.bf16 %v209, %v209
    %vm212 = vcmask 257024
    %213 = vst.msk [vmem:[%s7] sm:$0xf] %vm212, %v210
    %214 = vst.msk [vmem:[%s7 + $0x4] sm:$0xf] %vm212, %v211
    // Predicated region
    $region34: #{classic_transformer_forward.30} parent=1 // pred_check
      _
    $region35: #{classic_transformer_forward.30} parent=1 // pred_check_branch
      %216 = sbr.rel (0) target = $region37
    $region36: #{classic_transformer_forward.30} parent=1 // pred_region
      _
    $region37: #{classic_transformer_forward.30} parent=1 // pred_fallthru
      _
    // Predicated region
    $region38: #{classic_transformer_forward.30} parent=1 // pred_check
      _
    $region39: #{classic_transformer_forward.30} parent=1 // pred_check_branch
      %218 = sbr.rel (0) target = $region41
    $region40: #{classic_transformer_forward.30} parent=1 // pred_region
      _
    $region41: #{classic_transformer_forward.30} parent=1 // pred_fallthru
      _
    %219 = vsyncpa [#allocation3], 1

// kernel: classic_transformer_forward.32
$region0: #{classic_transformer_forward.32}
  #allocation0 [shape = 'u32[]', space=smem, size = 0x4, offset = 0x4, fixed_abs, tag = 'smem constant byte address 0x4 - core index']
  #allocation1 [shape = 'u32[72,128]{1,0:T(1,128)}', space=vmem, size = 0x9000, scoped, tag = 'internal scratch']
  %s0 = inlined_call_operand.vmem [shape: bf16[2,8,32], index: 0, kind: input, shape index: {}]
  %s1 = inlined_call_operand.vmem [shape: bf16[2,8,64], index: 1, kind: input, shape index: {}]
  %s2 = inlined_call_operand.vmem [shape: f32[2,1,8], index: 2, kind: input, shape index: {}]
  %s3 = inlined_call_operand.vmem [shape: bf16[2,8,32], index: 3, kind: input, shape index: {}]
  %s4 = inlined_call_operand.vmem [shape: bf16[32,32], index: 4, kind: input, shape index: {}]
  %s5 = inlined_call_operand.vmem [shape: f32[1,32], index: 5, kind: input, shape index: {}]
  %s6 = inlined_call_operand.vmem [shape: f32[1,32], index: 6, kind: input, shape index: {}]
  %s7 = inlined_call_operand.vmem [shape: f32[1,32], index: 7, kind: input, shape index: {}]
  %s8 = inlined_call_operand.vmem [shape: bf16[2,8,32], index: 8, kind: output, shape index: {}]
  %s9 = sld [smem:[#allocation0]]
  $region65: #{classic_transformer_forward.32} parent=0
    _
  %s11 = ssub.s32 1, %s9
  %s12 = scalar_select 0, %s11, %s9
  loop: start=0, step=1, limit=4
  $region2: #{classic_transformer_forward.32} parent=0 // loop_pre_header
    _
  $region3: #{classic_transformer_forward.32} parent=0 // loop_header
    %s14 = sphi 0, %s18
    %p15 = scmp.ge.s32.totalorder %s14, 4
    %s21 = sphi 0, %s33
    %s22 = sphi 0, %s29
    %s23 = sphi 0, %s21
    %s24 = sphi 0, %s22
    %s25 = sphi 0, %s23
    %s26 = sphi 0, %s24
    %s38 = sphi 0, %s40
    %s41 = sphi 0, %s38
    %s42 = sphi 0, %s41
    %s58 = sphi 0, %s42
    %s64 = sphi 0, %s66
    %s67 = sphi 0, %s64
    %s68 = sphi 0, %s67
    %s84 = sphi 0, %s68
    %s90 = sphi 0, %s92
    %s93 = sphi 0, %s90
    %s94 = sphi 0, %s93
    %s110 = sphi 0, %s94
    %s118 = sphi 0, %s120
    %s121 = sphi 0, %s118
    %s122 = sphi 0, %s121
    %s138 = sphi 0, %s122
    %s142 = sphi 0, %s142
    %s144 = sphi 0, %s142
    %s145 = sphi 0, %s144
    %s159 = sphi 0, %s145
    %s163 = sphi 0, %s163
    %s165 = sphi 0, %s163
    %s166 = sphi 0, %s165
    %s180 = sphi 0, %s166
    %s184 = sphi 0, %s184
    %s186 = sphi 0, %s184
    %s187 = sphi 0, %s186
    %s201 = sphi 0, %s187
    %s205 = sphi 0, %s205
    %s207 = sphi 0, %s205
    %s208 = sphi 0, %s207
    %s222 = sphi 0, %s208
    %s230 = sphi 0, %s232
    %s233 = sphi 0, %s230
    %s234 = sphi 0, %s233
    %s250 = sphi 0, %s234
  $region4: #{classic_transformer_forward.32} parent=0 // loop_header_branch
    %17 = sbr.rel (%p15) target = $region8
  $region5: #{classic_transformer_forward.32} parent=0 // loop_body
    %s19 = ssub.s32 %s14, 1
    %s20 = ssub.s32 %s14, 2
    %s27 = sadd.s32 1, %s22
    %p28 = scmp.ge.s32.totalorder %s27, 1
    %s29 = scalar_select %p28, 0, %s27
    %s30 = sadd.s32 1, %s21
    %s31 = scalar_select %p28, %s30, %s21
    %p32 = scmp.ge.s32.totalorder %s31, 2
    %s33 = scalar_select %p32, 0, %s31
    %s34 = ssub.s32 %s21, %s33
    %s35 = ssub.s32 %s22, %s29
    %s36 = sor.u32 %s34, %s35
    %p37 = scmp.eq.s32.totalorder %s36, 0
    %s39 = sadd.s32 %s38, 1
    %s40 = scalar_select %p37, %s38, %s39
    %p43 = pneg %p37
    %p44 = scmp.eq.s32.totalorder %s14, 1
    %p45 = por %p43, %p44
    %p46 = scmp.ne.s32.totalorder %s38, %s41
    %p47 = scmp.eq.s32.totalorder %s14, 0
    %p48 = por %p46, %p47
    %p49 = scmp.ne.s32.totalorder %s38, %s41
    %p50 = scmp.eq.s32.totalorder %s19, 1
    %p51 = por %p49, %p50
    %p52 = scmp.ne.s32.totalorder %s41, %s42
    %p53 = scmp.eq.s32.totalorder %s19, 0
    %p54 = por %p52, %p53
    %p55 = scmp.ne.s32.totalorder %s41, %s42
    %p56 = scmp.eq.s32.totalorder %s20, 1
    %p57 = por %p55, %p56
    %p59 = scmp.ne.s32.totalorder %s42, %s58
    %p60 = scmp.eq.s32.totalorder %s20, 0
    %p61 = por %p59, %p60
    %s62 = ssub.s32 %s21, %s33
    %p63 = scmp.eq.s32.totalorder %s62, 0
    %s65 = sadd.s32 %s64, 1
    %s66 = scalar_select %p63, %s64, %s65
    %p69 = pneg %p63
    %p70 = scmp.eq.s32.totalorder %s14, 1
    %p71 = por %p69, %p70
    %p72 = scmp.ne.s32.totalorder %s64, %s67
    %p73 = scmp.eq.s32.totalorder %s14, 0
    %p74 = por %p72, %p73
    %p75 = scmp.ne.s32.totalorder %s64, %s67
    %p76 = scmp.eq.s32.totalorder %s19, 1
    %p77 = por %p75, %p76
    %p78 = scmp.ne.s32.totalorder %s67, %s68
    %p79 = scmp.eq.s32.totalorder %s19, 0
    %p80 = por %p78, %p79
    %p81 = scmp.ne.s32.totalorder %s67, %s68
    %p82 = scmp.eq.s32.totalorder %s20, 1
    %p83 = por %p81, %p82
    %p85 = scmp.ne.s32.totalorder %s68, %s84
    %p86 = scmp.eq.s32.totalorder %s20, 0
    %p87 = por %p85, %p86
    %s88 = ssub.s32 %s21, %s33
    %p89 = scmp.eq.s32.totalorder %s88, 0
    %s91 = sadd.s32 %s90, 1
    %s92 = scalar_select %p89, %s90, %s91
    %p95 = pneg %p89
    %p96 = scmp.eq.s32.totalorder %s14, 1
    %p97 = por %p95, %p96
    %p98 = scmp.ne.s32.totalorder %s90, %s93
    %p99 = scmp.eq.s32.totalorder %s14, 0
    %p100 = por %p98, %p99
    %p101 = scmp.ne.s32.totalorder %s90, %s93
    %p102 = scmp.eq.s32.totalorder %s19, 1
    %p103 = por %p101, %p102
    %p104 = scmp.ne.s32.totalorder %s93, %s94
    %p105 = scmp.eq.s32.totalorder %s19, 0
    %p106 = por %p104, %p105
    %p107 = scmp.ne.s32.totalorder %s93, %s94
    %p108 = scmp.eq.s32.totalorder %s20, 1
    %p109 = por %p107, %p108
    %p111 = scmp.ne.s32.totalorder %s94, %s110
    %p112 = scmp.eq.s32.totalorder %s20, 0
    %p113 = por %p111, %p112
    %s114 = ssub.s32 %s21, %s33
    %s115 = ssub.s32 %s22, %s29
    %s116 = sor.u32 %s114, %s115
    %p117 = scmp.eq.s32.totalorder %s116, 0
    %s119 = sadd.s32 %s118, 1
    %s120 = scalar_select %p117, %s118, %s119
    %p123 = pneg %p117
    %p124 = scmp.eq.s32.totalorder %s14, 1
    %p125 = por %p123, %p124
    %p126 = scmp.ne.s32.totalorder %s118, %s121
    %p127 = scmp.eq.s32.totalorder %s14, 0
    %p128 = por %p126, %p127
    %p129 = scmp.ne.s32.totalorder %s118, %s121
    %p130 = scmp.eq.s32.totalorder %s19, 1
    %p131 = por %p129, %p130
    %p132 = scmp.ne.s32.totalorder %s121, %s122
    %p133 = scmp.eq.s32.totalorder %s19, 0
    %p134 = por %p132, %p133
    %p135 = scmp.ne.s32.totalorder %s121, %s122
    %p136 = scmp.eq.s32.totalorder %s20, 1
    %p137 = por %p135, %p136
    %p139 = scmp.ne.s32.totalorder %s122, %s138
    %p140 = scmp.eq.s32.totalorder %s20, 0
    %p141 = por %p139, %p140
    %s143 = sadd.s32 %s142, 1
    %p146 = scmp.eq.s32.totalorder %s14, 1
    %p147 = scmp.ne.s32.totalorder %s142, %s144
    %p148 = scmp.eq.s32.totalorder %s14, 0
    %p149 = por %p147, %p148
    %p150 = scmp.ne.s32.totalorder %s142, %s144
    %p151 = scmp.eq.s32.totalorder %s19, 1
    %p152 = por %p150, %p151
    %p153 = scmp.ne.s32.totalorder %s144, %s145
    %p154 = scmp.eq.s32.totalorder %s19, 0
    %p155 = por %p153, %p154
    %p156 = scmp.ne.s32.totalorder %s144, %s145
    %p157 = scmp.eq.s32.totalorder %s20, 1
    %p158 = por %p156, %p157
    %p160 = scmp.ne.s32.totalorder %s145, %s159
    %p161 = scmp.eq.s32.totalorder %s20, 0
    %p162 = por %p160, %p161
    %s164 = sadd.s32 %s163, 1
    %p167 = scmp.eq.s32.totalorder %s14, 1
    %p168 = scmp.ne.s32.totalorder %s163, %s165
    %p169 = scmp.eq.s32.totalorder %s14, 0
    %p170 = por %p168, %p169
    %p171 = scmp.ne.s32.totalorder %s163, %s165
    %p172 = scmp.eq.s32.totalorder %s19, 1
    %p173 = por %p171, %p172
    %p174 = scmp.ne.s32.totalorder %s165, %s166
    %p175 = scmp.eq.s32.totalorder %s19, 0
    %p176 = por %p174, %p175
    %p177 = scmp.ne.s32.totalorder %s165, %s166
    %p178 = scmp.eq.s32.totalorder %s20, 1
    %p179 = por %p177, %p178
    %p181 = scmp.ne.s32.totalorder %s166, %s180
    %p182 = scmp.eq.s32.totalorder %s20, 0
    %p183 = por %p181, %p182
    %s185 = sadd.s32 %s184, 1
    %p188 = scmp.eq.s32.totalorder %s14, 1
    %p189 = scmp.ne.s32.totalorder %s184, %s186
    %p190 = scmp.eq.s32.totalorder %s14, 0
    %p191 = por %p189, %p190
    %p192 = scmp.ne.s32.totalorder %s184, %s186
    %p193 = scmp.eq.s32.totalorder %s19, 1
    %p194 = por %p192, %p193
    %p195 = scmp.ne.s32.totalorder %s186, %s187
    %p196 = scmp.eq.s32.totalorder %s19, 0
    %p197 = por %p195, %p196
    %p198 = scmp.ne.s32.totalorder %s186, %s187
    %p199 = scmp.eq.s32.totalorder %s20, 1
    %p200 = por %p198, %p199
    %p202 = scmp.ne.s32.totalorder %s187, %s201
    %p203 = scmp.eq.s32.totalorder %s20, 0
    %p204 = por %p202, %p203
    %s206 = sadd.s32 %s205, 1
    %p209 = scmp.eq.s32.totalorder %s14, 1
    %p210 = scmp.ne.s32.totalorder %s205, %s207
    %p211 = scmp.eq.s32.totalorder %s14, 0
    %p212 = por %p210, %p211
    %p213 = scmp.ne.s32.totalorder %s205, %s207
    %p214 = scmp.eq.s32.totalorder %s19, 1
    %p215 = por %p213, %p214
    %p216 = scmp.ne.s32.totalorder %s207, %s208
    %p217 = scmp.eq.s32.totalorder %s19, 0
    %p218 = por %p216, %p217
    %p219 = scmp.ne.s32.totalorder %s207, %s208
    %p220 = scmp.eq.s32.totalorder %s20, 1
    %p221 = por %p219, %p220
    %p223 = scmp.ne.s32.totalorder %s208, %s222
    %p224 = scmp.eq.s32.totalorder %s20, 0
    %p225 = por %p223, %p224
    %s226 = ssub.s32 %s21, %s33
    %s227 = ssub.s32 %s22, %s29
    %s228 = sor.u32 %s226, %s227
    %p229 = scmp.eq.s32.totalorder %s228, 0
    %s231 = sadd.s32 %s230, 1
    %s232 = scalar_select %p229, %s230, %s231
    %p235 = pneg %p229
    %p236 = scmp.eq.s32.totalorder %s14, 1
    %p237 = por %p235, %p236
    %p238 = scmp.ne.s32.totalorder %s230, %s233
    %p239 = scmp.eq.s32.totalorder %s14, 0
    %p240 = por %p238, %p239
    %p241 = scmp.ne.s32.totalorder %s230, %s233
    %p242 = scmp.eq.s32.totalorder %s19, 1
    %p243 = por %p241, %p242
    %p244 = scmp.ne.s32.totalorder %s233, %s234
    %p245 = scmp.eq.s32.totalorder %s19, 0
    %p246 = por %p244, %p245
    %p247 = scmp.ne.s32.totalorder %s233, %s234
    %p248 = scmp.eq.s32.totalorder %s20, 1
    %p249 = por %p247, %p248
    %p251 = scmp.ne.s32.totalorder %s234, %s250
    %p252 = scmp.eq.s32.totalorder %s20, 0
    %p253 = por %p251, %p252
    %p254 = scmp.le.s32.totalorder 1, %s14
    %p255 = scmp.lt.s32.totalorder %s14, 3
    %p256 = pnand %p254, %p255
    %p257 = pneg %p256
    // Predicated region
    $region9: #{classic_transformer_forward.32} parent=5 // pred_check
      _
    $region10: #{classic_transformer_forward.32} parent=5 // pred_check_branch
      %259 = sbr.rel (%p256) target = $region12
    $region11: #{classic_transformer_forward.32} parent=5 // pred_region
      %s260 = ssub.s32 %s14, 1
      // Predicated region
      $region13: #{classic_transformer_forward.32} parent=11 // pred_check
        %p261 = pneg %p155
      $region14: #{classic_transformer_forward.32} parent=11 // pred_check_branch
        %263 = sbr.rel (%p261) target = $region16
      $region15: #{classic_transformer_forward.32} parent=11 // pred_region
        _
      $region16: #{classic_transformer_forward.32} parent=11 // pred_fallthru
        _
      // Predicated region
      $region17: #{classic_transformer_forward.32} parent=11 // pred_check
        %p264 = pneg %p176
      $region18: #{classic_transformer_forward.32} parent=11 // pred_check_branch
        %266 = sbr.rel (%p264) target = $region20
      $region19: #{classic_transformer_forward.32} parent=11 // pred_region
        _
      $region20: #{classic_transformer_forward.32} parent=11 // pred_fallthru
        _
      // Predicated region
      $region21: #{classic_transformer_forward.32} parent=11 // pred_check
        %p267 = pneg %p197
      $region22: #{classic_transformer_forward.32} parent=11 // pred_check_branch
        %269 = sbr.rel (%p267) target = $region24
      $region23: #{classic_transformer_forward.32} parent=11 // pred_region
        _
      $region24: #{classic_transformer_forward.32} parent=11 // pred_fallthru
        _
      // Predicated region
      $region25: #{classic_transformer_forward.32} parent=11 // pred_check
        %p270 = pneg %p218
      $region26: #{classic_transformer_forward.32} parent=11 // pred_check_branch
        %272 = sbr.rel (%p270) target = $region28
      $region27: #{classic_transformer_forward.32} parent=11 // pred_region
        _
      $region28: #{classic_transformer_forward.32} parent=11 // pred_fallthru
        _
    $region12: #{classic_transformer_forward.32} parent=5 // pred_fallthru
      _
    %p273 = scmp.lt.s32.totalorder %s14, 2
    // Predicated region
    $region29: #{classic_transformer_forward.32} parent=5 // pred_check
      %p274 = pneg %p273
    $region30: #{classic_transformer_forward.32} parent=5 // pred_check_branch
      %276 = sbr.rel (%p274) target = $region32
    $region31: #{classic_transformer_forward.32} parent=5 // pred_region
      // Predicated region
      $region33: #{classic_transformer_forward.32} parent=31 // pred_check
        %p277 = pneg %p48
      $region34: #{classic_transformer_forward.32} parent=31 // pred_check_branch
        %279 = sbr.rel (%p277) target = $region36
      $region35: #{classic_transformer_forward.32} parent=31 // pred_region
        %p280 = scmp.lt.s32.totalorder %s21, 1
        %s281 = scalar_select %p280, %s21, 1
        %p282 = scmp.lt.s32.totalorder %s22, 0
        %s283 = scalar_select %p282, %s22, 0
        %s284 = sadd.s32 %s283, %s281
        %s285 = smul.addr %s284, 4
        %s286 = scalar_lea.vmem %s0, %s285
      $region36: #{classic_transformer_forward.32} parent=31 // pred_fallthru
        _
      // Predicated region
      $region37: #{classic_transformer_forward.32} parent=31 // pred_check
        %p287 = pneg %p74
      $region38: #{classic_transformer_forward.32} parent=31 // pred_check_branch
        %289 = sbr.rel (%p287) target = $region40
      $region39: #{classic_transformer_forward.32} parent=31 // pred_region
        %p290 = scmp.lt.s32.totalorder %s21, 1
        %s291 = scalar_select %p290, %s21, 1
        %s292 = smul.addr %s291, 4
        %s293 = scalar_lea.vmem %s1, %s292
      $region40: #{classic_transformer_forward.32} parent=31 // pred_fallthru
        _
      // Predicated region
      $region41: #{classic_transformer_forward.32} parent=31 // pred_check
        %p294 = pneg %p100
      $region42: #{classic_transformer_forward.32} parent=31 // pred_check_branch
        %296 = sbr.rel (%p294) target = $region44
      $region43: #{classic_transformer_forward.32} parent=31 // pred_region
        %p297 = scmp.lt.s32.totalorder %s21, 1
        %s298 = scalar_select %p297, %s21, 1
        %s299 = scalar_lea.vmem %s2, %s298
      $region44: #{classic_transformer_forward.32} parent=31 // pred_fallthru
        _
      // Predicated region
      $region45: #{classic_transformer_forward.32} parent=31 // pred_check
        %p300 = pneg %p128
      $region46: #{classic_transformer_forward.32} parent=31 // pred_check_branch
        %302 = sbr.rel (%p300) target = $region48
      $region47: #{classic_transformer_forward.32} parent=31 // pred_region
        %p303 = scmp.lt.s32.totalorder %s21, 1
        %s304 = scalar_select %p303, %s21, 1
        %p305 = scmp.lt.s32.totalorder %s22, 0
        %s306 = scalar_select %p305, %s22, 0
        %s307 = sadd.s32 %s306, %s304
        %s308 = smul.addr %s307, 4
        %s309 = scalar_lea.vmem %s3, %s308
      $region48: #{classic_transformer_forward.32} parent=31 // pred_fallthru
        _
    $region32: #{classic_transformer_forward.32} parent=5 // pred_fallthru
      _
    %p310 = scmp.le.s32.totalorder 1, %s14
    %p311 = scmp.lt.s32.totalorder %s14, 3
    %p312 = pnand %p310, %p311
    %p313 = pneg %p312
    // Predicated region
    $region49: #{classic_transformer_forward.32} parent=5 // pred_check
      _
    $region50: #{classic_transformer_forward.32} parent=5 // pred_check_branch
      %315 = sbr.rel (%p312) target = $region52
    $region51: #{classic_transformer_forward.32} parent=5 // pred_region
      %s316 = ssub.s32 %s14, 1
      %p317 = scmp.lt.s32.totalorder %s23, 1
      %s318 = scalar_select %p317, %s23, 1
      %p319 = scmp.lt.s32.totalorder %s24, 0
      %s320 = scalar_select %p319, %s24, 0
      %s321 = sadd.s32 %s320, %s318
      %s322 = smul.addr %s321, 4
      %s323 = scalar_lea.vmem %s0, %s322
      %p324 = pneg %p54
      %p325 = pneg %p51
      %p326 = scmp.lt.s32.totalorder %s23, 1
      %s327 = scalar_select %p326, %s23, 1
      %s328 = smul.addr %s327, 4
      %s329 = scalar_lea.vmem %s1, %s328
      %p330 = pneg %p80
      %p331 = pneg %p77
      %p332 = scmp.lt.s32.totalorder %s23, 1
      %s333 = scalar_select %p332, %s23, 1
      %s334 = scalar_lea.vmem %s2, %s333
      %p335 = pneg %p106
      %p336 = pneg %p103
      %p337 = scmp.lt.s32.totalorder %s23, 1
      %s338 = scalar_select %p337, %s23, 1
      %p339 = scmp.lt.s32.totalorder %s24, 0
      %s340 = scalar_select %p339, %s24, 0
      %s341 = sadd.s32 %s340, %s338
      %s342 = smul.addr %s341, 4
      %s343 = scalar_lea.vmem %s3, %s342
      %p344 = pneg %p134
      %p345 = pneg %p131
      %p346 = pneg %p155
      %p347 = pneg %p152
      %p348 = pneg %p176
      %p349 = pneg %p173
      %p350 = pneg %p197
      %p351 = pneg %p194
      %p352 = pneg %p218
      %p353 = pneg %p215
      %p354 = pneg %p246
      %p355 = pneg %p243
      %p356 = scmp.lt.s32.totalorder %s23, 1
      %s357 = scalar_select %p356, %s23, 1
      %p358 = scmp.lt.s32.totalorder %s24, 0
      %s359 = scalar_select %p358, %s24, 0
      %s360 = sadd.s32 %s359, %s357
      %s361 = smul.addr %s360, 4
      %s362 = scalar_lea.vmem %s8, %s361
      %p363 = scmp.lt.s32.totalorder %s23, 1
      %s364 = scalar_select %p363, %s23, 1
      %p365 = scmp.lt.s32.totalorder %s24, 0
      %s366 = scalar_select %p365, %s24, 0
      %s367 = sadd.s32 %s366, %s364
      %s368 = smul.addr %s367, 4
      %s369 = scalar_lea.vmem %s0, %s368
      %p370 = scmp.lt.s32.totalorder %s23, 1
      %s371 = scalar_select %p370, %s23, 1
      %s372 = smul.addr %s371, 4
      %s373 = scalar_lea.vmem %s1, %s372
      %p374 = scmp.lt.s32.totalorder %s23, 1
      %s375 = scalar_select %p374, %s23, 1
      %s376 = scalar_lea.vmem %s2, %s375
      %p377 = scmp.lt.s32.totalorder %s23, 1
      %s378 = scalar_select %p377, %s23, 1
      %p379 = scmp.lt.s32.totalorder %s24, 0
      %s380 = scalar_select %p379, %s24, 0
      %s381 = sadd.s32 %s380, %s378
      %s382 = smul.addr %s381, 4
      %s383 = scalar_lea.vmem %s3, %s382
      %p384 = scmp.lt.s32.totalorder %s23, 1
      %s385 = scalar_select %p384, %s23, 1
      %p386 = scmp.lt.s32.totalorder %s24, 0
      %s387 = scalar_select %p386, %s24, 0
      %s388 = sadd.s32 %s387, %s385
      %s389 = smul.addr %s388, 4
      %s390 = scalar_lea.vmem %s8, %s389
      %v392 = vld [vmem:[%s369] sm:$0xf]
      %v393 = vld [vmem:[%s373] sm:$0xf]
      %v394 = vld [vmem:[%s376] sm:$0x1]
      %v396 = vperm.slane %v394, 0
      %s398 = smul.u32 %s24, 8
      %v399 = vlaneseq
      %v400 = vshrl.u32 %v399, 7
      %v401 = vstv %s398
      %v402 = vadd.s32 %v401, %v400
      %v403 = vlaneseq
      %v404 = vand.u32 %v403, 127
      %vm405 = vcmp.le.s32.totalorder %v404, %v402
      %v406 = vsel %vm405, %v396, -1e+09
      %v407 = vld [vmem:[%s4] sm:$0xf]
      %v408 = vld [vmem:[%s4 + $0x4] sm:$0xf]
      %v409 = vld [vmem:[%s4 + $0x8] sm:$0xf]
      %v410 = vld [vmem:[%s4 + $0xc] sm:$0xf]
      %vm411 = vcmask 64512
      %v413 = vsel %vm411, %v392, 0
      %v416 = vsel %vm411, %v393, 0
      %418 = vmatpush.bf16.xpose.msra.mxu0 0
      %419 = vmatpush.bf16.xpose.msra.mxu0 0
      %420 = vmatpush.bf16.xpose.msra.mxu0 0
      %421 = vmatpush.bf16.xpose.msra.mxu0 0
      %422 = vmatpush.bf16.xpose.msra.mxu0 0
      %423 = vmatpush.bf16.xpose.msra.mxu0 0
      %424 = vmatpush.bf16.xpose.msra.mxu0 0
      %425 = vmatpush.bf16.xpose.msra.mxu0 %v416
      %426 = vmatmul.bf16.gmra.mxu0 %v413
      %v427 = vpop.f32.mrf.mxu0
      %v428 = vadd.f32 %v406, %v427
      %v429 = vpop.f32.mrf.mxu0
      %430 = vdwg.mxu0
      %v431 = vsel %vm411, %v428, -inf
      %432 = vmax.xlane.f32.xlu0 %v431
      %v433 = vpop.xlane.xlu0 %432
      %v434 = vsub.f32 %v428, %v433
      %v435 = vmul.f32 %v434, 1.442695
      %v436 = vpow.pop %v435
      %v437 = vsel %vm411, %v436, 0.0
      %438 = vadd.xlane.f32.xlu0 %v437
      %v439 = vpop.xlane.xlu0 %438
      %v440 = vrcp.pop %v439
      %v441 = vmul.f32 %v436, %v440
      %v442 = vpack.c.bf16 %v441, %v441
      %v444 = vunpack.c.l.b16 %v393
      %v445 = vpack.c.b16 %v444, %v444
      %446 = vrot.lane.b32.xlu0 %v445, 96
      %v447 = vpop.permute.xlu0 %446
      %v449 = vsel %vm411, %v442, 0
      %vm451 = vcmask 1043456
      %v453 = vsel %vm451, %v447, 0
      %455 = vmatpush.bf16.msra.mxu0 0
      %456 = vmatpush.bf16.msra.mxu0 0
      %457 = vmatpush.bf16.msra.mxu0 0
      %458 = vmatpush.bf16.msra.mxu0 0
      %459 = vmatpush.bf16.msra.mxu0 0
      %460 = vmatpush.bf16.msra.mxu0 0
      %461 = vmatpush.bf16.msra.mxu0 0
      %462 = vmatpush.bf16.msra.mxu0 %v453
      %463 = vmatmul.bf16.gmra.mxu0 %v449
      %v464 = vpop.f32.mrf.mxu0
      %v465 = vadd.f32 0.0, %v464
      %v466 = vpop.f32.mrf.mxu0
      %467 = vdwg.mxu0
      %v468 = vpack.c.bf16 %v465, %v465
      %v470 = vunpack.c.l.b16 %v392
      %v471 = vpack.c.b16 %v470, %v470
      %472 = vrot.lane.b32.xlu0 %v471, 120
      %v473 = vpop.permute.xlu0 %472
      %474 = vrot.lane.b32.xlu0 %v445, 120
      %v475 = vpop.permute.xlu0 %474
      %v477 = vsel %vm411, %v473, 0
      %v480 = vsel %vm411, %v475, 0
      %482 = vmatpush.bf16.xpose.msra.mxu0 0
      %483 = vmatpush.bf16.xpose.msra.mxu0 0
      %484 = vmatpush.bf16.xpose.msra.mxu0 0
      %485 = vmatpush.bf16.xpose.msra.mxu0 0
      %486 = vmatpush.bf16.xpose.msra.mxu0 0
      %487 = vmatpush.bf16.xpose.msra.mxu0 0
      %488 = vmatpush.bf16.xpose.msra.mxu0 0
      %489 = vmatpush.bf16.xpose.msra.mxu0 %v480
      %490 = vmatmul.bf16.gmra.mxu0 %v477
      %v491 = vpop.f32.mrf.mxu0
      %v492 = vadd.f32 %v406, %v491
      %v493 = vpop.f32.mrf.mxu0
      %494 = vdwg.mxu0
      %v495 = vsel %vm411, %v492, -inf
      %496 = vmax.xlane.f32.xlu0 %v495
      %v497 = vpop.xlane.xlu0 %496
      %v498 = vsub.f32 %v492, %v497
      %v499 = vmul.f32 %v498, 1.442695
      %v500 = vpow.pop %v499
      %v501 = vsel %vm411, %v500, 0.0
      %502 = vadd.xlane.f32.xlu0 %v501
      %v503 = vpop.xlane.xlu0 %502
      %v504 = vrcp.pop %v503
      %v505 = vmul.f32 %v500, %v504
      %v506 = vpack.c.bf16 %v505, %v505
      %507 = vrot.lane.b32.xlu0 %v445, 88
      %v508 = vpop.permute.xlu0 %507
      %v510 = vsel %vm411, %v506, 0
      %v513 = vsel %vm451, %v508, 0
      %515 = vmatpush.bf16.msra.mxu0 0
      %516 = vmatpush.bf16.msra.mxu0 0
      %517 = vmatpush.bf16.msra.mxu0 0
      %518 = vmatpush.bf16.msra.mxu0 0
      %519 = vmatpush.bf16.msra.mxu0 0
      %520 = vmatpush.bf16.msra.mxu0 0
      %521 = vmatpush.bf16.msra.mxu0 0
      %522 = vmatpush.bf16.msra.mxu0 %v513
      %523 = vmatmul.bf16.gmra.mxu0 %v510
      %v524 = vpop.f32.mrf.mxu0
      %v525 = vadd.f32 0.0, %v524
      %v526 = vpop.f32.mrf.mxu0
      %527 = vdwg.mxu0
      %v528 = vpack.c.bf16 %v525, %v525
      %v530 = vsel %vm411, %v528, 0
      %v533 = vsel %vm451, %v408, 0
      %535 = vmatpush.bf16.msra.mxu0 0
      %536 = vmatpush.bf16.msra.mxu0 0
      %537 = vmatpush.bf16.msra.mxu0 0
      %538 = vmatpush.bf16.msra.mxu0 0
      %539 = vmatpush.bf16.msra.mxu0 0
      %540 = vmatpush.bf16.msra.mxu0 0
      %541 = vmatpush.bf16.msra.mxu0 0
      %542 = vmatpush.bf16.msra.mxu0 %v533
      %543 = vmatmul.bf16.gmra.mxu0 %v530
      %v544 = vpop.f32.mrf.mxu0
      %v545 = vadd.f32 0.0, %v544
      %v546 = vpop.f32.mrf.mxu0
      %547 = vdwg.mxu0
      %v549 = vsel %vm411, %v468, 0
      %v552 = vsel %vm451, %v407, 0
      %554 = vmatpush.bf16.msra.mxu0 0
      %555 = vmatpush.bf16.msra.mxu0 0
      %556 = vmatpush.bf16.msra.mxu0 0
      %557 = vmatpush.bf16.msra.mxu0 0
      %558 = vmatpush.bf16.msra.mxu0 0
      %559 = vmatpush.bf16.msra.mxu0 0
      %560 = vmatpush.bf16.msra.mxu0 0
      %561 = vmatpush.bf16.msra.mxu0 %v552
      %562 = vmatmul.bf16.gmra.mxu0 %v549
      %v563 = vpop.f32.mrf.mxu0
      %v564 = vadd.f32 %v545, %v563
      %v565 = vpop.f32.mrf.mxu0
      %566 = vdwg.mxu0
      %567 = vrot.lane.b32.xlu0 %v471, 112
      %v568 = vpop.permute.xlu0 %567
      %569 = vrot.lane.b32.xlu0 %v445, 112
      %v570 = vpop.permute.xlu0 %569
      %v572 = vsel %vm411, %v568, 0
      %v575 = vsel %vm411, %v570, 0
      %577 = vmatpush.bf16.xpose.msra.mxu0 0
      %578 = vmatpush.bf16.xpose.msra.mxu0 0
      %579 = vmatpush.bf16.xpose.msra.mxu0 0
      %580 = vmatpush.bf16.xpose.msra.mxu0 0
      %581 = vmatpush.bf16.xpose.msra.mxu0 0
      %582 = vmatpush.bf16.xpose.msra.mxu0 0
      %583 = vmatpush.bf16.xpose.msra.mxu0 0
      %584 = vmatpush.bf16.xpose.msra.mxu0 %v575
      %585 = vmatmul.bf16.gmra.mxu0 %v572
      %v586 = vpop.f32.mrf.mxu0
      %v587 = vadd.f32 %v406, %v586
      %v588 = vpop.f32.mrf.mxu0
      %589 = vdwg.mxu0
      %v590 = vsel %vm411, %v587, -inf
      %591 = vmax.xlane.f32.xlu0 %v590
      %v592 = vpop.xlane.xlu0 %591
      %v593 = vsub.f32 %v587, %v592
      %v594 = vmul.f32 %v593, 1.442695
      %v595 = vpow.pop %v594
      %v596 = vsel %vm411, %v595, 0.0
      %597 = vadd.xlane.f32.xlu0 %v596
      %v598 = vpop.xlane.xlu0 %597
      %v599 = vrcp.pop %v598
      %v600 = vmul.f32 %v595, %v599
      %v601 = vpack.c.bf16 %v600, %v600
      %602 = vrot.lane.b32.xlu0 %v445, 80
      %v603 = vpop.permute.xlu0 %602
      %v605 = vsel %vm411, %v601, 0
      %v608 = vsel %vm451, %v603, 0
      %610 = vmatpush.bf16.msra.mxu0 0
      %611 = vmatpush.bf16.msra.mxu0 0
      %612 = vmatpush.bf16.msra.mxu0 0
      %613 = vmatpush.bf16.msra.mxu0 0
      %614 = vmatpush.bf16.msra.mxu0 0
      %615 = vmatpush.bf16.msra.mxu0 0
      %616 = vmatpush.bf16.msra.mxu0 0
      %617 = vmatpush.bf16.msra.mxu0 %v608
      %618 = vmatmul.bf16.gmra.mxu0 %v605
      %v619 = vpop.f32.mrf.mxu0
      %v620 = vadd.f32 0.0, %v619
      %v621 = vpop.f32.mrf.mxu0
      %622 = vdwg.mxu0
      %v623 = vpack.c.bf16 %v620, %v620
      %v625 = vsel %vm411, %v623, 0
      %v628 = vsel %vm451, %v409, 0
      %630 = vmatpush.bf16.msra.mxu0 0
      %631 = vmatpush.bf16.msra.mxu0 0
      %632 = vmatpush.bf16.msra.mxu0 0
      %633 = vmatpush.bf16.msra.mxu0 0
      %634 = vmatpush.bf16.msra.mxu0 0
      %635 = vmatpush.bf16.msra.mxu0 0
      %636 = vmatpush.bf16.msra.mxu0 0
      %637 = vmatpush.bf16.msra.mxu0 %v628
      %638 = vmatmul.bf16.gmra.mxu0 %v625
      %v639 = vpop.f32.mrf.mxu0
      %v640 = vadd.f32 0.0, %v639
      %v641 = vpop.f32.mrf.mxu0
      %642 = vdwg.mxu0
      %v643 = vadd.f32 %v564, %v640
      %644 = vrot.lane.b32.xlu0 %v471, 104
      %v645 = vpop.permute.xlu0 %644
      %646 = vrot.lane.b32.xlu0 %v445, 104
      %v647 = vpop.permute.xlu0 %646
      %v649 = vsel %vm411, %v645, 0
      %v652 = vsel %vm411, %v647, 0
      %654 = vmatpush.bf16.xpose.msra.mxu0 0
      %655 = vmatpush.bf16.xpose.msra.mxu0 0
      %656 = vmatpush.bf16.xpose.msra.mxu0 0
      %657 = vmatpush.bf16.xpose.msra.mxu0 0
      %658 = vmatpush.bf16.xpose.msra.mxu0 0
      %659 = vmatpush.bf16.xpose.msra.mxu0 0
      %660 = vmatpush.bf16.xpose.msra.mxu0 0
      %661 = vmatpush.bf16.xpose.msra.mxu0 %v652
      %662 = vmatmul.bf16.gmra.mxu0 %v649
      %v663 = vpop.f32.mrf.mxu0
      %v664 = vadd.f32 %v406, %v663
      %v665 = vpop.f32.mrf.mxu0
      %666 = vdwg.mxu0
      %v667 = vsel %vm411, %v664, -inf
      %668 = vmax.xlane.f32.xlu0 %v667
      %v669 = vpop.xlane.xlu0 %668
      %v670 = vsub.f32 %v664, %v669
      %v671 = vmul.f32 %v670, 1.442695
      %v672 = vpow.pop %v671
      %v673 = vsel %vm411, %v672, 0.0
      %674 = vadd.xlane.f32.xlu0 %v673
      %v675 = vpop.xlane.xlu0 %674
      %v676 = vrcp.pop %v675
      %v677 = vmul.f32 %v672, %v676
      %v678 = vpack.c.bf16 %v677, %v677
      %679 = vrot.lane.b32.xlu0 %v445, 72
      %v680 = vpop.permute.xlu0 %679
      %v682 = vsel %vm411, %v678, 0
      %v685 = vsel %vm451, %v680, 0
      %687 = vmatpush.bf16.msra.mxu0 0
      %688 = vmatpush.bf16.msra.mxu0 0
      %689 = vmatpush.bf16.msra.mxu0 0
      %690 = vmatpush.bf16.msra.mxu0 0
      %691 = vmatpush.bf16.msra.mxu0 0
      %692 = vmatpush.bf16.msra.mxu0 0
      %693 = vmatpush.bf16.msra.mxu0 0
      %694 = vmatpush.bf16.msra.mxu0 %v685
      %695 = vmatmul.bf16.gmra.mxu0 %v682
      %v696 = vpop.f32.mrf.mxu0
      %v697 = vadd.f32 0.0, %v696
      %v698 = vpop.f32.mrf.mxu0
      %699 = vdwg.mxu0
      %v700 = vpack.c.bf16 %v697, %v697
      %v702 = vsel %vm411, %v700, 0
      %v705 = vsel %vm451, %v410, 0
      %707 = vmatpush.bf16.msra.mxu0 0
      %708 = vmatpush.bf16.msra.mxu0 0
      %709 = vmatpush.bf16.msra.mxu0 0
      %710 = vmatpush.bf16.msra.mxu0 0
      %711 = vmatpush.bf16.msra.mxu0 0
      %712 = vmatpush.bf16.msra.mxu0 0
      %713 = vmatpush.bf16.msra.mxu0 0
      %714 = vmatpush.bf16.msra.mxu0 %v705
      %715 = vmatmul.bf16.gmra.mxu0 %v702
      %v716 = vpop.f32.mrf.mxu0
      %v717 = vadd.f32 0.0, %v716
      %v718 = vpop.f32.mrf.mxu0
      %719 = vdwg.mxu0
      %v720 = vadd.f32 %v643, %v717
      %v721 = vld [vmem:[%s5] sm:$0x1]
      %v723 = vperm.slane %v721, 0
      %v725 = vadd.f32 %v720, %v723
      %v726 = vld [vmem:[%s383] sm:$0xf]
      %v727 = vunpack.c.l.bf16 %v726
      %v728 = vadd.f32 %v727, %v725
      %vm729 = vcmask 261120
      %v730 = vsel %vm729, %v728, 0.0
      %731 = vadd.xlane.f32.xlu0 %v730
      %v732 = vpop.xlane.xlu0 %731
      %v733 = vrcp.pop 32.0
      %v734 = vmul.f32 32.0, %v733
      %v735 = vsub.f32 1.0, %v734
      %v736 = vmul.f32 %v733, %v735
      %v737 = vadd.f32 %v733, %v736
      %vm738 = vweird.f32 %v733
      %v739 = vsel %vm738, %v733, %v737
      %v740 = vmul.f32 %v732, %v739
      %v741 = vsub.f32 %v728, %v740
      %v742 = vmul.f32 %v741, %v741
      %v743 = vsel %vm729, %v742, 0.0
      %744 = vadd.xlane.f32.xlu0 %v743
      %v745 = vpop.xlane.xlu0 %744
      %v746 = vmul.f32 %v745, %v739
      %v747 = vadd.f32 %v746, 1e-05
      %v748 = vrsqrt.pop %v747
      %v749 = vmul.f32 %v748, %v747
      %v750 = vmul.f32 %v749, %v748
      %v751 = vmul.f32 0.5, %v750
      %v752 = vsub.f32 1.5, %v751
      %v753 = vmul.f32 %v748, %v752
      %vm754 = vweird.f32 %v747
      %vm755 = vweird.f32 %v748
      %vm756 = vmor %vm754, %vm755
      %v757 = vsel %vm756, %v748, %v753
      %v758 = vmul.f32 %v741, %v757
      %v759 = vld [vmem:[%s6] sm:$0x1]
      %v761 = vperm.slane %v759, 0
      %v763 = vmul.f32 %v758, %v761
      %v764 = vld [vmem:[%s7] sm:$0x1]
      %v766 = vperm.slane %v764, 0
      %v768 = vadd.f32 %v763, %v766
      %v769 = vpack.c.bf16 %v768, %v768
      %vm770 = vcmask 257024
      %771 = vst.msk [vmem:[%s390] sm:$0xf] %vm770, %v769
      %p772 = scmp.lt.s32.totalorder %s23, 1
      %s773 = scalar_select %p772, %s23, 1
      %p774 = scmp.lt.s32.totalorder %s24, 0
      %s775 = scalar_select %p774, %s24, 0
      %s776 = sadd.s32 %s775, %s773
      %s777 = smul.addr %s776, 4
      %s778 = scalar_lea.vmem %s8, %s777
      // Predicated region
      $region53: #{classic_transformer_forward.32} parent=51 // pred_check
        %p779 = pneg %p243
      $region54: #{classic_transformer_forward.32} parent=51 // pred_check_branch
        %781 = sbr.rel (%p779) target = $region56
      $region55: #{classic_transformer_forward.32} parent=51 // pred_region
        _
      $region56: #{classic_transformer_forward.32} parent=51 // pred_fallthru
        _
    $region52: #{classic_transformer_forward.32} parent=5 // pred_fallthru
      _
    %p782 = scmp.le.s32.totalorder 2, %s14
    // Predicated region
    $region57: #{classic_transformer_forward.32} parent=5 // pred_check
      %p783 = pneg %p782
    $region58: #{classic_transformer_forward.32} parent=5 // pred_check_branch
      %785 = sbr.rel (%p783) target = $region60
    $region59: #{classic_transformer_forward.32} parent=5 // pred_region
      %s786 = ssub.s32 %s14, 2
      // Predicated region
      $region61: #{classic_transformer_forward.32} parent=59 // pred_check
        %p787 = pneg %p249
      $region62: #{classic_transformer_forward.32} parent=59 // pred_check_branch
        %789 = sbr.rel (%p787) target = $region64
      $region63: #{classic_transformer_forward.32} parent=59 // pred_region
        %p790 = scmp.lt.s32.totalorder %s25, 1
        %s791 = scalar_select %p790, %s25, 1
        %p792 = scmp.lt.s32.totalorder %s26, 0
        %s793 = scalar_select %p792, %s26, 0
        %s794 = sadd.s32 %s793, %s791
        %s795 = smul.addr %s794, 4
        %s796 = scalar_lea.vmem %s8, %s795
      $region64: #{classic_transformer_forward.32} parent=59 // pred_fallthru
        _
    $region60: #{classic_transformer_forward.32} parent=5 // pred_fallthru
      _
  $region6: #{classic_transformer_forward.32} parent=0 // loop_footer
    %s18 = sadd.s32 1, %s14
  $region7: #{classic_transformer_forward.32} parent=0 // loop_footer_branch
    %13 = sbr.rel target = $region3
  $region8: #{classic_transformer_forward.32} parent=0 // loop_exit
    _

// kernel: classic_transformer_forward.33
$region0: #{classic_transformer_forward.33}
  #allocation0 [shape = 'u32[]', space=smem, size = 0x4, offset = 0x4, fixed_abs, tag = 'smem constant byte address 0x4 - core index']
  #allocation1 [shape = 'u32[72,128]{1,0:T(1,128)}', space=vmem, size = 0x9000, scoped, tag = 'internal scratch']
  %s0 = inlined_call_operand.vmem [shape: bf16[16,32], index: 0, kind: input, shape index: {}]
  %s1 = inlined_call_operand.vmem [shape: bf16[32,32], index: 1, kind: input, shape index: {}]
  %s2 = inlined_call_operand.vmem [shape: f32[1,32], index: 2, kind: input, shape index: {}]
  %s3 = inlined_call_operand.vmem [shape: bf16[16,32], index: 3, kind: output, shape index: {}]
  %s4 = sld [smem:[#allocation0]]
  $region22: #{classic_transformer_forward.33} parent=0
    _
  %s6 = ssub.s32 1, %s4
  %s7 = scalar_select 0, %s6, %s4
  // Predicated region
  $region2: #{classic_transformer_forward.33} parent=0 // pred_check
    _
  $region3: #{classic_transformer_forward.33} parent=0 // pred_check_branch
    %9 = sbr.rel (0) target = $region5
  $region4: #{classic_transformer_forward.33} parent=0 // pred_region
    _
  $region5: #{classic_transformer_forward.33} parent=0 // pred_fallthru
    _
  // Predicated region
  $region6: #{classic_transformer_forward.33} parent=0 // pred_check
    _
  $region7: #{classic_transformer_forward.33} parent=0 // pred_check_branch
    %11 = sbr.rel (0) target = $region9
  $region8: #{classic_transformer_forward.33} parent=0 // pred_region
    _
  $region9: #{classic_transformer_forward.33} parent=0 // pred_fallthru
    _
  // Predicated region
  $region10: #{classic_transformer_forward.33} parent=0 // pred_check
    _
  $region11: #{classic_transformer_forward.33} parent=0 // pred_check_branch
    %13 = sbr.rel (0) target = $region13
  $region12: #{classic_transformer_forward.33} parent=0 // pred_region
    _
  $region13: #{classic_transformer_forward.33} parent=0 // pred_fallthru
    _
  %v15 = vld [vmem:[%s0] sm:$0xf]
  %v16 = vld [vmem:[%s0 + $0x4] sm:$0xf]
  %v17 = vld [vmem:[%s1] sm:$0xf]
  %v18 = vld [vmem:[%s1 + $0x4] sm:$0xf]
  %v19 = vld [vmem:[%s1 + $0x8] sm:$0xf]
  %v20 = vld [vmem:[%s1 + $0xc] sm:$0xf]
  %v21 = vld [vmem:[%s2] sm:$0x1]
  %v23 = vperm.slane %v21, 0
  %v27 = vunpack.c.l.b16 %v15
  %v28 = vunpack.c.l.b16 %v16
  %v29 = vpack.c.b16 %v28, %v27
  %v34 = vunpack.c.l.b16 %v17
  %v35 = vunpack.c.l.b16 %v18
  %v36 = vunpack.c.l.b16 %v19
  %v37 = vunpack.c.l.b16 %v20
  %v38 = vpack.c.b16 %v35, %v34
  %v39 = vpack.c.b16 %v37, %v36
  %vm42 = vcmask 261120
  %v44 = vsel %vm42, %v29, 0
  %46 = vmatpush.bf16.msra.mxu0 0
  %47 = vmatpush.bf16.msra.mxu0 0
  %48 = vmatpush.bf16.msra.mxu0 0
  %49 = vmatpush.bf16.msra.mxu0 0
  %50 = vmatpush.bf16.msra.mxu0 0
  %51 = vmatpush.bf16.msra.mxu0 0
  %52 = vmatpush.bf16.msra.mxu0 %v39
  %53 = vmatpush.bf16.msra.mxu0 %v38
  %54 = vmatmul.bf16.gmra.mxu0 %v44
  %v55 = vpop.f32.mrf.mxu0
  %v56 = vadd.f32 %v23, %v55
  %v57 = vpop.f32.mrf.mxu0
  %v58 = vadd.f32 %v23, %v57
  %59 = vdwg.mxu0
  %v60 = vpack.c.bf16 %v56, %v56
  %v61 = vpack.c.bf16 %v58, %v58
  %vm62 = vcmask 257024
  %63 = vst.msk [vmem:[%s3] sm:$0xf] %vm62, %v60
  %64 = vst.msk [vmem:[%s3 + $0x4] sm:$0xf] %vm62, %v61
  // Predicated region
  $region14: #{classic_transformer_forward.33} parent=0 // pred_check
    _
  $region15: #{classic_transformer_forward.33} parent=0 // pred_check_branch
    %66 = sbr.rel (0) target = $region17
  $region16: #{classic_transformer_forward.33} parent=0 // pred_region
    _
  $region17: #{classic_transformer_forward.33} parent=0 // pred_fallthru
    _
  // Predicated region
  $region18: #{classic_transformer_forward.33} parent=0 // pred_check
    _
  $region19: #{classic_transformer_forward.33} parent=0 // pred_check_branch
    %68 = sbr.rel (0) target = $region21
  $region20: #{classic_transformer_forward.33} parent=0 // pred_region
    _
  $region21: #{classic_transformer_forward.33} parent=0 // pred_fallthru
    _

// kernel: classic_transformer_forward.34
$region0: #{classic_transformer_forward.34}
  #allocation0 [shape = 'u32[]', space=smem, size = 0x4, offset = 0x4, fixed_abs, tag = 'smem constant byte address 0x4 - core index']
  #allocation1 [shape = 'u32[72,128]{1,0:T(1,128)}', space=vmem, size = 0x9000, scoped, tag = 'internal scratch']
  %s0 = inlined_call_operand.vmem [shape: bf16[16,32], index: 0, kind: input, shape index: {}]
  %s1 = inlined_call_operand.vmem [shape: bf16[32,64], index: 1, kind: input, shape index: {}]
  %s2 = inlined_call_operand.vmem [shape: f32[1,64], index: 2, kind: input, shape index: {}]
  %s3 = inlined_call_operand.vmem [shape: bf16[16,64], index: 3, kind: output, shape index: {}]
  %s4 = sld [smem:[#allocation0]]
  $region22: #{classic_transformer_forward.34} parent=0
    _
  %s6 = ssub.s32 1, %s4
  %s7 = scalar_select 0, %s6, %s4
  // Predicated region
  $region2: #{classic_transformer_forward.34} parent=0 // pred_check
    _
  $region3: #{classic_transformer_forward.34} parent=0 // pred_check_branch
    %9 = sbr.rel (0) target = $region5
  $region4: #{classic_transformer_forward.34} parent=0 // pred_region
    _
  $region5: #{classic_transformer_forward.34} parent=0 // pred_fallthru
    _
  // Predicated region
  $region6: #{classic_transformer_forward.34} parent=0 // pred_check
    _
  $region7: #{classic_transformer_forward.34} parent=0 // pred_check_branch
    %11 = sbr.rel (0) target = $region9
  $region8: #{classic_transformer_forward.34} parent=0 // pred_region
    _
  $region9: #{classic_transformer_forward.34} parent=0 // pred_fallthru
    _
  // Predicated region
  $region10: #{classic_transformer_forward.34} parent=0 // pred_check
    _
  $region11: #{classic_transformer_forward.34} parent=0 // pred_check_branch
    %13 = sbr.rel (0) target = $region13
  $region12: #{classic_transformer_forward.34} parent=0 // pred_region
    _
  $region13: #{classic_transformer_forward.34} parent=0 // pred_fallthru
    _
  %v15 = vld [vmem:[%s0] sm:$0xf]
  %v16 = vld [vmem:[%s0 + $0x4] sm:$0xf]
  %v17 = vld [vmem:[%s1] sm:$0xf]
  %v18 = vld [vmem:[%s1 + $0x4] sm:$0xf]
  %v19 = vld [vmem:[%s1 + $0x8] sm:$0xf]
  %v20 = vld [vmem:[%s1 + $0xc] sm:$0xf]
  %v21 = vld [vmem:[%s2] sm:$0x1]
  %v23 = vperm.slane %v21, 0
  %v27 = vunpack.c.l.b16 %v15
  %v28 = vunpack.c.l.b16 %v16
  %v29 = vpack.c.b16 %v28, %v27
  %v34 = vunpack.c.l.b16 %v17
  %v35 = vunpack.c.l.b16 %v18
  %v36 = vunpack.c.l.b16 %v19
  %v37 = vunpack.c.l.b16 %v20
  %v38 = vpack.c.b16 %v35, %v34
  %v39 = vpack.c.b16 %v37, %v36
  %vm42 = vcmask 261120
  %v44 = vsel %vm42, %v29, 0
  %46 = vmatpush.bf16.msra.mxu0 0
  %47 = vmatpush.bf16.msra.mxu0 0
  %48 = vmatpush.bf16.msra.mxu0 0
  %49 = vmatpush.bf16.msra.mxu0 0
  %50 = vmatpush.bf16.msra.mxu0 0
  %51 = vmatpush.bf16.msra.mxu0 0
  %52 = vmatpush.bf16.msra.mxu0 %v39
  %53 = vmatpush.bf16.msra.mxu0 %v38
  %54 = vmatmul.bf16.gmra.mxu0 %v44
  %v55 = vpop.f32.mrf.mxu0
  %v56 = vadd.f32 %v23, %v55
  %v57 = vpop.f32.mrf.mxu0
  %v58 = vadd.f32 %v23, %v57
  %59 = vdwg.mxu0
  %v60 = vpack.c.bf16 %v56, %v56
  %v61 = vpack.c.bf16 %v58, %v58
  %vm62 = vcmask 519168
  %63 = vst.msk [vmem:[%s3] sm:$0xf] %vm62, %v60
  %64 = vst.msk [vmem:[%s3 + $0x4] sm:$0xf] %vm62, %v61
  // Predicated region
  $region14: #{classic_transformer_forward.34} parent=0 // pred_check
    _
  $region15: #{classic_transformer_forward.34} parent=0 // pred_check_branch
    %66 = sbr.rel (0) target = $region17
  $region16: #{classic_transformer_forward.34} parent=0 // pred_region
    _
  $region17: #{classic_transformer_forward.34} parent=0 // pred_fallthru
    _
  // Predicated region
  $region18: #{classic_transformer_forward.34} parent=0 // pred_check
    _
  $region19: #{classic_transformer_forward.34} parent=0 // pred_check_branch
    %68 = sbr.rel (0) target = $region21
  $region20: #{classic_transformer_forward.34} parent=0 // pred_region
    _
  $region21: #{classic_transformer_forward.34} parent=0 // pred_fallthru
    _

// kernel: classic_transformer_forward.37
$region0: #{classic_transformer_forward.37}
  #allocation0 [shape = 'u32[]', space=smem, size = 0x4, offset = 0x4, fixed_abs, tag = 'smem constant byte address 0x4 - core index']
  #allocation1 [shape = 'u32[72,128]{1,0:T(1,128)}', space=vmem, size = 0x9000, scoped, tag = 'internal scratch']
  %s0 = inlined_call_operand.vmem [shape: bf16[16,32], index: 0, kind: input, shape index: {}]
  %s1 = inlined_call_operand.vmem [shape: bf16[32,32], index: 1, kind: input, shape index: {}]
  %s2 = inlined_call_operand.vmem [shape: f32[1,32], index: 2, kind: input, shape index: {}]
  %s3 = inlined_call_operand.hbm [shape: f32[16,32], index: 3, kind: output, shape index: {}]
  %s4 = sld [smem:[#allocation0]]
  $region22: #{classic_transformer_forward.37} parent=0
    _
  %s6 = ssub.s32 1, %s4
  %s7 = scalar_select 0, %s6, %s4
  $region1: #{classic_transformer_forward.37} parent=0
    #allocation2 [shape = 'u8[8192]{0}', space=vmem, size = 0x2000, scoped, tag = 'output window, operand 0, single buffered']
    #allocation3 [shape = 's32[1]{0}', space=sflag, size = 0x4, scoped, tag = 'scoped memory for classic_transformer_forward.37']
    %8 = vsyncpa [#allocation3], 0
    // Predicated region
    $region2: #{classic_transformer_forward.37} parent=1 // pred_check
      _
    $region3: #{classic_transformer_forward.37} parent=1 // pred_check_branch
      %10 = sbr.rel (0) target = $region5
    $region4: #{classic_transformer_forward.37} parent=1 // pred_region
      _
    $region5: #{classic_transformer_forward.37} parent=1 // pred_fallthru
      _
    // Predicated region
    $region6: #{classic_transformer_forward.37} parent=1 // pred_check
      _
    $region7: #{classic_transformer_forward.37} parent=1 // pred_check_branch
      %12 = sbr.rel (0) target = $region9
    $region8: #{classic_transformer_forward.37} parent=1 // pred_region
      _
    $region9: #{classic_transformer_forward.37} parent=1 // pred_fallthru
      _
    // Predicated region
    $region10: #{classic_transformer_forward.37} parent=1 // pred_check
      _
    $region11: #{classic_transformer_forward.37} parent=1 // pred_check_branch
      %14 = sbr.rel (0) target = $region13
    $region12: #{classic_transformer_forward.37} parent=1 // pred_region
      _
    $region13: #{classic_transformer_forward.37} parent=1 // pred_fallthru
      _
    %v16 = vld [vmem:[%s0] sm:$0xf]
    %v17 = vld [vmem:[%s0 + $0x4] sm:$0xf]
    %v18 = vld [vmem:[%s1] sm:$0xf]
    %v19 = vld [vmem:[%s1 + $0x4] sm:$0xf]
    %v20 = vld [vmem:[%s1 + $0x8] sm:$0xf]
    %v21 = vld [vmem:[%s1 + $0xc] sm:$0xf]
    %v22 = vld [vmem:[%s2] sm:$0x1]
    %v24 = vperm.slane %v22, 0
    %v28 = vunpack.c.l.b16 %v16
    %v29 = vunpack.c.l.b16 %v17
    %v30 = vpack.c.b16 %v29, %v28
    %v35 = vunpack.c.l.b16 %v18
    %v36 = vunpack.c.l.b16 %v19
    %v37 = vunpack.c.l.b16 %v20
    %v38 = vunpack.c.l.b16 %v21
    %v39 = vpack.c.b16 %v36, %v35
    %v40 = vpack.c.b16 %v38, %v37
    %vm43 = vcmask 261120
    %v45 = vsel %vm43, %v30, 0
    %47 = vmatpush.bf16.msra.mxu0 0
    %48 = vmatpush.bf16.msra.mxu0 0
    %49 = vmatpush.bf16.msra.mxu0 0
    %50 = vmatpush.bf16.msra.mxu0 0
    %51 = vmatpush.bf16.msra.mxu0 0
    %52 = vmatpush.bf16.msra.mxu0 0
    %53 = vmatpush.bf16.msra.mxu0 %v40
    %54 = vmatpush.bf16.msra.mxu0 %v39
    %55 = vmatmul.bf16.gmra.mxu0 %v45
    %v56 = vpop.f32.mrf.mxu0
    %v57 = vadd.f32 %v24, %v56
    %v58 = vpop.f32.mrf.mxu0
    %v59 = vadd.f32 %v24, %v58
    %60 = vdwg.mxu0
    %61 = vst.msk [vmem:[#allocation2] sm:$0xff] %vm43, %v57
    %62 = vst.msk [vmem:[#allocation2 + $0x8] sm:$0xff] %vm43, %v59
    // Predicated region
    $region14: #{classic_transformer_forward.37} parent=1 // pred_check
      _
    $region15: #{classic_transformer_forward.37} parent=1 // pred_check_branch
      %64 = sbr.rel (0) target = $region17
    $region16: #{classic_transformer_forward.37} parent=1 // pred_region
      %66 = vsyncadd [#allocation3], 0
      %s67 = sshll.u32 [#allocation2], 4
      %s68 = int_to_ptr.vmem [resolvable:$true] %s67
      %s69 = sshll.u32 %s3, 4
      %s70 = int_to_ptr.hbm [resolvable:$true] %s69
      %75 = dma.vmem_to_hbm [thread:$0]  %s68, 256, %s70, [#allocation3], 128, 128, 8
    $region17: #{classic_transformer_forward.37} parent=1 // pred_fallthru
      _
    // Predicated region
    $region18: #{classic_transformer_forward.37} parent=1 // pred_check
      _
    $region19: #{classic_transformer_forward.37} parent=1 // pred_check_branch
      %77 = sbr.rel (0) target = $region21
    $region20: #{classic_transformer_forward.37} parent=1 // pred_region
      %79 = dma.done [#allocation3], 256
    $region21: #{classic_transformer_forward.37} parent=1 // pred_fallthru
      _
    %80 = vsyncpa [#allocation3], 1

// kernel: classic_transformer_forward.35
$region0: #{classic_transformer_forward.35}
  #allocation0 [shape = 'u32[]', space=smem, size = 0x4, offset = 0x4, fixed_abs, tag = 'smem constant byte address 0x4 - core index']
  #allocation1 [shape = 'u32[72,128]{1,0:T(1,128)}', space=vmem, size = 0x9000, scoped, tag = 'internal scratch']
  %s0 = inlined_call_operand.vmem [shape: bf16[2,8,32], index: 0, kind: input, shape index: {}]
  %s1 = inlined_call_operand.vmem [shape: bf16[2,8,64], index: 1, kind: input, shape index: {}]
  %s2 = inlined_call_operand.vmem [shape: f32[2,1,8], index: 2, kind: input, shape index: {}]
  %s3 = inlined_call_operand.vmem [shape: bf16[2,8,32], index: 3, kind: input, shape index: {}]
  %s4 = inlined_call_operand.vmem [shape: bf16[32,32], index: 4, kind: input, shape index: {}]
  %s5 = inlined_call_operand.vmem [shape: f32[1,32], index: 5, kind: input, shape index: {}]
  %s6 = inlined_call_operand.hbm [shape: f32[1,32], index: 6, kind: input, shape index: {}]
  %s7 = inlined_call_operand.hbm [shape: f32[1,32], index: 7, kind: input, shape index: {}]
  %s8 = inlined_call_operand.vmem [shape: bf16[2,8,32], index: 8, kind: output, shape index: {}]
  %s9 = sld [smem:[#allocation0]]
  $region73: #{classic_transformer_forward.35} parent=0
    _
  %s11 = ssub.s32 1, %s9
  %s12 = scalar_select 0, %s11, %s9
  $region1: #{classic_transformer_forward.35} parent=0
    #allocation2 [shape = 'u8[512]{0}', space=vmem, size = 0x400, scoped, tag = 'input window, operand 6, single buffered']
    #allocation3 [shape = 's32[2]{0}', space=sflag, size = 0x8, scoped, tag = 'scoped memory for classic_transformer_forward.35']
    #allocation4 [shape = 'u8[512]{0}', space=vmem, size = 0x400, scoped, tag = 'input window, operand 7, single buffered']
    #allocation5 [shape = 's32[1]{0}', space=sflag, size = 0x4, scoped, tag = 'scoped memory for classic_transformer_forward.35']
    %13 = vsyncpa [#allocation3], 0
    %14 = vsyncpa [#allocation5], 0
    loop: start=0, step=1, limit=4
    $region2: #{classic_transformer_forward.35} parent=1 // loop_pre_header
      _
    $region3: #{classic_transformer_forward.35} parent=1 // loop_header
      %s16 = sphi 0, %s20
      %p17 = scmp.ge.s32.totalorder %s16, 4
      %s23 = sphi 0, %s35
      %s24 = sphi 0, %s31
      %s25 = sphi 0, %s23
      %s26 = sphi 0, %s24
      %s27 = sphi 0, %s25
      %s28 = sphi 0, %s26
      %s40 = sphi 0, %s42
      %s43 = sphi 0, %s40
      %s44 = sphi 0, %s43
      %s60 = sphi 0, %s44
      %s66 = sphi 0, %s68
      %s69 = sphi 0, %s66
      %s70 = sphi 0, %s69
      %s86 = sphi 0, %s70
      %s92 = sphi 0, %s94
      %s95 = sphi 0, %s92
      %s96 = sphi 0, %s95
      %s112 = sphi 0, %s96
      %s120 = sphi 0, %s122
      %s123 = sphi 0, %s120
      %s124 = sphi 0, %s123
      %s140 = sphi 0, %s124
      %s144 = sphi 0, %s144
      %s146 = sphi 0, %s144
      %s147 = sphi 0, %s146
      %s161 = sphi 0, %s147
      %s165 = sphi 0, %s165
      %s167 = sphi 0, %s165
      %s168 = sphi 0, %s167
      %s182 = sphi 0, %s168
      %s186 = sphi 0, %s186
      %s188 = sphi 0, %s186
      %s189 = sphi 0, %s188
      %s203 = sphi 0, %s189
      %s207 = sphi 0, %s207
      %s209 = sphi 0, %s207
      %s210 = sphi 0, %s209
      %s224 = sphi 0, %s210
      %s232 = sphi 0, %s234
      %s235 = sphi 0, %s232
      %s236 = sphi 0, %s235
      %s252 = sphi 0, %s236
    $region4: #{classic_transformer_forward.35} parent=1 // loop_header_branch
      %19 = sbr.rel (%p17) target = $region8
    $region5: #{classic_transformer_forward.35} parent=1 // loop_body
      %s21 = ssub.s32 %s16, 1
      %s22 = ssub.s32 %s16, 2
      %s29 = sadd.s32 1, %s24
      %p30 = scmp.ge.s32.totalorder %s29, 1
      %s31 = scalar_select %p30, 0, %s29
      %s32 = sadd.s32 1, %s23
      %s33 = scalar_select %p30, %s32, %s23
      %p34 = scmp.ge.s32.totalorder %s33, 2
      %s35 = scalar_select %p34, 0, %s33
      %s36 = ssub.s32 %s23, %s35
      %s37 = ssub.s32 %s24, %s31
      %s38 = sor.u32 %s36, %s37
      %p39 = scmp.eq.s32.totalorder %s38, 0
      %s41 = sadd.s32 %s40, 1
      %s42 = scalar_select %p39, %s40, %s41
      %p45 = pneg %p39
      %p46 = scmp.eq.s32.totalorder %s16, 1
      %p47 = por %p45, %p46
      %p48 = scmp.ne.s32.totalorder %s40, %s43
      %p49 = scmp.eq.s32.totalorder %s16, 0
      %p50 = por %p48, %p49
      %p51 = scmp.ne.s32.totalorder %s40, %s43
      %p52 = scmp.eq.s32.totalorder %s21, 1
      %p53 = por %p51, %p52
      %p54 = scmp.ne.s32.totalorder %s43, %s44
      %p55 = scmp.eq.s32.totalorder %s21, 0
      %p56 = por %p54, %p55
      %p57 = scmp.ne.s32.totalorder %s43, %s44
      %p58 = scmp.eq.s32.totalorder %s22, 1
      %p59 = por %p57, %p58
      %p61 = scmp.ne.s32.totalorder %s44, %s60
      %p62 = scmp.eq.s32.totalorder %s22, 0
      %p63 = por %p61, %p62
      %s64 = ssub.s32 %s23, %s35
      %p65 = scmp.eq.s32.totalorder %s64, 0
      %s67 = sadd.s32 %s66, 1
      %s68 = scalar_select %p65, %s66, %s67
      %p71 = pneg %p65
      %p72 = scmp.eq.s32.totalorder %s16, 1
      %p73 = por %p71, %p72
      %p74 = scmp.ne.s32.totalorder %s66, %s69
      %p75 = scmp.eq.s32.totalorder %s16, 0
      %p76 = por %p74, %p75
      %p77 = scmp.ne.s32.totalorder %s66, %s69
      %p78 = scmp.eq.s32.totalorder %s21, 1
      %p79 = por %p77, %p78
      %p80 = scmp.ne.s32.totalorder %s69, %s70
      %p81 = scmp.eq.s32.totalorder %s21, 0
      %p82 = por %p80, %p81
      %p83 = scmp.ne.s32.totalorder %s69, %s70
      %p84 = scmp.eq.s32.totalorder %s22, 1
      %p85 = por %p83, %p84
      %p87 = scmp.ne.s32.totalorder %s70, %s86
      %p88 = scmp.eq.s32.totalorder %s22, 0
      %p89 = por %p87, %p88
      %s90 = ssub.s32 %s23, %s35
      %p91 = scmp.eq.s32.totalorder %s90, 0
      %s93 = sadd.s32 %s92, 1
      %s94 = scalar_select %p91, %s92, %s93
      %p97 = pneg %p91
      %p98 = scmp.eq.s32.totalorder %s16, 1
      %p99 = por %p97, %p98
      %p100 = scmp.ne.s32.totalorder %s92, %s95
      %p101 = scmp.eq.s32.totalorder %s16, 0
      %p102 = por %p100, %p101
      %p103 = scmp.ne.s32.totalorder %s92, %s95
      %p104 = scmp.eq.s32.totalorder %s21, 1
      %p105 = por %p103, %p104
      %p106 = scmp.ne.s32.totalorder %s95, %s96
      %p107 = scmp.eq.s32.totalorder %s21, 0
      %p108 = por %p106, %p107
      %p109 = scmp.ne.s32.totalorder %s95, %s96
      %p110 = scmp.eq.s32.totalorder %s22, 1
      %p111 = por %p109, %p110
      %p113 = scmp.ne.s32.totalorder %s96, %s112
      %p114 = scmp.eq.s32.totalorder %s22, 0
      %p115 = por %p113, %p114
      %s116 = ssub.s32 %s23, %s35
      %s117 = ssub.s32 %s24, %s31
      %s118 = sor.u32 %s116, %s117
      %p119 = scmp.eq.s32.totalorder %s118, 0
      %s121 = sadd.s32 %s120, 1
      %s122 = scalar_select %p119, %s120, %s121
      %p125 = pneg %p119
      %p126 = scmp.eq.s32.totalorder %s16, 1
      %p127 = por %p125, %p126
      %p128 = scmp.ne.s32.totalorder %s120, %s123
      %p129 = scmp.eq.s32.totalorder %s16, 0
      %p130 = por %p128, %p129
      %p131 = scmp.ne.s32.totalorder %s120, %s123
      %p132 = scmp.eq.s32.totalorder %s21, 1
      %p133 = por %p131, %p132
      %p134 = scmp.ne.s32.totalorder %s123, %s124
      %p135 = scmp.eq.s32.totalorder %s21, 0
      %p136 = por %p134, %p135
      %p137 = scmp.ne.s32.totalorder %s123, %s124
      %p138 = scmp.eq.s32.totalorder %s22, 1
      %p139 = por %p137, %p138
      %p141 = scmp.ne.s32.totalorder %s124, %s140
      %p142 = scmp.eq.s32.totalorder %s22, 0
      %p143 = por %p141, %p142
      %s145 = sadd.s32 %s144, 1
      %p148 = scmp.eq.s32.totalorder %s16, 1
      %p149 = scmp.ne.s32.totalorder %s144, %s146
      %p150 = scmp.eq.s32.totalorder %s16, 0
      %p151 = por %p149, %p150
      %p152 = scmp.ne.s32.totalorder %s144, %s146
      %p153 = scmp.eq.s32.totalorder %s21, 1
      %p154 = por %p152, %p153
      %p155 = scmp.ne.s32.totalorder %s146, %s147
      %p156 = scmp.eq.s32.totalorder %s21, 0
      %p157 = por %p155, %p156
      %p158 = scmp.ne.s32.totalorder %s146, %s147
      %p159 = scmp.eq.s32.totalorder %s22, 1
      %p160 = por %p158, %p159
      %p162 = scmp.ne.s32.totalorder %s147, %s161
      %p163 = scmp.eq.s32.totalorder %s22, 0
      %p164 = por %p162, %p163
      %s166 = sadd.s32 %s165, 1
      %p169 = scmp.eq.s32.totalorder %s16, 1
      %p170 = scmp.ne.s32.totalorder %s165, %s167
      %p171 = scmp.eq.s32.totalorder %s16, 0
      %p172 = por %p170, %p171
      %p173 = scmp.ne.s32.totalorder %s165, %s167
      %p174 = scmp.eq.s32.totalorder %s21, 1
      %p175 = por %p173, %p174
      %p176 = scmp.ne.s32.totalorder %s167, %s168
      %p177 = scmp.eq.s32.totalorder %s21, 0
      %p178 = por %p176, %p177
      %p179 = scmp.ne.s32.totalorder %s167, %s168
      %p180 = scmp.eq.s32.totalorder %s22, 1
      %p181 = por %p179, %p180
      %p183 = scmp.ne.s32.totalorder %s168, %s182
      %p184 = scmp.eq.s32.totalorder %s22, 0
      %p185 = por %p183, %p184
      %s187 = sadd.s32 %s186, 1
      %p190 = scmp.eq.s32.totalorder %s16, 1
      %p191 = scmp.ne.s32.totalorder %s186, %s188
      %p192 = scmp.eq.s32.totalorder %s16, 0
      %p193 = por %p191, %p192
      %p194 = scmp.ne.s32.totalorder %s186, %s188
      %p195 = scmp.eq.s32.totalorder %s21, 1
      %p196 = por %p194, %p195
      %p197 = scmp.ne.s32.totalorder %s188, %s189
      %p198 = scmp.eq.s32.totalorder %s21, 0
      %p199 = por %p197, %p198
      %p200 = scmp.ne.s32.totalorder %s188, %s189
      %p201 = scmp.eq.s32.totalorder %s22, 1
      %p202 = por %p200, %p201
      %p204 = scmp.ne.s32.totalorder %s189, %s203
      %p205 = scmp.eq.s32.totalorder %s22, 0
      %p206 = por %p204, %p205
      %s208 = sadd.s32 %s207, 1
      %p211 = scmp.eq.s32.totalorder %s16, 1
      %p212 = scmp.ne.s32.totalorder %s207, %s209
      %p213 = scmp.eq.s32.totalorder %s16, 0
      %p214 = por %p212, %p213
      %p215 = scmp.ne.s32.totalorder %s207, %s209
      %p216 = scmp.eq.s32.totalorder %s21, 1
      %p217 = por %p215, %p216
      %p218 = scmp.ne.s32.totalorder %s209, %s210
      %p219 = scmp.eq.s32.totalorder %s21, 0
      %p220 = por %p218, %p219
      %p221 = scmp.ne.s32.totalorder %s209, %s210
      %p222 = scmp.eq.s32.totalorder %s22, 1
      %p223 = por %p221, %p222
      %p225 = scmp.ne.s32.totalorder %s210, %s224
      %p226 = scmp.eq.s32.totalorder %s22, 0
      %p227 = por %p225, %p226
      %s228 = ssub.s32 %s23, %s35
      %s229 = ssub.s32 %s24, %s31
      %s230 = sor.u32 %s228, %s229
      %p231 = scmp.eq.s32.totalorder %s230, 0
      %s233 = sadd.s32 %s232, 1
      %s234 = scalar_select %p231, %s232, %s233
      %p237 = pneg %p231
      %p238 = scmp.eq.s32.totalorder %s16, 1
      %p239 = por %p237, %p238
      %p240 = scmp.ne.s32.totalorder %s232, %s235
      %p241 = scmp.eq.s32.totalorder %s16, 0
      %p242 = por %p240, %p241
      %p243 = scmp.ne.s32.totalorder %s232, %s235
      %p244 = scmp.eq.s32.totalorder %s21, 1
      %p245 = por %p243, %p244
      %p246 = scmp.ne.s32.totalorder %s235, %s236
      %p247 = scmp.eq.s32.totalorder %s21, 0
      %p248 = por %p246, %p247
      %p249 = scmp.ne.s32.totalorder %s235, %s236
      %p250 = scmp.eq.s32.totalorder %s22, 1
      %p251 = por %p249, %p250
      %p253 = scmp.ne.s32.totalorder %s236, %s252
      %p254 = scmp.eq.s32.totalorder %s22, 0
      %p255 = por %p253, %p254
      %p256 = scmp.le.s32.totalorder 1, %s16
      %p257 = scmp.lt.s32.totalorder %s16, 3
      %p258 = pnand %p256, %p257
      %p259 = pneg %p258
      // Predicated region
      $region9: #{classic_transformer_forward.35} parent=5 // pred_check
        _
      $region10: #{classic_transformer_forward.35} parent=5 // pred_check_branch
        %261 = sbr.rel (%p258) target = $region12
      $region11: #{classic_transformer_forward.35} parent=5 // pred_region
        %s262 = ssub.s32 %s16, 1
        // Predicated region
        $region13: #{classic_transformer_forward.35} parent=11 // pred_check
          %p263 = pneg %p157
        $region14: #{classic_transformer_forward.35} parent=11 // pred_check_branch
          %265 = sbr.rel (%p263) target = $region16
        $region15: #{classic_transformer_forward.35} parent=11 // pred_region
          _
        $region16: #{classic_transformer_forward.35} parent=11 // pred_fallthru
          _
        // Predicated region
        $region17: #{classic_transformer_forward.35} parent=11 // pred_check
          %p266 = pneg %p178
        $region18: #{classic_transformer_forward.35} parent=11 // pred_check_branch
          %268 = sbr.rel (%p266) target = $region20
        $region19: #{classic_transformer_forward.35} parent=11 // pred_region
          _
        $region20: #{classic_transformer_forward.35} parent=11 // pred_fallthru
          _
        // Predicated region
        $region21: #{classic_transformer_forward.35} parent=11 // pred_check
          %p269 = pneg %p199
        $region22: #{classic_transformer_forward.35} parent=11 // pred_check_branch
          %271 = sbr.rel (%p269) target = $region24
        $region23: #{classic_transformer_forward.35} parent=11 // pred_region
          %273 = vsyncadd [#allocation3], 0
          %s275 = sshll.u32 %s6, 4
          %s276 = int_to_ptr.hbm [resolvable:$true] %s275
          %s277 = sshll.u32 [#allocation2], 4
          %s278 = int_to_ptr.vmem [resolvable:$true] %s277
          %280 = dma.hbm_to_vmem [thread:$0]  %s276, 16, %s278, [#allocation3]
        $region24: #{classic_transformer_forward.35} parent=11 // pred_fallthru
          _
        // Predicated region
        $region25: #{classic_transformer_forward.35} parent=11 // pred_check
          %p281 = pneg %p220
        $region26: #{classic_transformer_forward.35} parent=11 // pred_check_branch
          %283 = sbr.rel (%p281) target = $region28
        $region27: #{classic_transformer_forward.35} parent=11 // pred_region
          %285 = vsyncadd [#allocation5], 0
          %s287 = sshll.u32 %s7, 4
          %s288 = int_to_ptr.hbm [resolvable:$true] %s287
          %s289 = sshll.u32 [#allocation4], 4
          %s290 = int_to_ptr.vmem [resolvable:$true] %s289
          %292 = dma.hbm_to_vmem [thread:$0]  %s288, 16, %s290, [#allocation5]
        $region28: #{classic_transformer_forward.35} parent=11 // pred_fallthru
          _
      $region12: #{classic_transformer_forward.35} parent=5 // pred_fallthru
        _
      %p293 = scmp.lt.s32.totalorder %s16, 2
      // Predicated region
      $region29: #{classic_transformer_forward.35} parent=5 // pred_check
        %p294 = pneg %p293
      $region30: #{classic_transformer_forward.35} parent=5 // pred_check_branch
        %296 = sbr.rel (%p294) target = $region32
      $region31: #{classic_transformer_forward.35} parent=5 // pred_region
        // Predicated region
        $region33: #{classic_transformer_forward.35} parent=31 // pred_check
          %p297 = pneg %p50
        $region34: #{classic_transformer_forward.35} parent=31 // pred_check_branch
          %299 = sbr.rel (%p297) target = $region36
        $region35: #{classic_transformer_forward.35} parent=31 // pred_region
          %p300 = scmp.lt.s32.totalorder %s23, 1
          %s301 = scalar_select %p300, %s23, 1
          %p302 = scmp.lt.s32.totalorder %s24, 0
          %s303 = scalar_select %p302, %s24, 0
          %s304 = sadd.s32 %s303, %s301
          %s305 = smul.addr %s304, 4
          %s306 = scalar_lea.vmem %s0, %s305
        $region36: #{classic_transformer_forward.35} parent=31 // pred_fallthru
          _
        // Predicated region
        $region37: #{classic_transformer_forward.35} parent=31 // pred_check
          %p307 = pneg %p76
        $region38: #{classic_transformer_forward.35} parent=31 // pred_check_branch
          %309 = sbr.rel (%p307) target = $region40
        $region39: #{classic_transformer_forward.35} parent=31 // pred_region
          %p310 = scmp.lt.s32.totalorder %s23, 1
          %s311 = scalar_select %p310, %s23, 1
          %s312 = smul.addr %s311, 4
          %s313 = scalar_lea.vmem %s1, %s312
        $region40: #{classic_transformer_forward.35} parent=31 // pred_fallthru
          _
        // Predicated region
        $region41: #{classic_transformer_forward.35} parent=31 // pred_check
          %p314 = pneg %p102
        $region42: #{classic_transformer_forward.35} parent=31 // pred_check_branch
          %316 = sbr.rel (%p314) target = $region44
        $region43: #{classic_transformer_forward.35} parent=31 // pred_region
          %p317 = scmp.lt.s32.totalorder %s23, 1
          %s318 = scalar_select %p317, %s23, 1
          %s319 = scalar_lea.vmem %s2, %s318
        $region44: #{classic_transformer_forward.35} parent=31 // pred_fallthru
          _
        // Predicated region
        $region45: #{classic_transformer_forward.35} parent=31 // pred_check
          %p320 = pneg %p130
        $region46: #{classic_transformer_forward.35} parent=31 // pred_check_branch
          %322 = sbr.rel (%p320) target = $region48
        $region47: #{classic_transformer_forward.35} parent=31 // pred_region
          %p323 = scmp.lt.s32.totalorder %s23, 1
          %s324 = scalar_select %p323, %s23, 1
          %p325 = scmp.lt.s32.totalorder %s24, 0
          %s326 = scalar_select %p325, %s24, 0
          %s327 = sadd.s32 %s326, %s324
          %s328 = smul.addr %s327, 4
          %s329 = scalar_lea.vmem %s3, %s328
        $region48: #{classic_transformer_forward.35} parent=31 // pred_fallthru
          _
      $region32: #{classic_transformer_forward.35} parent=5 // pred_fallthru
        _
      %p330 = scmp.le.s32.totalorder 1, %s16
      %p331 = scmp.lt.s32.totalorder %s16, 3
      %p332 = pnand %p330, %p331
      %p333 = pneg %p332
      // Predicated region
      $region49: #{classic_transformer_forward.35} parent=5 // pred_check
        _
      $region50: #{classic_transformer_forward.35} parent=5 // pred_check_branch
        %335 = sbr.rel (%p332) target = $region52
      $region51: #{classic_transformer_forward.35} parent=5 // pred_region
        %s336 = ssub.s32 %s16, 1
        // Predicated region
        $region53: #{classic_transformer_forward.35} parent=51 // pred_check
          %p337 = pneg %p199
        $region54: #{classic_transformer_forward.35} parent=51 // pred_check_branch
          %339 = sbr.rel (%p337) target = $region56
        $region55: #{classic_transformer_forward.35} parent=51 // pred_region
          %341 = dma.done [#allocation3], 16
        $region56: #{classic_transformer_forward.35} parent=51 // pred_fallthru
          _
        // Predicated region
        $region57: #{classic_transformer_forward.35} parent=51 // pred_check
          %p342 = pneg %p220
        $region58: #{classic_transformer_forward.35} parent=51 // pred_check_branch
          %344 = sbr.rel (%p342) target = $region60
        $region59: #{classic_transformer_forward.35} parent=51 // pred_region
          %346 = dma.done [#allocation5], 16
        $region60: #{classic_transformer_forward.35} parent=51 // pred_fallthru
          _
        %p347 = scmp.lt.s32.totalorder %s25, 1
        %s348 = scalar_select %p347, %s25, 1
        %p349 = scmp.lt.s32.totalorder %s26, 0
        %s350 = scalar_select %p349, %s26, 0
        %s351 = sadd.s32 %s350, %s348
        %s352 = smul.addr %s351, 4
        %s353 = scalar_lea.vmem %s0, %s352
        %p354 = pneg %p56
        %p355 = pneg %p53
        %p356 = scmp.lt.s32.totalorder %s25, 1
        %s357 = scalar_select %p356, %s25, 1
        %s358 = smul.addr %s357, 4
        %s359 = scalar_lea.vmem %s1, %s358
        %p360 = pneg %p82
        %p361 = pneg %p79
        %p362 = scmp.lt.s32.totalorder %s25, 1
        %s363 = scalar_select %p362, %s25, 1
        %s364 = scalar_lea.vmem %s2, %s363
        %p365 = pneg %p108
        %p366 = pneg %p105
        %p367 = scmp.lt.s32.totalorder %s25, 1
        %s368 = scalar_select %p367, %s25, 1
        %p369 = scmp.lt.s32.totalorder %s26, 0
        %s370 = scalar_select %p369, %s26, 0
        %s371 = sadd.s32 %s370, %s368
        %s372 = smul.addr %s371, 4
        %s373 = scalar_lea.vmem %s3, %s372
        %p374 = pneg %p136
        %p375 = pneg %p133
        %p376 = pneg %p157
        %p377 = pneg %p154
        %p378 = pneg %p178
        %p379 = pneg %p175
        %p380 = pneg %p199
        %p381 = pneg %p196
        %p382 = pneg %p220
        %p383 = pneg %p217
        %p384 = pneg %p248
        %p385 = pneg %p245
        %p386 = scmp.lt.s32.totalorder %s25, 1
        %s387 = scalar_select %p386, %s25, 1
        %p388 = scmp.lt.s32.totalorder %s26, 0
        %s389 = scalar_select %p388, %s26, 0
        %s390 = sadd.s32 %s389, %s387
        %s391 = smul.addr %s390, 4
        %s392 = scalar_lea.vmem %s8, %s391
        %p393 = scmp.lt.s32.totalorder %s25, 1
        %s394 = scalar_select %p393, %s25, 1
        %p395 = scmp.lt.s32.totalorder %s26, 0
        %s396 = scalar_select %p395, %s26, 0
        %s397 = sadd.s32 %s396, %s394
        %s398 = smul.addr %s397, 4
        %s399 = scalar_lea.vmem %s0, %s398
        %p400 = scmp.lt.s32.totalorder %s25, 1
        %s401 = scalar_select %p400, %s25, 1
        %s402 = smul.addr %s401, 4
        %s403 = scalar_lea.vmem %s1, %s402
        %p404 = scmp.lt.s32.totalorder %s25, 1
        %s405 = scalar_select %p404, %s25, 1
        %s406 = scalar_lea.vmem %s2, %s405
        %p407 = scmp.lt.s32.totalorder %s25, 1
        %s408 = scalar_select %p407, %s25, 1
        %p409 = scmp.lt.s32.totalorder %s26, 0
        %s410 = scalar_select %p409, %s26, 0
        %s411 = sadd.s32 %s410, %s408
        %s412 = smul.addr %s411, 4
        %s413 = scalar_lea.vmem %s3, %s412
        %p414 = scmp.lt.s32.totalorder %s25, 1
        %s415 = scalar_select %p414, %s25, 1
        %p416 = scmp.lt.s32.totalorder %s26, 0
        %s417 = scalar_select %p416, %s26, 0
        %s418 = sadd.s32 %s417, %s415
        %s419 = smul.addr %s418, 4
        %s420 = scalar_lea.vmem %s8, %s419
        %v422 = vld [vmem:[%s399] sm:$0xf]
        %v423 = vld [vmem:[%s403] sm:$0xf]
        %v424 = vld [vmem:[%s406] sm:$0x1]
        %v426 = vperm.slane %v424, 0
        %v428 = vld [vmem:[%s4] sm:$0xf]
        %v429 = vld [vmem:[%s4 + $0x4] sm:$0xf]
        %v430 = vld [vmem:[%s4 + $0x8] sm:$0xf]
        %v431 = vld [vmem:[%s4 + $0xc] sm:$0xf]
        %vm432 = vcmask 64512
        %v434 = vsel %vm432, %v422, 0
        %v437 = vsel %vm432, %v423, 0
        %439 = vmatpush.bf16.xpose.msra.mxu0 0
        %440 = vmatpush.bf16.xpose.msra.mxu0 0
        %441 = vmatpush.bf16.xpose.msra.mxu0 0
        %442 = vmatpush.bf16.xpose.msra.mxu0 0
        %443 = vmatpush.bf16.xpose.msra.mxu0 0
        %444 = vmatpush.bf16.xpose.msra.mxu0 0
        %445 = vmatpush.bf16.xpose.msra.mxu0 0
        %446 = vmatpush.bf16.xpose.msra.mxu0 %v437
        %447 = vmatmul.bf16.gmra.mxu0 %v434
        %v448 = vpop.f32.mrf.mxu0
        %v449 = vadd.f32 %v426, %v448
        %v450 = vpop.f32.mrf.mxu0
        %451 = vdwg.mxu0
        %v452 = vsel %vm432, %v449, -inf
        %453 = vmax.xlane.f32.xlu0 %v452
        %v454 = vpop.xlane.xlu0 %453
        %v455 = vsub.f32 %v449, %v454
        %v456 = vmul.f32 %v455, 1.442695
        %v457 = vpow.pop %v456
        %v458 = vsel %vm432, %v457, 0.0
        %459 = vadd.xlane.f32.xlu0 %v458
        %v460 = vpop.xlane.xlu0 %459
        %v461 = vrcp.pop %v460
        %v462 = vmul.f32 %v457, %v461
        %v463 = vpack.c.bf16 %v462, %v462
        %v465 = vunpack.c.l.b16 %v423
        %v466 = vpack.c.b16 %v465, %v465
        %467 = vrot.lane.b32.xlu0 %v466, 96
        %v468 = vpop.permute.xlu0 %467
        %v470 = vsel %vm432, %v463, 0
        %vm472 = vcmask 1043456
        %v474 = vsel %vm472, %v468, 0
        %476 = vmatpush.bf16.msra.mxu0 0
        %477 = vmatpush.bf16.msra.mxu0 0
        %478 = vmatpush.bf16.msra.mxu0 0
        %479 = vmatpush.bf16.msra.mxu0 0
        %480 = vmatpush.bf16.msra.mxu0 0
        %481 = vmatpush.bf16.msra.mxu0 0
        %482 = vmatpush.bf16.msra.mxu0 0
        %483 = vmatpush.bf16.msra.mxu0 %v474
        %484 = vmatmul.bf16.gmra.mxu0 %v470
        %v485 = vpop.f32.mrf.mxu0
        %v486 = vadd.f32 0.0, %v485
        %v487 = vpop.f32.mrf.mxu0
        %488 = vdwg.mxu0
        %v489 = vpack.c.bf16 %v486, %v486
        %v491 = vunpack.c.l.b16 %v422
        %v492 = vpack.c.b16 %v491, %v491
        %493 = vrot.lane.b32.xlu0 %v492, 120
        %v494 = vpop.permute.xlu0 %493
        %495 = vrot.lane.b32.xlu0 %v466, 120
        %v496 = vpop.permute.xlu0 %495
        %v498 = vsel %vm432, %v494, 0
        %v501 = vsel %vm432, %v496, 0
        %503 = vmatpush.bf16.xpose.msra.mxu0 0
        %504 = vmatpush.bf16.xpose.msra.mxu0 0
        %505 = vmatpush.bf16.xpose.msra.mxu0 0
        %506 = vmatpush.bf16.xpose.msra.mxu0 0
        %507 = vmatpush.bf16.xpose.msra.mxu0 0
        %508 = vmatpush.bf16.xpose.msra.mxu0 0
        %509 = vmatpush.bf16.xpose.msra.mxu0 0
        %510 = vmatpush.bf16.xpose.msra.mxu0 %v501
        %511 = vmatmul.bf16.gmra.mxu0 %v498
        %v512 = vpop.f32.mrf.mxu0
        %v513 = vadd.f32 %v426, %v512
        %v514 = vpop.f32.mrf.mxu0
        %515 = vdwg.mxu0
        %v516 = vsel %vm432, %v513, -inf
        %517 = vmax.xlane.f32.xlu0 %v516
        %v518 = vpop.xlane.xlu0 %517
        %v519 = vsub.f32 %v513, %v518
        %v520 = vmul.f32 %v519, 1.442695
        %v521 = vpow.pop %v520
        %v522 = vsel %vm432, %v521, 0.0
        %523 = vadd.xlane.f32.xlu0 %v522
        %v524 = vpop.xlane.xlu0 %523
        %v525 = vrcp.pop %v524
        %v526 = vmul.f32 %v521, %v525
        %v527 = vpack.c.bf16 %v526, %v526
        %528 = vrot.lane.b32.xlu0 %v466, 88
        %v529 = vpop.permute.xlu0 %528
        %v531 = vsel %vm432, %v527, 0
        %v534 = vsel %vm472, %v529, 0
        %536 = vmatpush.bf16.msra.mxu0 0
        %537 = vmatpush.bf16.msra.mxu0 0
        %538 = vmatpush.bf16.msra.mxu0 0
        %539 = vmatpush.bf16.msra.mxu0 0
        %540 = vmatpush.bf16.msra.mxu0 0
        %541 = vmatpush.bf16.msra.mxu0 0
        %542 = vmatpush.bf16.msra.mxu0 0
        %543 = vmatpush.bf16.msra.mxu0 %v534
        %544 = vmatmul.bf16.gmra.mxu0 %v531
        %v545 = vpop.f32.mrf.mxu0
        %v546 = vadd.f32 0.0, %v545
        %v547 = vpop.f32.mrf.mxu0
        %548 = vdwg.mxu0
        %v549 = vpack.c.bf16 %v546, %v546
        %v551 = vsel %vm432, %v549, 0
        %v554 = vsel %vm472, %v429, 0
        %556 = vmatpush.bf16.msra.mxu0 0
        %557 = vmatpush.bf16.msra.mxu0 0
        %558 = vmatpush.bf16.msra.mxu0 0
        %559 = vmatpush.bf16.msra.mxu0 0
        %560 = vmatpush.bf16.msra.mxu0 0
        %561 = vmatpush.bf16.msra.mxu0 0
        %562 = vmatpush.bf16.msra.mxu0 0
        %563 = vmatpush.bf16.msra.mxu0 %v554
        %564 = vmatmul.bf16.gmra.mxu0 %v551
        %v565 = vpop.f32.mrf.mxu0
        %v566 = vadd.f32 0.0, %v565
        %v567 = vpop.f32.mrf.mxu0
        %568 = vdwg.mxu0
        %v570 = vsel %vm432, %v489, 0
        %v573 = vsel %vm472, %v428, 0
        %575 = vmatpush.bf16.msra.mxu0 0
        %576 = vmatpush.bf16.msra.mxu0 0
        %577 = vmatpush.bf16.msra.mxu0 0
        %578 = vmatpush.bf16.msra.mxu0 0
        %579 = vmatpush.bf16.msra.mxu0 0
        %580 = vmatpush.bf16.msra.mxu0 0
        %581 = vmatpush.bf16.msra.mxu0 0
        %582 = vmatpush.bf16.msra.mxu0 %v573
        %583 = vmatmul.bf16.gmra.mxu0 %v570
        %v584 = vpop.f32.mrf.mxu0
        %v585 = vadd.f32 %v566, %v584
        %v586 = vpop.f32.mrf.mxu0
        %587 = vdwg.mxu0
        %588 = vrot.lane.b32.xlu0 %v492, 112
        %v589 = vpop.permute.xlu0 %588
        %590 = vrot.lane.b32.xlu0 %v466, 112
        %v591 = vpop.permute.xlu0 %590
        %v593 = vsel %vm432, %v589, 0
        %v596 = vsel %vm432, %v591, 0
        %598 = vmatpush.bf16.xpose.msra.mxu0 0
        %599 = vmatpush.bf16.xpose.msra.mxu0 0
        %600 = vmatpush.bf16.xpose.msra.mxu0 0
        %601 = vmatpush.bf16.xpose.msra.mxu0 0
        %602 = vmatpush.bf16.xpose.msra.mxu0 0
        %603 = vmatpush.bf16.xpose.msra.mxu0 0
        %604 = vmatpush.bf16.xpose.msra.mxu0 0
        %605 = vmatpush.bf16.xpose.msra.mxu0 %v596
        %606 = vmatmul.bf16.gmra.mxu0 %v593
        %v607 = vpop.f32.mrf.mxu0
        %v608 = vadd.f32 %v426, %v607
        %v609 = vpop.f32.mrf.mxu0
        %610 = vdwg.mxu0
        %v611 = vsel %vm432, %v608, -inf
        %612 = vmax.xlane.f32.xlu0 %v611
        %v613 = vpop.xlane.xlu0 %612
        %v614 = vsub.f32 %v608, %v613
        %v615 = vmul.f32 %v614, 1.442695
        %v616 = vpow.pop %v615
        %v617 = vsel %vm432, %v616, 0.0
        %618 = vadd.xlane.f32.xlu0 %v617
        %v619 = vpop.xlane.xlu0 %618
        %v620 = vrcp.pop %v619
        %v621 = vmul.f32 %v616, %v620
        %v622 = vpack.c.bf16 %v621, %v621
        %623 = vrot.lane.b32.xlu0 %v466, 80
        %v624 = vpop.permute.xlu0 %623
        %v626 = vsel %vm432, %v622, 0
        %v629 = vsel %vm472, %v624, 0
        %631 = vmatpush.bf16.msra.mxu0 0
        %632 = vmatpush.bf16.msra.mxu0 0
        %633 = vmatpush.bf16.msra.mxu0 0
        %634 = vmatpush.bf16.msra.mxu0 0
        %635 = vmatpush.bf16.msra.mxu0 0
        %636 = vmatpush.bf16.msra.mxu0 0
        %637 = vmatpush.bf16.msra.mxu0 0
        %638 = vmatpush.bf16.msra.mxu0 %v629
        %639 = vmatmul.bf16.gmra.mxu0 %v626
        %v640 = vpop.f32.mrf.mxu0
        %v641 = vadd.f32 0.0, %v640
        %v642 = vpop.f32.mrf.mxu0
        %643 = vdwg.mxu0
        %v644 = vpack.c.bf16 %v641, %v641
        %v646 = vsel %vm432, %v644, 0
        %v649 = vsel %vm472, %v430, 0
        %651 = vmatpush.bf16.msra.mxu0 0
        %652 = vmatpush.bf16.msra.mxu0 0
        %653 = vmatpush.bf16.msra.mxu0 0
        %654 = vmatpush.bf16.msra.mxu0 0
        %655 = vmatpush.bf16.msra.mxu0 0
        %656 = vmatpush.bf16.msra.mxu0 0
        %657 = vmatpush.bf16.msra.mxu0 0
        %658 = vmatpush.bf16.msra.mxu0 %v649
        %659 = vmatmul.bf16.gmra.mxu0 %v646
        %v660 = vpop.f32.mrf.mxu0
        %v661 = vadd.f32 0.0, %v660
        %v662 = vpop.f32.mrf.mxu0
        %663 = vdwg.mxu0
        %v664 = vadd.f32 %v585, %v661
        %665 = vrot.lane.b32.xlu0 %v492, 104
        %v666 = vpop.permute.xlu0 %665
        %667 = vrot.lane.b32.xlu0 %v466, 104
        %v668 = vpop.permute.xlu0 %667
        %v670 = vsel %vm432, %v666, 0
        %v673 = vsel %vm432, %v668, 0
        %675 = vmatpush.bf16.xpose.msra.mxu0 0
        %676 = vmatpush.bf16.xpose.msra.mxu0 0
        %677 = vmatpush.bf16.xpose.msra.mxu0 0
        %678 = vmatpush.bf16.xpose.msra.mxu0 0
        %679 = vmatpush.bf16.xpose.msra.mxu0 0
        %680 = vmatpush.bf16.xpose.msra.mxu0 0
        %681 = vmatpush.bf16.xpose.msra.mxu0 0
        %682 = vmatpush.bf16.xpose.msra.mxu0 %v673
        %683 = vmatmul.bf16.gmra.mxu0 %v670
        %v684 = vpop.f32.mrf.mxu0
        %v685 = vadd.f32 %v426, %v684
        %v686 = vpop.f32.mrf.mxu0
        %687 = vdwg.mxu0
        %v688 = vsel %vm432, %v685, -inf
        %689 = vmax.xlane.f32.xlu0 %v688
        %v690 = vpop.xlane.xlu0 %689
        %v691 = vsub.f32 %v685, %v690
        %v692 = vmul.f32 %v691, 1.442695
        %v693 = vpow.pop %v692
        %v694 = vsel %vm432, %v693, 0.0
        %695 = vadd.xlane.f32.xlu0 %v694
        %v696 = vpop.xlane.xlu0 %695
        %v697 = vrcp.pop %v696
        %v698 = vmul.f32 %v693, %v697
        %v699 = vpack.c.bf16 %v698, %v698
        %700 = vrot.lane.b32.xlu0 %v466, 72
        %v701 = vpop.permute.xlu0 %700
        %v703 = vsel %vm432, %v699, 0
        %v706 = vsel %vm472, %v701, 0
        %708 = vmatpush.bf16.msra.mxu0 0
        %709 = vmatpush.bf16.msra.mxu0 0
        %710 = vmatpush.bf16.msra.mxu0 0
        %711 = vmatpush.bf16.msra.mxu0 0
        %712 = vmatpush.bf16.msra.mxu0 0
        %713 = vmatpush.bf16.msra.mxu0 0
        %714 = vmatpush.bf16.msra.mxu0 0
        %715 = vmatpush.bf16.msra.mxu0 %v706
        %716 = vmatmul.bf16.gmra.mxu0 %v703
        %v717 = vpop.f32.mrf.mxu0
        %v718 = vadd.f32 0.0, %v717
        %v719 = vpop.f32.mrf.mxu0
        %720 = vdwg.mxu0
        %v721 = vpack.c.bf16 %v718, %v718
        %v723 = vsel %vm432, %v721, 0
        %v726 = vsel %vm472, %v431, 0
        %728 = vmatpush.bf16.msra.mxu0 0
        %729 = vmatpush.bf16.msra.mxu0 0
        %730 = vmatpush.bf16.msra.mxu0 0
        %731 = vmatpush.bf16.msra.mxu0 0
        %732 = vmatpush.bf16.msra.mxu0 0
        %733 = vmatpush.bf16.msra.mxu0 0
        %734 = vmatpush.bf16.msra.mxu0 0
        %735 = vmatpush.bf16.msra.mxu0 %v726
        %736 = vmatmul.bf16.gmra.mxu0 %v723
        %v737 = vpop.f32.mrf.mxu0
        %v738 = vadd.f32 0.0, %v737
        %v739 = vpop.f32.mrf.mxu0
        %740 = vdwg.mxu0
        %v741 = vadd.f32 %v664, %v738
        %v742 = vld [vmem:[%s5] sm:$0x1]
        %v744 = vperm.slane %v742, 0
        %v746 = vadd.f32 %v741, %v744
        %v747 = vld [vmem:[%s413] sm:$0xf]
        %v748 = vunpack.c.l.bf16 %v747
        %v749 = vadd.f32 %v748, %v746
        %vm750 = vcmask 261120
        %v751 = vsel %vm750, %v749, 0.0
        %752 = vadd.xlane.f32.xlu0 %v751
        %v753 = vpop.xlane.xlu0 %752
        %v754 = vrcp.pop 32.0
        %v755 = vmul.f32 32.0, %v754
        %v756 = vsub.f32 1.0, %v755
        %v757 = vmul.f32 %v754, %v756
        %v758 = vadd.f32 %v754, %v757
        %vm759 = vweird.f32 %v754
        %v760 = vsel %vm759, %v754, %v758
        %v761 = vmul.f32 %v753, %v760
        %v762 = vsub.f32 %v749, %v761
        %v763 = vmul.f32 %v762, %v762
        %v764 = vsel %vm750, %v763, 0.0
        %765 = vadd.xlane.f32.xlu0 %v764
        %v766 = vpop.xlane.xlu0 %765
        %v767 = vmul.f32 %v766, %v760
        %v768 = vadd.f32 %v767, 1e-05
        %v769 = vrsqrt.pop %v768
        %v770 = vmul.f32 %v769, %v768
        %v771 = vmul.f32 %v770, %v769
        %v772 = vmul.f32 0.5, %v771
        %v773 = vsub.f32 1.5, %v772
        %v774 = vmul.f32 %v769, %v773
        %vm775 = vweird.f32 %v768
        %vm776 = vweird.f32 %v769
        %vm777 = vmor %vm775, %vm776
        %v778 = vsel %vm777, %v769, %v774
        %v779 = vmul.f32 %v762, %v778
        %v780 = vld [vmem:[#allocation2] sm:$0x1]
        %v782 = vperm.slane %v780, 0
        %v784 = vmul.f32 %v779, %v782
        %v785 = vld [vmem:[#allocation4] sm:$0x1]
        %v787 = vperm.slane %v785, 0
        %v789 = vadd.f32 %v784, %v787
        %v790 = vpack.c.bf16 %v789, %v789
        %vm791 = vcmask 257024
        %792 = vst.msk [vmem:[%s420] sm:$0xf] %vm791, %v790
        %p793 = scmp.lt.s32.totalorder %s25, 1
        %s794 = scalar_select %p793, %s25, 1
        %p795 = scmp.lt.s32.totalorder %s26, 0
        %s796 = scalar_select %p795, %s26, 0
        %s797 = sadd.s32 %s796, %s794
        %s798 = smul.addr %s797, 4
        %s799 = scalar_lea.vmem %s8, %s798
        // Predicated region
        $region61: #{classic_transformer_forward.35} parent=51 // pred_check
          %p800 = pneg %p245
        $region62: #{classic_transformer_forward.35} parent=51 // pred_check_branch
          %802 = sbr.rel (%p800) target = $region64
        $region63: #{classic_transformer_forward.35} parent=51 // pred_region
          _
        $region64: #{classic_transformer_forward.35} parent=51 // pred_fallthru
          _
      $region52: #{classic_transformer_forward.35} parent=5 // pred_fallthru
        _
      %p803 = scmp.le.s32.totalorder 2, %s16
      // Predicated region
      $region65: #{classic_transformer_forward.35} parent=5 // pred_check
        %p804 = pneg %p803
      $region66: #{classic_transformer_forward.35} parent=5 // pred_check_branch
        %806 = sbr.rel (%p804) target = $region68
      $region67: #{classic_transformer_forward.35} parent=5 // pred_region
        %s807 = ssub.s32 %s16, 2
        // Predicated region
        $region69: #{classic_transformer_forward.35} parent=67 // pred_check
          %p808 = pneg %p251
        $region70: #{classic_transformer_forward.35} parent=67 // pred_check_branch
          %810 = sbr.rel (%p808) target = $region72
        $region71: #{classic_transformer_forward.35} parent=67 // pred_region
          %p811 = scmp.lt.s32.totalorder %s27, 1
          %s812 = scalar_select %p811, %s27, 1
          %p813 = scmp.lt.s32.totalorder %s28, 0
          %s814 = scalar_select %p813, %s28, 0
          %s815 = sadd.s32 %s814, %s812
          %s816 = smul.addr %s815, 4
          %s817 = scalar_lea.vmem %s8, %s816
        $region72: #{classic_transformer_forward.35} parent=67 // pred_fallthru
          _
      $region68: #{classic_transformer_forward.35} parent=5 // pred_fallthru
        _
    $region6: #{classic_transformer_forward.35} parent=1 // loop_footer
      %s20 = sadd.s32 1, %s16
    $region7: #{classic_transformer_forward.35} parent=1 // loop_footer_branch
      %15 = sbr.rel target = $region3
    $region8: #{classic_transformer_forward.35} parent=1 // loop_exit
      _
    %818 = vsyncpa [#allocation3], 1
    %s819 = scalar_lea.sflag [#allocation3], 1
    %820 = vsyncpa %s819, 1
    %821 = vsyncpa [#allocation5], 1

</llo_original>
